<compile_context>
chip_gen: v5e
topology: v5e:2x2
jax: 0.10.0
libtpu: 0.0.40
codegen_flags: <defaults>
</compile_context>

<pallas_src>
import jax
import jax.numpy as jnp
from jax import lax
from jax.experimental import pallas as pl
from jax.experimental.pallas import tpu as pltpu

INPUT_DIM = 8
HIDDEN_DIM = 32
EMBED_DIM = 32
SEQ_LEN = 8
BATCH = 2                          # per-branch batch
NUM_HEADS = 4
ATT_DIM = 2 * HIDDEN_DIM           # 64 (bidirectional hidden)
HEAD_DIM = ATT_DIM // NUM_HEADS    # 16
BN_EPS = 1e-5
B2 = 2 * BATCH                     # stacked batch (both branches fused)
S = SEQ_LEN * B2                   # 32 rows in the time-major flat layout
NEG_INF = -1e30


# ------------------------------ the fused kernel ------------------------------

def siamese_kernel(
    x_ref, attn_bias_ref, pool_ref,
    wih1_ref, b1_ref, whh1f_ref, whh1b_ref,
    wih2_ref, b2_ref, whh2f_ref, whh2b_ref,
    wq_ref, bq_ref, wk_ref, bk_ref, wv_ref, bv_ref, wo_ref, bo_ref,
    fw1_ref, fb1_ref, fw2_ref, fb2_ref, fw3_ref, fb3_ref,
    cw1_ref, cb1_ref, cw2_ref, cb2_ref, cw3_ref, cb3_ref, cw4_ref, cb4_ref,
    out_ref,
):
    H = HIDDEN_DIM
    T = SEQ_LEN
    nb = B2

    def bidir_lstm_layer(pre, whh_f, whh_b):
        """pre: (S, 8H) hoisted input projection + bias, columns [fwd 4H | bwd 4H].
        Returns the (S, 2H) time-major-flat [fwd | bwd] hidden sequence."""

        def cell(g, c_prev):
            i = jax.nn.sigmoid(g[:, 0 * H:1 * H])
            f = jax.nn.sigmoid(g[:, 1 * H:2 * H])
            gg = jnp.tanh(g[:, 2 * H:3 * H])
            o = jax.nn.sigmoid(g[:, 3 * H:4 * H])
            c_new = f * c_prev + i * gg
            h_new = o * jnp.tanh(c_new)
            return h_new, c_new

        # forward direction (fully unrolled, all slices static)
        h = jnp.zeros((nb, H), jnp.float32)
        c = jnp.zeros((nb, H), jnp.float32)
        outs_f = []
        for t in range(T):
            g = pre[t * nb:(t + 1) * nb, 0:4 * H] + jnp.dot(
                h, whh_f, preferred_element_type=jnp.float32)
            h, c = cell(g, c)
            outs_f.append(h)

        # backward direction: walk time in reverse, store result at position t
        h = jnp.zeros((nb, H), jnp.float32)
        c = jnp.zeros((nb, H), jnp.float32)
        outs_b = [None] * T
        for step in range(T):
            t = T - 1 - step
            g = pre[t * nb:(t + 1) * nb, 4 * H:8 * H] + jnp.dot(
                h, whh_b, preferred_element_type=jnp.float32)
            h, c = cell(g, c)
            outs_b[t] = h

        fwd = jnp.concatenate(outs_f, axis=0)                 # (S, H)
        bwd = jnp.concatenate(outs_b, axis=0)                 # (S, H)
        return jnp.concatenate([fwd, bwd], axis=1)            # (S, 2H)

    # ---- 2-layer bidirectional LSTM (eval: inter-layer dropout is identity) ----
    x = x_ref[...]                                            # (S, INPUT_DIM)
    pre1 = jnp.dot(x, wih1_ref[...], preferred_element_type=jnp.float32) + b1_ref[...]
    h1 = bidir_lstm_layer(pre1, whh1f_ref[...], whh1b_ref[...])        # (S, 2H)
    pre2 = jnp.dot(h1, wih2_ref[...], preferred_element_type=jnp.float32) + b2_ref[...]
    h2 = bidir_lstm_layer(pre2, whh2f_ref[...], whh2b_ref[...])        # (S, 2H)

    # ---- multi-head self-attention, batched over all 32 rows with a constant
    #      same-sequence additive mask (block-diagonal softmax) ----
    scale = 1.0 / (HEAD_DIM ** 0.5)
    bias = attn_bias_ref[...]                                 # (S, S): 0 / -1e30
    o_acc = jnp.zeros((S, ATT_DIM), jnp.float32)
    for hd in range(NUM_HEADS):
        q = jnp.dot(h2, wq_ref[hd], preferred_element_type=jnp.float32) + bq_ref[hd]
        k = jnp.dot(h2, wk_ref[hd], preferred_element_type=jnp.float32) + bk_ref[hd]
        v = jnp.dot(h2, wv_ref[hd], preferred_element_type=jnp.float32) + bv_ref[hd]
        s = lax.dot_general(q, k, (((1,), (1,)), ((), ())),
                            preferred_element_type=jnp.float32) * scale + bias
        p = jax.nn.softmax(s, axis=-1)
        ctx = jnp.dot(p, v, preferred_element_type=jnp.float32)        # (S, HEAD_DIM)
        o_acc = o_acc + jnp.dot(ctx, wo_ref[hd], preferred_element_type=jnp.float32)
    attended = o_acc + bo_ref[...]                            # (S, 2H)

    # ---- mean over time = one matmul with the constant pooling matrix ----
    pooled = jnp.dot(pool_ref[...], attended,
                     preferred_element_type=jnp.float32)      # (B2, 2H)

    # ---- dense helper: bf16 weights get bf16 activations, f32 accumulation ----
    def dense(xv, w_ref, b_ref):
        return jnp.dot(xv.astype(w_ref.dtype), w_ref[...],
                       preferred_element_type=jnp.float32) + b_ref[...]

    # ---- feature extractor (BN already folded into the following Linear) ----
    z = jnp.maximum(dense(pooled, fw1_ref, fb1_ref), 0.0)     # (B2, 256)
    z = jnp.maximum(dense(z, fw2_ref, fb2_ref), 0.0)          # (B2, 128)
    emb = dense(z, fw3_ref, fb3_ref)                          # (B2, EMBED_DIM)

    # ---- classifier on [e1, e2, |e1-e2|, e1*e2] (branches kept VMEM-resident) ----
    e1 = emb[0:BATCH, :]
    e2 = emb[BATCH:2 * BATCH, :]
    feat = jnp.concatenate([e1, e2, jnp.abs(e1 - e2), e1 * e2], axis=1)  # (B, 4E)
    z = jnp.maximum(dense(feat, cw1_ref, cb1_ref), 0.0)
    z = jnp.maximum(dense(z, cw2_ref, cb2_ref), 0.0)
    z = jnp.maximum(dense(z, cw3_ref, cb3_ref), 0.0)
    out_ref[...] = jax.nn.sigmoid(dense(z, cw4_ref, cb4_ref))


# ------------------------------ wrapper ------------------------------

def _vmem_specs(n):
    return [pl.BlockSpec(memory_space=pltpu.MemorySpace.VMEM)] * n


@jax.jit
def siamese_forward(ops, x1, x2):
    """x1, x2: (BATCH, SEQ_LEN, INPUT_DIM) float32  ->  (BATCH, 1) float32."""
    x = jnp.concatenate([x1, x2], axis=0)                       # (B2, T, F)
    x_flat = jnp.transpose(x, (1, 0, 2)).reshape(S, INPUT_DIM)  # time-major flat
    args = (x_flat,) + tuple(ops)
    return pl.pallas_call(
        siamese_kernel,
        out_shape=jax.ShapeDtypeStruct((BATCH, 1), jnp.float32),
        in_specs=_vmem_specs(len(args)),
        out_specs=pl.BlockSpec(memory_space=pltpu.MemorySpace.VMEM),
    )(*args)
    # TODO(synk): on v7x the fused kernel runs on one TensorCore; a grid=(2,)
    # per-sample parallel split could engage the second core if ever needed.


# ------------------------------ parameters ------------------------------

def _uniform(key, shape, bound):
    return jax.random.uniform(key, shape, jnp.float32, minval=-bound, maxval=bound)


def init_torch_like_params(seed=1234):
    """Random parameters in PyTorch layouts (eval-mode BN running stats)."""
    keys = iter(jax.random.split(jax.random.PRNGKey(seed), 64))

    def linear(din, dout):
        bound = 1.0 / (din ** 0.5)
        return (_uniform(next(keys), (dout, din), bound),
                _uniform(next(keys), (dout,), bound))

    def bn(n):
        return dict(gamma=jnp.ones((n,), jnp.float32), beta=jnp.zeros((n,), jnp.float32),
                    mean=jnp.zeros((n,), jnp.float32), var=jnp.ones((n,), jnp.float32))

    p = {}
    lstm = []
    for layer in range(2):
        din = INPUT_DIM if layer == 0 else 2 * HIDDEN_DIM
        bound = 1.0 / (HIDDEN_DIM ** 0.5)
        dirs = {}
        for d in ("fwd", "bwd"):
            dirs[d] = dict(
                w_ih=_uniform(next(keys), (4 * HIDDEN_DIM, din), bound),
                w_hh=_uniform(next(keys), (4 * HIDDEN_DIM, HIDDEN_DIM), bound),
                b_ih=_uniform(next(keys), (4 * HIDDEN_DIM,), bound),
                b_hh=_uniform(next(keys), (4 * HIDDEN_DIM,), bound))
        lstm.append(dirs)
    p["lstm"] = lstm

    p["attn"] = dict(wq=linear(ATT_DIM, ATT_DIM), wk=linear(ATT_DIM, ATT_DIM),
                     wv=linear(ATT_DIM, ATT_DIM), wo=linear(ATT_DIM, ATT_DIM))
    p["feat"] = dict(l1=linear(ATT_DIM, 256), bn1=bn(256),
                     l2=linear(256, 128), bn2=bn(128),
                     l3=linear(128, EMBED_DIM))
    p["cls"] = dict(l1=linear(4 * EMBED_DIM, 256), bn1=bn(256),
                    l2=linear(256, 128), bn2=bn(128),
                    l3=linear(128, 64), l4=linear(64, 1))
    return p


def prepare_operands(p):
    """Fold / transpose / pre-split PyTorch-layout params into kernel operands."""

    def bn_affine(bn):
        scale = bn["gamma"] / jnp.sqrt(bn["var"] + BN_EPS)
        shift = bn["beta"] - bn["mean"] * scale
        return scale, shift

    # LSTM: sum b_ih+b_hh, transpose, pack [fwd | bwd] input projections
    def lstm_layer(layer):
        f, b = layer["fwd"], layer["bwd"]
        wih = jnp.concatenate([f["w_ih"].T, b["w_ih"].T], axis=1)        # (Din, 8H)
        bias = jnp.concatenate([f["b_ih"] + f["b_hh"],
                                b["b_ih"] + b["b_hh"]])[None, :]         # (1, 8H)
        return wih, bias, f["w_hh"].T, b["w_hh"].T

    wih1, b1, whh1f, whh1b = lstm_layer(p["lstm"][0])
    wih2, b2, whh2f, whh2b = lstm_layer(p["lstm"][1])

    # attention: per-head weight splits done host-side (no lane slicing in-kernel)
    def split_heads_in(wb):      # (E,E),(E,)  ->  (nH, E, Dh), (nH, 1, Dh)
        w, bias = wb
        wt = w.T.reshape(ATT_DIM, NUM_HEADS, HEAD_DIM)
        return jnp.transpose(wt, (1, 0, 2)), bias.reshape(NUM_HEADS, 1, HEAD_DIM)

    wq, bq = split_heads_in(p["attn"]["wq"])
    wk, bk = split_heads_in(p["attn"]["wk"])
    wv, bv = split_heads_in(p["attn"]["wv"])
    wo_w, wo_b = p["attn"]["wo"]
    wo = wo_w.T.reshape(NUM_HEADS, HEAD_DIM, ATT_DIM)                    # (nH, Dh, E)
    bo = wo_b[None, :]

    # Linear -> ReLU -> BN -> (Dropout) -> Linear  ==>  fold BN into next Linear
    def fold_into_next(scale, shift, w_next, b_next):
        wt = w_next.T                                                    # (din, dout)
        return scale[:, None] * wt, (shift @ wt + b_next)[None, :]

    (f1w, f1b), (f2w, f2b), (f3w, f3b) = p["feat"]["l1"], p["feat"]["l2"], p["feat"]["l3"]
    s1, t1 = bn_affine(p["feat"]["bn1"])
    s2, t2 = bn_affine(p["feat"]["bn2"])
    fw1, fb1 = f1w.T, f1b[None, :]
    fw2, fb2 = fold_into_next(s1, t1, f2w, f2b)
    fw3, fb3 = fold_into_next(s2, t2, f3w, f3b)

    (c1w, c1b), (c2w, c2b) = p["cls"]["l1"], p["cls"]["l2"]
    (c3w, c3b), (c4w, c4b) = p["cls"]["l3"], p["cls"]["l4"]
    cs1, ct1 = bn_affine(p["cls"]["bn1"])
    cs2, ct2 = bn_affine(p["cls"]["bn2"])
    cw1, cb1 = c1w.T, c1b[None, :]
    cw2, cb2 = fold_into_next(cs1, ct1, c2w, c2b)
    cw3, cb3 = fold_into_next(cs2, ct2, c3w, c3b)
    cw4, cb4 = c4w.T, c4b[None, :]

    # bf16 weights for the wide dense layers (f32 accumulation in-kernel)
    fw1 = fw1.astype(jnp.bfloat16)
    fw2 = fw2.astype(jnp.bfloat16)
    cw1 = cw1.astype(jnp.bfloat16)
    cw2 = cw2.astype(jnp.bfloat16)

    # constants: same-sequence additive attention mask + mean-over-time matrix
    r = jnp.arange(S)
    same_seq = (r[:, None] % B2) == (r[None, :] % B2)
    attn_bias = jnp.where(same_seq, 0.0, NEG_INF).astype(jnp.float32)    # (S, S)
    pool = jnp.where((r[None, :] % B2) == jnp.arange(B2)[:, None],
                     1.0 / SEQ_LEN, 0.0).astype(jnp.float32)             # (B2, S)

    return (attn_bias, pool,
            wih1, b1, whh1f, whh1b, wih2, b2, whh2f, whh2b,
            wq, bq, wk, bk, wv, bv, wo, bo,
            fw1, fb1, fw2, fb2, fw3, fb3,
            cw1, cb1, cw2, cb2, cw3, cb3, cw4, cb4)


# ------------------------------ main ------------------------------

if __name__ == "__main__":
    params = init_torch_like_params()
    ops = prepare_operands(params)

    k1, k2 = jax.random.split(jax.random.PRNGKey(0))
    x1 = jax.random.normal(k1, (BATCH, SEQ_LEN, INPUT_DIM), jnp.float32)
    x2 = jax.random.normal(k2, (BATCH, SEQ_LEN, INPUT_DIM), jnp.float32)

    out = siamese_forward(ops, x1, x2)
    jax.block_until_ready(out)
    assert out.shape == (BATCH, 1) and out.dtype == jnp.float32
    assert bool(jnp.all(jnp.isfinite(out)))
    print("KERNEL_OK")
</pallas_src>

<mosaic_0001>
module attributes {stable_mosaic.version = 11 : i64} {
  func.func @siamese_kernel(%arg0: memref<32x8xf32, #tpu.memory_space<vmem>>, %arg1: memref<32x32xf32, #tpu.memory_space<vmem>>, %arg2: memref<4x32xf32, #tpu.memory_space<vmem>>, %arg3: memref<8x256xf32, #tpu.memory_space<vmem>>, %arg4: memref<1x256xf32, #tpu.memory_space<vmem>>, %arg5: memref<32x128xf32, #tpu.memory_space<vmem>>, %arg6: memref<32x128xf32, #tpu.memory_space<vmem>>, %arg7: memref<64x256xf32, #tpu.memory_space<vmem>>, %arg8: memref<1x256xf32, #tpu.memory_space<vmem>>, %arg9: memref<32x128xf32, #tpu.memory_space<vmem>>, %arg10: memref<32x128xf32, #tpu.memory_space<vmem>>, %arg11: memref<4x64x16xf32, #tpu.memory_space<vmem>>, %arg12: memref<4x1x16xf32, #tpu.memory_space<vmem>>, %arg13: memref<4x64x16xf32, #tpu.memory_space<vmem>>, %arg14: memref<4x1x16xf32, #tpu.memory_space<vmem>>, %arg15: memref<4x64x16xf32, #tpu.memory_space<vmem>>, %arg16: memref<4x1x16xf32, #tpu.memory_space<vmem>>, %arg17: memref<4x16x64xf32, #tpu.memory_space<vmem>>, %arg18: memref<1x64xf32, #tpu.memory_space<vmem>>, %arg19: memref<64x256xbf16, #tpu.memory_space<vmem>>, %arg20: memref<1x256xf32, #tpu.memory_space<vmem>>, %arg21: memref<256x128xbf16, #tpu.memory_space<vmem>>, %arg22: memref<1x128xf32, #tpu.memory_space<vmem>>, %arg23: memref<128x32xf32, #tpu.memory_space<vmem>>, %arg24: memref<1x32xf32, #tpu.memory_space<vmem>>, %arg25: memref<128x256xbf16, #tpu.memory_space<vmem>>, %arg26: memref<1x256xf32, #tpu.memory_space<vmem>>, %arg27: memref<256x128xbf16, #tpu.memory_space<vmem>>, %arg28: memref<1x128xf32, #tpu.memory_space<vmem>>, %arg29: memref<128x64xf32, #tpu.memory_space<vmem>>, %arg30: memref<1x64xf32, #tpu.memory_space<vmem>>, %arg31: memref<64x1xf32, #tpu.memory_space<vmem>>, %arg32: memref<1x1xf32, #tpu.memory_space<vmem>>, %arg33: memref<2x1xf32, #tpu.memory_space<vmem>>) attributes {dimension_semantics = [], scalar_prefetch = 0 : i64, scratch_operands = 0 : i64, tpu.core_type = #tpu.core_type<tc>} {
    %c0 = arith.constant 0 : index
    %c0_0 = arith.constant 0 : index
    %0 = vector.load %arg0[%c0, %c0_0] : memref<32x8xf32, #tpu.memory_space<vmem>>, vector<32x8xf32>
    %c0_1 = arith.constant 0 : index
    %c0_2 = arith.constant 0 : index
    %1 = vector.load %arg3[%c0_1, %c0_2] : memref<8x256xf32, #tpu.memory_space<vmem>>, vector<8x256xf32>
    %cst = arith.constant dense<0.000000e+00> : vector<32x256xf32>
    %2 = tpu.matmul %0, %1, %cst {dimension_numbers = #tpu.dot_dimension_numbers<[1], [0], [0], [1], [0, 0, 1, 1], [], []>} : vector<32x8xf32>, vector<8x256xf32>, vector<32x256xf32> -> vector<32x256xf32>
    %c0_3 = arith.constant 0 : index
    %c0_4 = arith.constant 0 : index
    %3 = vector.load %arg4[%c0_3, %c0_4] : memref<1x256xf32, #tpu.memory_space<vmem>>, vector<1x256xf32>
    %4 = vector.broadcast %3 : vector<1x256xf32> to vector<32x256xf32>
    %5 = arith.addf %2, %4 : vector<32x256xf32>
    %c0_5 = arith.constant 0 : index
    %c0_6 = arith.constant 0 : index
    %6 = vector.load %arg5[%c0_5, %c0_6] : memref<32x128xf32, #tpu.memory_space<vmem>>, vector<32x128xf32>
    %c0_7 = arith.constant 0 : index
    %c0_8 = arith.constant 0 : index
    %7 = vector.load %arg6[%c0_7, %c0_8] : memref<32x128xf32, #tpu.memory_space<vmem>>, vector<32x128xf32>
    %cst_9 = arith.constant 0.000000e+00 : f32
    %8 = vector.broadcast %cst_9 : f32 to vector<4x32xf32>
    %cst_10 = arith.constant 0.000000e+00 : f32
    %9 = vector.broadcast %cst_10 : f32 to vector<4x32xf32>
    %10 = vector.extract_strided_slice %5 {offsets = [0, 0], sizes = [4, 128], strides = [1, 1]} : vector<32x256xf32> to vector<4x128xf32>
    %cst_11 = arith.constant dense<0.000000e+00> : vector<4x128xf32>
    %11 = tpu.matmul %8, %6, %cst_11 {dimension_numbers = #tpu.dot_dimension_numbers<[1], [0], [0], [1], [0, 0, 1, 1], [], []>} : vector<4x32xf32>, vector<32x128xf32>, vector<4x128xf32> -> vector<4x128xf32>
    %12 = arith.addf %10, %11 : vector<4x128xf32>
    %13 = vector.extract_strided_slice %12 {offsets = [0, 0], sizes = [4, 32], strides = [1, 1]} : vector<4x128xf32> to vector<4x32xf32>
    %14 = arith.negf %13 : vector<4x32xf32>
    %15 = math.exp %14 : vector<4x32xf32>
    %cst_12 = arith.constant 1.000000e+00 : f32
    %16 = vector.broadcast %cst_12 : f32 to vector<4x32xf32>
    %17 = arith.addf %16, %15 : vector<4x32xf32>
    %18 = arith.divf %16, %17 : vector<4x32xf32>
    %19 = vector.extract_strided_slice %12 {offsets = [0, 32], sizes = [4, 32], strides = [1, 1]} : vector<4x128xf32> to vector<4x32xf32>
    %20 = arith.negf %19 : vector<4x32xf32>
    %21 = math.exp %20 : vector<4x32xf32>
    %cst_13 = arith.constant 1.000000e+00 : f32
    %22 = vector.broadcast %cst_13 : f32 to vector<4x32xf32>
    %23 = arith.addf %22, %21 : vector<4x32xf32>
    %24 = arith.divf %22, %23 : vector<4x32xf32>
    %25 = vector.extract_strided_slice %12 {offsets = [0, 64], sizes = [4, 32], strides = [1, 1]} : vector<4x128xf32> to vector<4x32xf32>
    %26 = math.tanh %25 : vector<4x32xf32>
    %27 = vector.extract_strided_slice %12 {offsets = [0, 96], sizes = [4, 32], strides = [1, 1]} : vector<4x128xf32> to vector<4x32xf32>
    %28 = arith.negf %27 : vector<4x32xf32>
    %29 = math.exp %28 : vector<4x32xf32>
    %cst_14 = arith.constant 1.000000e+00 : f32
    %30 = vector.broadcast %cst_14 : f32 to vector<4x32xf32>
    %31 = arith.addf %30, %29 : vector<4x32xf32>
    %32 = arith.divf %30, %31 : vector<4x32xf32>
    %33 = arith.mulf %24, %9 : vector<4x32xf32>
    %34 = arith.mulf %18, %26 : vector<4x32xf32>
    %35 = arith.addf %33, %34 : vector<4x32xf32>
    %36 = math.tanh %35 : vector<4x32xf32>
    %37 = arith.mulf %32, %36 : vector<4x32xf32>
    %38 = vector.extract_strided_slice %5 {offsets = [4, 0], sizes = [4, 128], strides = [1, 1]} : vector<32x256xf32> to vector<4x128xf32>
    %cst_15 = arith.constant dense<0.000000e+00> : vector<4x128xf32>
    %39 = tpu.matmul %37, %6, %cst_15 {dimension_numbers = #tpu.dot_dimension_numbers<[1], [0], [0], [1], [0, 0, 1, 1], [], []>} : vector<4x32xf32>, vector<32x128xf32>, vector<4x128xf32> -> vector<4x128xf32>
    %40 = arith.addf %38, %39 : vector<4x128xf32>
    %41 = vector.extract_strided_slice %40 {offsets = [0, 0], sizes = [4, 32], strides = [1, 1]} : vector<4x128xf32> to vector<4x32xf32>
    %42 = arith.negf %41 : vector<4x32xf32>
    %43 = math.exp %42 : vector<4x32xf32>
    %cst_16 = arith.constant 1.000000e+00 : f32
    %44 = vector.broadcast %cst_16 : f32 to vector<4x32xf32>
    %45 = arith.addf %44, %43 : vector<4x32xf32>
    %46 = arith.divf %44, %45 : vector<4x32xf32>
    %47 = vector.extract_strided_slice %40 {offsets = [0, 32], sizes = [4, 32], strides = [1, 1]} : vector<4x128xf32> to vector<4x32xf32>
    %48 = arith.negf %47 : vector<4x32xf32>
    %49 = math.exp %48 : vector<4x32xf32>
    %cst_17 = arith.constant 1.000000e+00 : f32
    %50 = vector.broadcast %cst_17 : f32 to vector<4x32xf32>
    %51 = arith.addf %50, %49 : vector<4x32xf32>
    %52 = arith.divf %50, %51 : vector<4x32xf32>
    %53 = vector.extract_strided_slice %40 {offsets = [0, 64], sizes = [4, 32], strides = [1, 1]} : vector<4x128xf32> to vector<4x32xf32>
    %54 = math.tanh %53 : vector<4x32xf32>
    %55 = vector.extract_strided_slice %40 {offsets = [0, 96], sizes = [4, 32], strides = [1, 1]} : vector<4x128xf32> to vector<4x32xf32>
    %56 = arith.negf %55 : vector<4x32xf32>
    %57 = math.exp %56 : vector<4x32xf32>
    %cst_18 = arith.constant 1.000000e+00 : f32
    %58 = vector.broadcast %cst_18 : f32 to vector<4x32xf32>
    %59 = arith.addf %58, %57 : vector<4x32xf32>
    %60 = arith.divf %58, %59 : vector<4x32xf32>
    %61 = arith.mulf %52, %35 : vector<4x32xf32>
    %62 = arith.mulf %46, %54 : vector<4x32xf32>
    %63 = arith.addf %61, %62 : vector<4x32xf32>
    %64 = math.tanh %63 : vector<4x32xf32>
    %65 = arith.mulf %60, %64 : vector<4x32xf32>
    %66 = vector.extract_strided_slice %5 {offsets = [8, 0], sizes = [4, 128], strides = [1, 1]} : vector<32x256xf32> to vector<4x128xf32>
    %cst_19 = arith.constant dense<0.000000e+00> : vector<4x128xf32>
    %67 = tpu.matmul %65, %6, %cst_19 {dimension_numbers = #tpu.dot_dimension_numbers<[1], [0], [0], [1], [0, 0, 1, 1], [], []>} : vector<4x32xf32>, vector<32x128xf32>, vector<4x128xf32> -> vector<4x128xf32>
    %68 = arith.addf %66, %67 : vector<4x128xf32>
    %69 = vector.extract_strided_slice %68 {offsets = [0, 0], sizes = [4, 32], strides = [1, 1]} : vector<4x128xf32> to vector<4x32xf32>
    %70 = arith.negf %69 : vector<4x32xf32>
    %71 = math.exp %70 : vector<4x32xf32>
    %cst_20 = arith.constant 1.000000e+00 : f32
    %72 = vector.broadcast %cst_20 : f32 to vector<4x32xf32>
    %73 = arith.addf %72, %71 : vector<4x32xf32>
    %74 = arith.divf %72, %73 : vector<4x32xf32>
    %75 = vector.extract_strided_slice %68 {offsets = [0, 32], sizes = [4, 32], strides = [1, 1]} : vector<4x128xf32> to vector<4x32xf32>
    %76 = arith.negf %75 : vector<4x32xf32>
    %77 = math.exp %76 : vector<4x32xf32>
    %cst_21 = arith.constant 1.000000e+00 : f32
    %78 = vector.broadcast %cst_21 : f32 to vector<4x32xf32>
    %79 = arith.addf %78, %77 : vector<4x32xf32>
    %80 = arith.divf %78, %79 : vector<4x32xf32>
    %81 = vector.extract_strided_slice %68 {offsets = [0, 64], sizes = [4, 32], strides = [1, 1]} : vector<4x128xf32> to vector<4x32xf32>
    %82 = math.tanh %81 : vector<4x32xf32>
    %83 = vector.extract_strided_slice %68 {offsets = [0, 96], sizes = [4, 32], strides = [1, 1]} : vector<4x128xf32> to vector<4x32xf32>
    %84 = arith.negf %83 : vector<4x32xf32>
    %85 = math.exp %84 : vector<4x32xf32>
    %cst_22 = arith.constant 1.000000e+00 : f32
    %86 = vector.broadcast %cst_22 : f32 to vector<4x32xf32>
    %87 = arith.addf %86, %85 : vector<4x32xf32>
    %88 = arith.divf %86, %87 : vector<4x32xf32>
    %89 = arith.mulf %80, %63 : vector<4x32xf32>
    %90 = arith.mulf %74, %82 : vector<4x32xf32>
    %91 = arith.addf %89, %90 : vector<4x32xf32>
    %92 = math.tanh %91 : vector<4x32xf32>
    %93 = arith.mulf %88, %92 : vector<4x32xf32>
    %94 = vector.extract_strided_slice %5 {offsets = [12, 0], sizes = [4, 128], strides = [1, 1]} : vector<32x256xf32> to vector<4x128xf32>
    %cst_23 = arith.constant dense<0.000000e+00> : vector<4x128xf32>
    %95 = tpu.matmul %93, %6, %cst_23 {dimension_numbers = #tpu.dot_dimension_numbers<[1], [0], [0], [1], [0, 0, 1, 1], [], []>} : vector<4x32xf32>, vector<32x128xf32>, vector<4x128xf32> -> vector<4x128xf32>
    %96 = arith.addf %94, %95 : vector<4x128xf32>
    %97 = vector.extract_strided_slice %96 {offsets = [0, 0], sizes = [4, 32], strides = [1, 1]} : vector<4x128xf32> to vector<4x32xf32>
    %98 = arith.negf %97 : vector<4x32xf32>
    %99 = math.exp %98 : vector<4x32xf32>
    %cst_24 = arith.constant 1.000000e+00 : f32
    %100 = vector.broadcast %cst_24 : f32 to vector<4x32xf32>
    %101 = arith.addf %100, %99 : vector<4x32xf32>
    %102 = arith.divf %100, %101 : vector<4x32xf32>
    %103 = vector.extract_strided_slice %96 {offsets = [0, 32], sizes = [4, 32], strides = [1, 1]} : vector<4x128xf32> to vector<4x32xf32>
    %104 = arith.negf %103 : vector<4x32xf32>
    %105 = math.exp %104 : vector<4x32xf32>
    %cst_25 = arith.constant 1.000000e+00 : f32
    %106 = vector.broadcast %cst_25 : f32 to vector<4x32xf32>
    %107 = arith.addf %106, %105 : vector<4x32xf32>
    %108 = arith.divf %106, %107 : vector<4x32xf32>
    %109 = vector.extract_strided_slice %96 {offsets = [0, 64], sizes = [4, 32], strides = [1, 1]} : vector<4x128xf32> to vector<4x32xf32>
    %110 = math.tanh %109 : vector<4x32xf32>
    %111 = vector.extract_strided_slice %96 {offsets = [0, 96], sizes = [4, 32], strides = [1, 1]} : vector<4x128xf32> to vector<4x32xf32>
    %112 = arith.negf %111 : vector<4x32xf32>
    %113 = math.exp %112 : vector<4x32xf32>
    %cst_26 = arith.constant 1.000000e+00 : f32
    %114 = vector.broadcast %cst_26 : f32 to vector<4x32xf32>
    %115 = arith.addf %114, %113 : vector<4x32xf32>
    %116 = arith.divf %114, %115 : vector<4x32xf32>
    %117 = arith.mulf %108, %91 : vector<4x32xf32>
    %118 = arith.mulf %102, %110 : vector<4x32xf32>
    %119 = arith.addf %117, %118 : vector<4x32xf32>
    %120 = math.tanh %119 : vector<4x32xf32>
    %121 = arith.mulf %116, %120 : vector<4x32xf32>
    %122 = vector.extract_strided_slice %5 {offsets = [16, 0], sizes = [4, 128], strides = [1, 1]} : vector<32x256xf32> to vector<4x128xf32>
    %cst_27 = arith.constant dense<0.000000e+00> : vector<4x128xf32>
    %123 = tpu.matmul %121, %6, %cst_27 {dimension_numbers = #tpu.dot_dimension_numbers<[1], [0], [0], [1], [0, 0, 1, 1], [], []>} : vector<4x32xf32>, vector<32x128xf32>, vector<4x128xf32> -> vector<4x128xf32>
    %124 = arith.addf %122, %123 : vector<4x128xf32>
    %125 = vector.extract_strided_slice %124 {offsets = [0, 0], sizes = [4, 32], strides = [1, 1]} : vector<4x128xf32> to vector<4x32xf32>
    %126 = arith.negf %125 : vector<4x32xf32>
    %127 = math.exp %126 : vector<4x32xf32>
    %cst_28 = arith.constant 1.000000e+00 : f32
    %128 = vector.broadcast %cst_28 : f32 to vector<4x32xf32>
    %129 = arith.addf %128, %127 : vector<4x32xf32>
    %130 = arith.divf %128, %129 : vector<4x32xf32>
    %131 = vector.extract_strided_slice %124 {offsets = [0, 32], sizes = [4, 32], strides = [1, 1]} : vector<4x128xf32> to vector<4x32xf32>
    %132 = arith.negf %131 : vector<4x32xf32>
    %133 = math.exp %132 : vector<4x32xf32>
    %cst_29 = arith.constant 1.000000e+00 : f32
    %134 = vector.broadcast %cst_29 : f32 to vector<4x32xf32>
    %135 = arith.addf %134, %133 : vector<4x32xf32>
    %136 = arith.divf %134, %135 : vector<4x32xf32>
    %137 = vector.extract_strided_slice %124 {offsets = [0, 64], sizes = [4, 32], strides = [1, 1]} : vector<4x128xf32> to vector<4x32xf32>
    %138 = math.tanh %137 : vector<4x32xf32>
    %139 = vector.extract_strided_slice %124 {offsets = [0, 96], sizes = [4, 32], strides = [1, 1]} : vector<4x128xf32> to vector<4x32xf32>
    %140 = arith.negf %139 : vector<4x32xf32>
    %141 = math.exp %140 : vector<4x32xf32>
    %cst_30 = arith.constant 1.000000e+00 : f32
    %142 = vector.broadcast %cst_30 : f32 to vector<4x32xf32>
    %143 = arith.addf %142, %141 : vector<4x32xf32>
    %144 = arith.divf %142, %143 : vector<4x32xf32>
    %145 = arith.mulf %136, %119 : vector<4x32xf32>
    %146 = arith.mulf %130, %138 : vector<4x32xf32>
    %147 = arith.addf %145, %146 : vector<4x32xf32>
    %148 = math.tanh %147 : vector<4x32xf32>
    %149 = arith.mulf %144, %148 : vector<4x32xf32>
    %150 = vector.extract_strided_slice %5 {offsets = [20, 0], sizes = [4, 128], strides = [1, 1]} : vector<32x256xf32> to vector<4x128xf32>
    %cst_31 = arith.constant dense<0.000000e+00> : vector<4x128xf32>
    %151 = tpu.matmul %149, %6, %cst_31 {dimension_numbers = #tpu.dot_dimension_numbers<[1], [0], [0], [1], [0, 0, 1, 1], [], []>} : vector<4x32xf32>, vector<32x128xf32>, vector<4x128xf32> -> vector<4x128xf32>
    %152 = arith.addf %150, %151 : vector<4x128xf32>
    %153 = vector.extract_strided_slice %152 {offsets = [0, 0], sizes = [4, 32], strides = [1, 1]} : vector<4x128xf32> to vector<4x32xf32>
    %154 = arith.negf %153 : vector<4x32xf32>
    %155 = math.exp %154 : vector<4x32xf32>
    %cst_32 = arith.constant 1.000000e+00 : f32
    %156 = vector.broadcast %cst_32 : f32 to vector<4x32xf32>
    %157 = arith.addf %156, %155 : vector<4x32xf32>
    %158 = arith.divf %156, %157 : vector<4x32xf32>
    %159 = vector.extract_strided_slice %152 {offsets = [0, 32], sizes = [4, 32], strides = [1, 1]} : vector<4x128xf32> to vector<4x32xf32>
    %160 = arith.negf %159 : vector<4x32xf32>
    %161 = math.exp %160 : vector<4x32xf32>
    %cst_33 = arith.constant 1.000000e+00 : f32
    %162 = vector.broadcast %cst_33 : f32 to vector<4x32xf32>
    %163 = arith.addf %162, %161 : vector<4x32xf32>
    %164 = arith.divf %162, %163 : vector<4x32xf32>
    %165 = vector.extract_strided_slice %152 {offsets = [0, 64], sizes = [4, 32], strides = [1, 1]} : vector<4x128xf32> to vector<4x32xf32>
    %166 = math.tanh %165 : vector<4x32xf32>
    %167 = vector.extract_strided_slice %152 {offsets = [0, 96], sizes = [4, 32], strides = [1, 1]} : vector<4x128xf32> to vector<4x32xf32>
    %168 = arith.negf %167 : vector<4x32xf32>
    %169 = math.exp %168 : vector<4x32xf32>
    %cst_34 = arith.constant 1.000000e+00 : f32
    %170 = vector.broadcast %cst_34 : f32 to vector<4x32xf32>
    %171 = arith.addf %170, %169 : vector<4x32xf32>
    %172 = arith.divf %170, %171 : vector<4x32xf32>
    %173 = arith.mulf %164, %147 : vector<4x32xf32>
    %174 = arith.mulf %158, %166 : vector<4x32xf32>
    %175 = arith.addf %173, %174 : vector<4x32xf32>
    %176 = math.tanh %175 : vector<4x32xf32>
    %177 = arith.mulf %172, %176 : vector<4x32xf32>
    %178 = vector.extract_strided_slice %5 {offsets = [24, 0], sizes = [4, 128], strides = [1, 1]} : vector<32x256xf32> to vector<4x128xf32>
    %cst_35 = arith.constant dense<0.000000e+00> : vector<4x128xf32>
    %179 = tpu.matmul %177, %6, %cst_35 {dimension_numbers = #tpu.dot_dimension_numbers<[1], [0], [0], [1], [0, 0, 1, 1], [], []>} : vector<4x32xf32>, vector<32x128xf32>, vector<4x128xf32> -> vector<4x128xf32>
    %180 = arith.addf %178, %179 : vector<4x128xf32>
    %181 = vector.extract_strided_slice %180 {offsets = [0, 0], sizes = [4, 32], strides = [1, 1]} : vector<4x128xf32> to vector<4x32xf32>
    %182 = arith.negf %181 : vector<4x32xf32>
    %183 = math.exp %182 : vector<4x32xf32>
    %cst_36 = arith.constant 1.000000e+00 : f32
    %184 = vector.broadcast %cst_36 : f32 to vector<4x32xf32>
    %185 = arith.addf %184, %183 : vector<4x32xf32>
    %186 = arith.divf %184, %185 : vector<4x32xf32>
    %187 = vector.extract_strided_slice %180 {offsets = [0, 32], sizes = [4, 32], strides = [1, 1]} : vector<4x128xf32> to vector<4x32xf32>
    %188 = arith.negf %187 : vector<4x32xf32>
    %189 = math.exp %188 : vector<4x32xf32>
    %cst_37 = arith.constant 1.000000e+00 : f32
    %190 = vector.broadcast %cst_37 : f32 to vector<4x32xf32>
    %191 = arith.addf %190, %189 : vector<4x32xf32>
    %192 = arith.divf %190, %191 : vector<4x32xf32>
    %193 = vector.extract_strided_slice %180 {offsets = [0, 64], sizes = [4, 32], strides = [1, 1]} : vector<4x128xf32> to vector<4x32xf32>
    %194 = math.tanh %193 : vector<4x32xf32>
    %195 = vector.extract_strided_slice %180 {offsets = [0, 96], sizes = [4, 32], strides = [1, 1]} : vector<4x128xf32> to vector<4x32xf32>
    %196 = arith.negf %195 : vector<4x32xf32>
    %197 = math.exp %196 : vector<4x32xf32>
    %cst_38 = arith.constant 1.000000e+00 : f32
    %198 = vector.broadcast %cst_38 : f32 to vector<4x32xf32>
    %199 = arith.addf %198, %197 : vector<4x32xf32>
    %200 = arith.divf %198, %199 : vector<4x32xf32>
    %201 = arith.mulf %192, %175 : vector<4x32xf32>
    %202 = arith.mulf %186, %194 : vector<4x32xf32>
    %203 = arith.addf %201, %202 : vector<4x32xf32>
    %204 = math.tanh %203 : vector<4x32xf32>
    %205 = arith.mulf %200, %204 : vector<4x32xf32>
    %206 = vector.extract_strided_slice %5 {offsets = [28, 0], sizes = [4, 128], strides = [1, 1]} : vector<32x256xf32> to vector<4x128xf32>
    %cst_39 = arith.constant dense<0.000000e+00> : vector<4x128xf32>
    %207 = tpu.matmul %205, %6, %cst_39 {dimension_numbers = #tpu.dot_dimension_numbers<[1], [0], [0], [1], [0, 0, 1, 1], [], []>} : vector<4x32xf32>, vector<32x128xf32>, vector<4x128xf32> -> vector<4x128xf32>
    %208 = arith.addf %206, %207 : vector<4x128xf32>
    %209 = vector.extract_strided_slice %208 {offsets = [0, 0], sizes = [4, 32], strides = [1, 1]} : vector<4x128xf32> to vector<4x32xf32>
    %210 = arith.negf %209 : vector<4x32xf32>
    %211 = math.exp %210 : vector<4x32xf32>
    %cst_40 = arith.constant 1.000000e+00 : f32
    %212 = vector.broadcast %cst_40 : f32 to vector<4x32xf32>
    %213 = arith.addf %212, %211 : vector<4x32xf32>
    %214 = arith.divf %212, %213 : vector<4x32xf32>
    %215 = vector.extract_strided_slice %208 {offsets = [0, 32], sizes = [4, 32], strides = [1, 1]} : vector<4x128xf32> to vector<4x32xf32>
    %216 = arith.negf %215 : vector<4x32xf32>
    %217 = math.exp %216 : vector<4x32xf32>
    %cst_41 = arith.constant 1.000000e+00 : f32
    %218 = vector.broadcast %cst_41 : f32 to vector<4x32xf32>
    %219 = arith.addf %218, %217 : vector<4x32xf32>
    %220 = arith.divf %218, %219 : vector<4x32xf32>
    %221 = vector.extract_strided_slice %208 {offsets = [0, 64], sizes = [4, 32], strides = [1, 1]} : vector<4x128xf32> to vector<4x32xf32>
    %222 = math.tanh %221 : vector<4x32xf32>
    %223 = vector.extract_strided_slice %208 {offsets = [0, 96], sizes = [4, 32], strides = [1, 1]} : vector<4x128xf32> to vector<4x32xf32>
    %224 = arith.negf %223 : vector<4x32xf32>
    %225 = math.exp %224 : vector<4x32xf32>
    %cst_42 = arith.constant 1.000000e+00 : f32
    %226 = vector.broadcast %cst_42 : f32 to vector<4x32xf32>
    %227 = arith.addf %226, %225 : vector<4x32xf32>
    %228 = arith.divf %226, %227 : vector<4x32xf32>
    %229 = arith.mulf %220, %203 : vector<4x32xf32>
    %230 = arith.mulf %214, %222 : vector<4x32xf32>
    %231 = arith.addf %229, %230 : vector<4x32xf32>
    %232 = math.tanh %231 : vector<4x32xf32>
    %233 = arith.mulf %228, %232 : vector<4x32xf32>
    %cst_43 = arith.constant 0.000000e+00 : f32
    %234 = vector.broadcast %cst_43 : f32 to vector<4x32xf32>
    %cst_44 = arith.constant 0.000000e+00 : f32
    %235 = vector.broadcast %cst_44 : f32 to vector<4x32xf32>
    %236 = vector.extract_strided_slice %5 {offsets = [28, 128], sizes = [4, 128], strides = [1, 1]} : vector<32x256xf32> to vector<4x128xf32>
    %cst_45 = arith.constant dense<0.000000e+00> : vector<4x128xf32>
    %237 = tpu.matmul %234, %7, %cst_45 {dimension_numbers = #tpu.dot_dimension_numbers<[1], [0], [0], [1], [0, 0, 1, 1], [], []>} : vector<4x32xf32>, vector<32x128xf32>, vector<4x128xf32> -> vector<4x128xf32>
    %238 = arith.addf %236, %237 : vector<4x128xf32>
    %239 = vector.extract_strided_slice %238 {offsets = [0, 0], sizes = [4, 32], strides = [1, 1]} : vector<4x128xf32> to vector<4x32xf32>
    %240 = arith.negf %239 : vector<4x32xf32>
    %241 = math.exp %240 : vector<4x32xf32>
    %cst_46 = arith.constant 1.000000e+00 : f32
    %242 = vector.broadcast %cst_46 : f32 to vector<4x32xf32>
    %243 = arith.addf %242, %241 : vector<4x32xf32>
    %244 = arith.divf %242, %243 : vector<4x32xf32>
    %245 = vector.extract_strided_slice %238 {offsets = [0, 32], sizes = [4, 32], strides = [1, 1]} : vector<4x128xf32> to vector<4x32xf32>
    %246 = arith.negf %245 : vector<4x32xf32>
    %247 = math.exp %246 : vector<4x32xf32>
    %cst_47 = arith.constant 1.000000e+00 : f32
    %248 = vector.broadcast %cst_47 : f32 to vector<4x32xf32>
    %249 = arith.addf %248, %247 : vector<4x32xf32>
    %250 = arith.divf %248, %249 : vector<4x32xf32>
    %251 = vector.extract_strided_slice %238 {offsets = [0, 64], sizes = [4, 32], strides = [1, 1]} : vector<4x128xf32> to vector<4x32xf32>
    %252 = math.tanh %251 : vector<4x32xf32>
    %253 = vector.extract_strided_slice %238 {offsets = [0, 96], sizes = [4, 32], strides = [1, 1]} : vector<4x128xf32> to vector<4x32xf32>
    %254 = arith.negf %253 : vector<4x32xf32>
    %255 = math.exp %254 : vector<4x32xf32>
    %cst_48 = arith.constant 1.000000e+00 : f32
    %256 = vector.broadcast %cst_48 : f32 to vector<4x32xf32>
    %257 = arith.addf %256, %255 : vector<4x32xf32>
    %258 = arith.divf %256, %257 : vector<4x32xf32>
    %259 = arith.mulf %250, %235 : vector<4x32xf32>
    %260 = arith.mulf %244, %252 : vector<4x32xf32>
    %261 = arith.addf %259, %260 : vector<4x32xf32>
    %262 = math.tanh %261 : vector<4x32xf32>
    %263 = arith.mulf %258, %262 : vector<4x32xf32>
    %264 = vector.extract_strided_slice %5 {offsets = [24, 128], sizes = [4, 128], strides = [1, 1]} : vector<32x256xf32> to vector<4x128xf32>
    %cst_49 = arith.constant dense<0.000000e+00> : vector<4x128xf32>
    %265 = tpu.matmul %263, %7, %cst_49 {dimension_numbers = #tpu.dot_dimension_numbers<[1], [0], [0], [1], [0, 0, 1, 1], [], []>} : vector<4x32xf32>, vector<32x128xf32>, vector<4x128xf32> -> vector<4x128xf32>
    %266 = arith.addf %264, %265 : vector<4x128xf32>
    %267 = vector.extract_strided_slice %266 {offsets = [0, 0], sizes = [4, 32], strides = [1, 1]} : vector<4x128xf32> to vector<4x32xf32>
    %268 = arith.negf %267 : vector<4x32xf32>
    %269 = math.exp %268 : vector<4x32xf32>
    %cst_50 = arith.constant 1.000000e+00 : f32
    %270 = vector.broadcast %cst_50 : f32 to vector<4x32xf32>
    %271 = arith.addf %270, %269 : vector<4x32xf32>
    %272 = arith.divf %270, %271 : vector<4x32xf32>
    %273 = vector.extract_strided_slice %266 {offsets = [0, 32], sizes = [4, 32], strides = [1, 1]} : vector<4x128xf32> to vector<4x32xf32>
    %274 = arith.negf %273 : vector<4x32xf32>
    %275 = math.exp %274 : vector<4x32xf32>
    %cst_51 = arith.constant 1.000000e+00 : f32
    %276 = vector.broadcast %cst_51 : f32 to vector<4x32xf32>
    %277 = arith.addf %276, %275 : vector<4x32xf32>
    %278 = arith.divf %276, %277 : vector<4x32xf32>
    %279 = vector.extract_strided_slice %266 {offsets = [0, 64], sizes = [4, 32], strides = [1, 1]} : vector<4x128xf32> to vector<4x32xf32>
    %280 = math.tanh %279 : vector<4x32xf32>
    %281 = vector.extract_strided_slice %266 {offsets = [0, 96], sizes = [4, 32], strides = [1, 1]} : vector<4x128xf32> to vector<4x32xf32>
    %282 = arith.negf %281 : vector<4x32xf32>
    %283 = math.exp %282 : vector<4x32xf32>
    %cst_52 = arith.constant 1.000000e+00 : f32
    %284 = vector.broadcast %cst_52 : f32 to vector<4x32xf32>
    %285 = arith.addf %284, %283 : vector<4x32xf32>
    %286 = arith.divf %284, %285 : vector<4x32xf32>
    %287 = arith.mulf %278, %261 : vector<4x32xf32>
    %288 = arith.mulf %272, %280 : vector<4x32xf32>
    %289 = arith.addf %287, %288 : vector<4x32xf32>
    %290 = math.tanh %289 : vector<4x32xf32>
    %291 = arith.mulf %286, %290 : vector<4x32xf32>
    %292 = vector.extract_strided_slice %5 {offsets = [20, 128], sizes = [4, 128], strides = [1, 1]} : vector<32x256xf32> to vector<4x128xf32>
    %cst_53 = arith.constant dense<0.000000e+00> : vector<4x128xf32>
    %293 = tpu.matmul %291, %7, %cst_53 {dimension_numbers = #tpu.dot_dimension_numbers<[1], [0], [0], [1], [0, 0, 1, 1], [], []>} : vector<4x32xf32>, vector<32x128xf32>, vector<4x128xf32> -> vector<4x128xf32>
    %294 = arith.addf %292, %293 : vector<4x128xf32>
    %295 = vector.extract_strided_slice %294 {offsets = [0, 0], sizes = [4, 32], strides = [1, 1]} : vector<4x128xf32> to vector<4x32xf32>
    %296 = arith.negf %295 : vector<4x32xf32>
    %297 = math.exp %296 : vector<4x32xf32>
    %cst_54 = arith.constant 1.000000e+00 : f32
    %298 = vector.broadcast %cst_54 : f32 to vector<4x32xf32>
    %299 = arith.addf %298, %297 : vector<4x32xf32>
    %300 = arith.divf %298, %299 : vector<4x32xf32>
    %301 = vector.extract_strided_slice %294 {offsets = [0, 32], sizes = [4, 32], strides = [1, 1]} : vector<4x128xf32> to vector<4x32xf32>
    %302 = arith.negf %301 : vector<4x32xf32>
    %303 = math.exp %302 : vector<4x32xf32>
    %cst_55 = arith.constant 1.000000e+00 : f32
    %304 = vector.broadcast %cst_55 : f32 to vector<4x32xf32>
    %305 = arith.addf %304, %303 : vector<4x32xf32>
    %306 = arith.divf %304, %305 : vector<4x32xf32>
    %307 = vector.extract_strided_slice %294 {offsets = [0, 64], sizes = [4, 32], strides = [1, 1]} : vector<4x128xf32> to vector<4x32xf32>
    %308 = math.tanh %307 : vector<4x32xf32>
    %309 = vector.extract_strided_slice %294 {offsets = [0, 96], sizes = [4, 32], strides = [1, 1]} : vector<4x128xf32> to vector<4x32xf32>
    %310 = arith.negf %309 : vector<4x32xf32>
    %311 = math.exp %310 : vector<4x32xf32>
    %cst_56 = arith.constant 1.000000e+00 : f32
    %312 = vector.broadcast %cst_56 : f32 to vector<4x32xf32>
    %313 = arith.addf %312, %311 : vector<4x32xf32>
    %314 = arith.divf %312, %313 : vector<4x32xf32>
    %315 = arith.mulf %306, %289 : vector<4x32xf32>
    %316 = arith.mulf %300, %308 : vector<4x32xf32>
    %317 = arith.addf %315, %316 : vector<4x32xf32>
    %318 = math.tanh %317 : vector<4x32xf32>
    %319 = arith.mulf %314, %318 : vector<4x32xf32>
    %320 = vector.extract_strided_slice %5 {offsets = [16, 128], sizes = [4, 128], strides = [1, 1]} : vector<32x256xf32> to vector<4x128xf32>
    %cst_57 = arith.constant dense<0.000000e+00> : vector<4x128xf32>
    %321 = tpu.matmul %319, %7, %cst_57 {dimension_numbers = #tpu.dot_dimension_numbers<[1], [0], [0], [1], [0, 0, 1, 1], [], []>} : vector<4x32xf32>, vector<32x128xf32>, vector<4x128xf32> -> vector<4x128xf32>
    %322 = arith.addf %320, %321 : vector<4x128xf32>
    %323 = vector.extract_strided_slice %322 {offsets = [0, 0], sizes = [4, 32], strides = [1, 1]} : vector<4x128xf32> to vector<4x32xf32>
    %324 = arith.negf %323 : vector<4x32xf32>
    %325 = math.exp %324 : vector<4x32xf32>
    %cst_58 = arith.constant 1.000000e+00 : f32
    %326 = vector.broadcast %cst_58 : f32 to vector<4x32xf32>
    %327 = arith.addf %326, %325 : vector<4x32xf32>
    %328 = arith.divf %326, %327 : vector<4x32xf32>
    %329 = vector.extract_strided_slice %322 {offsets = [0, 32], sizes = [4, 32], strides = [1, 1]} : vector<4x128xf32> to vector<4x32xf32>
    %330 = arith.negf %329 : vector<4x32xf32>
    %331 = math.exp %330 : vector<4x32xf32>
    %cst_59 = arith.constant 1.000000e+00 : f32
    %332 = vector.broadcast %cst_59 : f32 to vector<4x32xf32>
    %333 = arith.addf %332, %331 : vector<4x32xf32>
    %334 = arith.divf %332, %333 : vector<4x32xf32>
    %335 = vector.extract_strided_slice %322 {offsets = [0, 64], sizes = [4, 32], strides = [1, 1]} : vector<4x128xf32> to vector<4x32xf32>
    %336 = math.tanh %335 : vector<4x32xf32>
    %337 = vector.extract_strided_slice %322 {offsets = [0, 96], sizes = [4, 32], strides = [1, 1]} : vector<4x128xf32> to vector<4x32xf32>
    %338 = arith.negf %337 : vector<4x32xf32>
    %339 = math.exp %338 : vector<4x32xf32>
    %cst_60 = arith.constant 1.000000e+00 : f32
    %340 = vector.broadcast %cst_60 : f32 to vector<4x32xf32>
    %341 = arith.addf %340, %339 : vector<4x32xf32>
    %342 = arith.divf %340, %341 : vector<4x32xf32>
    %343 = arith.mulf %334, %317 : vector<4x32xf32>
    %344 = arith.mulf %328, %336 : vector<4x32xf32>
    %345 = arith.addf %343, %344 : vector<4x32xf32>
    %346 = math.tanh %345 : vector<4x32xf32>
    %347 = arith.mulf %342, %346 : vector<4x32xf32>
    %348 = vector.extract_strided_slice %5 {offsets = [12, 128], sizes = [4, 128], strides = [1, 1]} : vector<32x256xf32> to vector<4x128xf32>
    %cst_61 = arith.constant dense<0.000000e+00> : vector<4x128xf32>
    %349 = tpu.matmul %347, %7, %cst_61 {dimension_numbers = #tpu.dot_dimension_numbers<[1], [0], [0], [1], [0, 0, 1, 1], [], []>} : vector<4x32xf32>, vector<32x128xf32>, vector<4x128xf32> -> vector<4x128xf32>
    %350 = arith.addf %348, %349 : vector<4x128xf32>
    %351 = vector.extract_strided_slice %350 {offsets = [0, 0], sizes = [4, 32], strides = [1, 1]} : vector<4x128xf32> to vector<4x32xf32>
    %352 = arith.negf %351 : vector<4x32xf32>
    %353 = math.exp %352 : vector<4x32xf32>
    %cst_62 = arith.constant 1.000000e+00 : f32
    %354 = vector.broadcast %cst_62 : f32 to vector<4x32xf32>
    %355 = arith.addf %354, %353 : vector<4x32xf32>
    %356 = arith.divf %354, %355 : vector<4x32xf32>
    %357 = vector.extract_strided_slice %350 {offsets = [0, 32], sizes = [4, 32], strides = [1, 1]} : vector<4x128xf32> to vector<4x32xf32>
    %358 = arith.negf %357 : vector<4x32xf32>
    %359 = math.exp %358 : vector<4x32xf32>
    %cst_63 = arith.constant 1.000000e+00 : f32
    %360 = vector.broadcast %cst_63 : f32 to vector<4x32xf32>
    %361 = arith.addf %360, %359 : vector<4x32xf32>
    %362 = arith.divf %360, %361 : vector<4x32xf32>
    %363 = vector.extract_strided_slice %350 {offsets = [0, 64], sizes = [4, 32], strides = [1, 1]} : vector<4x128xf32> to vector<4x32xf32>
    %364 = math.tanh %363 : vector<4x32xf32>
    %365 = vector.extract_strided_slice %350 {offsets = [0, 96], sizes = [4, 32], strides = [1, 1]} : vector<4x128xf32> to vector<4x32xf32>
    %366 = arith.negf %365 : vector<4x32xf32>
    %367 = math.exp %366 : vector<4x32xf32>
    %cst_64 = arith.constant 1.000000e+00 : f32
    %368 = vector.broadcast %cst_64 : f32 to vector<4x32xf32>
    %369 = arith.addf %368, %367 : vector<4x32xf32>
    %370 = arith.divf %368, %369 : vector<4x32xf32>
    %371 = arith.mulf %362, %345 : vector<4x32xf32>
    %372 = arith.mulf %356, %364 : vector<4x32xf32>
    %373 = arith.addf %371, %372 : vector<4x32xf32>
    %374 = math.tanh %373 : vector<4x32xf32>
    %375 = arith.mulf %370, %374 : vector<4x32xf32>
    %376 = vector.extract_strided_slice %5 {offsets = [8, 128], sizes = [4, 128], strides = [1, 1]} : vector<32x256xf32> to vector<4x128xf32>
    %cst_65 = arith.constant dense<0.000000e+00> : vector<4x128xf32>
    %377 = tpu.matmul %375, %7, %cst_65 {dimension_numbers = #tpu.dot_dimension_numbers<[1], [0], [0], [1], [0, 0, 1, 1], [], []>} : vector<4x32xf32>, vector<32x128xf32>, vector<4x128xf32> -> vector<4x128xf32>
    %378 = arith.addf %376, %377 : vector<4x128xf32>
    %379 = vector.extract_strided_slice %378 {offsets = [0, 0], sizes = [4, 32], strides = [1, 1]} : vector<4x128xf32> to vector<4x32xf32>
    %380 = arith.negf %379 : vector<4x32xf32>
    %381 = math.exp %380 : vector<4x32xf32>
    %cst_66 = arith.constant 1.000000e+00 : f32
    %382 = vector.broadcast %cst_66 : f32 to vector<4x32xf32>
    %383 = arith.addf %382, %381 : vector<4x32xf32>
    %384 = arith.divf %382, %383 : vector<4x32xf32>
    %385 = vector.extract_strided_slice %378 {offsets = [0, 32], sizes = [4, 32], strides = [1, 1]} : vector<4x128xf32> to vector<4x32xf32>
    %386 = arith.negf %385 : vector<4x32xf32>
    %387 = math.exp %386 : vector<4x32xf32>
    %cst_67 = arith.constant 1.000000e+00 : f32
    %388 = vector.broadcast %cst_67 : f32 to vector<4x32xf32>
    %389 = arith.addf %388, %387 : vector<4x32xf32>
    %390 = arith.divf %388, %389 : vector<4x32xf32>
    %391 = vector.extract_strided_slice %378 {offsets = [0, 64], sizes = [4, 32], strides = [1, 1]} : vector<4x128xf32> to vector<4x32xf32>
    %392 = math.tanh %391 : vector<4x32xf32>
    %393 = vector.extract_strided_slice %378 {offsets = [0, 96], sizes = [4, 32], strides = [1, 1]} : vector<4x128xf32> to vector<4x32xf32>
    %394 = arith.negf %393 : vector<4x32xf32>
    %395 = math.exp %394 : vector<4x32xf32>
    %cst_68 = arith.constant 1.000000e+00 : f32
    %396 = vector.broadcast %cst_68 : f32 to vector<4x32xf32>
    %397 = arith.addf %396, %395 : vector<4x32xf32>
    %398 = arith.divf %396, %397 : vector<4x32xf32>
    %399 = arith.mulf %390, %373 : vector<4x32xf32>
    %400 = arith.mulf %384, %392 : vector<4x32xf32>
    %401 = arith.addf %399, %400 : vector<4x32xf32>
    %402 = math.tanh %401 : vector<4x32xf32>
    %403 = arith.mulf %398, %402 : vector<4x32xf32>
    %404 = vector.extract_strided_slice %5 {offsets = [4, 128], sizes = [4, 128], strides = [1, 1]} : vector<32x256xf32> to vector<4x128xf32>
    %cst_69 = arith.constant dense<0.000000e+00> : vector<4x128xf32>
    %405 = tpu.matmul %403, %7, %cst_69 {dimension_numbers = #tpu.dot_dimension_numbers<[1], [0], [0], [1], [0, 0, 1, 1], [], []>} : vector<4x32xf32>, vector<32x128xf32>, vector<4x128xf32> -> vector<4x128xf32>
    %406 = arith.addf %404, %405 : vector<4x128xf32>
    %407 = vector.extract_strided_slice %406 {offsets = [0, 0], sizes = [4, 32], strides = [1, 1]} : vector<4x128xf32> to vector<4x32xf32>
    %408 = arith.negf %407 : vector<4x32xf32>
    %409 = math.exp %408 : vector<4x32xf32>
    %cst_70 = arith.constant 1.000000e+00 : f32
    %410 = vector.broadcast %cst_70 : f32 to vector<4x32xf32>
    %411 = arith.addf %410, %409 : vector<4x32xf32>
    %412 = arith.divf %410, %411 : vector<4x32xf32>
    %413 = vector.extract_strided_slice %406 {offsets = [0, 32], sizes = [4, 32], strides = [1, 1]} : vector<4x128xf32> to vector<4x32xf32>
    %414 = arith.negf %413 : vector<4x32xf32>
    %415 = math.exp %414 : vector<4x32xf32>
    %cst_71 = arith.constant 1.000000e+00 : f32
    %416 = vector.broadcast %cst_71 : f32 to vector<4x32xf32>
    %417 = arith.addf %416, %415 : vector<4x32xf32>
    %418 = arith.divf %416, %417 : vector<4x32xf32>
    %419 = vector.extract_strided_slice %406 {offsets = [0, 64], sizes = [4, 32], strides = [1, 1]} : vector<4x128xf32> to vector<4x32xf32>
    %420 = math.tanh %419 : vector<4x32xf32>
    %421 = vector.extract_strided_slice %406 {offsets = [0, 96], sizes = [4, 32], strides = [1, 1]} : vector<4x128xf32> to vector<4x32xf32>
    %422 = arith.negf %421 : vector<4x32xf32>
    %423 = math.exp %422 : vector<4x32xf32>
    %cst_72 = arith.constant 1.000000e+00 : f32
    %424 = vector.broadcast %cst_72 : f32 to vector<4x32xf32>
    %425 = arith.addf %424, %423 : vector<4x32xf32>
    %426 = arith.divf %424, %425 : vector<4x32xf32>
    %427 = arith.mulf %418, %401 : vector<4x32xf32>
    %428 = arith.mulf %412, %420 : vector<4x32xf32>
    %429 = arith.addf %427, %428 : vector<4x32xf32>
    %430 = math.tanh %429 : vector<4x32xf32>
    %431 = arith.mulf %426, %430 : vector<4x32xf32>
    %432 = vector.extract_strided_slice %5 {offsets = [0, 128], sizes = [4, 128], strides = [1, 1]} : vector<32x256xf32> to vector<4x128xf32>
    %cst_73 = arith.constant dense<0.000000e+00> : vector<4x128xf32>
    %433 = tpu.matmul %431, %7, %cst_73 {dimension_numbers = #tpu.dot_dimension_numbers<[1], [0], [0], [1], [0, 0, 1, 1], [], []>} : vector<4x32xf32>, vector<32x128xf32>, vector<4x128xf32> -> vector<4x128xf32>
    %434 = arith.addf %432, %433 : vector<4x128xf32>
    %435 = vector.extract_strided_slice %434 {offsets = [0, 0], sizes = [4, 32], strides = [1, 1]} : vector<4x128xf32> to vector<4x32xf32>
    %436 = arith.negf %435 : vector<4x32xf32>
    %437 = math.exp %436 : vector<4x32xf32>
    %cst_74 = arith.constant 1.000000e+00 : f32
    %438 = vector.broadcast %cst_74 : f32 to vector<4x32xf32>
    %439 = arith.addf %438, %437 : vector<4x32xf32>
    %440 = arith.divf %438, %439 : vector<4x32xf32>
    %441 = vector.extract_strided_slice %434 {offsets = [0, 32], sizes = [4, 32], strides = [1, 1]} : vector<4x128xf32> to vector<4x32xf32>
    %442 = arith.negf %441 : vector<4x32xf32>
    %443 = math.exp %442 : vector<4x32xf32>
    %cst_75 = arith.constant 1.000000e+00 : f32
    %444 = vector.broadcast %cst_75 : f32 to vector<4x32xf32>
    %445 = arith.addf %444, %443 : vector<4x32xf32>
    %446 = arith.divf %444, %445 : vector<4x32xf32>
    %447 = vector.extract_strided_slice %434 {offsets = [0, 64], sizes = [4, 32], strides = [1, 1]} : vector<4x128xf32> to vector<4x32xf32>
    %448 = math.tanh %447 : vector<4x32xf32>
    %449 = vector.extract_strided_slice %434 {offsets = [0, 96], sizes = [4, 32], strides = [1, 1]} : vector<4x128xf32> to vector<4x32xf32>
    %450 = arith.negf %449 : vector<4x32xf32>
    %451 = math.exp %450 : vector<4x32xf32>
    %cst_76 = arith.constant 1.000000e+00 : f32
    %452 = vector.broadcast %cst_76 : f32 to vector<4x32xf32>
    %453 = arith.addf %452, %451 : vector<4x32xf32>
    %454 = arith.divf %452, %453 : vector<4x32xf32>
    %455 = arith.mulf %446, %429 : vector<4x32xf32>
    %456 = arith.mulf %440, %448 : vector<4x32xf32>
    %457 = arith.addf %455, %456 : vector<4x32xf32>
    %458 = math.tanh %457 : vector<4x32xf32>
    %459 = arith.mulf %454, %458 : vector<4x32xf32>
    %460 = tpu.concatenate %37, %65, %93, %121, %149, %177, %205, %233 in 0 : vector<4x32xf32>, vector<4x32xf32>, vector<4x32xf32>, vector<4x32xf32>, vector<4x32xf32>, vector<4x32xf32>, vector<4x32xf32>, vector<4x32xf32> -> vector<32x32xf32>
    %461 = tpu.concatenate %459, %431, %403, %375, %347, %319, %291, %263 in 0 : vector<4x32xf32>, vector<4x32xf32>, vector<4x32xf32>, vector<4x32xf32>, vector<4x32xf32>, vector<4x32xf32>, vector<4x32xf32>, vector<4x32xf32> -> vector<32x32xf32>
    %462 = tpu.concatenate %460, %461 in 1 : vector<32x32xf32>, vector<32x32xf32> -> vector<32x64xf32>
    %c0_77 = arith.constant 0 : index
    %c0_78 = arith.constant 0 : index
    %463 = vector.load %arg7[%c0_77, %c0_78] : memref<64x256xf32, #tpu.memory_space<vmem>>, vector<64x256xf32>
    %cst_79 = arith.constant dense<0.000000e+00> : vector<32x256xf32>
    %464 = tpu.matmul %462, %463, %cst_79 {dimension_numbers = #tpu.dot_dimension_numbers<[1], [0], [0], [1], [0, 0, 1, 1], [], []>} : vector<32x64xf32>, vector<64x256xf32>, vector<32x256xf32> -> vector<32x256xf32>
    %c0_80 = arith.constant 0 : index
    %c0_81 = arith.constant 0 : index
    %465 = vector.load %arg8[%c0_80, %c0_81] : memref<1x256xf32, #tpu.memory_space<vmem>>, vector<1x256xf32>
    %466 = vector.broadcast %465 : vector<1x256xf32> to vector<32x256xf32>
    %467 = arith.addf %464, %466 : vector<32x256xf32>
    %c0_82 = arith.constant 0 : index
    %c0_83 = arith.constant 0 : index
    %468 = vector.load %arg9[%c0_82, %c0_83] : memref<32x128xf32, #tpu.memory_space<vmem>>, vector<32x128xf32>
    %c0_84 = arith.constant 0 : index
    %c0_85 = arith.constant 0 : index
    %469 = vector.load %arg10[%c0_84, %c0_85] : memref<32x128xf32, #tpu.memory_space<vmem>>, vector<32x128xf32>
    %cst_86 = arith.constant 0.000000e+00 : f32
    %470 = vector.broadcast %cst_86 : f32 to vector<4x32xf32>
    %cst_87 = arith.constant 0.000000e+00 : f32
    %471 = vector.broadcast %cst_87 : f32 to vector<4x32xf32>
    %472 = vector.extract_strided_slice %467 {offsets = [0, 0], sizes = [4, 128], strides = [1, 1]} : vector<32x256xf32> to vector<4x128xf32>
    %cst_88 = arith.constant dense<0.000000e+00> : vector<4x128xf32>
    %473 = tpu.matmul %470, %468, %cst_88 {dimension_numbers = #tpu.dot_dimension_numbers<[1], [0], [0], [1], [0, 0, 1, 1], [], []>} : vector<4x32xf32>, vector<32x128xf32>, vector<4x128xf32> -> vector<4x128xf32>
    %474 = arith.addf %472, %473 : vector<4x128xf32>
    %475 = vector.extract_strided_slice %474 {offsets = [0, 0], sizes = [4, 32], strides = [1, 1]} : vector<4x128xf32> to vector<4x32xf32>
    %476 = arith.negf %475 : vector<4x32xf32>
    %477 = math.exp %476 : vector<4x32xf32>
    %cst_89 = arith.constant 1.000000e+00 : f32
    %478 = vector.broadcast %cst_89 : f32 to vector<4x32xf32>
    %479 = arith.addf %478, %477 : vector<4x32xf32>
    %480 = arith.divf %478, %479 : vector<4x32xf32>
    %481 = vector.extract_strided_slice %474 {offsets = [0, 32], sizes = [4, 32], strides = [1, 1]} : vector<4x128xf32> to vector<4x32xf32>
    %482 = arith.negf %481 : vector<4x32xf32>
    %483 = math.exp %482 : vector<4x32xf32>
    %cst_90 = arith.constant 1.000000e+00 : f32
    %484 = vector.broadcast %cst_90 : f32 to vector<4x32xf32>
    %485 = arith.addf %484, %483 : vector<4x32xf32>
    %486 = arith.divf %484, %485 : vector<4x32xf32>
    %487 = vector.extract_strided_slice %474 {offsets = [0, 64], sizes = [4, 32], strides = [1, 1]} : vector<4x128xf32> to vector<4x32xf32>
    %488 = math.tanh %487 : vector<4x32xf32>
    %489 = vector.extract_strided_slice %474 {offsets = [0, 96], sizes = [4, 32], strides = [1, 1]} : vector<4x128xf32> to vector<4x32xf32>
    %490 = arith.negf %489 : vector<4x32xf32>
    %491 = math.exp %490 : vector<4x32xf32>
    %cst_91 = arith.constant 1.000000e+00 : f32
    %492 = vector.broadcast %cst_91 : f32 to vector<4x32xf32>
    %493 = arith.addf %492, %491 : vector<4x32xf32>
    %494 = arith.divf %492, %493 : vector<4x32xf32>
    %495 = arith.mulf %486, %471 : vector<4x32xf32>
    %496 = arith.mulf %480, %488 : vector<4x32xf32>
    %497 = arith.addf %495, %496 : vector<4x32xf32>
    %498 = math.tanh %497 : vector<4x32xf32>
    %499 = arith.mulf %494, %498 : vector<4x32xf32>
    %500 = vector.extract_strided_slice %467 {offsets = [4, 0], sizes = [4, 128], strides = [1, 1]} : vector<32x256xf32> to vector<4x128xf32>
    %cst_92 = arith.constant dense<0.000000e+00> : vector<4x128xf32>
    %501 = tpu.matmul %499, %468, %cst_92 {dimension_numbers = #tpu.dot_dimension_numbers<[1], [0], [0], [1], [0, 0, 1, 1], [], []>} : vector<4x32xf32>, vector<32x128xf32>, vector<4x128xf32> -> vector<4x128xf32>
    %502 = arith.addf %500, %501 : vector<4x128xf32>
    %503 = vector.extract_strided_slice %502 {offsets = [0, 0], sizes = [4, 32], strides = [1, 1]} : vector<4x128xf32> to vector<4x32xf32>
    %504 = arith.negf %503 : vector<4x32xf32>
    %505 = math.exp %504 : vector<4x32xf32>
    %cst_93 = arith.constant 1.000000e+00 : f32
    %506 = vector.broadcast %cst_93 : f32 to vector<4x32xf32>
    %507 = arith.addf %506, %505 : vector<4x32xf32>
    %508 = arith.divf %506, %507 : vector<4x32xf32>
    %509 = vector.extract_strided_slice %502 {offsets = [0, 32], sizes = [4, 32], strides = [1, 1]} : vector<4x128xf32> to vector<4x32xf32>
    %510 = arith.negf %509 : vector<4x32xf32>
    %511 = math.exp %510 : vector<4x32xf32>
    %cst_94 = arith.constant 1.000000e+00 : f32
    %512 = vector.broadcast %cst_94 : f32 to vector<4x32xf32>
    %513 = arith.addf %512, %511 : vector<4x32xf32>
    %514 = arith.divf %512, %513 : vector<4x32xf32>
    %515 = vector.extract_strided_slice %502 {offsets = [0, 64], sizes = [4, 32], strides = [1, 1]} : vector<4x128xf32> to vector<4x32xf32>
    %516 = math.tanh %515 : vector<4x32xf32>
    %517 = vector.extract_strided_slice %502 {offsets = [0, 96], sizes = [4, 32], strides = [1, 1]} : vector<4x128xf32> to vector<4x32xf32>
    %518 = arith.negf %517 : vector<4x32xf32>
    %519 = math.exp %518 : vector<4x32xf32>
    %cst_95 = arith.constant 1.000000e+00 : f32
    %520 = vector.broadcast %cst_95 : f32 to vector<4x32xf32>
    %521 = arith.addf %520, %519 : vector<4x32xf32>
    %522 = arith.divf %520, %521 : vector<4x32xf32>
    %523 = arith.mulf %514, %497 : vector<4x32xf32>
    %524 = arith.mulf %508, %516 : vector<4x32xf32>
    %525 = arith.addf %523, %524 : vector<4x32xf32>
    %526 = math.tanh %525 : vector<4x32xf32>
    %527 = arith.mulf %522, %526 : vector<4x32xf32>
    %528 = vector.extract_strided_slice %467 {offsets = [8, 0], sizes = [4, 128], strides = [1, 1]} : vector<32x256xf32> to vector<4x128xf32>
    %cst_96 = arith.constant dense<0.000000e+00> : vector<4x128xf32>
    %529 = tpu.matmul %527, %468, %cst_96 {dimension_numbers = #tpu.dot_dimension_numbers<[1], [0], [0], [1], [0, 0, 1, 1], [], []>} : vector<4x32xf32>, vector<32x128xf32>, vector<4x128xf32> -> vector<4x128xf32>
    %530 = arith.addf %528, %529 : vector<4x128xf32>
    %531 = vector.extract_strided_slice %530 {offsets = [0, 0], sizes = [4, 32], strides = [1, 1]} : vector<4x128xf32> to vector<4x32xf32>
    %532 = arith.negf %531 : vector<4x32xf32>
    %533 = math.exp %532 : vector<4x32xf32>
    %cst_97 = arith.constant 1.000000e+00 : f32
    %534 = vector.broadcast %cst_97 : f32 to vector<4x32xf32>
    %535 = arith.addf %534, %533 : vector<4x32xf32>
    %536 = arith.divf %534, %535 : vector<4x32xf32>
    %537 = vector.extract_strided_slice %530 {offsets = [0, 32], sizes = [4, 32], strides = [1, 1]} : vector<4x128xf32> to vector<4x32xf32>
    %538 = arith.negf %537 : vector<4x32xf32>
    %539 = math.exp %538 : vector<4x32xf32>
    %cst_98 = arith.constant 1.000000e+00 : f32
    %540 = vector.broadcast %cst_98 : f32 to vector<4x32xf32>
    %541 = arith.addf %540, %539 : vector<4x32xf32>
    %542 = arith.divf %540, %541 : vector<4x32xf32>
    %543 = vector.extract_strided_slice %530 {offsets = [0, 64], sizes = [4, 32], strides = [1, 1]} : vector<4x128xf32> to vector<4x32xf32>
    %544 = math.tanh %543 : vector<4x32xf32>
    %545 = vector.extract_strided_slice %530 {offsets = [0, 96], sizes = [4, 32], strides = [1, 1]} : vector<4x128xf32> to vector<4x32xf32>
    %546 = arith.negf %545 : vector<4x32xf32>
    %547 = math.exp %546 : vector<4x32xf32>
    %cst_99 = arith.constant 1.000000e+00 : f32
    %548 = vector.broadcast %cst_99 : f32 to vector<4x32xf32>
    %549 = arith.addf %548, %547 : vector<4x32xf32>
    %550 = arith.divf %548, %549 : vector<4x32xf32>
    %551 = arith.mulf %542, %525 : vector<4x32xf32>
    %552 = arith.mulf %536, %544 : vector<4x32xf32>
    %553 = arith.addf %551, %552 : vector<4x32xf32>
    %554 = math.tanh %553 : vector<4x32xf32>
    %555 = arith.mulf %550, %554 : vector<4x32xf32>
    %556 = vector.extract_strided_slice %467 {offsets = [12, 0], sizes = [4, 128], strides = [1, 1]} : vector<32x256xf32> to vector<4x128xf32>
    %cst_100 = arith.constant dense<0.000000e+00> : vector<4x128xf32>
    %557 = tpu.matmul %555, %468, %cst_100 {dimension_numbers = #tpu.dot_dimension_numbers<[1], [0], [0], [1], [0, 0, 1, 1], [], []>} : vector<4x32xf32>, vector<32x128xf32>, vector<4x128xf32> -> vector<4x128xf32>
    %558 = arith.addf %556, %557 : vector<4x128xf32>
    %559 = vector.extract_strided_slice %558 {offsets = [0, 0], sizes = [4, 32], strides = [1, 1]} : vector<4x128xf32> to vector<4x32xf32>
    %560 = arith.negf %559 : vector<4x32xf32>
    %561 = math.exp %560 : vector<4x32xf32>
    %cst_101 = arith.constant 1.000000e+00 : f32
    %562 = vector.broadcast %cst_101 : f32 to vector<4x32xf32>
    %563 = arith.addf %562, %561 : vector<4x32xf32>
    %564 = arith.divf %562, %563 : vector<4x32xf32>
    %565 = vector.extract_strided_slice %558 {offsets = [0, 32], sizes = [4, 32], strides = [1, 1]} : vector<4x128xf32> to vector<4x32xf32>
    %566 = arith.negf %565 : vector<4x32xf32>
    %567 = math.exp %566 : vector<4x32xf32>
    %cst_102 = arith.constant 1.000000e+00 : f32
    %568 = vector.broadcast %cst_102 : f32 to vector<4x32xf32>
    %569 = arith.addf %568, %567 : vector<4x32xf32>
    %570 = arith.divf %568, %569 : vector<4x32xf32>
    %571 = vector.extract_strided_slice %558 {offsets = [0, 64], sizes = [4, 32], strides = [1, 1]} : vector<4x128xf32> to vector<4x32xf32>
    %572 = math.tanh %571 : vector<4x32xf32>
    %573 = vector.extract_strided_slice %558 {offsets = [0, 96], sizes = [4, 32], strides = [1, 1]} : vector<4x128xf32> to vector<4x32xf32>
    %574 = arith.negf %573 : vector<4x32xf32>
    %575 = math.exp %574 : vector<4x32xf32>
    %cst_103 = arith.constant 1.000000e+00 : f32
    %576 = vector.broadcast %cst_103 : f32 to vector<4x32xf32>
    %577 = arith.addf %576, %575 : vector<4x32xf32>
    %578 = arith.divf %576, %577 : vector<4x32xf32>
    %579 = arith.mulf %570, %553 : vector<4x32xf32>
    %580 = arith.mulf %564, %572 : vector<4x32xf32>
    %581 = arith.addf %579, %580 : vector<4x32xf32>
    %582 = math.tanh %581 : vector<4x32xf32>
    %583 = arith.mulf %578, %582 : vector<4x32xf32>
    %584 = vector.extract_strided_slice %467 {offsets = [16, 0], sizes = [4, 128], strides = [1, 1]} : vector<32x256xf32> to vector<4x128xf32>
    %cst_104 = arith.constant dense<0.000000e+00> : vector<4x128xf32>
    %585 = tpu.matmul %583, %468, %cst_104 {dimension_numbers = #tpu.dot_dimension_numbers<[1], [0], [0], [1], [0, 0, 1, 1], [], []>} : vector<4x32xf32>, vector<32x128xf32>, vector<4x128xf32> -> vector<4x128xf32>
    %586 = arith.addf %584, %585 : vector<4x128xf32>
    %587 = vector.extract_strided_slice %586 {offsets = [0, 0], sizes = [4, 32], strides = [1, 1]} : vector<4x128xf32> to vector<4x32xf32>
    %588 = arith.negf %587 : vector<4x32xf32>
    %589 = math.exp %588 : vector<4x32xf32>
    %cst_105 = arith.constant 1.000000e+00 : f32
    %590 = vector.broadcast %cst_105 : f32 to vector<4x32xf32>
    %591 = arith.addf %590, %589 : vector<4x32xf32>
    %592 = arith.divf %590, %591 : vector<4x32xf32>
    %593 = vector.extract_strided_slice %586 {offsets = [0, 32], sizes = [4, 32], strides = [1, 1]} : vector<4x128xf32> to vector<4x32xf32>
    %594 = arith.negf %593 : vector<4x32xf32>
    %595 = math.exp %594 : vector<4x32xf32>
    %cst_106 = arith.constant 1.000000e+00 : f32
    %596 = vector.broadcast %cst_106 : f32 to vector<4x32xf32>
    %597 = arith.addf %596, %595 : vector<4x32xf32>
    %598 = arith.divf %596, %597 : vector<4x32xf32>
    %599 = vector.extract_strided_slice %586 {offsets = [0, 64], sizes = [4, 32], strides = [1, 1]} : vector<4x128xf32> to vector<4x32xf32>
    %600 = math.tanh %599 : vector<4x32xf32>
    %601 = vector.extract_strided_slice %586 {offsets = [0, 96], sizes = [4, 32], strides = [1, 1]} : vector<4x128xf32> to vector<4x32xf32>
    %602 = arith.negf %601 : vector<4x32xf32>
    %603 = math.exp %602 : vector<4x32xf32>
    %cst_107 = arith.constant 1.000000e+00 : f32
    %604 = vector.broadcast %cst_107 : f32 to vector<4x32xf32>
    %605 = arith.addf %604, %603 : vector<4x32xf32>
    %606 = arith.divf %604, %605 : vector<4x32xf32>
    %607 = arith.mulf %598, %581 : vector<4x32xf32>
    %608 = arith.mulf %592, %600 : vector<4x32xf32>
    %609 = arith.addf %607, %608 : vector<4x32xf32>
    %610 = math.tanh %609 : vector<4x32xf32>
    %611 = arith.mulf %606, %610 : vector<4x32xf32>
    %612 = vector.extract_strided_slice %467 {offsets = [20, 0], sizes = [4, 128], strides = [1, 1]} : vector<32x256xf32> to vector<4x128xf32>
    %cst_108 = arith.constant dense<0.000000e+00> : vector<4x128xf32>
    %613 = tpu.matmul %611, %468, %cst_108 {dimension_numbers = #tpu.dot_dimension_numbers<[1], [0], [0], [1], [0, 0, 1, 1], [], []>} : vector<4x32xf32>, vector<32x128xf32>, vector<4x128xf32> -> vector<4x128xf32>
    %614 = arith.addf %612, %613 : vector<4x128xf32>
    %615 = vector.extract_strided_slice %614 {offsets = [0, 0], sizes = [4, 32], strides = [1, 1]} : vector<4x128xf32> to vector<4x32xf32>
    %616 = arith.negf %615 : vector<4x32xf32>
    %617 = math.exp %616 : vector<4x32xf32>
    %cst_109 = arith.constant 1.000000e+00 : f32
    %618 = vector.broadcast %cst_109 : f32 to vector<4x32xf32>
    %619 = arith.addf %618, %617 : vector<4x32xf32>
    %620 = arith.divf %618, %619 : vector<4x32xf32>
    %621 = vector.extract_strided_slice %614 {offsets = [0, 32], sizes = [4, 32], strides = [1, 1]} : vector<4x128xf32> to vector<4x32xf32>
    %622 = arith.negf %621 : vector<4x32xf32>
    %623 = math.exp %622 : vector<4x32xf32>
    %cst_110 = arith.constant 1.000000e+00 : f32
    %624 = vector.broadcast %cst_110 : f32 to vector<4x32xf32>
    %625 = arith.addf %624, %623 : vector<4x32xf32>
    %626 = arith.divf %624, %625 : vector<4x32xf32>
    %627 = vector.extract_strided_slice %614 {offsets = [0, 64], sizes = [4, 32], strides = [1, 1]} : vector<4x128xf32> to vector<4x32xf32>
    %628 = math.tanh %627 : vector<4x32xf32>
    %629 = vector.extract_strided_slice %614 {offsets = [0, 96], sizes = [4, 32], strides = [1, 1]} : vector<4x128xf32> to vector<4x32xf32>
    %630 = arith.negf %629 : vector<4x32xf32>
    %631 = math.exp %630 : vector<4x32xf32>
    %cst_111 = arith.constant 1.000000e+00 : f32
    %632 = vector.broadcast %cst_111 : f32 to vector<4x32xf32>
    %633 = arith.addf %632, %631 : vector<4x32xf32>
    %634 = arith.divf %632, %633 : vector<4x32xf32>
    %635 = arith.mulf %626, %609 : vector<4x32xf32>
    %636 = arith.mulf %620, %628 : vector<4x32xf32>
    %637 = arith.addf %635, %636 : vector<4x32xf32>
    %638 = math.tanh %637 : vector<4x32xf32>
    %639 = arith.mulf %634, %638 : vector<4x32xf32>
    %640 = vector.extract_strided_slice %467 {offsets = [24, 0], sizes = [4, 128], strides = [1, 1]} : vector<32x256xf32> to vector<4x128xf32>
    %cst_112 = arith.constant dense<0.000000e+00> : vector<4x128xf32>
    %641 = tpu.matmul %639, %468, %cst_112 {dimension_numbers = #tpu.dot_dimension_numbers<[1], [0], [0], [1], [0, 0, 1, 1], [], []>} : vector<4x32xf32>, vector<32x128xf32>, vector<4x128xf32> -> vector<4x128xf32>
    %642 = arith.addf %640, %641 : vector<4x128xf32>
    %643 = vector.extract_strided_slice %642 {offsets = [0, 0], sizes = [4, 32], strides = [1, 1]} : vector<4x128xf32> to vector<4x32xf32>
    %644 = arith.negf %643 : vector<4x32xf32>
    %645 = math.exp %644 : vector<4x32xf32>
    %cst_113 = arith.constant 1.000000e+00 : f32
    %646 = vector.broadcast %cst_113 : f32 to vector<4x32xf32>
    %647 = arith.addf %646, %645 : vector<4x32xf32>
    %648 = arith.divf %646, %647 : vector<4x32xf32>
    %649 = vector.extract_strided_slice %642 {offsets = [0, 32], sizes = [4, 32], strides = [1, 1]} : vector<4x128xf32> to vector<4x32xf32>
    %650 = arith.negf %649 : vector<4x32xf32>
    %651 = math.exp %650 : vector<4x32xf32>
    %cst_114 = arith.constant 1.000000e+00 : f32
    %652 = vector.broadcast %cst_114 : f32 to vector<4x32xf32>
    %653 = arith.addf %652, %651 : vector<4x32xf32>
    %654 = arith.divf %652, %653 : vector<4x32xf32>
    %655 = vector.extract_strided_slice %642 {offsets = [0, 64], sizes = [4, 32], strides = [1, 1]} : vector<4x128xf32> to vector<4x32xf32>
    %656 = math.tanh %655 : vector<4x32xf32>
    %657 = vector.extract_strided_slice %642 {offsets = [0, 96], sizes = [4, 32], strides = [1, 1]} : vector<4x128xf32> to vector<4x32xf32>
    %658 = arith.negf %657 : vector<4x32xf32>
    %659 = math.exp %658 : vector<4x32xf32>
    %cst_115 = arith.constant 1.000000e+00 : f32
    %660 = vector.broadcast %cst_115 : f32 to vector<4x32xf32>
    %661 = arith.addf %660, %659 : vector<4x32xf32>
    %662 = arith.divf %660, %661 : vector<4x32xf32>
    %663 = arith.mulf %654, %637 : vector<4x32xf32>
    %664 = arith.mulf %648, %656 : vector<4x32xf32>
    %665 = arith.addf %663, %664 : vector<4x32xf32>
    %666 = math.tanh %665 : vector<4x32xf32>
    %667 = arith.mulf %662, %666 : vector<4x32xf32>
    %668 = vector.extract_strided_slice %467 {offsets = [28, 0], sizes = [4, 128], strides = [1, 1]} : vector<32x256xf32> to vector<4x128xf32>
    %cst_116 = arith.constant dense<0.000000e+00> : vector<4x128xf32>
    %669 = tpu.matmul %667, %468, %cst_116 {dimension_numbers = #tpu.dot_dimension_numbers<[1], [0], [0], [1], [0, 0, 1, 1], [], []>} : vector<4x32xf32>, vector<32x128xf32>, vector<4x128xf32> -> vector<4x128xf32>
    %670 = arith.addf %668, %669 : vector<4x128xf32>
    %671 = vector.extract_strided_slice %670 {offsets = [0, 0], sizes = [4, 32], strides = [1, 1]} : vector<4x128xf32> to vector<4x32xf32>
    %672 = arith.negf %671 : vector<4x32xf32>
    %673 = math.exp %672 : vector<4x32xf32>
    %cst_117 = arith.constant 1.000000e+00 : f32
    %674 = vector.broadcast %cst_117 : f32 to vector<4x32xf32>
    %675 = arith.addf %674, %673 : vector<4x32xf32>
    %676 = arith.divf %674, %675 : vector<4x32xf32>
    %677 = vector.extract_strided_slice %670 {offsets = [0, 32], sizes = [4, 32], strides = [1, 1]} : vector<4x128xf32> to vector<4x32xf32>
    %678 = arith.negf %677 : vector<4x32xf32>
    %679 = math.exp %678 : vector<4x32xf32>
    %cst_118 = arith.constant 1.000000e+00 : f32
    %680 = vector.broadcast %cst_118 : f32 to vector<4x32xf32>
    %681 = arith.addf %680, %679 : vector<4x32xf32>
    %682 = arith.divf %680, %681 : vector<4x32xf32>
    %683 = vector.extract_strided_slice %670 {offsets = [0, 64], sizes = [4, 32], strides = [1, 1]} : vector<4x128xf32> to vector<4x32xf32>
    %684 = math.tanh %683 : vector<4x32xf32>
    %685 = vector.extract_strided_slice %670 {offsets = [0, 96], sizes = [4, 32], strides = [1, 1]} : vector<4x128xf32> to vector<4x32xf32>
    %686 = arith.negf %685 : vector<4x32xf32>
    %687 = math.exp %686 : vector<4x32xf32>
    %cst_119 = arith.constant 1.000000e+00 : f32
    %688 = vector.broadcast %cst_119 : f32 to vector<4x32xf32>
    %689 = arith.addf %688, %687 : vector<4x32xf32>
    %690 = arith.divf %688, %689 : vector<4x32xf32>
    %691 = arith.mulf %682, %665 : vector<4x32xf32>
    %692 = arith.mulf %676, %684 : vector<4x32xf32>
    %693 = arith.addf %691, %692 : vector<4x32xf32>
    %694 = math.tanh %693 : vector<4x32xf32>
    %695 = arith.mulf %690, %694 : vector<4x32xf32>
    %cst_120 = arith.constant 0.000000e+00 : f32
    %696 = vector.broadcast %cst_120 : f32 to vector<4x32xf32>
    %cst_121 = arith.constant 0.000000e+00 : f32
    %697 = vector.broadcast %cst_121 : f32 to vector<4x32xf32>
    %698 = vector.extract_strided_slice %467 {offsets = [28, 128], sizes = [4, 128], strides = [1, 1]} : vector<32x256xf32> to vector<4x128xf32>
    %cst_122 = arith.constant dense<0.000000e+00> : vector<4x128xf32>
    %699 = tpu.matmul %696, %469, %cst_122 {dimension_numbers = #tpu.dot_dimension_numbers<[1], [0], [0], [1], [0, 0, 1, 1], [], []>} : vector<4x32xf32>, vector<32x128xf32>, vector<4x128xf32> -> vector<4x128xf32>
    %700 = arith.addf %698, %699 : vector<4x128xf32>
    %701 = vector.extract_strided_slice %700 {offsets = [0, 0], sizes = [4, 32], strides = [1, 1]} : vector<4x128xf32> to vector<4x32xf32>
    %702 = arith.negf %701 : vector<4x32xf32>
    %703 = math.exp %702 : vector<4x32xf32>
    %cst_123 = arith.constant 1.000000e+00 : f32
    %704 = vector.broadcast %cst_123 : f32 to vector<4x32xf32>
    %705 = arith.addf %704, %703 : vector<4x32xf32>
    %706 = arith.divf %704, %705 : vector<4x32xf32>
    %707 = vector.extract_strided_slice %700 {offsets = [0, 32], sizes = [4, 32], strides = [1, 1]} : vector<4x128xf32> to vector<4x32xf32>
    %708 = arith.negf %707 : vector<4x32xf32>
    %709 = math.exp %708 : vector<4x32xf32>
    %cst_124 = arith.constant 1.000000e+00 : f32
    %710 = vector.broadcast %cst_124 : f32 to vector<4x32xf32>
    %711 = arith.addf %710, %709 : vector<4x32xf32>
    %712 = arith.divf %710, %711 : vector<4x32xf32>
    %713 = vector.extract_strided_slice %700 {offsets = [0, 64], sizes = [4, 32], strides = [1, 1]} : vector<4x128xf32> to vector<4x32xf32>
    %714 = math.tanh %713 : vector<4x32xf32>
    %715 = vector.extract_strided_slice %700 {offsets = [0, 96], sizes = [4, 32], strides = [1, 1]} : vector<4x128xf32> to vector<4x32xf32>
    %716 = arith.negf %715 : vector<4x32xf32>
    %717 = math.exp %716 : vector<4x32xf32>
    %cst_125 = arith.constant 1.000000e+00 : f32
    %718 = vector.broadcast %cst_125 : f32 to vector<4x32xf32>
    %719 = arith.addf %718, %717 : vector<4x32xf32>
    %720 = arith.divf %718, %719 : vector<4x32xf32>
    %721 = arith.mulf %712, %697 : vector<4x32xf32>
    %722 = arith.mulf %706, %714 : vector<4x32xf32>
    %723 = arith.addf %721, %722 : vector<4x32xf32>
    %724 = math.tanh %723 : vector<4x32xf32>
    %725 = arith.mulf %720, %724 : vector<4x32xf32>
    %726 = vector.extract_strided_slice %467 {offsets = [24, 128], sizes = [4, 128], strides = [1, 1]} : vector<32x256xf32> to vector<4x128xf32>
    %cst_126 = arith.constant dense<0.000000e+00> : vector<4x128xf32>
    %727 = tpu.matmul %725, %469, %cst_126 {dimension_numbers = #tpu.dot_dimension_numbers<[1], [0], [0], [1], [0, 0, 1, 1], [], []>} : vector<4x32xf32>, vector<32x128xf32>, vector<4x128xf32> -> vector<4x128xf32>
    %728 = arith.addf %726, %727 : vector<4x128xf32>
    %729 = vector.extract_strided_slice %728 {offsets = [0, 0], sizes = [4, 32], strides = [1, 1]} : vector<4x128xf32> to vector<4x32xf32>
    %730 = arith.negf %729 : vector<4x32xf32>
    %731 = math.exp %730 : vector<4x32xf32>
    %cst_127 = arith.constant 1.000000e+00 : f32
    %732 = vector.broadcast %cst_127 : f32 to vector<4x32xf32>
    %733 = arith.addf %732, %731 : vector<4x32xf32>
    %734 = arith.divf %732, %733 : vector<4x32xf32>
    %735 = vector.extract_strided_slice %728 {offsets = [0, 32], sizes = [4, 32], strides = [1, 1]} : vector<4x128xf32> to vector<4x32xf32>
    %736 = arith.negf %735 : vector<4x32xf32>
    %737 = math.exp %736 : vector<4x32xf32>
    %cst_128 = arith.constant 1.000000e+00 : f32
    %738 = vector.broadcast %cst_128 : f32 to vector<4x32xf32>
    %739 = arith.addf %738, %737 : vector<4x32xf32>
    %740 = arith.divf %738, %739 : vector<4x32xf32>
    %741 = vector.extract_strided_slice %728 {offsets = [0, 64], sizes = [4, 32], strides = [1, 1]} : vector<4x128xf32> to vector<4x32xf32>
    %742 = math.tanh %741 : vector<4x32xf32>
    %743 = vector.extract_strided_slice %728 {offsets = [0, 96], sizes = [4, 32], strides = [1, 1]} : vector<4x128xf32> to vector<4x32xf32>
    %744 = arith.negf %743 : vector<4x32xf32>
    %745 = math.exp %744 : vector<4x32xf32>
    %cst_129 = arith.constant 1.000000e+00 : f32
    %746 = vector.broadcast %cst_129 : f32 to vector<4x32xf32>
    %747 = arith.addf %746, %745 : vector<4x32xf32>
    %748 = arith.divf %746, %747 : vector<4x32xf32>
    %749 = arith.mulf %740, %723 : vector<4x32xf32>
    %750 = arith.mulf %734, %742 : vector<4x32xf32>
    %751 = arith.addf %749, %750 : vector<4x32xf32>
    %752 = math.tanh %751 : vector<4x32xf32>
    %753 = arith.mulf %748, %752 : vector<4x32xf32>
    %754 = vector.extract_strided_slice %467 {offsets = [20, 128], sizes = [4, 128], strides = [1, 1]} : vector<32x256xf32> to vector<4x128xf32>
    %cst_130 = arith.constant dense<0.000000e+00> : vector<4x128xf32>
    %755 = tpu.matmul %753, %469, %cst_130 {dimension_numbers = #tpu.dot_dimension_numbers<[1], [0], [0], [1], [0, 0, 1, 1], [], []>} : vector<4x32xf32>, vector<32x128xf32>, vector<4x128xf32> -> vector<4x128xf32>
    %756 = arith.addf %754, %755 : vector<4x128xf32>
    %757 = vector.extract_strided_slice %756 {offsets = [0, 0], sizes = [4, 32], strides = [1, 1]} : vector<4x128xf32> to vector<4x32xf32>
    %758 = arith.negf %757 : vector<4x32xf32>
    %759 = math.exp %758 : vector<4x32xf32>
    %cst_131 = arith.constant 1.000000e+00 : f32
    %760 = vector.broadcast %cst_131 : f32 to vector<4x32xf32>
    %761 = arith.addf %760, %759 : vector<4x32xf32>
    %762 = arith.divf %760, %761 : vector<4x32xf32>
    %763 = vector.extract_strided_slice %756 {offsets = [0, 32], sizes = [4, 32], strides = [1, 1]} : vector<4x128xf32> to vector<4x32xf32>
    %764 = arith.negf %763 : vector<4x32xf32>
    %765 = math.exp %764 : vector<4x32xf32>
    %cst_132 = arith.constant 1.000000e+00 : f32
    %766 = vector.broadcast %cst_132 : f32 to vector<4x32xf32>
    %767 = arith.addf %766, %765 : vector<4x32xf32>
    %768 = arith.divf %766, %767 : vector<4x32xf32>
    %769 = vector.extract_strided_slice %756 {offsets = [0, 64], sizes = [4, 32], strides = [1, 1]} : vector<4x128xf32> to vector<4x32xf32>
    %770 = math.tanh %769 : vector<4x32xf32>
    %771 = vector.extract_strided_slice %756 {offsets = [0, 96], sizes = [4, 32], strides = [1, 1]} : vector<4x128xf32> to vector<4x32xf32>
    %772 = arith.negf %771 : vector<4x32xf32>
    %773 = math.exp %772 : vector<4x32xf32>
    %cst_133 = arith.constant 1.000000e+00 : f32
    %774 = vector.broadcast %cst_133 : f32 to vector<4x32xf32>
    %775 = arith.addf %774, %773 : vector<4x32xf32>
    %776 = arith.divf %774, %775 : vector<4x32xf32>
    %777 = arith.mulf %768, %751 : vector<4x32xf32>
    %778 = arith.mulf %762, %770 : vector<4x32xf32>
    %779 = arith.addf %777, %778 : vector<4x32xf32>
    %780 = math.tanh %779 : vector<4x32xf32>
    %781 = arith.mulf %776, %780 : vector<4x32xf32>
    %782 = vector.extract_strided_slice %467 {offsets = [16, 128], sizes = [4, 128], strides = [1, 1]} : vector<32x256xf32> to vector<4x128xf32>
    %cst_134 = arith.constant dense<0.000000e+00> : vector<4x128xf32>
    %783 = tpu.matmul %781, %469, %cst_134 {dimension_numbers = #tpu.dot_dimension_numbers<[1], [0], [0], [1], [0, 0, 1, 1], [], []>} : vector<4x32xf32>, vector<32x128xf32>, vector<4x128xf32> -> vector<4x128xf32>
    %784 = arith.addf %782, %783 : vector<4x128xf32>
    %785 = vector.extract_strided_slice %784 {offsets = [0, 0], sizes = [4, 32], strides = [1, 1]} : vector<4x128xf32> to vector<4x32xf32>
    %786 = arith.negf %785 : vector<4x32xf32>
    %787 = math.exp %786 : vector<4x32xf32>
    %cst_135 = arith.constant 1.000000e+00 : f32
    %788 = vector.broadcast %cst_135 : f32 to vector<4x32xf32>
    %789 = arith.addf %788, %787 : vector<4x32xf32>
    %790 = arith.divf %788, %789 : vector<4x32xf32>
    %791 = vector.extract_strided_slice %784 {offsets = [0, 32], sizes = [4, 32], strides = [1, 1]} : vector<4x128xf32> to vector<4x32xf32>
    %792 = arith.negf %791 : vector<4x32xf32>
    %793 = math.exp %792 : vector<4x32xf32>
    %cst_136 = arith.constant 1.000000e+00 : f32
    %794 = vector.broadcast %cst_136 : f32 to vector<4x32xf32>
    %795 = arith.addf %794, %793 : vector<4x32xf32>
    %796 = arith.divf %794, %795 : vector<4x32xf32>
    %797 = vector.extract_strided_slice %784 {offsets = [0, 64], sizes = [4, 32], strides = [1, 1]} : vector<4x128xf32> to vector<4x32xf32>
    %798 = math.tanh %797 : vector<4x32xf32>
    %799 = vector.extract_strided_slice %784 {offsets = [0, 96], sizes = [4, 32], strides = [1, 1]} : vector<4x128xf32> to vector<4x32xf32>
    %800 = arith.negf %799 : vector<4x32xf32>
    %801 = math.exp %800 : vector<4x32xf32>
    %cst_137 = arith.constant 1.000000e+00 : f32
    %802 = vector.broadcast %cst_137 : f32 to vector<4x32xf32>
    %803 = arith.addf %802, %801 : vector<4x32xf32>
    %804 = arith.divf %802, %803 : vector<4x32xf32>
    %805 = arith.mulf %796, %779 : vector<4x32xf32>
    %806 = arith.mulf %790, %798 : vector<4x32xf32>
    %807 = arith.addf %805, %806 : vector<4x32xf32>
    %808 = math.tanh %807 : vector<4x32xf32>
    %809 = arith.mulf %804, %808 : vector<4x32xf32>
    %810 = vector.extract_strided_slice %467 {offsets = [12, 128], sizes = [4, 128], strides = [1, 1]} : vector<32x256xf32> to vector<4x128xf32>
    %cst_138 = arith.constant dense<0.000000e+00> : vector<4x128xf32>
    %811 = tpu.matmul %809, %469, %cst_138 {dimension_numbers = #tpu.dot_dimension_numbers<[1], [0], [0], [1], [0, 0, 1, 1], [], []>} : vector<4x32xf32>, vector<32x128xf32>, vector<4x128xf32> -> vector<4x128xf32>
    %812 = arith.addf %810, %811 : vector<4x128xf32>
    %813 = vector.extract_strided_slice %812 {offsets = [0, 0], sizes = [4, 32], strides = [1, 1]} : vector<4x128xf32> to vector<4x32xf32>
    %814 = arith.negf %813 : vector<4x32xf32>
    %815 = math.exp %814 : vector<4x32xf32>
    %cst_139 = arith.constant 1.000000e+00 : f32
    %816 = vector.broadcast %cst_139 : f32 to vector<4x32xf32>
    %817 = arith.addf %816, %815 : vector<4x32xf32>
    %818 = arith.divf %816, %817 : vector<4x32xf32>
    %819 = vector.extract_strided_slice %812 {offsets = [0, 32], sizes = [4, 32], strides = [1, 1]} : vector<4x128xf32> to vector<4x32xf32>
    %820 = arith.negf %819 : vector<4x32xf32>
    %821 = math.exp %820 : vector<4x32xf32>
    %cst_140 = arith.constant 1.000000e+00 : f32
    %822 = vector.broadcast %cst_140 : f32 to vector<4x32xf32>
    %823 = arith.addf %822, %821 : vector<4x32xf32>
    %824 = arith.divf %822, %823 : vector<4x32xf32>
    %825 = vector.extract_strided_slice %812 {offsets = [0, 64], sizes = [4, 32], strides = [1, 1]} : vector<4x128xf32> to vector<4x32xf32>
    %826 = math.tanh %825 : vector<4x32xf32>
    %827 = vector.extract_strided_slice %812 {offsets = [0, 96], sizes = [4, 32], strides = [1, 1]} : vector<4x128xf32> to vector<4x32xf32>
    %828 = arith.negf %827 : vector<4x32xf32>
    %829 = math.exp %828 : vector<4x32xf32>
    %cst_141 = arith.constant 1.000000e+00 : f32
    %830 = vector.broadcast %cst_141 : f32 to vector<4x32xf32>
    %831 = arith.addf %830, %829 : vector<4x32xf32>
    %832 = arith.divf %830, %831 : vector<4x32xf32>
    %833 = arith.mulf %824, %807 : vector<4x32xf32>
    %834 = arith.mulf %818, %826 : vector<4x32xf32>
    %835 = arith.addf %833, %834 : vector<4x32xf32>
    %836 = math.tanh %835 : vector<4x32xf32>
    %837 = arith.mulf %832, %836 : vector<4x32xf32>
    %838 = vector.extract_strided_slice %467 {offsets = [8, 128], sizes = [4, 128], strides = [1, 1]} : vector<32x256xf32> to vector<4x128xf32>
    %cst_142 = arith.constant dense<0.000000e+00> : vector<4x128xf32>
    %839 = tpu.matmul %837, %469, %cst_142 {dimension_numbers = #tpu.dot_dimension_numbers<[1], [0], [0], [1], [0, 0, 1, 1], [], []>} : vector<4x32xf32>, vector<32x128xf32>, vector<4x128xf32> -> vector<4x128xf32>
    %840 = arith.addf %838, %839 : vector<4x128xf32>
    %841 = vector.extract_strided_slice %840 {offsets = [0, 0], sizes = [4, 32], strides = [1, 1]} : vector<4x128xf32> to vector<4x32xf32>
    %842 = arith.negf %841 : vector<4x32xf32>
    %843 = math.exp %842 : vector<4x32xf32>
    %cst_143 = arith.constant 1.000000e+00 : f32
    %844 = vector.broadcast %cst_143 : f32 to vector<4x32xf32>
    %845 = arith.addf %844, %843 : vector<4x32xf32>
    %846 = arith.divf %844, %845 : vector<4x32xf32>
    %847 = vector.extract_strided_slice %840 {offsets = [0, 32], sizes = [4, 32], strides = [1, 1]} : vector<4x128xf32> to vector<4x32xf32>
    %848 = arith.negf %847 : vector<4x32xf32>
    %849 = math.exp %848 : vector<4x32xf32>
    %cst_144 = arith.constant 1.000000e+00 : f32
    %850 = vector.broadcast %cst_144 : f32 to vector<4x32xf32>
    %851 = arith.addf %850, %849 : vector<4x32xf32>
    %852 = arith.divf %850, %851 : vector<4x32xf32>
    %853 = vector.extract_strided_slice %840 {offsets = [0, 64], sizes = [4, 32], strides = [1, 1]} : vector<4x128xf32> to vector<4x32xf32>
    %854 = math.tanh %853 : vector<4x32xf32>
    %855 = vector.extract_strided_slice %840 {offsets = [0, 96], sizes = [4, 32], strides = [1, 1]} : vector<4x128xf32> to vector<4x32xf32>
    %856 = arith.negf %855 : vector<4x32xf32>
    %857 = math.exp %856 : vector<4x32xf32>
    %cst_145 = arith.constant 1.000000e+00 : f32
    %858 = vector.broadcast %cst_145 : f32 to vector<4x32xf32>
    %859 = arith.addf %858, %857 : vector<4x32xf32>
    %860 = arith.divf %858, %859 : vector<4x32xf32>
    %861 = arith.mulf %852, %835 : vector<4x32xf32>
    %862 = arith.mulf %846, %854 : vector<4x32xf32>
    %863 = arith.addf %861, %862 : vector<4x32xf32>
    %864 = math.tanh %863 : vector<4x32xf32>
    %865 = arith.mulf %860, %864 : vector<4x32xf32>
    %866 = vector.extract_strided_slice %467 {offsets = [4, 128], sizes = [4, 128], strides = [1, 1]} : vector<32x256xf32> to vector<4x128xf32>
    %cst_146 = arith.constant dense<0.000000e+00> : vector<4x128xf32>
    %867 = tpu.matmul %865, %469, %cst_146 {dimension_numbers = #tpu.dot_dimension_numbers<[1], [0], [0], [1], [0, 0, 1, 1], [], []>} : vector<4x32xf32>, vector<32x128xf32>, vector<4x128xf32> -> vector<4x128xf32>
    %868 = arith.addf %866, %867 : vector<4x128xf32>
    %869 = vector.extract_strided_slice %868 {offsets = [0, 0], sizes = [4, 32], strides = [1, 1]} : vector<4x128xf32> to vector<4x32xf32>
    %870 = arith.negf %869 : vector<4x32xf32>
    %871 = math.exp %870 : vector<4x32xf32>
    %cst_147 = arith.constant 1.000000e+00 : f32
    %872 = vector.broadcast %cst_147 : f32 to vector<4x32xf32>
    %873 = arith.addf %872, %871 : vector<4x32xf32>
    %874 = arith.divf %872, %873 : vector<4x32xf32>
    %875 = vector.extract_strided_slice %868 {offsets = [0, 32], sizes = [4, 32], strides = [1, 1]} : vector<4x128xf32> to vector<4x32xf32>
    %876 = arith.negf %875 : vector<4x32xf32>
    %877 = math.exp %876 : vector<4x32xf32>
    %cst_148 = arith.constant 1.000000e+00 : f32
    %878 = vector.broadcast %cst_148 : f32 to vector<4x32xf32>
    %879 = arith.addf %878, %877 : vector<4x32xf32>
    %880 = arith.divf %878, %879 : vector<4x32xf32>
    %881 = vector.extract_strided_slice %868 {offsets = [0, 64], sizes = [4, 32], strides = [1, 1]} : vector<4x128xf32> to vector<4x32xf32>
    %882 = math.tanh %881 : vector<4x32xf32>
    %883 = vector.extract_strided_slice %868 {offsets = [0, 96], sizes = [4, 32], strides = [1, 1]} : vector<4x128xf32> to vector<4x32xf32>
    %884 = arith.negf %883 : vector<4x32xf32>
    %885 = math.exp %884 : vector<4x32xf32>
    %cst_149 = arith.constant 1.000000e+00 : f32
    %886 = vector.broadcast %cst_149 : f32 to vector<4x32xf32>
    %887 = arith.addf %886, %885 : vector<4x32xf32>
    %888 = arith.divf %886, %887 : vector<4x32xf32>
    %889 = arith.mulf %880, %863 : vector<4x32xf32>
    %890 = arith.mulf %874, %882 : vector<4x32xf32>
    %891 = arith.addf %889, %890 : vector<4x32xf32>
    %892 = math.tanh %891 : vector<4x32xf32>
    %893 = arith.mulf %888, %892 : vector<4x32xf32>
    %894 = vector.extract_strided_slice %467 {offsets = [0, 128], sizes = [4, 128], strides = [1, 1]} : vector<32x256xf32> to vector<4x128xf32>
    %cst_150 = arith.constant dense<0.000000e+00> : vector<4x128xf32>
    %895 = tpu.matmul %893, %469, %cst_150 {dimension_numbers = #tpu.dot_dimension_numbers<[1], [0], [0], [1], [0, 0, 1, 1], [], []>} : vector<4x32xf32>, vector<32x128xf32>, vector<4x128xf32> -> vector<4x128xf32>
    %896 = arith.addf %894, %895 : vector<4x128xf32>
    %897 = vector.extract_strided_slice %896 {offsets = [0, 0], sizes = [4, 32], strides = [1, 1]} : vector<4x128xf32> to vector<4x32xf32>
    %898 = arith.negf %897 : vector<4x32xf32>
    %899 = math.exp %898 : vector<4x32xf32>
    %cst_151 = arith.constant 1.000000e+00 : f32
    %900 = vector.broadcast %cst_151 : f32 to vector<4x32xf32>
    %901 = arith.addf %900, %899 : vector<4x32xf32>
    %902 = arith.divf %900, %901 : vector<4x32xf32>
    %903 = vector.extract_strided_slice %896 {offsets = [0, 32], sizes = [4, 32], strides = [1, 1]} : vector<4x128xf32> to vector<4x32xf32>
    %904 = arith.negf %903 : vector<4x32xf32>
    %905 = math.exp %904 : vector<4x32xf32>
    %cst_152 = arith.constant 1.000000e+00 : f32
    %906 = vector.broadcast %cst_152 : f32 to vector<4x32xf32>
    %907 = arith.addf %906, %905 : vector<4x32xf32>
    %908 = arith.divf %906, %907 : vector<4x32xf32>
    %909 = vector.extract_strided_slice %896 {offsets = [0, 64], sizes = [4, 32], strides = [1, 1]} : vector<4x128xf32> to vector<4x32xf32>
    %910 = math.tanh %909 : vector<4x32xf32>
    %911 = vector.extract_strided_slice %896 {offsets = [0, 96], sizes = [4, 32], strides = [1, 1]} : vector<4x128xf32> to vector<4x32xf32>
    %912 = arith.negf %911 : vector<4x32xf32>
    %913 = math.exp %912 : vector<4x32xf32>
    %cst_153 = arith.constant 1.000000e+00 : f32
    %914 = vector.broadcast %cst_153 : f32 to vector<4x32xf32>
    %915 = arith.addf %914, %913 : vector<4x32xf32>
    %916 = arith.divf %914, %915 : vector<4x32xf32>
    %917 = arith.mulf %908, %891 : vector<4x32xf32>
    %918 = arith.mulf %902, %910 : vector<4x32xf32>
    %919 = arith.addf %917, %918 : vector<4x32xf32>
    %920 = math.tanh %919 : vector<4x32xf32>
    %921 = arith.mulf %916, %920 : vector<4x32xf32>
    %922 = tpu.concatenate %499, %527, %555, %583, %611, %639, %667, %695 in 0 : vector<4x32xf32>, vector<4x32xf32>, vector<4x32xf32>, vector<4x32xf32>, vector<4x32xf32>, vector<4x32xf32>, vector<4x32xf32>, vector<4x32xf32> -> vector<32x32xf32>
    %923 = tpu.concatenate %921, %893, %865, %837, %809, %781, %753, %725 in 0 : vector<4x32xf32>, vector<4x32xf32>, vector<4x32xf32>, vector<4x32xf32>, vector<4x32xf32>, vector<4x32xf32>, vector<4x32xf32>, vector<4x32xf32> -> vector<32x32xf32>
    %924 = tpu.concatenate %922, %923 in 1 : vector<32x32xf32>, vector<32x32xf32> -> vector<32x64xf32>
    %c0_154 = arith.constant 0 : index
    %c0_155 = arith.constant 0 : index
    %925 = vector.load %arg1[%c0_154, %c0_155] : memref<32x32xf32, #tpu.memory_space<vmem>>, vector<32x32xf32>
    %cst_156 = arith.constant 0.000000e+00 : f32
    %926 = vector.broadcast %cst_156 : f32 to vector<32x64xf32>
    %c0_157 = arith.constant 0 : index
    %c0_158 = arith.constant 0 : index
    %c0_159 = arith.constant 0 : index
    %927 = vector.load %arg11[%c0_157, %c0_158, %c0_159] : memref<4x64x16xf32, #tpu.memory_space<vmem>>, vector<1x64x16xf32>
    %928 = vector.shape_cast %927 : vector<1x64x16xf32> to vector<64x16xf32>
    %cst_160 = arith.constant dense<0.000000e+00> : vector<32x16xf32>
    %929 = tpu.matmul %924, %928, %cst_160 {dimension_numbers = #tpu.dot_dimension_numbers<[1], [0], [0], [1], [0, 0, 1, 1], [], []>} : vector<32x64xf32>, vector<64x16xf32>, vector<32x16xf32> -> vector<32x16xf32>
    %c0_161 = arith.constant 0 : index
    %c0_162 = arith.constant 0 : index
    %c0_163 = arith.constant 0 : index
    %930 = vector.load %arg12[%c0_161, %c0_162, %c0_163] : memref<4x1x16xf32, #tpu.memory_space<vmem>>, vector<1x1x16xf32>
    %931 = vector.shape_cast %930 : vector<1x1x16xf32> to vector<1x16xf32>
    %932 = vector.broadcast %931 : vector<1x16xf32> to vector<32x16xf32>
    %933 = arith.addf %929, %932 : vector<32x16xf32>
    %c0_164 = arith.constant 0 : index
    %c0_165 = arith.constant 0 : index
    %c0_166 = arith.constant 0 : index
    %934 = vector.load %arg13[%c0_164, %c0_165, %c0_166] : memref<4x64x16xf32, #tpu.memory_space<vmem>>, vector<1x64x16xf32>
    %935 = vector.shape_cast %934 : vector<1x64x16xf32> to vector<64x16xf32>
    %cst_167 = arith.constant dense<0.000000e+00> : vector<32x16xf32>
    %936 = tpu.matmul %924, %935, %cst_167 {dimension_numbers = #tpu.dot_dimension_numbers<[1], [0], [0], [1], [0, 0, 1, 1], [], []>} : vector<32x64xf32>, vector<64x16xf32>, vector<32x16xf32> -> vector<32x16xf32>
    %c0_168 = arith.constant 0 : index
    %c0_169 = arith.constant 0 : index
    %c0_170 = arith.constant 0 : index
    %937 = vector.load %arg14[%c0_168, %c0_169, %c0_170] : memref<4x1x16xf32, #tpu.memory_space<vmem>>, vector<1x1x16xf32>
    %938 = vector.shape_cast %937 : vector<1x1x16xf32> to vector<1x16xf32>
    %939 = vector.broadcast %938 : vector<1x16xf32> to vector<32x16xf32>
    %940 = arith.addf %936, %939 : vector<32x16xf32>
    %c0_171 = arith.constant 0 : index
    %c0_172 = arith.constant 0 : index
    %c0_173 = arith.constant 0 : index
    %941 = vector.load %arg15[%c0_171, %c0_172, %c0_173] : memref<4x64x16xf32, #tpu.memory_space<vmem>>, vector<1x64x16xf32>
    %942 = vector.shape_cast %941 : vector<1x64x16xf32> to vector<64x16xf32>
    %cst_174 = arith.constant dense<0.000000e+00> : vector<32x16xf32>
    %943 = tpu.matmul %924, %942, %cst_174 {dimension_numbers = #tpu.dot_dimension_numbers<[1], [0], [0], [1], [0, 0, 1, 1], [], []>} : vector<32x64xf32>, vector<64x16xf32>, vector<32x16xf32> -> vector<32x16xf32>
    %c0_175 = arith.constant 0 : index
    %c0_176 = arith.constant 0 : index
    %c0_177 = arith.constant 0 : index
    %944 = vector.load %arg16[%c0_175, %c0_176, %c0_177] : memref<4x1x16xf32, #tpu.memory_space<vmem>>, vector<1x1x16xf32>
    %945 = vector.shape_cast %944 : vector<1x1x16xf32> to vector<1x16xf32>
    %946 = vector.broadcast %945 : vector<1x16xf32> to vector<32x16xf32>
    %947 = arith.addf %943, %946 : vector<32x16xf32>
    %cst_178 = arith.constant dense<0.000000e+00> : vector<32x32xf32>
    %948 = tpu.matmul %933, %940, %cst_178 {dimension_numbers = #tpu.dot_dimension_numbers<[1], [1], [0], [0], [0, 0, 1, 0], [], []>} : vector<32x16xf32>, vector<32x16xf32>, vector<32x32xf32> -> vector<32x32xf32>
    %cst_179 = arith.constant 2.500000e-01 : f32
    %949 = vector.broadcast %cst_179 : f32 to vector<32x32xf32>
    %950 = arith.mulf %948, %949 : vector<32x32xf32>
    %951 = arith.addf %950, %925 : vector<32x32xf32>
    %cst_180 = arith.constant dense<0xFF800000> : vector<32xf32>
    %952 = vector.multi_reduction <maximumf>, %951, %cst_180 [1] : vector<32x32xf32> to vector<32xf32>
    %cst_181 = arith.constant 0xFF800000 : f32
    %953 = vector.broadcast %cst_181 : f32 to vector<32xf32>
    %954 = arith.maximumf %953, %952 : vector<32xf32>
    %955 = vector.shape_cast %954 : vector<32xf32> to vector<32x1xf32>
    %956 = vector.broadcast %955 : vector<32x1xf32> to vector<32x32xf32>
    %957 = arith.subf %951, %956 : vector<32x32xf32>
    %958 = math.exp %957 : vector<32x32xf32>
    %cst_182 = arith.constant dense<0.000000e+00> : vector<32xf32>
    %959 = vector.multi_reduction <add>, %958, %cst_182 [1] : vector<32x32xf32> to vector<32xf32>
    %960 = vector.shape_cast %959 : vector<32xf32> to vector<32x1xf32>
    %961 = vector.broadcast %960 : vector<32x1xf32> to vector<32x32xf32>
    %962 = arith.divf %958, %961 : vector<32x32xf32>
    %cst_183 = arith.constant dense<0.000000e+00> : vector<32x16xf32>
    %963 = tpu.matmul %962, %947, %cst_183 {dimension_numbers = #tpu.dot_dimension_numbers<[1], [0], [0], [1], [0, 0, 1, 1], [], []>} : vector<32x32xf32>, vector<32x16xf32>, vector<32x16xf32> -> vector<32x16xf32>
    %c0_184 = arith.constant 0 : index
    %c0_185 = arith.constant 0 : index
    %c0_186 = arith.constant 0 : index
    %964 = vector.load %arg17[%c0_184, %c0_185, %c0_186] : memref<4x16x64xf32, #tpu.memory_space<vmem>>, vector<1x16x64xf32>
    %965 = vector.shape_cast %964 : vector<1x16x64xf32> to vector<16x64xf32>
    %cst_187 = arith.constant dense<0.000000e+00> : vector<32x64xf32>
    %966 = tpu.matmul %963, %965, %cst_187 {dimension_numbers = #tpu.dot_dimension_numbers<[1], [0], [0], [1], [0, 0, 1, 1], [], []>} : vector<32x16xf32>, vector<16x64xf32>, vector<32x64xf32> -> vector<32x64xf32>
    %967 = arith.addf %926, %966 : vector<32x64xf32>
    %c1 = arith.constant 1 : index
    %c0_188 = arith.constant 0 : index
    %c0_189 = arith.constant 0 : index
    %968 = vector.load %arg11[%c1, %c0_188, %c0_189] : memref<4x64x16xf32, #tpu.memory_space<vmem>>, vector<1x64x16xf32>
    %969 = vector.shape_cast %968 : vector<1x64x16xf32> to vector<64x16xf32>
    %cst_190 = arith.constant dense<0.000000e+00> : vector<32x16xf32>
    %970 = tpu.matmul %924, %969, %cst_190 {dimension_numbers = #tpu.dot_dimension_numbers<[1], [0], [0], [1], [0, 0, 1, 1], [], []>} : vector<32x64xf32>, vector<64x16xf32>, vector<32x16xf32> -> vector<32x16xf32>
    %c1_191 = arith.constant 1 : index
    %c0_192 = arith.constant 0 : index
    %c0_193 = arith.constant 0 : index
    %971 = vector.load %arg12[%c1_191, %c0_192, %c0_193] : memref<4x1x16xf32, #tpu.memory_space<vmem>>, vector<1x1x16xf32>
    %972 = vector.shape_cast %971 : vector<1x1x16xf32> to vector<1x16xf32>
    %973 = vector.broadcast %972 : vector<1x16xf32> to vector<32x16xf32>
    %974 = arith.addf %970, %973 : vector<32x16xf32>
    %c1_194 = arith.constant 1 : index
    %c0_195 = arith.constant 0 : index
    %c0_196 = arith.constant 0 : index
    %975 = vector.load %arg13[%c1_194, %c0_195, %c0_196] : memref<4x64x16xf32, #tpu.memory_space<vmem>>, vector<1x64x16xf32>
    %976 = vector.shape_cast %975 : vector<1x64x16xf32> to vector<64x16xf32>
    %cst_197 = arith.constant dense<0.000000e+00> : vector<32x16xf32>
    %977 = tpu.matmul %924, %976, %cst_197 {dimension_numbers = #tpu.dot_dimension_numbers<[1], [0], [0], [1], [0, 0, 1, 1], [], []>} : vector<32x64xf32>, vector<64x16xf32>, vector<32x16xf32> -> vector<32x16xf32>
    %c1_198 = arith.constant 1 : index
    %c0_199 = arith.constant 0 : index
    %c0_200 = arith.constant 0 : index
    %978 = vector.load %arg14[%c1_198, %c0_199, %c0_200] : memref<4x1x16xf32, #tpu.memory_space<vmem>>, vector<1x1x16xf32>
    %979 = vector.shape_cast %978 : vector<1x1x16xf32> to vector<1x16xf32>
    %980 = vector.broadcast %979 : vector<1x16xf32> to vector<32x16xf32>
    %981 = arith.addf %977, %980 : vector<32x16xf32>
    %c1_201 = arith.constant 1 : index
    %c0_202 = arith.constant 0 : index
    %c0_203 = arith.constant 0 : index
    %982 = vector.load %arg15[%c1_201, %c0_202, %c0_203] : memref<4x64x16xf32, #tpu.memory_space<vmem>>, vector<1x64x16xf32>
    %983 = vector.shape_cast %982 : vector<1x64x16xf32> to vector<64x16xf32>
    %cst_204 = arith.constant dense<0.000000e+00> : vector<32x16xf32>
    %984 = tpu.matmul %924, %983, %cst_204 {dimension_numbers = #tpu.dot_dimension_numbers<[1], [0], [0], [1], [0, 0, 1, 1], [], []>} : vector<32x64xf32>, vector<64x16xf32>, vector<32x16xf32> -> vector<32x16xf32>
    %c1_205 = arith.constant 1 : index
    %c0_206 = arith.constant 0 : index
    %c0_207 = arith.constant 0 : index
    %985 = vector.load %arg16[%c1_205, %c0_206, %c0_207] : memref<4x1x16xf32, #tpu.memory_space<vmem>>, vector<1x1x16xf32>
    %986 = vector.shape_cast %985 : vector<1x1x16xf32> to vector<1x16xf32>
    %987 = vector.broadcast %986 : vector<1x16xf32> to vector<32x16xf32>
    %988 = arith.addf %984, %987 : vector<32x16xf32>
    %cst_208 = arith.constant dense<0.000000e+00> : vector<32x32xf32>
    %989 = tpu.matmul %974, %981, %cst_208 {dimension_numbers = #tpu.dot_dimension_numbers<[1], [1], [0], [0], [0, 0, 1, 0], [], []>} : vector<32x16xf32>, vector<32x16xf32>, vector<32x32xf32> -> vector<32x32xf32>
    %cst_209 = arith.constant 2.500000e-01 : f32
    %990 = vector.broadcast %cst_209 : f32 to vector<32x32xf32>
    %991 = arith.mulf %989, %990 : vector<32x32xf32>
    %992 = arith.addf %991, %925 : vector<32x32xf32>
    %cst_210 = arith.constant dense<0xFF800000> : vector<32xf32>
    %993 = vector.multi_reduction <maximumf>, %992, %cst_210 [1] : vector<32x32xf32> to vector<32xf32>
    %cst_211 = arith.constant 0xFF800000 : f32
    %994 = vector.broadcast %cst_211 : f32 to vector<32xf32>
    %995 = arith.maximumf %994, %993 : vector<32xf32>
    %996 = vector.shape_cast %995 : vector<32xf32> to vector<32x1xf32>
    %997 = vector.broadcast %996 : vector<32x1xf32> to vector<32x32xf32>
    %998 = arith.subf %992, %997 : vector<32x32xf32>
    %999 = math.exp %998 : vector<32x32xf32>
    %cst_212 = arith.constant dense<0.000000e+00> : vector<32xf32>
    %1000 = vector.multi_reduction <add>, %999, %cst_212 [1] : vector<32x32xf32> to vector<32xf32>
    %1001 = vector.shape_cast %1000 : vector<32xf32> to vector<32x1xf32>
    %1002 = vector.broadcast %1001 : vector<32x1xf32> to vector<32x32xf32>
    %1003 = arith.divf %999, %1002 : vector<32x32xf32>
    %cst_213 = arith.constant dense<0.000000e+00> : vector<32x16xf32>
    %1004 = tpu.matmul %1003, %988, %cst_213 {dimension_numbers = #tpu.dot_dimension_numbers<[1], [0], [0], [1], [0, 0, 1, 1], [], []>} : vector<32x32xf32>, vector<32x16xf32>, vector<32x16xf32> -> vector<32x16xf32>
    %c1_214 = arith.constant 1 : index
    %c0_215 = arith.constant 0 : index
    %c0_216 = arith.constant 0 : index
    %1005 = vector.load %arg17[%c1_214, %c0_215, %c0_216] : memref<4x16x64xf32, #tpu.memory_space<vmem>>, vector<1x16x64xf32>
    %1006 = vector.shape_cast %1005 : vector<1x16x64xf32> to vector<16x64xf32>
    %cst_217 = arith.constant dense<0.000000e+00> : vector<32x64xf32>
    %1007 = tpu.matmul %1004, %1006, %cst_217 {dimension_numbers = #tpu.dot_dimension_numbers<[1], [0], [0], [1], [0, 0, 1, 1], [], []>} : vector<32x16xf32>, vector<16x64xf32>, vector<32x64xf32> -> vector<32x64xf32>
    %1008 = arith.addf %967, %1007 : vector<32x64xf32>
    %c2 = arith.constant 2 : index
    %c0_218 = arith.constant 0 : index
    %c0_219 = arith.constant 0 : index
    %1009 = vector.load %arg11[%c2, %c0_218, %c0_219] : memref<4x64x16xf32, #tpu.memory_space<vmem>>, vector<1x64x16xf32>
    %1010 = vector.shape_cast %1009 : vector<1x64x16xf32> to vector<64x16xf32>
    %cst_220 = arith.constant dense<0.000000e+00> : vector<32x16xf32>
    %1011 = tpu.matmul %924, %1010, %cst_220 {dimension_numbers = #tpu.dot_dimension_numbers<[1], [0], [0], [1], [0, 0, 1, 1], [], []>} : vector<32x64xf32>, vector<64x16xf32>, vector<32x16xf32> -> vector<32x16xf32>
    %c2_221 = arith.constant 2 : index
    %c0_222 = arith.constant 0 : index
    %c0_223 = arith.constant 0 : index
    %1012 = vector.load %arg12[%c2_221, %c0_222, %c0_223] : memref<4x1x16xf32, #tpu.memory_space<vmem>>, vector<1x1x16xf32>
    %1013 = vector.shape_cast %1012 : vector<1x1x16xf32> to vector<1x16xf32>
    %1014 = vector.broadcast %1013 : vector<1x16xf32> to vector<32x16xf32>
    %1015 = arith.addf %1011, %1014 : vector<32x16xf32>
    %c2_224 = arith.constant 2 : index
    %c0_225 = arith.constant 0 : index
    %c0_226 = arith.constant 0 : index
    %1016 = vector.load %arg13[%c2_224, %c0_225, %c0_226] : memref<4x64x16xf32, #tpu.memory_space<vmem>>, vector<1x64x16xf32>
    %1017 = vector.shape_cast %1016 : vector<1x64x16xf32> to vector<64x16xf32>
    %cst_227 = arith.constant dense<0.000000e+00> : vector<32x16xf32>
    %1018 = tpu.matmul %924, %1017, %cst_227 {dimension_numbers = #tpu.dot_dimension_numbers<[1], [0], [0], [1], [0, 0, 1, 1], [], []>} : vector<32x64xf32>, vector<64x16xf32>, vector<32x16xf32> -> vector<32x16xf32>
    %c2_228 = arith.constant 2 : index
    %c0_229 = arith.constant 0 : index
    %c0_230 = arith.constant 0 : index
    %1019 = vector.load %arg14[%c2_228, %c0_229, %c0_230] : memref<4x1x16xf32, #tpu.memory_space<vmem>>, vector<1x1x16xf32>
    %1020 = vector.shape_cast %1019 : vector<1x1x16xf32> to vector<1x16xf32>
    %1021 = vector.broadcast %1020 : vector<1x16xf32> to vector<32x16xf32>
    %1022 = arith.addf %1018, %1021 : vector<32x16xf32>
    %c2_231 = arith.constant 2 : index
    %c0_232 = arith.constant 0 : index
    %c0_233 = arith.constant 0 : index
    %1023 = vector.load %arg15[%c2_231, %c0_232, %c0_233] : memref<4x64x16xf32, #tpu.memory_space<vmem>>, vector<1x64x16xf32>
    %1024 = vector.shape_cast %1023 : vector<1x64x16xf32> to vector<64x16xf32>
    %cst_234 = arith.constant dense<0.000000e+00> : vector<32x16xf32>
    %1025 = tpu.matmul %924, %1024, %cst_234 {dimension_numbers = #tpu.dot_dimension_numbers<[1], [0], [0], [1], [0, 0, 1, 1], [], []>} : vector<32x64xf32>, vector<64x16xf32>, vector<32x16xf32> -> vector<32x16xf32>
    %c2_235 = arith.constant 2 : index
    %c0_236 = arith.constant 0 : index
    %c0_237 = arith.constant 0 : index
    %1026 = vector.load %arg16[%c2_235, %c0_236, %c0_237] : memref<4x1x16xf32, #tpu.memory_space<vmem>>, vector<1x1x16xf32>
    %1027 = vector.shape_cast %1026 : vector<1x1x16xf32> to vector<1x16xf32>
    %1028 = vector.broadcast %1027 : vector<1x16xf32> to vector<32x16xf32>
    %1029 = arith.addf %1025, %1028 : vector<32x16xf32>
    %cst_238 = arith.constant dense<0.000000e+00> : vector<32x32xf32>
    %1030 = tpu.matmul %1015, %1022, %cst_238 {dimension_numbers = #tpu.dot_dimension_numbers<[1], [1], [0], [0], [0, 0, 1, 0], [], []>} : vector<32x16xf32>, vector<32x16xf32>, vector<32x32xf32> -> vector<32x32xf32>
    %cst_239 = arith.constant 2.500000e-01 : f32
    %1031 = vector.broadcast %cst_239 : f32 to vector<32x32xf32>
    %1032 = arith.mulf %1030, %1031 : vector<32x32xf32>
    %1033 = arith.addf %1032, %925 : vector<32x32xf32>
    %cst_240 = arith.constant dense<0xFF800000> : vector<32xf32>
    %1034 = vector.multi_reduction <maximumf>, %1033, %cst_240 [1] : vector<32x32xf32> to vector<32xf32>
    %cst_241 = arith.constant 0xFF800000 : f32
    %1035 = vector.broadcast %cst_241 : f32 to vector<32xf32>
    %1036 = arith.maximumf %1035, %1034 : vector<32xf32>
    %1037 = vector.shape_cast %1036 : vector<32xf32> to vector<32x1xf32>
    %1038 = vector.broadcast %1037 : vector<32x1xf32> to vector<32x32xf32>
    %1039 = arith.subf %1033, %1038 : vector<32x32xf32>
    %1040 = math.exp %1039 : vector<32x32xf32>
    %cst_242 = arith.constant dense<0.000000e+00> : vector<32xf32>
    %1041 = vector.multi_reduction <add>, %1040, %cst_242 [1] : vector<32x32xf32> to vector<32xf32>
    %1042 = vector.shape_cast %1041 : vector<32xf32> to vector<32x1xf32>
    %1043 = vector.broadcast %1042 : vector<32x1xf32> to vector<32x32xf32>
    %1044 = arith.divf %1040, %1043 : vector<32x32xf32>
    %cst_243 = arith.constant dense<0.000000e+00> : vector<32x16xf32>
    %1045 = tpu.matmul %1044, %1029, %cst_243 {dimension_numbers = #tpu.dot_dimension_numbers<[1], [0], [0], [1], [0, 0, 1, 1], [], []>} : vector<32x32xf32>, vector<32x16xf32>, vector<32x16xf32> -> vector<32x16xf32>
    %c2_244 = arith.constant 2 : index
    %c0_245 = arith.constant 0 : index
    %c0_246 = arith.constant 0 : index
    %1046 = vector.load %arg17[%c2_244, %c0_245, %c0_246] : memref<4x16x64xf32, #tpu.memory_space<vmem>>, vector<1x16x64xf32>
    %1047 = vector.shape_cast %1046 : vector<1x16x64xf32> to vector<16x64xf32>
    %cst_247 = arith.constant dense<0.000000e+00> : vector<32x64xf32>
    %1048 = tpu.matmul %1045, %1047, %cst_247 {dimension_numbers = #tpu.dot_dimension_numbers<[1], [0], [0], [1], [0, 0, 1, 1], [], []>} : vector<32x16xf32>, vector<16x64xf32>, vector<32x64xf32> -> vector<32x64xf32>
    %1049 = arith.addf %1008, %1048 : vector<32x64xf32>
    %c3 = arith.constant 3 : index
    %c0_248 = arith.constant 0 : index
    %c0_249 = arith.constant 0 : index
    %1050 = vector.load %arg11[%c3, %c0_248, %c0_249] : memref<4x64x16xf32, #tpu.memory_space<vmem>>, vector<1x64x16xf32>
    %1051 = vector.shape_cast %1050 : vector<1x64x16xf32> to vector<64x16xf32>
    %cst_250 = arith.constant dense<0.000000e+00> : vector<32x16xf32>
    %1052 = tpu.matmul %924, %1051, %cst_250 {dimension_numbers = #tpu.dot_dimension_numbers<[1], [0], [0], [1], [0, 0, 1, 1], [], []>} : vector<32x64xf32>, vector<64x16xf32>, vector<32x16xf32> -> vector<32x16xf32>
    %c3_251 = arith.constant 3 : index
    %c0_252 = arith.constant 0 : index
    %c0_253 = arith.constant 0 : index
    %1053 = vector.load %arg12[%c3_251, %c0_252, %c0_253] : memref<4x1x16xf32, #tpu.memory_space<vmem>>, vector<1x1x16xf32>
    %1054 = vector.shape_cast %1053 : vector<1x1x16xf32> to vector<1x16xf32>
    %1055 = vector.broadcast %1054 : vector<1x16xf32> to vector<32x16xf32>
    %1056 = arith.addf %1052, %1055 : vector<32x16xf32>
    %c3_254 = arith.constant 3 : index
    %c0_255 = arith.constant 0 : index
    %c0_256 = arith.constant 0 : index
    %1057 = vector.load %arg13[%c3_254, %c0_255, %c0_256] : memref<4x64x16xf32, #tpu.memory_space<vmem>>, vector<1x64x16xf32>
    %1058 = vector.shape_cast %1057 : vector<1x64x16xf32> to vector<64x16xf32>
    %cst_257 = arith.constant dense<0.000000e+00> : vector<32x16xf32>
    %1059 = tpu.matmul %924, %1058, %cst_257 {dimension_numbers = #tpu.dot_dimension_numbers<[1], [0], [0], [1], [0, 0, 1, 1], [], []>} : vector<32x64xf32>, vector<64x16xf32>, vector<32x16xf32> -> vector<32x16xf32>
    %c3_258 = arith.constant 3 : index
    %c0_259 = arith.constant 0 : index
    %c0_260 = arith.constant 0 : index
    %1060 = vector.load %arg14[%c3_258, %c0_259, %c0_260] : memref<4x1x16xf32, #tpu.memory_space<vmem>>, vector<1x1x16xf32>
    %1061 = vector.shape_cast %1060 : vector<1x1x16xf32> to vector<1x16xf32>
    %1062 = vector.broadcast %1061 : vector<1x16xf32> to vector<32x16xf32>
    %1063 = arith.addf %1059, %1062 : vector<32x16xf32>
    %c3_261 = arith.constant 3 : index
    %c0_262 = arith.constant 0 : index
    %c0_263 = arith.constant 0 : index
    %1064 = vector.load %arg15[%c3_261, %c0_262, %c0_263] : memref<4x64x16xf32, #tpu.memory_space<vmem>>, vector<1x64x16xf32>
    %1065 = vector.shape_cast %1064 : vector<1x64x16xf32> to vector<64x16xf32>
    %cst_264 = arith.constant dense<0.000000e+00> : vector<32x16xf32>
    %1066 = tpu.matmul %924, %1065, %cst_264 {dimension_numbers = #tpu.dot_dimension_numbers<[1], [0], [0], [1], [0, 0, 1, 1], [], []>} : vector<32x64xf32>, vector<64x16xf32>, vector<32x16xf32> -> vector<32x16xf32>
    %c3_265 = arith.constant 3 : index
    %c0_266 = arith.constant 0 : index
    %c0_267 = arith.constant 0 : index
    %1067 = vector.load %arg16[%c3_265, %c0_266, %c0_267] : memref<4x1x16xf32, #tpu.memory_space<vmem>>, vector<1x1x16xf32>
    %1068 = vector.shape_cast %1067 : vector<1x1x16xf32> to vector<1x16xf32>
    %1069 = vector.broadcast %1068 : vector<1x16xf32> to vector<32x16xf32>
    %1070 = arith.addf %1066, %1069 : vector<32x16xf32>
    %cst_268 = arith.constant dense<0.000000e+00> : vector<32x32xf32>
    %1071 = tpu.matmul %1056, %1063, %cst_268 {dimension_numbers = #tpu.dot_dimension_numbers<[1], [1], [0], [0], [0, 0, 1, 0], [], []>} : vector<32x16xf32>, vector<32x16xf32>, vector<32x32xf32> -> vector<32x32xf32>
    %cst_269 = arith.constant 2.500000e-01 : f32
    %1072 = vector.broadcast %cst_269 : f32 to vector<32x32xf32>
    %1073 = arith.mulf %1071, %1072 : vector<32x32xf32>
    %1074 = arith.addf %1073, %925 : vector<32x32xf32>
    %cst_270 = arith.constant dense<0xFF800000> : vector<32xf32>
    %1075 = vector.multi_reduction <maximumf>, %1074, %cst_270 [1] : vector<32x32xf32> to vector<32xf32>
    %cst_271 = arith.constant 0xFF800000 : f32
    %1076 = vector.broadcast %cst_271 : f32 to vector<32xf32>
    %1077 = arith.maximumf %1076, %1075 : vector<32xf32>
    %1078 = vector.shape_cast %1077 : vector<32xf32> to vector<32x1xf32>
    %1079 = vector.broadcast %1078 : vector<32x1xf32> to vector<32x32xf32>
    %1080 = arith.subf %1074, %1079 : vector<32x32xf32>
    %1081 = math.exp %1080 : vector<32x32xf32>
    %cst_272 = arith.constant dense<0.000000e+00> : vector<32xf32>
    %1082 = vector.multi_reduction <add>, %1081, %cst_272 [1] : vector<32x32xf32> to vector<32xf32>
    %1083 = vector.shape_cast %1082 : vector<32xf32> to vector<32x1xf32>
    %1084 = vector.broadcast %1083 : vector<32x1xf32> to vector<32x32xf32>
    %1085 = arith.divf %1081, %1084 : vector<32x32xf32>
    %cst_273 = arith.constant dense<0.000000e+00> : vector<32x16xf32>
    %1086 = tpu.matmul %1085, %1070, %cst_273 {dimension_numbers = #tpu.dot_dimension_numbers<[1], [0], [0], [1], [0, 0, 1, 1], [], []>} : vector<32x32xf32>, vector<32x16xf32>, vector<32x16xf32> -> vector<32x16xf32>
    %c3_274 = arith.constant 3 : index
    %c0_275 = arith.constant 0 : index
    %c0_276 = arith.constant 0 : index
    %1087 = vector.load %arg17[%c3_274, %c0_275, %c0_276] : memref<4x16x64xf32, #tpu.memory_space<vmem>>, vector<1x16x64xf32>
    %1088 = vector.shape_cast %1087 : vector<1x16x64xf32> to vector<16x64xf32>
    %cst_277 = arith.constant dense<0.000000e+00> : vector<32x64xf32>
    %1089 = tpu.matmul %1086, %1088, %cst_277 {dimension_numbers = #tpu.dot_dimension_numbers<[1], [0], [0], [1], [0, 0, 1, 1], [], []>} : vector<32x16xf32>, vector<16x64xf32>, vector<32x64xf32> -> vector<32x64xf32>
    %1090 = arith.addf %1049, %1089 : vector<32x64xf32>
    %c0_278 = arith.constant 0 : index
    %c0_279 = arith.constant 0 : index
    %1091 = vector.load %arg18[%c0_278, %c0_279] : memref<1x64xf32, #tpu.memory_space<vmem>>, vector<1x64xf32>
    %1092 = vector.broadcast %1091 : vector<1x64xf32> to vector<32x64xf32>
    %1093 = arith.addf %1090, %1092 : vector<32x64xf32>
    %c0_280 = arith.constant 0 : index
    %c0_281 = arith.constant 0 : index
    %1094 = vector.load %arg2[%c0_280, %c0_281] : memref<4x32xf32, #tpu.memory_space<vmem>>, vector<4x32xf32>
    %cst_282 = arith.constant dense<0.000000e+00> : vector<4x64xf32>
    %1095 = tpu.matmul %1094, %1093, %cst_282 {dimension_numbers = #tpu.dot_dimension_numbers<[1], [0], [0], [1], [0, 0, 1, 1], [], []>} : vector<4x32xf32>, vector<32x64xf32>, vector<4x64xf32> -> vector<4x64xf32>
    %1096 = arith.truncf %1095 : vector<4x64xf32> to vector<4x64xbf16>
    %c0_283 = arith.constant 0 : index
    %c0_284 = arith.constant 0 : index
    %1097 = vector.load %arg19[%c0_283, %c0_284] : memref<64x256xbf16, #tpu.memory_space<vmem>>, vector<64x256xbf16>
    %cst_285 = arith.constant dense<0.000000e+00> : vector<4x256xf32>
    %1098 = tpu.matmul %1096, %1097, %cst_285 {dimension_numbers = #tpu.dot_dimension_numbers<[1], [0], [0], [1], [0, 0, 1, 1], [], []>} : vector<4x64xbf16>, vector<64x256xbf16>, vector<4x256xf32> -> vector<4x256xf32>
    %c0_286 = arith.constant 0 : index
    %c0_287 = arith.constant 0 : index
    %1099 = vector.load %arg20[%c0_286, %c0_287] : memref<1x256xf32, #tpu.memory_space<vmem>>, vector<1x256xf32>
    %1100 = vector.broadcast %1099 : vector<1x256xf32> to vector<4x256xf32>
    %1101 = arith.addf %1098, %1100 : vector<4x256xf32>
    %cst_288 = arith.constant 0.000000e+00 : f32
    %1102 = vector.broadcast %cst_288 : f32 to vector<4x256xf32>
    %1103 = arith.maximumf %1101, %1102 : vector<4x256xf32>
    %1104 = arith.truncf %1103 : vector<4x256xf32> to vector<4x256xbf16>
    %c0_289 = arith.constant 0 : index
    %c0_290 = arith.constant 0 : index
    %1105 = vector.load %arg21[%c0_289, %c0_290] : memref<256x128xbf16, #tpu.memory_space<vmem>>, vector<256x128xbf16>
    %cst_291 = arith.constant dense<0.000000e+00> : vector<4x128xf32>
    %1106 = tpu.matmul %1104, %1105, %cst_291 {dimension_numbers = #tpu.dot_dimension_numbers<[1], [0], [0], [1], [0, 0, 1, 1], [], []>} : vector<4x256xbf16>, vector<256x128xbf16>, vector<4x128xf32> -> vector<4x128xf32>
    %c0_292 = arith.constant 0 : index
    %c0_293 = arith.constant 0 : index
    %1107 = vector.load %arg22[%c0_292, %c0_293] : memref<1x128xf32, #tpu.memory_space<vmem>>, vector<1x128xf32>
    %1108 = vector.broadcast %1107 : vector<1x128xf32> to vector<4x128xf32>
    %1109 = arith.addf %1106, %1108 : vector<4x128xf32>
    %cst_294 = arith.constant 0.000000e+00 : f32
    %1110 = vector.broadcast %cst_294 : f32 to vector<4x128xf32>
    %1111 = arith.maximumf %1109, %1110 : vector<4x128xf32>
    %c0_295 = arith.constant 0 : index
    %c0_296 = arith.constant 0 : index
    %1112 = vector.load %arg23[%c0_295, %c0_296] : memref<128x32xf32, #tpu.memory_space<vmem>>, vector<128x32xf32>
    %cst_297 = arith.constant dense<0.000000e+00> : vector<4x32xf32>
    %1113 = tpu.matmul %1111, %1112, %cst_297 {dimension_numbers = #tpu.dot_dimension_numbers<[1], [0], [0], [1], [0, 0, 1, 1], [], []>} : vector<4x128xf32>, vector<128x32xf32>, vector<4x32xf32> -> vector<4x32xf32>
    %c0_298 = arith.constant 0 : index
    %c0_299 = arith.constant 0 : index
    %1114 = vector.load %arg24[%c0_298, %c0_299] : memref<1x32xf32, #tpu.memory_space<vmem>>, vector<1x32xf32>
    %1115 = vector.broadcast %1114 : vector<1x32xf32> to vector<4x32xf32>
    %1116 = arith.addf %1113, %1115 : vector<4x32xf32>
    %1117 = vector.extract_strided_slice %1116 {offsets = [0, 0], sizes = [2, 32], strides = [1, 1]} : vector<4x32xf32> to vector<2x32xf32>
    %1118 = vector.extract_strided_slice %1116 {offsets = [2, 0], sizes = [2, 32], strides = [1, 1]} : vector<4x32xf32> to vector<2x32xf32>
    %1119 = arith.subf %1117, %1118 : vector<2x32xf32>
    %1120 = math.absf %1119 : vector<2x32xf32>
    %1121 = arith.mulf %1117, %1118 : vector<2x32xf32>
    %1122 = tpu.concatenate %1117, %1118, %1120, %1121 in 1 : vector<2x32xf32>, vector<2x32xf32>, vector<2x32xf32>, vector<2x32xf32> -> vector<2x128xf32>
    %1123 = arith.truncf %1122 : vector<2x128xf32> to vector<2x128xbf16>
    %c0_300 = arith.constant 0 : index
    %c0_301 = arith.constant 0 : index
    %1124 = vector.load %arg25[%c0_300, %c0_301] : memref<128x256xbf16, #tpu.memory_space<vmem>>, vector<128x256xbf16>
    %cst_302 = arith.constant dense<0.000000e+00> : vector<2x256xf32>
    %1125 = tpu.matmul %1123, %1124, %cst_302 {dimension_numbers = #tpu.dot_dimension_numbers<[1], [0], [0], [1], [0, 0, 1, 1], [], []>} : vector<2x128xbf16>, vector<128x256xbf16>, vector<2x256xf32> -> vector<2x256xf32>
    %c0_303 = arith.constant 0 : index
    %c0_304 = arith.constant 0 : index
    %1126 = vector.load %arg26[%c0_303, %c0_304] : memref<1x256xf32, #tpu.memory_space<vmem>>, vector<1x256xf32>
    %1127 = vector.broadcast %1126 : vector<1x256xf32> to vector<2x256xf32>
    %1128 = arith.addf %1125, %1127 : vector<2x256xf32>
    %cst_305 = arith.constant 0.000000e+00 : f32
    %1129 = vector.broadcast %cst_305 : f32 to vector<2x256xf32>
    %1130 = arith.maximumf %1128, %1129 : vector<2x256xf32>
    %1131 = arith.truncf %1130 : vector<2x256xf32> to vector<2x256xbf16>
    %c0_306 = arith.constant 0 : index
    %c0_307 = arith.constant 0 : index
    %1132 = vector.load %arg27[%c0_306, %c0_307] : memref<256x128xbf16, #tpu.memory_space<vmem>>, vector<256x128xbf16>
    %cst_308 = arith.constant dense<0.000000e+00> : vector<2x128xf32>
    %1133 = tpu.matmul %1131, %1132, %cst_308 {dimension_numbers = #tpu.dot_dimension_numbers<[1], [0], [0], [1], [0, 0, 1, 1], [], []>} : vector<2x256xbf16>, vector<256x128xbf16>, vector<2x128xf32> -> vector<2x128xf32>
    %c0_309 = arith.constant 0 : index
    %c0_310 = arith.constant 0 : index
    %1134 = vector.load %arg28[%c0_309, %c0_310] : memref<1x128xf32, #tpu.memory_space<vmem>>, vector<1x128xf32>
    %1135 = vector.broadcast %1134 : vector<1x128xf32> to vector<2x128xf32>
    %1136 = arith.addf %1133, %1135 : vector<2x128xf32>
    %cst_311 = arith.constant 0.000000e+00 : f32
    %1137 = vector.broadcast %cst_311 : f32 to vector<2x128xf32>
    %1138 = arith.maximumf %1136, %1137 : vector<2x128xf32>
    %c0_312 = arith.constant 0 : index
    %c0_313 = arith.constant 0 : index
    %1139 = vector.load %arg29[%c0_312, %c0_313] : memref<128x64xf32, #tpu.memory_space<vmem>>, vector<128x64xf32>
    %cst_314 = arith.constant dense<0.000000e+00> : vector<2x64xf32>
    %1140 = tpu.matmul %1138, %1139, %cst_314 {dimension_numbers = #tpu.dot_dimension_numbers<[1], [0], [0], [1], [0, 0, 1, 1], [], []>} : vector<2x128xf32>, vector<128x64xf32>, vector<2x64xf32> -> vector<2x64xf32>
    %c0_315 = arith.constant 0 : index
    %c0_316 = arith.constant 0 : index
    %1141 = vector.load %arg30[%c0_315, %c0_316] : memref<1x64xf32, #tpu.memory_space<vmem>>, vector<1x64xf32>
    %1142 = vector.broadcast %1141 : vector<1x64xf32> to vector<2x64xf32>
    %1143 = arith.addf %1140, %1142 : vector<2x64xf32>
    %cst_317 = arith.constant 0.000000e+00 : f32
    %1144 = vector.broadcast %cst_317 : f32 to vector<2x64xf32>
    %1145 = arith.maximumf %1143, %1144 : vector<2x64xf32>
    %c0_318 = arith.constant 0 : index
    %c0_319 = arith.constant 0 : index
    %1146 = vector.load %arg31[%c0_318, %c0_319] : memref<64x1xf32, #tpu.memory_space<vmem>>, vector<64x1xf32>
    %cst_320 = arith.constant dense<0.000000e+00> : vector<2x1xf32>
    %1147 = tpu.matmul %1145, %1146, %cst_320 {dimension_numbers = #tpu.dot_dimension_numbers<[1], [0], [0], [1], [0, 0, 1, 1], [], []>} : vector<2x64xf32>, vector<64x1xf32>, vector<2x1xf32> -> vector<2x1xf32>
    %c0_321 = arith.constant 0 : index
    %c0_322 = arith.constant 0 : index
    %1148 = vector.load %arg32[%c0_321, %c0_322] : memref<1x1xf32, #tpu.memory_space<vmem>>, vector<1x1xf32>
    %1149 = vector.broadcast %1148 : vector<1x1xf32> to vector<2x1xf32>
    %1150 = arith.addf %1147, %1149 : vector<2x1xf32>
    %1151 = arith.negf %1150 : vector<2x1xf32>
    %1152 = math.exp %1151 : vector<2x1xf32>
    %cst_323 = arith.constant 1.000000e+00 : f32
    %1153 = vector.broadcast %cst_323 : f32 to vector<2x1xf32>
    %1154 = arith.addf %1153, %1152 : vector<2x1xf32>
    %1155 = arith.divf %1153, %1154 : vector<2x1xf32>
    %c0_324 = arith.constant 0 : index
    %c0_325 = arith.constant 0 : index
    %1156 = vector.load %arg33[%c0_324, %c0_325] : memref<2x1xf32, #tpu.memory_space<vmem>>, vector<2x1xf32>
    tpu.vector_store %arg33[%c0_324, %c0_325], %1155 {strides = array<i32>} : memref<2x1xf32, #tpu.memory_space<vmem>>, vector<2x1xf32>,
    return
  }
}

</mosaic_0001>

<llo_original>
// kernel: siamese_forward.1
$region0: #{siamese_forward.1}
  #allocation0 [shape = 'u32[]', space=smem, size = 0x4, offset = 0x4, fixed_abs, tag = 'smem constant byte address 0x4 - core index']
  #allocation1 [shape = 'u32[72,128]{1,0:T(1,128)}', space=vmem, size = 0x9000, scoped, tag = 'internal scratch']
  #allocation2 [shape = 'f32[1,1]{1,0:T(1,128)S(1)}', space=vmem, size = 0x200, scoped, tag = 'scoped memory for siamese_forward.1']
  %s0 = inlined_call_operand.smem [shape: u32[34], index: -1, kind: input, shape index: {}]
  %s1 = sld [smem:[%s0]]
  %s2 = scalar_lea.smem %s0, 1
  %s3 = sld [smem:[%s2]]
  %s4 = scalar_lea.smem %s0, 2
  %s5 = sld [smem:[%s4]]
  %s6 = scalar_lea.smem %s0, 3
  %s7 = sld [smem:[%s6]]
  %s8 = scalar_lea.smem %s0, 4
  %s9 = sld [smem:[%s8]]
  %s10 = scalar_lea.smem %s0, 5
  %s11 = sld [smem:[%s10]]
  %s12 = scalar_lea.smem %s0, 6
  %s13 = sld [smem:[%s12]]
  %s14 = scalar_lea.smem %s0, 7
  %s15 = sld [smem:[%s14]]
  %s16 = scalar_lea.smem %s0, 8
  %s17 = sld [smem:[%s16]]
  %s18 = scalar_lea.smem %s0, 9
  %s19 = sld [smem:[%s18]]
  %s20 = scalar_lea.smem %s0, 10
  %s21 = sld [smem:[%s20]]
  %s22 = scalar_lea.smem %s0, 11
  %s23 = sld [smem:[%s22]]
  %s24 = scalar_lea.smem %s0, 12
  %s25 = sld [smem:[%s24]]
  %s26 = scalar_lea.smem %s0, 13
  %s27 = sld [smem:[%s26]]
  %s28 = scalar_lea.smem %s0, 14
  %s29 = sld [smem:[%s28]]
  %s30 = scalar_lea.smem %s0, 15
  %s31 = sld [smem:[%s30]]
  %s32 = scalar_lea.smem %s0, 16
  %s33 = sld [smem:[%s32]]
  %s34 = scalar_lea.smem %s0, 17
  %s35 = sld [smem:[%s34]]
  %s36 = scalar_lea.smem %s0, 18
  %s37 = sld [smem:[%s36]]
  %s38 = scalar_lea.smem %s0, 19
  %s39 = sld [smem:[%s38]]
  %s40 = scalar_lea.smem %s0, 20
  %s41 = sld [smem:[%s40]]
  %s42 = scalar_lea.smem %s0, 21
  %s43 = sld [smem:[%s42]]
  %s44 = scalar_lea.smem %s0, 22
  %s45 = sld [smem:[%s44]]
  %s46 = scalar_lea.smem %s0, 23
  %s47 = sld [smem:[%s46]]
  %s48 = scalar_lea.smem %s0, 24
  %s49 = sld [smem:[%s48]]
  %s50 = scalar_lea.smem %s0, 25
  %s51 = sld [smem:[%s50]]
  %s52 = scalar_lea.smem %s0, 26
  %s53 = sld [smem:[%s52]]
  %s54 = scalar_lea.smem %s0, 27
  %s55 = sld [smem:[%s54]]
  %s56 = scalar_lea.smem %s0, 28
  %s57 = sld [smem:[%s56]]
  %s58 = scalar_lea.smem %s0, 29
  %s59 = sld [smem:[%s58]]
  %s60 = scalar_lea.smem %s0, 30
  %s61 = sld [smem:[%s60]]
  %s62 = scalar_lea.smem %s0, 31
  %s63 = sld [smem:[%s62]]
  %s64 = scalar_lea.smem %s0, 32
  %s65 = sld [smem:[%s64]]
  %s66 = scalar_lea.smem %s0, 33
  %s67 = sld [smem:[%s66]]
  %s68 = sld [smem:[#allocation0]]
  $region142: #{siamese_forward.1} parent=0
    _
  %s70 = ssub.s32 1, %s68
  %s71 = scalar_select 0, %s70, %s68
  %v72 = vstv %s65
  %73 = vst [vmem:[#allocation2] sm:$0x1] %v72
  // Predicated region
  $region2: #{siamese_forward.1} parent=0 // pred_check
    _
  $region3: #{siamese_forward.1} parent=0 // pred_check_branch
    %75 = sbr.rel (0) target = $region5
  $region4: #{siamese_forward.1} parent=0 // pred_region
    _
  $region5: #{siamese_forward.1} parent=0 // pred_fallthru
    _
  // Predicated region
  $region6: #{siamese_forward.1} parent=0 // pred_check
    _
  $region7: #{siamese_forward.1} parent=0 // pred_check_branch
    %77 = sbr.rel (0) target = $region9
  $region8: #{siamese_forward.1} parent=0 // pred_region
    _
  $region9: #{siamese_forward.1} parent=0 // pred_fallthru
    _
  // Predicated region
  $region10: #{siamese_forward.1} parent=0 // pred_check
    _
  $region11: #{siamese_forward.1} parent=0 // pred_check_branch
    %79 = sbr.rel (0) target = $region13
  $region12: #{siamese_forward.1} parent=0 // pred_region
    _
  $region13: #{siamese_forward.1} parent=0 // pred_fallthru
    _
  // Predicated region
  $region14: #{siamese_forward.1} parent=0 // pred_check
    _
  $region15: #{siamese_forward.1} parent=0 // pred_check_branch
    %81 = sbr.rel (0) target = $region17
  $region16: #{siamese_forward.1} parent=0 // pred_region
    _
  $region17: #{siamese_forward.1} parent=0 // pred_fallthru
    _
  // Predicated region
  $region18: #{siamese_forward.1} parent=0 // pred_check
    _
  $region19: #{siamese_forward.1} parent=0 // pred_check_branch
    %83 = sbr.rel (0) target = $region21
  $region20: #{siamese_forward.1} parent=0 // pred_region
    _
  $region21: #{siamese_forward.1} parent=0 // pred_fallthru
    _
  // Predicated region
  $region22: #{siamese_forward.1} parent=0 // pred_check
    _
  $region23: #{siamese_forward.1} parent=0 // pred_check_branch
    %85 = sbr.rel (0) target = $region25
  $region24: #{siamese_forward.1} parent=0 // pred_region
    _
  $region25: #{siamese_forward.1} parent=0 // pred_fallthru
    _
  // Predicated region
  $region26: #{siamese_forward.1} parent=0 // pred_check
    _
  $region27: #{siamese_forward.1} parent=0 // pred_check_branch
    %87 = sbr.rel (0) target = $region29
  $region28: #{siamese_forward.1} parent=0 // pred_region
    _
  $region29: #{siamese_forward.1} parent=0 // pred_fallthru
    _
  // Predicated region
  $region30: #{siamese_forward.1} parent=0 // pred_check
    _
  $region31: #{siamese_forward.1} parent=0 // pred_check_branch
    %89 = sbr.rel (0) target = $region33
  $region32: #{siamese_forward.1} parent=0 // pred_region
    _
  $region33: #{siamese_forward.1} parent=0 // pred_fallthru
    _
  // Predicated region
  $region34: #{siamese_forward.1} parent=0 // pred_check
    _
  $region35: #{siamese_forward.1} parent=0 // pred_check_branch
    %91 = sbr.rel (0) target = $region37
  $region36: #{siamese_forward.1} parent=0 // pred_region
    _
  $region37: #{siamese_forward.1} parent=0 // pred_fallthru
    _
  // Predicated region
  $region38: #{siamese_forward.1} parent=0 // pred_check
    _
  $region39: #{siamese_forward.1} parent=0 // pred_check_branch
    %93 = sbr.rel (0) target = $region41
  $region40: #{siamese_forward.1} parent=0 // pred_region
    _
  $region41: #{siamese_forward.1} parent=0 // pred_fallthru
    _
  // Predicated region
  $region42: #{siamese_forward.1} parent=0 // pred_check
    _
  $region43: #{siamese_forward.1} parent=0 // pred_check_branch
    %95 = sbr.rel (0) target = $region45
  $region44: #{siamese_forward.1} parent=0 // pred_region
    _
  $region45: #{siamese_forward.1} parent=0 // pred_fallthru
    _
  // Predicated region
  $region46: #{siamese_forward.1} parent=0 // pred_check
    _
  $region47: #{siamese_forward.1} parent=0 // pred_check_branch
    %97 = sbr.rel (0) target = $region49
  $region48: #{siamese_forward.1} parent=0 // pred_region
    _
  $region49: #{siamese_forward.1} parent=0 // pred_fallthru
    _
  // Predicated region
  $region50: #{siamese_forward.1} parent=0 // pred_check
    _
  $region51: #{siamese_forward.1} parent=0 // pred_check_branch
    %99 = sbr.rel (0) target = $region53
  $region52: #{siamese_forward.1} parent=0 // pred_region
    _
  $region53: #{siamese_forward.1} parent=0 // pred_fallthru
    _
  // Predicated region
  $region54: #{siamese_forward.1} parent=0 // pred_check
    _
  $region55: #{siamese_forward.1} parent=0 // pred_check_branch
    %101 = sbr.rel (0) target = $region57
  $region56: #{siamese_forward.1} parent=0 // pred_region
    _
  $region57: #{siamese_forward.1} parent=0 // pred_fallthru
    _
  // Predicated region
  $region58: #{siamese_forward.1} parent=0 // pred_check
    _
  $region59: #{siamese_forward.1} parent=0 // pred_check_branch
    %103 = sbr.rel (0) target = $region61
  $region60: #{siamese_forward.1} parent=0 // pred_region
    _
  $region61: #{siamese_forward.1} parent=0 // pred_fallthru
    _
  // Predicated region
  $region62: #{siamese_forward.1} parent=0 // pred_check
    _
  $region63: #{siamese_forward.1} parent=0 // pred_check_branch
    %105 = sbr.rel (0) target = $region65
  $region64: #{siamese_forward.1} parent=0 // pred_region
    _
  $region65: #{siamese_forward.1} parent=0 // pred_fallthru
    _
  // Predicated region
  $region66: #{siamese_forward.1} parent=0 // pred_check
    _
  $region67: #{siamese_forward.1} parent=0 // pred_check_branch
    %107 = sbr.rel (0) target = $region69
  $region68: #{siamese_forward.1} parent=0 // pred_region
    _
  $region69: #{siamese_forward.1} parent=0 // pred_fallthru
    _
  // Predicated region
  $region70: #{siamese_forward.1} parent=0 // pred_check
    _
  $region71: #{siamese_forward.1} parent=0 // pred_check_branch
    %109 = sbr.rel (0) target = $region73
  $region72: #{siamese_forward.1} parent=0 // pred_region
    _
  $region73: #{siamese_forward.1} parent=0 // pred_fallthru
    _
  // Predicated region
  $region74: #{siamese_forward.1} parent=0 // pred_check
    _
  $region75: #{siamese_forward.1} parent=0 // pred_check_branch
    %111 = sbr.rel (0) target = $region77
  $region76: #{siamese_forward.1} parent=0 // pred_region
    _
  $region77: #{siamese_forward.1} parent=0 // pred_fallthru
    _
  // Predicated region
  $region78: #{siamese_forward.1} parent=0 // pred_check
    _
  $region79: #{siamese_forward.1} parent=0 // pred_check_branch
    %113 = sbr.rel (0) target = $region81
  $region80: #{siamese_forward.1} parent=0 // pred_region
    _
  $region81: #{siamese_forward.1} parent=0 // pred_fallthru
    _
  // Predicated region
  $region82: #{siamese_forward.1} parent=0 // pred_check
    _
  $region83: #{siamese_forward.1} parent=0 // pred_check_branch
    %115 = sbr.rel (0) target = $region85
  $region84: #{siamese_forward.1} parent=0 // pred_region
    _
  $region85: #{siamese_forward.1} parent=0 // pred_fallthru
    _
  // Predicated region
  $region86: #{siamese_forward.1} parent=0 // pred_check
    _
  $region87: #{siamese_forward.1} parent=0 // pred_check_branch
    %117 = sbr.rel (0) target = $region89
  $region88: #{siamese_forward.1} parent=0 // pred_region
    _
  $region89: #{siamese_forward.1} parent=0 // pred_fallthru
    _
  // Predicated region
  $region90: #{siamese_forward.1} parent=0 // pred_check
    _
  $region91: #{siamese_forward.1} parent=0 // pred_check_branch
    %119 = sbr.rel (0) target = $region93
  $region92: #{siamese_forward.1} parent=0 // pred_region
    _
  $region93: #{siamese_forward.1} parent=0 // pred_fallthru
    _
  // Predicated region
  $region94: #{siamese_forward.1} parent=0 // pred_check
    _
  $region95: #{siamese_forward.1} parent=0 // pred_check_branch
    %121 = sbr.rel (0) target = $region97
  $region96: #{siamese_forward.1} parent=0 // pred_region
    _
  $region97: #{siamese_forward.1} parent=0 // pred_fallthru
    _
  // Predicated region
  $region98: #{siamese_forward.1} parent=0 // pred_check
    _
  $region99: #{siamese_forward.1} parent=0 // pred_check_branch
    %123 = sbr.rel (0) target = $region101
  $region100: #{siamese_forward.1} parent=0 // pred_region
    _
  $region101: #{siamese_forward.1} parent=0 // pred_fallthru
    _
  // Predicated region
  $region102: #{siamese_forward.1} parent=0 // pred_check
    _
  $region103: #{siamese_forward.1} parent=0 // pred_check_branch
    %125 = sbr.rel (0) target = $region105
  $region104: #{siamese_forward.1} parent=0 // pred_region
    _
  $region105: #{siamese_forward.1} parent=0 // pred_fallthru
    _
  // Predicated region
  $region106: #{siamese_forward.1} parent=0 // pred_check
    _
  $region107: #{siamese_forward.1} parent=0 // pred_check_branch
    %127 = sbr.rel (0) target = $region109
  $region108: #{siamese_forward.1} parent=0 // pred_region
    _
  $region109: #{siamese_forward.1} parent=0 // pred_fallthru
    _
  // Predicated region
  $region110: #{siamese_forward.1} parent=0 // pred_check
    _
  $region111: #{siamese_forward.1} parent=0 // pred_check_branch
    %129 = sbr.rel (0) target = $region113
  $region112: #{siamese_forward.1} parent=0 // pred_region
    _
  $region113: #{siamese_forward.1} parent=0 // pred_fallthru
    _
  // Predicated region
  $region114: #{siamese_forward.1} parent=0 // pred_check
    _
  $region115: #{siamese_forward.1} parent=0 // pred_check_branch
    %131 = sbr.rel (0) target = $region117
  $region116: #{siamese_forward.1} parent=0 // pred_region
    _
  $region117: #{siamese_forward.1} parent=0 // pred_fallthru
    _
  // Predicated region
  $region118: #{siamese_forward.1} parent=0 // pred_check
    _
  $region119: #{siamese_forward.1} parent=0 // pred_check_branch
    %133 = sbr.rel (0) target = $region121
  $region120: #{siamese_forward.1} parent=0 // pred_region
    _
  $region121: #{siamese_forward.1} parent=0 // pred_fallthru
    _
  // Predicated region
  $region122: #{siamese_forward.1} parent=0 // pred_check
    _
  $region123: #{siamese_forward.1} parent=0 // pred_check_branch
    %135 = sbr.rel (0) target = $region125
  $region124: #{siamese_forward.1} parent=0 // pred_region
    _
  $region125: #{siamese_forward.1} parent=0 // pred_fallthru
    _
  // Predicated region
  $region126: #{siamese_forward.1} parent=0 // pred_check
    _
  $region127: #{siamese_forward.1} parent=0 // pred_check_branch
    %137 = sbr.rel (0) target = $region129
  $region128: #{siamese_forward.1} parent=0 // pred_region
    _
  $region129: #{siamese_forward.1} parent=0 // pred_fallthru
    _
  // Predicated region
  $region130: #{siamese_forward.1} parent=0 // pred_check
    _
  $region131: #{siamese_forward.1} parent=0 // pred_check_branch
    %139 = sbr.rel (0) target = $region133
  $region132: #{siamese_forward.1} parent=0 // pred_region
    _
  $region133: #{siamese_forward.1} parent=0 // pred_fallthru
    _
  %v141 = vld [vmem:[%s1] sm:$0xff]
  %v142 = vld [vmem:[%s1 + $0x8] sm:$0xff]
  %v143 = vld [vmem:[%s1 + $0x10] sm:$0xff]
  %v144 = vld [vmem:[%s1 + $0x18] sm:$0xff]
  %v145 = vld [vmem:[%s7] sm:$0xff]
  %v146 = vld [vmem:[%s7 + $0x8] sm:$0xff]
  %v147 = vld [vmem:[%s9] sm:$0x3]
  %v149 = vperm.slane %v147, 0
  %v150 = vperm.slane %v147, 1
  %vm153 = vcmask 64512
  %v155 = vsel %vm153, %v141, 0
  %v158 = vsel %vm153, %v142, 0
  %v161 = vsel %vm153, %v143, 0
  %v164 = vsel %vm153, %v144, 0
  %166 = vmatpush.msra.mxu0 0.0
  %167 = vmatpush.msra.mxu0 0.0
  %168 = vmatpush.msra.mxu0 0.0
  %169 = vmatpush.msra.mxu0 0.0
  %170 = vmatpush.msra.mxu0 0.0
  %171 = vmatpush.msra.mxu0 0.0
  %172 = vmatpush.msra.mxu0 0.0
  %173 = vmatpush.msra.mxu0 0.0
  %174 = vmatpush.msra.mxu0 0.0
  %175 = vmatpush.msra.mxu0 0.0
  %176 = vmatpush.msra.mxu0 0.0
  %177 = vmatpush.msra.mxu0 0.0
  %178 = vmatpush.msra.mxu0 0.0
  %179 = vmatpush.msra.mxu0 0.0
  %180 = vmatpush.msra.mxu0 0.0
  %181 = vmatpush.msra.mxu0 %v145
  %182 = vmatmul.f32.gmra.mxu0 %v155
  %v183 = vpop.f32.mrf.mxu0
  %v184 = vadd.f32 %v149, %v183
  %185 = vmatmul.f32.gmra.mxu0 %v158
  %v186 = vpop.f32.mrf.mxu0
  %v187 = vadd.f32 %v149, %v186
  %188 = vmatmul.f32.gmra.mxu0 %v161
  %v189 = vpop.f32.mrf.mxu0
  %v190 = vadd.f32 %v149, %v189
  %191 = vmatmul.f32.gmra.mxu0 %v164
  %v192 = vpop.f32.mrf.mxu0
  %v193 = vadd.f32 %v149, %v192
  %194 = vdwg.mxu0
  %195 = vmatpush.msra.mxu0 0.0
  %196 = vmatpush.msra.mxu0 0.0
  %197 = vmatpush.msra.mxu0 0.0
  %198 = vmatpush.msra.mxu0 0.0
  %199 = vmatpush.msra.mxu0 0.0
  %200 = vmatpush.msra.mxu0 0.0
  %201 = vmatpush.msra.mxu0 0.0
  %202 = vmatpush.msra.mxu0 0.0
  %203 = vmatpush.msra.mxu0 0.0
  %204 = vmatpush.msra.mxu0 0.0
  %205 = vmatpush.msra.mxu0 0.0
  %206 = vmatpush.msra.mxu0 0.0
  %207 = vmatpush.msra.mxu0 0.0
  %208 = vmatpush.msra.mxu0 0.0
  %209 = vmatpush.msra.mxu0 0.0
  %210 = vmatpush.msra.mxu0 %v146
  %211 = vmatmul.f32.gmra.mxu0 %v155
  %v212 = vpop.f32.mrf.mxu0
  %v213 = vadd.f32 %v150, %v212
  %214 = vmatmul.f32.gmra.mxu0 %v158
  %v215 = vpop.f32.mrf.mxu0
  %v216 = vadd.f32 %v150, %v215
  %217 = vmatmul.f32.gmra.mxu0 %v161
  %v218 = vpop.f32.mrf.mxu0
  %v219 = vadd.f32 %v150, %v218
  %220 = vmatmul.f32.gmra.mxu0 %v164
  %v221 = vpop.f32.mrf.mxu0
  %v222 = vadd.f32 %v150, %v221
  %223 = vdwg.mxu0
  %v224 = vld [vmem:[%s11] sm:$0xff]
  %v225 = vld [vmem:[%s11 + $0x8] sm:$0xff]
  %v226 = vld [vmem:[%s11 + $0x10] sm:$0xff]
  %v227 = vld [vmem:[%s11 + $0x18] sm:$0xff]
  %v228 = vld [vmem:[%s13] sm:$0xff]
  %v229 = vld [vmem:[%s13 + $0x8] sm:$0xff]
  %v230 = vld [vmem:[%s13 + $0x10] sm:$0xff]
  %v231 = vld [vmem:[%s13 + $0x18] sm:$0xff]
  %vm232 = vcmask 261120
  %v234 = vsel %vm232, 0.0, 0
  %236 = vmatpush.msra.mxu0 0.0
  %237 = vmatpush.msra.mxu0 0.0
  %238 = vmatpush.msra.mxu0 0.0
  %239 = vmatpush.msra.mxu0 0.0
  %240 = vmatpush.msra.mxu0 0.0
  %241 = vmatpush.msra.mxu0 0.0
  %242 = vmatpush.msra.mxu0 0.0
  %243 = vmatpush.msra.mxu0 0.0
  %244 = vmatpush.msra.mxu0 0.0
  %245 = vmatpush.msra.mxu0 0.0
  %246 = vmatpush.msra.mxu0 0.0
  %247 = vmatpush.msra.mxu0 0.0
  %248 = vmatpush.msra.mxu0 %v227
  %249 = vmatpush.msra.mxu0 %v226
  %250 = vmatpush.msra.mxu0 %v225
  %251 = vmatpush.msra.mxu0 %v224
  %252 = vmatmul.f32.gmra.mxu0 %v234
  %v253 = vpop.f32.mrf.mxu0
  %v254 = vadd.f32 0.0, %v253
  %255 = vdwg.mxu0
  %v256 = vadd.f32 %v184, %v254
  %v257 = vxor.u32 %v256, 2147483648
  %v258 = vmul.f32 %v257, 1.442695
  %v259 = vpow.pop %v258
  %v260 = vadd.f32 %v259, 1.0
  %v261 = vrcp.pop %v260
  %v262 = vmul.f32 %v260, %v261
  %v263 = vsub.f32 1.0, %v262
  %v264 = vmul.f32 %v261, %v263
  %v265 = vadd.f32 %v261, %v264
  %vm266 = vweird.f32 %v260
  %vm267 = vweird.f32 %v261
  %vm268 = vmor %vm266, %vm267
  %v269 = vsel %vm268, %v261, %v265
  %v270 = vand.u32 2147483647, %v260
  %vm271 = vcmp.eq.f32.partialorder %v270, 8.507059e+37
  %v272 = vand.u32 %v260, 2147483648
  %v273 = vor.u32 1.1754944e-38, %v272
  %v274 = vsel %vm271, %v273, %v269
  %v275 = vmul.f32 1.0, %v274
  %v276 = vtanh.pop %v256
  %v277 = vmul.f32 %v275, 0.0
  %279 = vrot.lane.b32.xlu0 %v276, 64
  %v280 = vpop.permute.xlu0 %279
  %v282 = vmul.f32 %v275, %v280
  %284 = vrot.lane.b32.xlu0 %v282, 32
  %v285 = vpop.permute.xlu0 %284
  %v287 = vadd.f32 %v277, %v285
  %v288 = vtanh.pop %v287
  %290 = vrot.lane.b32.xlu0 %v288, 64
  %v291 = vpop.permute.xlu0 %290
  %v293 = vmul.f32 %v275, %v291
  %295 = vrot.lane.b32.xlu0 %v293, 32
  %v296 = vpop.permute.xlu0 %295
  %v297 = vsel %vm232, %v296, 0
  %299 = vmatpush.msra.mxu0 0.0
  %300 = vmatpush.msra.mxu0 0.0
  %301 = vmatpush.msra.mxu0 0.0
  %302 = vmatpush.msra.mxu0 0.0
  %303 = vmatpush.msra.mxu0 0.0
  %304 = vmatpush.msra.mxu0 0.0
  %305 = vmatpush.msra.mxu0 0.0
  %306 = vmatpush.msra.mxu0 0.0
  %307 = vmatpush.msra.mxu0 0.0
  %308 = vmatpush.msra.mxu0 0.0
  %309 = vmatpush.msra.mxu0 0.0
  %310 = vmatpush.msra.mxu0 0.0
  %311 = vmatpush.msra.mxu0 %v227
  %312 = vmatpush.msra.mxu0 %v226
  %313 = vmatpush.msra.mxu0 %v225
  %314 = vmatpush.msra.mxu0 %v224
  %315 = vmatmul.f32.gmra.mxu0 %v297
  %v316 = vpop.f32.mrf.mxu0
  %v317 = vadd.f32 0.0, %v316
  %318 = vdwg.mxu0
  %v320 = vrot.slane %v317, 4
  %v322 = vadd.f32 %v184, %v320
  %v323 = vxor.u32 %v322, 2147483648
  %v324 = vmul.f32 %v323, 1.442695
  %v325 = vpow.pop %v324
  %v326 = vadd.f32 %v325, 1.0
  %v327 = vrcp.pop %v326
  %v328 = vmul.f32 %v326, %v327
  %v329 = vsub.f32 1.0, %v328
  %v330 = vmul.f32 %v327, %v329
  %v331 = vadd.f32 %v327, %v330
  %vm332 = vweird.f32 %v326
  %vm333 = vweird.f32 %v327
  %vm334 = vmor %vm332, %vm333
  %v335 = vsel %vm334, %v327, %v331
  %v336 = vand.u32 2147483647, %v326
  %vm337 = vcmp.eq.f32.partialorder %v336, 8.507059e+37
  %v338 = vand.u32 %v326, 2147483648
  %v339 = vor.u32 1.1754944e-38, %v338
  %v340 = vsel %vm337, %v339, %v335
  %v341 = vmul.f32 1.0, %v340
  %v342 = vtanh.pop %v322
  %v344 = vrot.slane %v287, 4
  %v346 = vmul.f32 %v341, %v344
  %348 = vrot.lane.b32.xlu0 %v342, 64
  %v349 = vpop.permute.xlu0 %348
  %v351 = vmul.f32 %v341, %v349
  %353 = vrot.lane.b32.xlu0 %v351, 32
  %v354 = vpop.permute.xlu0 %353
  %v356 = vadd.f32 %v346, %v354
  %v357 = vtanh.pop %v356
  %359 = vrot.lane.b32.xlu0 %v357, 64
  %v360 = vpop.permute.xlu0 %359
  %v362 = vmul.f32 %v341, %v360
  %v364 = vrot.slane %v362, 4
  %365 = vrot.lane.b32.xlu0 %v364, 32
  %v366 = vpop.permute.xlu0 %365
  %v367 = vsel %vm232, %v366, 0
  %369 = vmatpush.msra.mxu0 0.0
  %370 = vmatpush.msra.mxu0 0.0
  %371 = vmatpush.msra.mxu0 0.0
  %372 = vmatpush.msra.mxu0 0.0
  %373 = vmatpush.msra.mxu0 0.0
  %374 = vmatpush.msra.mxu0 0.0
  %375 = vmatpush.msra.mxu0 0.0
  %376 = vmatpush.msra.mxu0 0.0
  %377 = vmatpush.msra.mxu0 0.0
  %378 = vmatpush.msra.mxu0 0.0
  %379 = vmatpush.msra.mxu0 0.0
  %380 = vmatpush.msra.mxu0 0.0
  %381 = vmatpush.msra.mxu0 %v227
  %382 = vmatpush.msra.mxu0 %v226
  %383 = vmatpush.msra.mxu0 %v225
  %384 = vmatpush.msra.mxu0 %v224
  %385 = vmatmul.f32.gmra.mxu0 %v367
  %v386 = vpop.f32.mrf.mxu0
  %v387 = vadd.f32 0.0, %v386
  %388 = vdwg.mxu0
  %v389 = vadd.f32 %v187, %v387
  %v390 = vxor.u32 %v389, 2147483648
  %v391 = vmul.f32 %v390, 1.442695
  %v392 = vpow.pop %v391
  %v393 = vadd.f32 %v392, 1.0
  %v394 = vrcp.pop %v393
  %v395 = vmul.f32 %v393, %v394
  %v396 = vsub.f32 1.0, %v395
  %v397 = vmul.f32 %v394, %v396
  %v398 = vadd.f32 %v394, %v397
  %vm399 = vweird.f32 %v393
  %vm400 = vweird.f32 %v394
  %vm401 = vmor %vm399, %vm400
  %v402 = vsel %vm401, %v394, %v398
  %v403 = vand.u32 2147483647, %v393
  %vm404 = vcmp.eq.f32.partialorder %v403, 8.507059e+37
  %v405 = vand.u32 %v393, 2147483648
  %v406 = vor.u32 1.1754944e-38, %v405
  %v407 = vsel %vm404, %v406, %v402
  %v408 = vmul.f32 1.0, %v407
  %v409 = vtanh.pop %v389
  %v411 = vrot.slane %v356, 4
  %v413 = vmul.f32 %v408, %v411
  %415 = vrot.lane.b32.xlu0 %v409, 64
  %v416 = vpop.permute.xlu0 %415
  %v418 = vmul.f32 %v408, %v416
  %420 = vrot.lane.b32.xlu0 %v418, 32
  %v421 = vpop.permute.xlu0 %420
  %v423 = vadd.f32 %v413, %v421
  %v424 = vtanh.pop %v423
  %426 = vrot.lane.b32.xlu0 %v424, 64
  %v427 = vpop.permute.xlu0 %426
  %v429 = vmul.f32 %v408, %v427
  %431 = vrot.lane.b32.xlu0 %v429, 32
  %v432 = vpop.permute.xlu0 %431
  %v433 = vsel %vm232, %v432, 0
  %435 = vmatpush.msra.mxu0 0.0
  %436 = vmatpush.msra.mxu0 0.0
  %437 = vmatpush.msra.mxu0 0.0
  %438 = vmatpush.msra.mxu0 0.0
  %439 = vmatpush.msra.mxu0 0.0
  %440 = vmatpush.msra.mxu0 0.0
  %441 = vmatpush.msra.mxu0 0.0
  %442 = vmatpush.msra.mxu0 0.0
  %443 = vmatpush.msra.mxu0 0.0
  %444 = vmatpush.msra.mxu0 0.0
  %445 = vmatpush.msra.mxu0 0.0
  %446 = vmatpush.msra.mxu0 0.0
  %447 = vmatpush.msra.mxu0 %v227
  %448 = vmatpush.msra.mxu0 %v226
  %449 = vmatpush.msra.mxu0 %v225
  %450 = vmatpush.msra.mxu0 %v224
  %451 = vmatmul.f32.gmra.mxu0 %v433
  %v452 = vpop.f32.mrf.mxu0
  %v453 = vadd.f32 0.0, %v452
  %454 = vdwg.mxu0
  %v456 = vrot.slane %v453, 4
  %v458 = vadd.f32 %v187, %v456
  %v459 = vxor.u32 %v458, 2147483648
  %v460 = vmul.f32 %v459, 1.442695
  %v461 = vpow.pop %v460
  %v462 = vadd.f32 %v461, 1.0
  %v463 = vrcp.pop %v462
  %v464 = vmul.f32 %v462, %v463
  %v465 = vsub.f32 1.0, %v464
  %v466 = vmul.f32 %v463, %v465
  %v467 = vadd.f32 %v463, %v466
  %vm468 = vweird.f32 %v462
  %vm469 = vweird.f32 %v463
  %vm470 = vmor %vm468, %vm469
  %v471 = vsel %vm470, %v463, %v467
  %v472 = vand.u32 2147483647, %v462
  %vm473 = vcmp.eq.f32.partialorder %v472, 8.507059e+37
  %v474 = vand.u32 %v462, 2147483648
  %v475 = vor.u32 1.1754944e-38, %v474
  %v476 = vsel %vm473, %v475, %v471
  %v477 = vmul.f32 1.0, %v476
  %v478 = vtanh.pop %v458
  %v480 = vrot.slane %v423, 4
  %v482 = vmul.f32 %v477, %v480
  %484 = vrot.lane.b32.xlu0 %v478, 64
  %v485 = vpop.permute.xlu0 %484
  %v487 = vmul.f32 %v477, %v485
  %489 = vrot.lane.b32.xlu0 %v487, 32
  %v490 = vpop.permute.xlu0 %489
  %v492 = vadd.f32 %v482, %v490
  %v493 = vtanh.pop %v492
  %495 = vrot.lane.b32.xlu0 %v493, 64
  %v496 = vpop.permute.xlu0 %495
  %v498 = vmul.f32 %v477, %v496
  %v500 = vrot.slane %v498, 4
  %501 = vrot.lane.b32.xlu0 %v500, 32
  %v502 = vpop.permute.xlu0 %501
  %v503 = vsel %vm232, %v502, 0
  %505 = vmatpush.msra.mxu0 0.0
  %506 = vmatpush.msra.mxu0 0.0
  %507 = vmatpush.msra.mxu0 0.0
  %508 = vmatpush.msra.mxu0 0.0
  %509 = vmatpush.msra.mxu0 0.0
  %510 = vmatpush.msra.mxu0 0.0
  %511 = vmatpush.msra.mxu0 0.0
  %512 = vmatpush.msra.mxu0 0.0
  %513 = vmatpush.msra.mxu0 0.0
  %514 = vmatpush.msra.mxu0 0.0
  %515 = vmatpush.msra.mxu0 0.0
  %516 = vmatpush.msra.mxu0 0.0
  %517 = vmatpush.msra.mxu0 %v227
  %518 = vmatpush.msra.mxu0 %v226
  %519 = vmatpush.msra.mxu0 %v225
  %520 = vmatpush.msra.mxu0 %v224
  %521 = vmatmul.f32.gmra.mxu0 %v503
  %v522 = vpop.f32.mrf.mxu0
  %v523 = vadd.f32 0.0, %v522
  %524 = vdwg.mxu0
  %v525 = vadd.f32 %v190, %v523
  %v526 = vxor.u32 %v525, 2147483648
  %v527 = vmul.f32 %v526, 1.442695
  %v528 = vpow.pop %v527
  %v529 = vadd.f32 %v528, 1.0
  %v530 = vrcp.pop %v529
  %v531 = vmul.f32 %v529, %v530
  %v532 = vsub.f32 1.0, %v531
  %v533 = vmul.f32 %v530, %v532
  %v534 = vadd.f32 %v530, %v533
  %vm535 = vweird.f32 %v529
  %vm536 = vweird.f32 %v530
  %vm537 = vmor %vm535, %vm536
  %v538 = vsel %vm537, %v530, %v534
  %v539 = vand.u32 2147483647, %v529
  %vm540 = vcmp.eq.f32.partialorder %v539, 8.507059e+37
  %v541 = vand.u32 %v529, 2147483648
  %v542 = vor.u32 1.1754944e-38, %v541
  %v543 = vsel %vm540, %v542, %v538
  %v544 = vmul.f32 1.0, %v543
  %v545 = vtanh.pop %v525
  %v547 = vrot.slane %v492, 4
  %v549 = vmul.f32 %v544, %v547
  %551 = vrot.lane.b32.xlu0 %v545, 64
  %v552 = vpop.permute.xlu0 %551
  %v554 = vmul.f32 %v544, %v552
  %556 = vrot.lane.b32.xlu0 %v554, 32
  %v557 = vpop.permute.xlu0 %556
  %v559 = vadd.f32 %v549, %v557
  %v560 = vtanh.pop %v559
  %562 = vrot.lane.b32.xlu0 %v560, 64
  %v563 = vpop.permute.xlu0 %562
  %v565 = vmul.f32 %v544, %v563
  %567 = vrot.lane.b32.xlu0 %v565, 32
  %v568 = vpop.permute.xlu0 %567
  %v569 = vsel %vm232, %v568, 0
  %571 = vmatpush.msra.mxu0 0.0
  %572 = vmatpush.msra.mxu0 0.0
  %573 = vmatpush.msra.mxu0 0.0
  %574 = vmatpush.msra.mxu0 0.0
  %575 = vmatpush.msra.mxu0 0.0
  %576 = vmatpush.msra.mxu0 0.0
  %577 = vmatpush.msra.mxu0 0.0
  %578 = vmatpush.msra.mxu0 0.0
  %579 = vmatpush.msra.mxu0 0.0
  %580 = vmatpush.msra.mxu0 0.0
  %581 = vmatpush.msra.mxu0 0.0
  %582 = vmatpush.msra.mxu0 0.0
  %583 = vmatpush.msra.mxu0 %v227
  %584 = vmatpush.msra.mxu0 %v226
  %585 = vmatpush.msra.mxu0 %v225
  %586 = vmatpush.msra.mxu0 %v224
  %587 = vmatmul.f32.gmra.mxu0 %v569
  %v588 = vpop.f32.mrf.mxu0
  %v589 = vadd.f32 0.0, %v588
  %590 = vdwg.mxu0
  %v592 = vrot.slane %v589, 4
  %v594 = vadd.f32 %v190, %v592
  %v595 = vxor.u32 %v594, 2147483648
  %v596 = vmul.f32 %v595, 1.442695
  %v597 = vpow.pop %v596
  %v598 = vadd.f32 %v597, 1.0
  %v599 = vrcp.pop %v598
  %v600 = vmul.f32 %v598, %v599
  %v601 = vsub.f32 1.0, %v600
  %v602 = vmul.f32 %v599, %v601
  %v603 = vadd.f32 %v599, %v602
  %vm604 = vweird.f32 %v598
  %vm605 = vweird.f32 %v599
  %vm606 = vmor %vm604, %vm605
  %v607 = vsel %vm606, %v599, %v603
  %v608 = vand.u32 2147483647, %v598
  %vm609 = vcmp.eq.f32.partialorder %v608, 8.507059e+37
  %v610 = vand.u32 %v598, 2147483648
  %v611 = vor.u32 1.1754944e-38, %v610
  %v612 = vsel %vm609, %v611, %v607
  %v613 = vmul.f32 1.0, %v612
  %v614 = vtanh.pop %v594
  %v616 = vrot.slane %v559, 4
  %v618 = vmul.f32 %v613, %v616
  %620 = vrot.lane.b32.xlu0 %v614, 64
  %v621 = vpop.permute.xlu0 %620
  %v623 = vmul.f32 %v613, %v621
  %625 = vrot.lane.b32.xlu0 %v623, 32
  %v626 = vpop.permute.xlu0 %625
  %v628 = vadd.f32 %v618, %v626
  %v629 = vtanh.pop %v628
  %631 = vrot.lane.b32.xlu0 %v629, 64
  %v632 = vpop.permute.xlu0 %631
  %v634 = vmul.f32 %v613, %v632
  %v636 = vrot.slane %v634, 4
  %637 = vrot.lane.b32.xlu0 %v636, 32
  %v638 = vpop.permute.xlu0 %637
  %v639 = vsel %vm232, %v638, 0
  %641 = vmatpush.msra.mxu0 0.0
  %642 = vmatpush.msra.mxu0 0.0
  %643 = vmatpush.msra.mxu0 0.0
  %644 = vmatpush.msra.mxu0 0.0
  %645 = vmatpush.msra.mxu0 0.0
  %646 = vmatpush.msra.mxu0 0.0
  %647 = vmatpush.msra.mxu0 0.0
  %648 = vmatpush.msra.mxu0 0.0
  %649 = vmatpush.msra.mxu0 0.0
  %650 = vmatpush.msra.mxu0 0.0
  %651 = vmatpush.msra.mxu0 0.0
  %652 = vmatpush.msra.mxu0 0.0
  %653 = vmatpush.msra.mxu0 %v227
  %654 = vmatpush.msra.mxu0 %v226
  %655 = vmatpush.msra.mxu0 %v225
  %656 = vmatpush.msra.mxu0 %v224
  %657 = vmatmul.f32.gmra.mxu0 %v639
  %v658 = vpop.f32.mrf.mxu0
  %v659 = vadd.f32 0.0, %v658
  %660 = vdwg.mxu0
  %v661 = vadd.f32 %v193, %v659
  %v662 = vxor.u32 %v661, 2147483648
  %v663 = vmul.f32 %v662, 1.442695
  %v664 = vpow.pop %v663
  %v665 = vadd.f32 %v664, 1.0
  %v666 = vrcp.pop %v665
  %v667 = vmul.f32 %v665, %v666
  %v668 = vsub.f32 1.0, %v667
  %v669 = vmul.f32 %v666, %v668
  %v670 = vadd.f32 %v666, %v669
  %vm671 = vweird.f32 %v665
  %vm672 = vweird.f32 %v666
  %vm673 = vmor %vm671, %vm672
  %v674 = vsel %vm673, %v666, %v670
  %v675 = vand.u32 2147483647, %v665
  %vm676 = vcmp.eq.f32.partialorder %v675, 8.507059e+37
  %v677 = vand.u32 %v665, 2147483648
  %v678 = vor.u32 1.1754944e-38, %v677
  %v679 = vsel %vm676, %v678, %v674
  %v680 = vmul.f32 1.0, %v679
  %v681 = vtanh.pop %v661
  %v683 = vrot.slane %v628, 4
  %v685 = vmul.f32 %v680, %v683
  %687 = vrot.lane.b32.xlu0 %v681, 64
  %v688 = vpop.permute.xlu0 %687
  %v690 = vmul.f32 %v680, %v688
  %692 = vrot.lane.b32.xlu0 %v690, 32
  %v693 = vpop.permute.xlu0 %692
  %v695 = vadd.f32 %v685, %v693
  %v696 = vtanh.pop %v695
  %698 = vrot.lane.b32.xlu0 %v696, 64
  %v699 = vpop.permute.xlu0 %698
  %v701 = vmul.f32 %v680, %v699
  %703 = vrot.lane.b32.xlu0 %v701, 32
  %v704 = vpop.permute.xlu0 %703
  %v705 = vsel %vm232, %v704, 0
  %707 = vmatpush.msra.mxu0 0.0
  %708 = vmatpush.msra.mxu0 0.0
  %709 = vmatpush.msra.mxu0 0.0
  %710 = vmatpush.msra.mxu0 0.0
  %711 = vmatpush.msra.mxu0 0.0
  %712 = vmatpush.msra.mxu0 0.0
  %713 = vmatpush.msra.mxu0 0.0
  %714 = vmatpush.msra.mxu0 0.0
  %715 = vmatpush.msra.mxu0 0.0
  %716 = vmatpush.msra.mxu0 0.0
  %717 = vmatpush.msra.mxu0 0.0
  %718 = vmatpush.msra.mxu0 0.0
  %719 = vmatpush.msra.mxu0 %v227
  %720 = vmatpush.msra.mxu0 %v226
  %721 = vmatpush.msra.mxu0 %v225
  %722 = vmatpush.msra.mxu0 %v224
  %723 = vmatmul.f32.gmra.mxu0 %v705
  %v724 = vpop.f32.mrf.mxu0
  %v725 = vadd.f32 0.0, %v724
  %726 = vdwg.mxu0
  %v728 = vrot.slane %v725, 4
  %v730 = vadd.f32 %v193, %v728
  %v731 = vxor.u32 %v730, 2147483648
  %v732 = vmul.f32 %v731, 1.442695
  %v733 = vpow.pop %v732
  %v734 = vadd.f32 %v733, 1.0
  %v735 = vrcp.pop %v734
  %v736 = vmul.f32 %v734, %v735
  %v737 = vsub.f32 1.0, %v736
  %v738 = vmul.f32 %v735, %v737
  %v739 = vadd.f32 %v735, %v738
  %vm740 = vweird.f32 %v734
  %vm741 = vweird.f32 %v735
  %vm742 = vmor %vm740, %vm741
  %v743 = vsel %vm742, %v735, %v739
  %v744 = vand.u32 2147483647, %v734
  %vm745 = vcmp.eq.f32.partialorder %v744, 8.507059e+37
  %v746 = vand.u32 %v734, 2147483648
  %v747 = vor.u32 1.1754944e-38, %v746
  %v748 = vsel %vm745, %v747, %v743
  %v749 = vmul.f32 1.0, %v748
  %v750 = vtanh.pop %v730
  %v752 = vrot.slane %v695, 4
  %v754 = vmul.f32 %v749, %v752
  %756 = vrot.lane.b32.xlu0 %v750, 64
  %v757 = vpop.permute.xlu0 %756
  %v759 = vmul.f32 %v749, %v757
  %761 = vrot.lane.b32.xlu0 %v759, 32
  %v762 = vpop.permute.xlu0 %761
  %v764 = vadd.f32 %v754, %v762
  %v765 = vtanh.pop %v764
  %767 = vrot.lane.b32.xlu0 %v765, 64
  %v768 = vpop.permute.xlu0 %767
  %v770 = vmul.f32 %v749, %v768
  %771 = vmatpush.msra.mxu0 0.0
  %772 = vmatpush.msra.mxu0 0.0
  %773 = vmatpush.msra.mxu0 0.0
  %774 = vmatpush.msra.mxu0 0.0
  %775 = vmatpush.msra.mxu0 0.0
  %776 = vmatpush.msra.mxu0 0.0
  %777 = vmatpush.msra.mxu0 0.0
  %778 = vmatpush.msra.mxu0 0.0
  %779 = vmatpush.msra.mxu0 0.0
  %780 = vmatpush.msra.mxu0 0.0
  %781 = vmatpush.msra.mxu0 0.0
  %782 = vmatpush.msra.mxu0 0.0
  %783 = vmatpush.msra.mxu0 %v231
  %784 = vmatpush.msra.mxu0 %v230
  %785 = vmatpush.msra.mxu0 %v229
  %786 = vmatpush.msra.mxu0 %v228
  %787 = vmatmul.f32.gmra.mxu0 %v234
  %v788 = vpop.f32.mrf.mxu0
  %v789 = vadd.f32 0.0, %v788
  %790 = vdwg.mxu0
  %v792 = vrot.slane %v789, 4
  %v794 = vadd.f32 %v222, %v792
  %v795 = vxor.u32 %v794, 2147483648
  %v796 = vmul.f32 %v795, 1.442695
  %v797 = vpow.pop %v796
  %v798 = vadd.f32 %v797, 1.0
  %v799 = vrcp.pop %v798
  %v800 = vmul.f32 %v798, %v799
  %v801 = vsub.f32 1.0, %v800
  %v802 = vmul.f32 %v799, %v801
  %v803 = vadd.f32 %v799, %v802
  %vm804 = vweird.f32 %v798
  %vm805 = vweird.f32 %v799
  %vm806 = vmor %vm804, %vm805
  %v807 = vsel %vm806, %v799, %v803
  %v808 = vand.u32 2147483647, %v798
  %vm809 = vcmp.eq.f32.partialorder %v808, 8.507059e+37
  %v810 = vand.u32 %v798, 2147483648
  %v811 = vor.u32 1.1754944e-38, %v810
  %v812 = vsel %vm809, %v811, %v807
  %v813 = vmul.f32 1.0, %v812
  %v814 = vtanh.pop %v794
  %v815 = vmul.f32 %v813, 0.0
  %817 = vrot.lane.b32.xlu0 %v814, 64
  %v818 = vpop.permute.xlu0 %817
  %v820 = vmul.f32 %v813, %v818
  %822 = vrot.lane.b32.xlu0 %v820, 32
  %v823 = vpop.permute.xlu0 %822
  %v825 = vadd.f32 %v815, %v823
  %v826 = vtanh.pop %v825
  %828 = vrot.lane.b32.xlu0 %v826, 64
  %v829 = vpop.permute.xlu0 %828
  %v831 = vmul.f32 %v813, %v829
  %v833 = vrot.slane %v831, 4
  %834 = vrot.lane.b32.xlu0 %v833, 32
  %v835 = vpop.permute.xlu0 %834
  %v836 = vsel %vm232, %v835, 0
  %838 = vmatpush.msra.mxu0 0.0
  %839 = vmatpush.msra.mxu0 0.0
  %840 = vmatpush.msra.mxu0 0.0
  %841 = vmatpush.msra.mxu0 0.0
  %842 = vmatpush.msra.mxu0 0.0
  %843 = vmatpush.msra.mxu0 0.0
  %844 = vmatpush.msra.mxu0 0.0
  %845 = vmatpush.msra.mxu0 0.0
  %846 = vmatpush.msra.mxu0 0.0
  %847 = vmatpush.msra.mxu0 0.0
  %848 = vmatpush.msra.mxu0 0.0
  %849 = vmatpush.msra.mxu0 0.0
  %850 = vmatpush.msra.mxu0 %v231
  %851 = vmatpush.msra.mxu0 %v230
  %852 = vmatpush.msra.mxu0 %v229
  %853 = vmatpush.msra.mxu0 %v228
  %854 = vmatmul.f32.gmra.mxu0 %v836
  %v855 = vpop.f32.mrf.mxu0
  %v856 = vadd.f32 0.0, %v855
  %857 = vdwg.mxu0
  %v858 = vadd.f32 %v222, %v856
  %v859 = vxor.u32 %v858, 2147483648
  %v860 = vmul.f32 %v859, 1.442695
  %v861 = vpow.pop %v860
  %v862 = vadd.f32 %v861, 1.0
  %v863 = vrcp.pop %v862
  %v864 = vmul.f32 %v862, %v863
  %v865 = vsub.f32 1.0, %v864
  %v866 = vmul.f32 %v863, %v865
  %v867 = vadd.f32 %v863, %v866
  %vm868 = vweird.f32 %v862
  %vm869 = vweird.f32 %v863
  %vm870 = vmor %vm868, %vm869
  %v871 = vsel %vm870, %v863, %v867
  %v872 = vand.u32 2147483647, %v862
  %vm873 = vcmp.eq.f32.partialorder %v872, 8.507059e+37
  %v874 = vand.u32 %v862, 2147483648
  %v875 = vor.u32 1.1754944e-38, %v874
  %v876 = vsel %vm873, %v875, %v871
  %v877 = vmul.f32 1.0, %v876
  %v878 = vtanh.pop %v858
  %v880 = vrot.slane %v825, 4
  %v882 = vmul.f32 %v877, %v880
  %884 = vrot.lane.b32.xlu0 %v878, 64
  %v885 = vpop.permute.xlu0 %884
  %v887 = vmul.f32 %v877, %v885
  %889 = vrot.lane.b32.xlu0 %v887, 32
  %v890 = vpop.permute.xlu0 %889
  %v892 = vadd.f32 %v882, %v890
  %v893 = vtanh.pop %v892
  %895 = vrot.lane.b32.xlu0 %v893, 64
  %v896 = vpop.permute.xlu0 %895
  %v898 = vmul.f32 %v877, %v896
  %900 = vrot.lane.b32.xlu0 %v898, 32
  %v901 = vpop.permute.xlu0 %900
  %v902 = vsel %vm232, %v901, 0
  %904 = vmatpush.msra.mxu0 0.0
  %905 = vmatpush.msra.mxu0 0.0
  %906 = vmatpush.msra.mxu0 0.0
  %907 = vmatpush.msra.mxu0 0.0
  %908 = vmatpush.msra.mxu0 0.0
  %909 = vmatpush.msra.mxu0 0.0
  %910 = vmatpush.msra.mxu0 0.0
  %911 = vmatpush.msra.mxu0 0.0
  %912 = vmatpush.msra.mxu0 0.0
  %913 = vmatpush.msra.mxu0 0.0
  %914 = vmatpush.msra.mxu0 0.0
  %915 = vmatpush.msra.mxu0 0.0
  %916 = vmatpush.msra.mxu0 %v231
  %917 = vmatpush.msra.mxu0 %v230
  %918 = vmatpush.msra.mxu0 %v229
  %919 = vmatpush.msra.mxu0 %v228
  %920 = vmatmul.f32.gmra.mxu0 %v902
  %v921 = vpop.f32.mrf.mxu0
  %v922 = vadd.f32 0.0, %v921
  %923 = vdwg.mxu0
  %v925 = vrot.slane %v922, 4
  %v927 = vadd.f32 %v219, %v925
  %v928 = vxor.u32 %v927, 2147483648
  %v929 = vmul.f32 %v928, 1.442695
  %v930 = vpow.pop %v929
  %v931 = vadd.f32 %v930, 1.0
  %v932 = vrcp.pop %v931
  %v933 = vmul.f32 %v931, %v932
  %v934 = vsub.f32 1.0, %v933
  %v935 = vmul.f32 %v932, %v934
  %v936 = vadd.f32 %v932, %v935
  %vm937 = vweird.f32 %v931
  %vm938 = vweird.f32 %v932
  %vm939 = vmor %vm937, %vm938
  %v940 = vsel %vm939, %v932, %v936
  %v941 = vand.u32 2147483647, %v931
  %vm942 = vcmp.eq.f32.partialorder %v941, 8.507059e+37
  %v943 = vand.u32 %v931, 2147483648
  %v944 = vor.u32 1.1754944e-38, %v943
  %v945 = vsel %vm942, %v944, %v940
  %v946 = vmul.f32 1.0, %v945
  %v947 = vtanh.pop %v927
  %v949 = vrot.slane %v892, 4
  %v951 = vmul.f32 %v946, %v949
  %953 = vrot.lane.b32.xlu0 %v947, 64
  %v954 = vpop.permute.xlu0 %953
  %v956 = vmul.f32 %v946, %v954
  %958 = vrot.lane.b32.xlu0 %v956, 32
  %v959 = vpop.permute.xlu0 %958
  %v961 = vadd.f32 %v951, %v959
  %v962 = vtanh.pop %v961
  %964 = vrot.lane.b32.xlu0 %v962, 64
  %v965 = vpop.permute.xlu0 %964
  %v967 = vmul.f32 %v946, %v965
  %v969 = vrot.slane %v967, 4
  %970 = vrot.lane.b32.xlu0 %v969, 32
  %v971 = vpop.permute.xlu0 %970
  %v972 = vsel %vm232, %v971, 0
  %974 = vmatpush.msra.mxu0 0.0
  %975 = vmatpush.msra.mxu0 0.0
  %976 = vmatpush.msra.mxu0 0.0
  %977 = vmatpush.msra.mxu0 0.0
  %978 = vmatpush.msra.mxu0 0.0
  %979 = vmatpush.msra.mxu0 0.0
  %980 = vmatpush.msra.mxu0 0.0
  %981 = vmatpush.msra.mxu0 0.0
  %982 = vmatpush.msra.mxu0 0.0
  %983 = vmatpush.msra.mxu0 0.0
  %984 = vmatpush.msra.mxu0 0.0
  %985 = vmatpush.msra.mxu0 0.0
  %986 = vmatpush.msra.mxu0 %v231
  %987 = vmatpush.msra.mxu0 %v230
  %988 = vmatpush.msra.mxu0 %v229
  %989 = vmatpush.msra.mxu0 %v228
  %990 = vmatmul.f32.gmra.mxu0 %v972
  %v991 = vpop.f32.mrf.mxu0
  %v992 = vadd.f32 0.0, %v991
  %993 = vdwg.mxu0
  %v994 = vadd.f32 %v219, %v992
  %v995 = vxor.u32 %v994, 2147483648
  %v996 = vmul.f32 %v995, 1.442695
  %v997 = vpow.pop %v996
  %v998 = vadd.f32 %v997, 1.0
  %v999 = vrcp.pop %v998
  %v1000 = vmul.f32 %v998, %v999
  %v1001 = vsub.f32 1.0, %v1000
  %v1002 = vmul.f32 %v999, %v1001
  %v1003 = vadd.f32 %v999, %v1002
  %vm1004 = vweird.f32 %v998
  %vm1005 = vweird.f32 %v999
  %vm1006 = vmor %vm1004, %vm1005
  %v1007 = vsel %vm1006, %v999, %v1003
  %v1008 = vand.u32 2147483647, %v998
  %vm1009 = vcmp.eq.f32.partialorder %v1008, 8.507059e+37
  %v1010 = vand.u32 %v998, 2147483648
  %v1011 = vor.u32 1.1754944e-38, %v1010
  %v1012 = vsel %vm1009, %v1011, %v1007
  %v1013 = vmul.f32 1.0, %v1012
  %v1014 = vtanh.pop %v994
  %v1016 = vrot.slane %v961, 4
  %v1018 = vmul.f32 %v1013, %v1016
  %1020 = vrot.lane.b32.xlu0 %v1014, 64
  %v1021 = vpop.permute.xlu0 %1020
  %v1023 = vmul.f32 %v1013, %v1021
  %1025 = vrot.lane.b32.xlu0 %v1023, 32
  %v1026 = vpop.permute.xlu0 %1025
  %v1028 = vadd.f32 %v1018, %v1026
  %v1029 = vtanh.pop %v1028
  %1031 = vrot.lane.b32.xlu0 %v1029, 64
  %v1032 = vpop.permute.xlu0 %1031
  %v1034 = vmul.f32 %v1013, %v1032
  %1036 = vrot.lane.b32.xlu0 %v1034, 32
  %v1037 = vpop.permute.xlu0 %1036
  %v1038 = vsel %vm232, %v1037, 0
  %1040 = vmatpush.msra.mxu0 0.0
  %1041 = vmatpush.msra.mxu0 0.0
  %1042 = vmatpush.msra.mxu0 0.0
  %1043 = vmatpush.msra.mxu0 0.0
  %1044 = vmatpush.msra.mxu0 0.0
  %1045 = vmatpush.msra.mxu0 0.0
  %1046 = vmatpush.msra.mxu0 0.0
  %1047 = vmatpush.msra.mxu0 0.0
  %1048 = vmatpush.msra.mxu0 0.0
  %1049 = vmatpush.msra.mxu0 0.0
  %1050 = vmatpush.msra.mxu0 0.0
  %1051 = vmatpush.msra.mxu0 0.0
  %1052 = vmatpush.msra.mxu0 %v231
  %1053 = vmatpush.msra.mxu0 %v230
  %1054 = vmatpush.msra.mxu0 %v229
  %1055 = vmatpush.msra.mxu0 %v228
  %1056 = vmatmul.f32.gmra.mxu0 %v1038
  %v1057 = vpop.f32.mrf.mxu0
  %v1058 = vadd.f32 0.0, %v1057
  %1059 = vdwg.mxu0
  %v1061 = vrot.slane %v1058, 4
  %v1063 = vadd.f32 %v216, %v1061
  %v1064 = vxor.u32 %v1063, 2147483648
  %v1065 = vmul.f32 %v1064, 1.442695
  %v1066 = vpow.pop %v1065
  %v1067 = vadd.f32 %v1066, 1.0
  %v1068 = vrcp.pop %v1067
  %v1069 = vmul.f32 %v1067, %v1068
  %v1070 = vsub.f32 1.0, %v1069
  %v1071 = vmul.f32 %v1068, %v1070
  %v1072 = vadd.f32 %v1068, %v1071
  %vm1073 = vweird.f32 %v1067
  %vm1074 = vweird.f32 %v1068
  %vm1075 = vmor %vm1073, %vm1074
  %v1076 = vsel %vm1075, %v1068, %v1072
  %v1077 = vand.u32 2147483647, %v1067
  %vm1078 = vcmp.eq.f32.partialorder %v1077, 8.507059e+37
  %v1079 = vand.u32 %v1067, 2147483648
  %v1080 = vor.u32 1.1754944e-38, %v1079
  %v1081 = vsel %vm1078, %v1080, %v1076
  %v1082 = vmul.f32 1.0, %v1081
  %v1083 = vtanh.pop %v1063
  %v1085 = vrot.slane %v1028, 4
  %v1087 = vmul.f32 %v1082, %v1085
  %1089 = vrot.lane.b32.xlu0 %v1083, 64
  %v1090 = vpop.permute.xlu0 %1089
  %v1092 = vmul.f32 %v1082, %v1090
  %1094 = vrot.lane.b32.xlu0 %v1092, 32
  %v1095 = vpop.permute.xlu0 %1094
  %v1097 = vadd.f32 %v1087, %v1095
  %v1098 = vtanh.pop %v1097
  %1100 = vrot.lane.b32.xlu0 %v1098, 64
  %v1101 = vpop.permute.xlu0 %1100
  %v1103 = vmul.f32 %v1082, %v1101
  %v1105 = vrot.slane %v1103, 4
  %1106 = vrot.lane.b32.xlu0 %v1105, 32
  %v1107 = vpop.permute.xlu0 %1106
  %v1108 = vsel %vm232, %v1107, 0
  %1110 = vmatpush.msra.mxu0 0.0
  %1111 = vmatpush.msra.mxu0 0.0
  %1112 = vmatpush.msra.mxu0 0.0
  %1113 = vmatpush.msra.mxu0 0.0
  %1114 = vmatpush.msra.mxu0 0.0
  %1115 = vmatpush.msra.mxu0 0.0
  %1116 = vmatpush.msra.mxu0 0.0
  %1117 = vmatpush.msra.mxu0 0.0
  %1118 = vmatpush.msra.mxu0 0.0
  %1119 = vmatpush.msra.mxu0 0.0
  %1120 = vmatpush.msra.mxu0 0.0
  %1121 = vmatpush.msra.mxu0 0.0
  %1122 = vmatpush.msra.mxu0 %v231
  %1123 = vmatpush.msra.mxu0 %v230
  %1124 = vmatpush.msra.mxu0 %v229
  %1125 = vmatpush.msra.mxu0 %v228
  %1126 = vmatmul.f32.gmra.mxu0 %v1108
  %v1127 = vpop.f32.mrf.mxu0
  %v1128 = vadd.f32 0.0, %v1127
  %1129 = vdwg.mxu0
  %v1130 = vadd.f32 %v216, %v1128
  %v1131 = vxor.u32 %v1130, 2147483648
  %v1132 = vmul.f32 %v1131, 1.442695
  %v1133 = vpow.pop %v1132
  %v1134 = vadd.f32 %v1133, 1.0
  %v1135 = vrcp.pop %v1134
  %v1136 = vmul.f32 %v1134, %v1135
  %v1137 = vsub.f32 1.0, %v1136
  %v1138 = vmul.f32 %v1135, %v1137
  %v1139 = vadd.f32 %v1135, %v1138
  %vm1140 = vweird.f32 %v1134
  %vm1141 = vweird.f32 %v1135
  %vm1142 = vmor %vm1140, %vm1141
  %v1143 = vsel %vm1142, %v1135, %v1139
  %v1144 = vand.u32 2147483647, %v1134
  %vm1145 = vcmp.eq.f32.partialorder %v1144, 8.507059e+37
  %v1146 = vand.u32 %v1134, 2147483648
  %v1147 = vor.u32 1.1754944e-38, %v1146
  %v1148 = vsel %vm1145, %v1147, %v1143
  %v1149 = vmul.f32 1.0, %v1148
  %v1150 = vtanh.pop %v1130
  %v1152 = vrot.slane %v1097, 4
  %v1154 = vmul.f32 %v1149, %v1152
  %1156 = vrot.lane.b32.xlu0 %v1150, 64
  %v1157 = vpop.permute.xlu0 %1156
  %v1159 = vmul.f32 %v1149, %v1157
  %1161 = vrot.lane.b32.xlu0 %v1159, 32
  %v1162 = vpop.permute.xlu0 %1161
  %v1164 = vadd.f32 %v1154, %v1162
  %v1165 = vtanh.pop %v1164
  %1167 = vrot.lane.b32.xlu0 %v1165, 64
  %v1168 = vpop.permute.xlu0 %1167
  %v1170 = vmul.f32 %v1149, %v1168
  %1172 = vrot.lane.b32.xlu0 %v1170, 32
  %v1173 = vpop.permute.xlu0 %1172
  %v1174 = vsel %vm232, %v1173, 0
  %1176 = vmatpush.msra.mxu0 0.0
  %1177 = vmatpush.msra.mxu0 0.0
  %1178 = vmatpush.msra.mxu0 0.0
  %1179 = vmatpush.msra.mxu0 0.0
  %1180 = vmatpush.msra.mxu0 0.0
  %1181 = vmatpush.msra.mxu0 0.0
  %1182 = vmatpush.msra.mxu0 0.0
  %1183 = vmatpush.msra.mxu0 0.0
  %1184 = vmatpush.msra.mxu0 0.0
  %1185 = vmatpush.msra.mxu0 0.0
  %1186 = vmatpush.msra.mxu0 0.0
  %1187 = vmatpush.msra.mxu0 0.0
  %1188 = vmatpush.msra.mxu0 %v231
  %1189 = vmatpush.msra.mxu0 %v230
  %1190 = vmatpush.msra.mxu0 %v229
  %1191 = vmatpush.msra.mxu0 %v228
  %1192 = vmatmul.f32.gmra.mxu0 %v1174
  %v1193 = vpop.f32.mrf.mxu0
  %v1194 = vadd.f32 0.0, %v1193
  %1195 = vdwg.mxu0
  %v1197 = vrot.slane %v1194, 4
  %v1199 = vadd.f32 %v213, %v1197
  %v1200 = vxor.u32 %v1199, 2147483648
  %v1201 = vmul.f32 %v1200, 1.442695
  %v1202 = vpow.pop %v1201
  %v1203 = vadd.f32 %v1202, 1.0
  %v1204 = vrcp.pop %v1203
  %v1205 = vmul.f32 %v1203, %v1204
  %v1206 = vsub.f32 1.0, %v1205
  %v1207 = vmul.f32 %v1204, %v1206
  %v1208 = vadd.f32 %v1204, %v1207
  %vm1209 = vweird.f32 %v1203
  %vm1210 = vweird.f32 %v1204
  %vm1211 = vmor %vm1209, %vm1210
  %v1212 = vsel %vm1211, %v1204, %v1208
  %v1213 = vand.u32 2147483647, %v1203
  %vm1214 = vcmp.eq.f32.partialorder %v1213, 8.507059e+37
  %v1215 = vand.u32 %v1203, 2147483648
  %v1216 = vor.u32 1.1754944e-38, %v1215
  %v1217 = vsel %vm1214, %v1216, %v1212
  %v1218 = vmul.f32 1.0, %v1217
  %v1219 = vtanh.pop %v1199
  %v1221 = vrot.slane %v1164, 4
  %v1223 = vmul.f32 %v1218, %v1221
  %1225 = vrot.lane.b32.xlu0 %v1219, 64
  %v1226 = vpop.permute.xlu0 %1225
  %v1228 = vmul.f32 %v1218, %v1226
  %1230 = vrot.lane.b32.xlu0 %v1228, 32
  %v1231 = vpop.permute.xlu0 %1230
  %v1233 = vadd.f32 %v1223, %v1231
  %v1234 = vtanh.pop %v1233
  %1236 = vrot.lane.b32.xlu0 %v1234, 64
  %v1237 = vpop.permute.xlu0 %1236
  %v1239 = vmul.f32 %v1218, %v1237
  %v1241 = vrot.slane %v1239, 4
  %1242 = vrot.lane.b32.xlu0 %v1241, 32
  %v1243 = vpop.permute.xlu0 %1242
  %v1244 = vsel %vm232, %v1243, 0
  %1246 = vmatpush.msra.mxu0 0.0
  %1247 = vmatpush.msra.mxu0 0.0
  %1248 = vmatpush.msra.mxu0 0.0
  %1249 = vmatpush.msra.mxu0 0.0
  %1250 = vmatpush.msra.mxu0 0.0
  %1251 = vmatpush.msra.mxu0 0.0
  %1252 = vmatpush.msra.mxu0 0.0
  %1253 = vmatpush.msra.mxu0 0.0
  %1254 = vmatpush.msra.mxu0 0.0
  %1255 = vmatpush.msra.mxu0 0.0
  %1256 = vmatpush.msra.mxu0 0.0
  %1257 = vmatpush.msra.mxu0 0.0
  %1258 = vmatpush.msra.mxu0 %v231
  %1259 = vmatpush.msra.mxu0 %v230
  %1260 = vmatpush.msra.mxu0 %v229
  %1261 = vmatpush.msra.mxu0 %v228
  %1262 = vmatmul.f32.gmra.mxu0 %v1244
  %v1263 = vpop.f32.mrf.mxu0
  %v1264 = vadd.f32 0.0, %v1263
  %1265 = vdwg.mxu0
  %v1266 = vadd.f32 %v213, %v1264
  %v1267 = vxor.u32 %v1266, 2147483648
  %v1268 = vmul.f32 %v1267, 1.442695
  %v1269 = vpow.pop %v1268
  %v1270 = vadd.f32 %v1269, 1.0
  %v1271 = vrcp.pop %v1270
  %v1272 = vmul.f32 %v1270, %v1271
  %v1273 = vsub.f32 1.0, %v1272
  %v1274 = vmul.f32 %v1271, %v1273
  %v1275 = vadd.f32 %v1271, %v1274
  %vm1276 = vweird.f32 %v1270
  %vm1277 = vweird.f32 %v1271
  %vm1278 = vmor %vm1276, %vm1277
  %v1279 = vsel %vm1278, %v1271, %v1275
  %v1280 = vand.u32 2147483647, %v1270
  %vm1281 = vcmp.eq.f32.partialorder %v1280, 8.507059e+37
  %v1282 = vand.u32 %v1270, 2147483648
  %v1283 = vor.u32 1.1754944e-38, %v1282
  %v1284 = vsel %vm1281, %v1283, %v1279
  %v1285 = vmul.f32 1.0, %v1284
  %v1286 = vtanh.pop %v1266
  %v1288 = vrot.slane %v1233, 4
  %v1290 = vmul.f32 %v1285, %v1288
  %1292 = vrot.lane.b32.xlu0 %v1286, 64
  %v1293 = vpop.permute.xlu0 %1292
  %v1295 = vmul.f32 %v1285, %v1293
  %1297 = vrot.lane.b32.xlu0 %v1295, 32
  %v1298 = vpop.permute.xlu0 %1297
  %v1300 = vadd.f32 %v1290, %v1298
  %v1301 = vtanh.pop %v1300
  %1303 = vrot.lane.b32.xlu0 %v1301, 64
  %v1304 = vpop.permute.xlu0 %1303
  %v1306 = vmul.f32 %v1285, %v1304
  %vm1307 = vcmask 1043456
  %v1308 = vsel %vm1307, %v293, %v362
  %v1309 = vsel %vm1307, %v429, %v498
  %v1310 = vsel %vm1307, %v565, %v634
  %v1311 = vsel %vm1307, %v701, %v770
  %v1312 = vsel %vm1307, %v1306, %v1239
  %v1313 = vsel %vm1307, %v1170, %v1103
  %v1314 = vsel %vm1307, %v1034, %v967
  %v1315 = vsel %vm1307, %v898, %v831
  %1320 = vrot.lane.b32.xlu0 %v1308, 32
  %v1321 = vpop.permute.xlu0 %1320
  %1322 = vrot.lane.b32.xlu0 %v1309, 32
  %v1323 = vpop.permute.xlu0 %1322
  %1324 = vrot.lane.b32.xlu0 %v1310, 32
  %v1325 = vpop.permute.xlu0 %1324
  %1326 = vrot.lane.b32.xlu0 %v1311, 32
  %v1327 = vpop.permute.xlu0 %1326
  %1336 = vrot.lane.b32.xlu0 %v1312, 64
  %v1337 = vpop.permute.xlu0 %1336
  %1338 = vrot.lane.b32.xlu0 %v1313, 64
  %v1339 = vpop.permute.xlu0 %1338
  %1340 = vrot.lane.b32.xlu0 %v1314, 64
  %v1341 = vpop.permute.xlu0 %1340
  %1342 = vrot.lane.b32.xlu0 %v1315, 64
  %v1343 = vpop.permute.xlu0 %1342
  %v1348 = vsel %vm232, %v1321, %v1337
  %v1349 = vsel %vm232, %v1323, %v1339
  %v1350 = vsel %vm232, %v1325, %v1341
  %v1351 = vsel %vm232, %v1327, %v1343
  %v1352 = vld [vmem:[%s15] sm:$0xff]
  %v1353 = vld [vmem:[%s15 + $0x8] sm:$0xff]
  %v1354 = vld [vmem:[%s15 + $0x10] sm:$0xff]
  %v1355 = vld [vmem:[%s15 + $0x18] sm:$0xff]
  %v1356 = vld [vmem:[%s15 + $0x20] sm:$0xff]
  %v1357 = vld [vmem:[%s15 + $0x28] sm:$0xff]
  %v1358 = vld [vmem:[%s15 + $0x30] sm:$0xff]
  %v1359 = vld [vmem:[%s15 + $0x38] sm:$0xff]
  %v1360 = vld [vmem:[%s15 + $0x40] sm:$0xff]
  %v1361 = vld [vmem:[%s15 + $0x48] sm:$0xff]
  %v1362 = vld [vmem:[%s15 + $0x50] sm:$0xff]
  %v1363 = vld [vmem:[%s15 + $0x58] sm:$0xff]
  %v1364 = vld [vmem:[%s15 + $0x60] sm:$0xff]
  %v1365 = vld [vmem:[%s15 + $0x68] sm:$0xff]
  %v1366 = vld [vmem:[%s15 + $0x70] sm:$0xff]
  %v1367 = vld [vmem:[%s15 + $0x78] sm:$0xff]
  %v1368 = vld [vmem:[%s17] sm:$0x3]
  %v1370 = vperm.slane %v1368, 0
  %v1371 = vperm.slane %v1368, 1
  %vm1374 = vcmask 523264
  %v1376 = vsel %vm1374, %v1348, 0
  %v1379 = vsel %vm1374, %v1349, 0
  %v1382 = vsel %vm1374, %v1350, 0
  %v1385 = vsel %vm1374, %v1351, 0
  %1387 = vmatpush.msra.mxu0 0.0
  %1388 = vmatpush.msra.mxu0 0.0
  %1389 = vmatpush.msra.mxu0 0.0
  %1390 = vmatpush.msra.mxu0 0.0
  %1391 = vmatpush.msra.mxu0 0.0
  %1392 = vmatpush.msra.mxu0 0.0
  %1393 = vmatpush.msra.mxu0 0.0
  %1394 = vmatpush.msra.mxu0 0.0
  %1395 = vmatpush.msra.mxu0 %v1366
  %1396 = vmatpush.msra.mxu0 %v1364
  %1397 = vmatpush.msra.mxu0 %v1362
  %1398 = vmatpush.msra.mxu0 %v1360
  %1399 = vmatpush.msra.mxu0 %v1358
  %1400 = vmatpush.msra.mxu0 %v1356
  %1401 = vmatpush.msra.mxu0 %v1354
  %1402 = vmatpush.msra.mxu0 %v1352
  %1403 = vmatmul.f32.gmra.mxu0 %v1376
  %v1404 = vpop.f32.mrf.mxu0
  %v1405 = vadd.f32 %v1370, %v1404
  %1406 = vmatmul.f32.gmra.mxu0 %v1379
  %v1407 = vpop.f32.mrf.mxu0
  %v1408 = vadd.f32 %v1370, %v1407
  %1409 = vmatmul.f32.gmra.mxu0 %v1382
  %v1410 = vpop.f32.mrf.mxu0
  %v1411 = vadd.f32 %v1370, %v1410
  %1412 = vmatmul.f32.gmra.mxu0 %v1385
  %v1413 = vpop.f32.mrf.mxu0
  %v1414 = vadd.f32 %v1370, %v1413
  %1415 = vdwg.mxu0
  %1416 = vmatpush.msra.mxu0 0.0
  %1417 = vmatpush.msra.mxu0 0.0
  %1418 = vmatpush.msra.mxu0 0.0
  %1419 = vmatpush.msra.mxu0 0.0
  %1420 = vmatpush.msra.mxu0 0.0
  %1421 = vmatpush.msra.mxu0 0.0
  %1422 = vmatpush.msra.mxu0 0.0
  %1423 = vmatpush.msra.mxu0 0.0
  %1424 = vmatpush.msra.mxu0 %v1367
  %1425 = vmatpush.msra.mxu0 %v1365
  %1426 = vmatpush.msra.mxu0 %v1363
  %1427 = vmatpush.msra.mxu0 %v1361
  %1428 = vmatpush.msra.mxu0 %v1359
  %1429 = vmatpush.msra.mxu0 %v1357
  %1430 = vmatpush.msra.mxu0 %v1355
  %1431 = vmatpush.msra.mxu0 %v1353
  %1432 = vmatmul.f32.gmra.mxu0 %v1376
  %v1433 = vpop.f32.mrf.mxu0
  %v1434 = vadd.f32 %v1371, %v1433
  %1435 = vmatmul.f32.gmra.mxu0 %v1379
  %v1436 = vpop.f32.mrf.mxu0
  %v1437 = vadd.f32 %v1371, %v1436
  %1438 = vmatmul.f32.gmra.mxu0 %v1382
  %v1439 = vpop.f32.mrf.mxu0
  %v1440 = vadd.f32 %v1371, %v1439
  %1441 = vmatmul.f32.gmra.mxu0 %v1385
  %v1442 = vpop.f32.mrf.mxu0
  %v1443 = vadd.f32 %v1371, %v1442
  %1444 = vdwg.mxu0
  %v1445 = vld [vmem:[%s19] sm:$0xff]
  %v1446 = vld [vmem:[%s19 + $0x8] sm:$0xff]
  %v1447 = vld [vmem:[%s19 + $0x10] sm:$0xff]
  %v1448 = vld [vmem:[%s19 + $0x18] sm:$0xff]
  %v1449 = vld [vmem:[%s21] sm:$0xff]
  %v1450 = vld [vmem:[%s21 + $0x8] sm:$0xff]
  %v1451 = vld [vmem:[%s21 + $0x10] sm:$0xff]
  %v1452 = vld [vmem:[%s21 + $0x18] sm:$0xff]
  %1453 = vmatpush.msra.mxu0 0.0
  %1454 = vmatpush.msra.mxu0 0.0
  %1455 = vmatpush.msra.mxu0 0.0
  %1456 = vmatpush.msra.mxu0 0.0
  %1457 = vmatpush.msra.mxu0 0.0
  %1458 = vmatpush.msra.mxu0 0.0
  %1459 = vmatpush.msra.mxu0 0.0
  %1460 = vmatpush.msra.mxu0 0.0
  %1461 = vmatpush.msra.mxu0 0.0
  %1462 = vmatpush.msra.mxu0 0.0
  %1463 = vmatpush.msra.mxu0 0.0
  %1464 = vmatpush.msra.mxu0 0.0
  %1465 = vmatpush.msra.mxu0 %v1448
  %1466 = vmatpush.msra.mxu0 %v1447
  %1467 = vmatpush.msra.mxu0 %v1446
  %1468 = vmatpush.msra.mxu0 %v1445
  %1469 = vmatmul.f32.gmra.mxu0 %v234
  %v1470 = vpop.f32.mrf.mxu0
  %v1471 = vadd.f32 0.0, %v1470
  %1472 = vdwg.mxu0
  %v1473 = vadd.f32 %v1405, %v1471
  %v1474 = vxor.u32 %v1473, 2147483648
  %v1475 = vmul.f32 %v1474, 1.442695
  %v1476 = vpow.pop %v1475
  %v1477 = vadd.f32 %v1476, 1.0
  %v1478 = vrcp.pop %v1477
  %v1479 = vmul.f32 %v1477, %v1478
  %v1480 = vsub.f32 1.0, %v1479
  %v1481 = vmul.f32 %v1478, %v1480
  %v1482 = vadd.f32 %v1478, %v1481
  %vm1483 = vweird.f32 %v1477
  %vm1484 = vweird.f32 %v1478
  %vm1485 = vmor %vm1483, %vm1484
  %v1486 = vsel %vm1485, %v1478, %v1482
  %v1487 = vand.u32 2147483647, %v1477
  %vm1488 = vcmp.eq.f32.partialorder %v1487, 8.507059e+37
  %v1489 = vand.u32 %v1477, 2147483648
  %v1490 = vor.u32 1.1754944e-38, %v1489
  %v1491 = vsel %vm1488, %v1490, %v1486
  %v1492 = vmul.f32 1.0, %v1491
  %v1493 = vtanh.pop %v1473
  %v1494 = vmul.f32 %v1492, 0.0
  %1496 = vrot.lane.b32.xlu0 %v1493, 64
  %v1497 = vpop.permute.xlu0 %1496
  %v1499 = vmul.f32 %v1492, %v1497
  %1501 = vrot.lane.b32.xlu0 %v1499, 32
  %v1502 = vpop.permute.xlu0 %1501
  %v1504 = vadd.f32 %v1494, %v1502
  %v1505 = vtanh.pop %v1504
  %1507 = vrot.lane.b32.xlu0 %v1505, 64
  %v1508 = vpop.permute.xlu0 %1507
  %v1510 = vmul.f32 %v1492, %v1508
  %1512 = vrot.lane.b32.xlu0 %v1510, 32
  %v1513 = vpop.permute.xlu0 %1512
  %v1514 = vsel %vm232, %v1513, 0
  %1516 = vmatpush.msra.mxu0 0.0
  %1517 = vmatpush.msra.mxu0 0.0
  %1518 = vmatpush.msra.mxu0 0.0
  %1519 = vmatpush.msra.mxu0 0.0
  %1520 = vmatpush.msra.mxu0 0.0
  %1521 = vmatpush.msra.mxu0 0.0
  %1522 = vmatpush.msra.mxu0 0.0
  %1523 = vmatpush.msra.mxu0 0.0
  %1524 = vmatpush.msra.mxu0 0.0
  %1525 = vmatpush.msra.mxu0 0.0
  %1526 = vmatpush.msra.mxu0 0.0
  %1527 = vmatpush.msra.mxu0 0.0
  %1528 = vmatpush.msra.mxu0 %v1448
  %1529 = vmatpush.msra.mxu0 %v1447
  %1530 = vmatpush.msra.mxu0 %v1446
  %1531 = vmatpush.msra.mxu0 %v1445
  %1532 = vmatmul.f32.gmra.mxu0 %v1514
  %v1533 = vpop.f32.mrf.mxu0
  %v1534 = vadd.f32 0.0, %v1533
  %1535 = vdwg.mxu0
  %v1537 = vrot.slane %v1534, 4
  %v1539 = vadd.f32 %v1405, %v1537
  %v1540 = vxor.u32 %v1539, 2147483648
  %v1541 = vmul.f32 %v1540, 1.442695
  %v1542 = vpow.pop %v1541
  %v1543 = vadd.f32 %v1542, 1.0
  %v1544 = vrcp.pop %v1543
  %v1545 = vmul.f32 %v1543, %v1544
  %v1546 = vsub.f32 1.0, %v1545
  %v1547 = vmul.f32 %v1544, %v1546
  %v1548 = vadd.f32 %v1544, %v1547
  %vm1549 = vweird.f32 %v1543
  %vm1550 = vweird.f32 %v1544
  %vm1551 = vmor %vm1549, %vm1550
  %v1552 = vsel %vm1551, %v1544, %v1548
  %v1553 = vand.u32 2147483647, %v1543
  %vm1554 = vcmp.eq.f32.partialorder %v1553, 8.507059e+37
  %v1555 = vand.u32 %v1543, 2147483648
  %v1556 = vor.u32 1.1754944e-38, %v1555
  %v1557 = vsel %vm1554, %v1556, %v1552
  %v1558 = vmul.f32 1.0, %v1557
  %v1559 = vtanh.pop %v1539
  %v1561 = vrot.slane %v1504, 4
  %v1563 = vmul.f32 %v1558, %v1561
  %1565 = vrot.lane.b32.xlu0 %v1559, 64
  %v1566 = vpop.permute.xlu0 %1565
  %v1568 = vmul.f32 %v1558, %v1566
  %1570 = vrot.lane.b32.xlu0 %v1568, 32
  %v1571 = vpop.permute.xlu0 %1570
  %v1573 = vadd.f32 %v1563, %v1571
  %v1574 = vtanh.pop %v1573
  %1576 = vrot.lane.b32.xlu0 %v1574, 64
  %v1577 = vpop.permute.xlu0 %1576
  %v1579 = vmul.f32 %v1558, %v1577
  %v1581 = vrot.slane %v1579, 4
  %1582 = vrot.lane.b32.xlu0 %v1581, 32
  %v1583 = vpop.permute.xlu0 %1582
  %v1584 = vsel %vm232, %v1583, 0
  %1586 = vmatpush.msra.mxu0 0.0
  %1587 = vmatpush.msra.mxu0 0.0
  %1588 = vmatpush.msra.mxu0 0.0
  %1589 = vmatpush.msra.mxu0 0.0
  %1590 = vmatpush.msra.mxu0 0.0
  %1591 = vmatpush.msra.mxu0 0.0
  %1592 = vmatpush.msra.mxu0 0.0
  %1593 = vmatpush.msra.mxu0 0.0
  %1594 = vmatpush.msra.mxu0 0.0
  %1595 = vmatpush.msra.mxu0 0.0
  %1596 = vmatpush.msra.mxu0 0.0
  %1597 = vmatpush.msra.mxu0 0.0
  %1598 = vmatpush.msra.mxu0 %v1448
  %1599 = vmatpush.msra.mxu0 %v1447
  %1600 = vmatpush.msra.mxu0 %v1446
  %1601 = vmatpush.msra.mxu0 %v1445
  %1602 = vmatmul.f32.gmra.mxu0 %v1584
  %v1603 = vpop.f32.mrf.mxu0
  %v1604 = vadd.f32 0.0, %v1603
  %1605 = vdwg.mxu0
  %v1606 = vadd.f32 %v1408, %v1604
  %v1607 = vxor.u32 %v1606, 2147483648
  %v1608 = vmul.f32 %v1607, 1.442695
  %v1609 = vpow.pop %v1608
  %v1610 = vadd.f32 %v1609, 1.0
  %v1611 = vrcp.pop %v1610
  %v1612 = vmul.f32 %v1610, %v1611
  %v1613 = vsub.f32 1.0, %v1612
  %v1614 = vmul.f32 %v1611, %v1613
  %v1615 = vadd.f32 %v1611, %v1614
  %vm1616 = vweird.f32 %v1610
  %vm1617 = vweird.f32 %v1611
  %vm1618 = vmor %vm1616, %vm1617
  %v1619 = vsel %vm1618, %v1611, %v1615
  %v1620 = vand.u32 2147483647, %v1610
  %vm1621 = vcmp.eq.f32.partialorder %v1620, 8.507059e+37
  %v1622 = vand.u32 %v1610, 2147483648
  %v1623 = vor.u32 1.1754944e-38, %v1622
  %v1624 = vsel %vm1621, %v1623, %v1619
  %v1625 = vmul.f32 1.0, %v1624
  %v1626 = vtanh.pop %v1606
  %v1628 = vrot.slane %v1573, 4
  %v1630 = vmul.f32 %v1625, %v1628
  %1632 = vrot.lane.b32.xlu0 %v1626, 64
  %v1633 = vpop.permute.xlu0 %1632
  %v1635 = vmul.f32 %v1625, %v1633
  %1637 = vrot.lane.b32.xlu0 %v1635, 32
  %v1638 = vpop.permute.xlu0 %1637
  %v1640 = vadd.f32 %v1630, %v1638
  %v1641 = vtanh.pop %v1640
  %1643 = vrot.lane.b32.xlu0 %v1641, 64
  %v1644 = vpop.permute.xlu0 %1643
  %v1646 = vmul.f32 %v1625, %v1644
  %1648 = vrot.lane.b32.xlu0 %v1646, 32
  %v1649 = vpop.permute.xlu0 %1648
  %v1650 = vsel %vm232, %v1649, 0
  %1652 = vmatpush.msra.mxu0 0.0
  %1653 = vmatpush.msra.mxu0 0.0
  %1654 = vmatpush.msra.mxu0 0.0
  %1655 = vmatpush.msra.mxu0 0.0
  %1656 = vmatpush.msra.mxu0 0.0
  %1657 = vmatpush.msra.mxu0 0.0
  %1658 = vmatpush.msra.mxu0 0.0
  %1659 = vmatpush.msra.mxu0 0.0
  %1660 = vmatpush.msra.mxu0 0.0
  %1661 = vmatpush.msra.mxu0 0.0
  %1662 = vmatpush.msra.mxu0 0.0
  %1663 = vmatpush.msra.mxu0 0.0
  %1664 = vmatpush.msra.mxu0 %v1448
  %1665 = vmatpush.msra.mxu0 %v1447
  %1666 = vmatpush.msra.mxu0 %v1446
  %1667 = vmatpush.msra.mxu0 %v1445
  %1668 = vmatmul.f32.gmra.mxu0 %v1650
  %v1669 = vpop.f32.mrf.mxu0
  %v1670 = vadd.f32 0.0, %v1669
  %1671 = vdwg.mxu0
  %v1673 = vrot.slane %v1670, 4
  %v1675 = vadd.f32 %v1408, %v1673
  %v1676 = vxor.u32 %v1675, 2147483648
  %v1677 = vmul.f32 %v1676, 1.442695
  %v1678 = vpow.pop %v1677
  %v1679 = vadd.f32 %v1678, 1.0
  %v1680 = vrcp.pop %v1679
  %v1681 = vmul.f32 %v1679, %v1680
  %v1682 = vsub.f32 1.0, %v1681
  %v1683 = vmul.f32 %v1680, %v1682
  %v1684 = vadd.f32 %v1680, %v1683
  %vm1685 = vweird.f32 %v1679
  %vm1686 = vweird.f32 %v1680
  %vm1687 = vmor %vm1685, %vm1686
  %v1688 = vsel %vm1687, %v1680, %v1684
  %v1689 = vand.u32 2147483647, %v1679
  %vm1690 = vcmp.eq.f32.partialorder %v1689, 8.507059e+37
  %v1691 = vand.u32 %v1679, 2147483648
  %v1692 = vor.u32 1.1754944e-38, %v1691
  %v1693 = vsel %vm1690, %v1692, %v1688
  %v1694 = vmul.f32 1.0, %v1693
  %v1695 = vtanh.pop %v1675
  %v1697 = vrot.slane %v1640, 4
  %v1699 = vmul.f32 %v1694, %v1697
  %1701 = vrot.lane.b32.xlu0 %v1695, 64
  %v1702 = vpop.permute.xlu0 %1701
  %v1704 = vmul.f32 %v1694, %v1702
  %1706 = vrot.lane.b32.xlu0 %v1704, 32
  %v1707 = vpop.permute.xlu0 %1706
  %v1709 = vadd.f32 %v1699, %v1707
  %v1710 = vtanh.pop %v1709
  %1712 = vrot.lane.b32.xlu0 %v1710, 64
  %v1713 = vpop.permute.xlu0 %1712
  %v1715 = vmul.f32 %v1694, %v1713
  %v1717 = vrot.slane %v1715, 4
  %1718 = vrot.lane.b32.xlu0 %v1717, 32
  %v1719 = vpop.permute.xlu0 %1718
  %v1720 = vsel %vm232, %v1719, 0
  %1722 = vmatpush.msra.mxu0 0.0
  %1723 = vmatpush.msra.mxu0 0.0
  %1724 = vmatpush.msra.mxu0 0.0
  %1725 = vmatpush.msra.mxu0 0.0
  %1726 = vmatpush.msra.mxu0 0.0
  %1727 = vmatpush.msra.mxu0 0.0
  %1728 = vmatpush.msra.mxu0 0.0
  %1729 = vmatpush.msra.mxu0 0.0
  %1730 = vmatpush.msra.mxu0 0.0
  %1731 = vmatpush.msra.mxu0 0.0
  %1732 = vmatpush.msra.mxu0 0.0
  %1733 = vmatpush.msra.mxu0 0.0
  %1734 = vmatpush.msra.mxu0 %v1448
  %1735 = vmatpush.msra.mxu0 %v1447
  %1736 = vmatpush.msra.mxu0 %v1446
  %1737 = vmatpush.msra.mxu0 %v1445
  %1738 = vmatmul.f32.gmra.mxu0 %v1720
  %v1739 = vpop.f32.mrf.mxu0
  %v1740 = vadd.f32 0.0, %v1739
  %1741 = vdwg.mxu0
  %v1742 = vadd.f32 %v1411, %v1740
  %v1743 = vxor.u32 %v1742, 2147483648
  %v1744 = vmul.f32 %v1743, 1.442695
  %v1745 = vpow.pop %v1744
  %v1746 = vadd.f32 %v1745, 1.0
  %v1747 = vrcp.pop %v1746
  %v1748 = vmul.f32 %v1746, %v1747
  %v1749 = vsub.f32 1.0, %v1748
  %v1750 = vmul.f32 %v1747, %v1749
  %v1751 = vadd.f32 %v1747, %v1750
  %vm1752 = vweird.f32 %v1746
  %vm1753 = vweird.f32 %v1747
  %vm1754 = vmor %vm1752, %vm1753
  %v1755 = vsel %vm1754, %v1747, %v1751
  %v1756 = vand.u32 2147483647, %v1746
  %vm1757 = vcmp.eq.f32.partialorder %v1756, 8.507059e+37
  %v1758 = vand.u32 %v1746, 2147483648
  %v1759 = vor.u32 1.1754944e-38, %v1758
  %v1760 = vsel %vm1757, %v1759, %v1755
  %v1761 = vmul.f32 1.0, %v1760
  %v1762 = vtanh.pop %v1742
  %v1764 = vrot.slane %v1709, 4
  %v1766 = vmul.f32 %v1761, %v1764
  %1768 = vrot.lane.b32.xlu0 %v1762, 64
  %v1769 = vpop.permute.xlu0 %1768
  %v1771 = vmul.f32 %v1761, %v1769
  %1773 = vrot.lane.b32.xlu0 %v1771, 32
  %v1774 = vpop.permute.xlu0 %1773
  %v1776 = vadd.f32 %v1766, %v1774
  %v1777 = vtanh.pop %v1776
  %1779 = vrot.lane.b32.xlu0 %v1777, 64
  %v1780 = vpop.permute.xlu0 %1779
  %v1782 = vmul.f32 %v1761, %v1780
  %1784 = vrot.lane.b32.xlu0 %v1782, 32
  %v1785 = vpop.permute.xlu0 %1784
  %v1786 = vsel %vm232, %v1785, 0
  %1788 = vmatpush.msra.mxu0 0.0
  %1789 = vmatpush.msra.mxu0 0.0
  %1790 = vmatpush.msra.mxu0 0.0
  %1791 = vmatpush.msra.mxu0 0.0
  %1792 = vmatpush.msra.mxu0 0.0
  %1793 = vmatpush.msra.mxu0 0.0
  %1794 = vmatpush.msra.mxu0 0.0
  %1795 = vmatpush.msra.mxu0 0.0
  %1796 = vmatpush.msra.mxu0 0.0
  %1797 = vmatpush.msra.mxu0 0.0
  %1798 = vmatpush.msra.mxu0 0.0
  %1799 = vmatpush.msra.mxu0 0.0
  %1800 = vmatpush.msra.mxu0 %v1448
  %1801 = vmatpush.msra.mxu0 %v1447
  %1802 = vmatpush.msra.mxu0 %v1446
  %1803 = vmatpush.msra.mxu0 %v1445
  %1804 = vmatmul.f32.gmra.mxu0 %v1786
  %v1805 = vpop.f32.mrf.mxu0
  %v1806 = vadd.f32 0.0, %v1805
  %1807 = vdwg.mxu0
  %v1809 = vrot.slane %v1806, 4
  %v1811 = vadd.f32 %v1411, %v1809
  %v1812 = vxor.u32 %v1811, 2147483648
  %v1813 = vmul.f32 %v1812, 1.442695
  %v1814 = vpow.pop %v1813
  %v1815 = vadd.f32 %v1814, 1.0
  %v1816 = vrcp.pop %v1815
  %v1817 = vmul.f32 %v1815, %v1816
  %v1818 = vsub.f32 1.0, %v1817
  %v1819 = vmul.f32 %v1816, %v1818
  %v1820 = vadd.f32 %v1816, %v1819
  %vm1821 = vweird.f32 %v1815
  %vm1822 = vweird.f32 %v1816
  %vm1823 = vmor %vm1821, %vm1822
  %v1824 = vsel %vm1823, %v1816, %v1820
  %v1825 = vand.u32 2147483647, %v1815
  %vm1826 = vcmp.eq.f32.partialorder %v1825, 8.507059e+37
  %v1827 = vand.u32 %v1815, 2147483648
  %v1828 = vor.u32 1.1754944e-38, %v1827
  %v1829 = vsel %vm1826, %v1828, %v1824
  %v1830 = vmul.f32 1.0, %v1829
  %v1831 = vtanh.pop %v1811
  %v1833 = vrot.slane %v1776, 4
  %v1835 = vmul.f32 %v1830, %v1833
  %1837 = vrot.lane.b32.xlu0 %v1831, 64
  %v1838 = vpop.permute.xlu0 %1837
  %v1840 = vmul.f32 %v1830, %v1838
  %1842 = vrot.lane.b32.xlu0 %v1840, 32
  %v1843 = vpop.permute.xlu0 %1842
  %v1845 = vadd.f32 %v1835, %v1843
  %v1846 = vtanh.pop %v1845
  %1848 = vrot.lane.b32.xlu0 %v1846, 64
  %v1849 = vpop.permute.xlu0 %1848
  %v1851 = vmul.f32 %v1830, %v1849
  %v1853 = vrot.slane %v1851, 4
  %1854 = vrot.lane.b32.xlu0 %v1853, 32
  %v1855 = vpop.permute.xlu0 %1854
  %v1856 = vsel %vm232, %v1855, 0
  %1858 = vmatpush.msra.mxu0 0.0
  %1859 = vmatpush.msra.mxu0 0.0
  %1860 = vmatpush.msra.mxu0 0.0
  %1861 = vmatpush.msra.mxu0 0.0
  %1862 = vmatpush.msra.mxu0 0.0
  %1863 = vmatpush.msra.mxu0 0.0
  %1864 = vmatpush.msra.mxu0 0.0
  %1865 = vmatpush.msra.mxu0 0.0
  %1866 = vmatpush.msra.mxu0 0.0
  %1867 = vmatpush.msra.mxu0 0.0
  %1868 = vmatpush.msra.mxu0 0.0
  %1869 = vmatpush.msra.mxu0 0.0
  %1870 = vmatpush.msra.mxu0 %v1448
  %1871 = vmatpush.msra.mxu0 %v1447
  %1872 = vmatpush.msra.mxu0 %v1446
  %1873 = vmatpush.msra.mxu0 %v1445
  %1874 = vmatmul.f32.gmra.mxu0 %v1856
  %v1875 = vpop.f32.mrf.mxu0
  %v1876 = vadd.f32 0.0, %v1875
  %1877 = vdwg.mxu0
  %v1878 = vadd.f32 %v1414, %v1876
  %v1879 = vxor.u32 %v1878, 2147483648
  %v1880 = vmul.f32 %v1879, 1.442695
  %v1881 = vpow.pop %v1880
  %v1882 = vadd.f32 %v1881, 1.0
  %v1883 = vrcp.pop %v1882
  %v1884 = vmul.f32 %v1882, %v1883
  %v1885 = vsub.f32 1.0, %v1884
  %v1886 = vmul.f32 %v1883, %v1885
  %v1887 = vadd.f32 %v1883, %v1886
  %vm1888 = vweird.f32 %v1882
  %vm1889 = vweird.f32 %v1883
  %vm1890 = vmor %vm1888, %vm1889
  %v1891 = vsel %vm1890, %v1883, %v1887
  %v1892 = vand.u32 2147483647, %v1882
  %vm1893 = vcmp.eq.f32.partialorder %v1892, 8.507059e+37
  %v1894 = vand.u32 %v1882, 2147483648
  %v1895 = vor.u32 1.1754944e-38, %v1894
  %v1896 = vsel %vm1893, %v1895, %v1891
  %v1897 = vmul.f32 1.0, %v1896
  %v1898 = vtanh.pop %v1878
  %v1900 = vrot.slane %v1845, 4
  %v1902 = vmul.f32 %v1897, %v1900
  %1904 = vrot.lane.b32.xlu0 %v1898, 64
  %v1905 = vpop.permute.xlu0 %1904
  %v1907 = vmul.f32 %v1897, %v1905
  %1909 = vrot.lane.b32.xlu0 %v1907, 32
  %v1910 = vpop.permute.xlu0 %1909
  %v1912 = vadd.f32 %v1902, %v1910
  %v1913 = vtanh.pop %v1912
  %1915 = vrot.lane.b32.xlu0 %v1913, 64
  %v1916 = vpop.permute.xlu0 %1915
  %v1918 = vmul.f32 %v1897, %v1916
  %1920 = vrot.lane.b32.xlu0 %v1918, 32
  %v1921 = vpop.permute.xlu0 %1920
  %v1922 = vsel %vm232, %v1921, 0
  %1924 = vmatpush.msra.mxu0 0.0
  %1925 = vmatpush.msra.mxu0 0.0
  %1926 = vmatpush.msra.mxu0 0.0
  %1927 = vmatpush.msra.mxu0 0.0
  %1928 = vmatpush.msra.mxu0 0.0
  %1929 = vmatpush.msra.mxu0 0.0
  %1930 = vmatpush.msra.mxu0 0.0
  %1931 = vmatpush.msra.mxu0 0.0
  %1932 = vmatpush.msra.mxu0 0.0
  %1933 = vmatpush.msra.mxu0 0.0
  %1934 = vmatpush.msra.mxu0 0.0
  %1935 = vmatpush.msra.mxu0 0.0
  %1936 = vmatpush.msra.mxu0 %v1448
  %1937 = vmatpush.msra.mxu0 %v1447
  %1938 = vmatpush.msra.mxu0 %v1446
  %1939 = vmatpush.msra.mxu0 %v1445
  %1940 = vmatmul.f32.gmra.mxu0 %v1922
  %v1941 = vpop.f32.mrf.mxu0
  %v1942 = vadd.f32 0.0, %v1941
  %1943 = vdwg.mxu0
  %v1945 = vrot.slane %v1942, 4
  %v1947 = vadd.f32 %v1414, %v1945
  %v1948 = vxor.u32 %v1947, 2147483648
  %v1949 = vmul.f32 %v1948, 1.442695
  %v1950 = vpow.pop %v1949
  %v1951 = vadd.f32 %v1950, 1.0
  %v1952 = vrcp.pop %v1951
  %v1953 = vmul.f32 %v1951, %v1952
  %v1954 = vsub.f32 1.0, %v1953
  %v1955 = vmul.f32 %v1952, %v1954
  %v1956 = vadd.f32 %v1952, %v1955
  %vm1957 = vweird.f32 %v1951
  %vm1958 = vweird.f32 %v1952
  %vm1959 = vmor %vm1957, %vm1958
  %v1960 = vsel %vm1959, %v1952, %v1956
  %v1961 = vand.u32 2147483647, %v1951
  %vm1962 = vcmp.eq.f32.partialorder %v1961, 8.507059e+37
  %v1963 = vand.u32 %v1951, 2147483648
  %v1964 = vor.u32 1.1754944e-38, %v1963
  %v1965 = vsel %vm1962, %v1964, %v1960
  %v1966 = vmul.f32 1.0, %v1965
  %v1967 = vtanh.pop %v1947
  %v1969 = vrot.slane %v1912, 4
  %v1971 = vmul.f32 %v1966, %v1969
  %1973 = vrot.lane.b32.xlu0 %v1967, 64
  %v1974 = vpop.permute.xlu0 %1973
  %v1976 = vmul.f32 %v1966, %v1974
  %1978 = vrot.lane.b32.xlu0 %v1976, 32
  %v1979 = vpop.permute.xlu0 %1978
  %v1981 = vadd.f32 %v1971, %v1979
  %v1982 = vtanh.pop %v1981
  %1984 = vrot.lane.b32.xlu0 %v1982, 64
  %v1985 = vpop.permute.xlu0 %1984
  %v1987 = vmul.f32 %v1966, %v1985
  %1988 = vmatpush.msra.mxu0 0.0
  %1989 = vmatpush.msra.mxu0 0.0
  %1990 = vmatpush.msra.mxu0 0.0
  %1991 = vmatpush.msra.mxu0 0.0
  %1992 = vmatpush.msra.mxu0 0.0
  %1993 = vmatpush.msra.mxu0 0.0
  %1994 = vmatpush.msra.mxu0 0.0
  %1995 = vmatpush.msra.mxu0 0.0
  %1996 = vmatpush.msra.mxu0 0.0
  %1997 = vmatpush.msra.mxu0 0.0
  %1998 = vmatpush.msra.mxu0 0.0
  %1999 = vmatpush.msra.mxu0 0.0
  %2000 = vmatpush.msra.mxu0 %v1452
  %2001 = vmatpush.msra.mxu0 %v1451
  %2002 = vmatpush.msra.mxu0 %v1450
  %2003 = vmatpush.msra.mxu0 %v1449
  %2004 = vmatmul.f32.gmra.mxu0 %v234
  %v2005 = vpop.f32.mrf.mxu0
  %v2006 = vadd.f32 0.0, %v2005
  %2007 = vdwg.mxu0
  %v2009 = vrot.slane %v2006, 4
  %v2011 = vadd.f32 %v1443, %v2009
  %v2012 = vxor.u32 %v2011, 2147483648
  %v2013 = vmul.f32 %v2012, 1.442695
  %v2014 = vpow.pop %v2013
  %v2015 = vadd.f32 %v2014, 1.0
  %v2016 = vrcp.pop %v2015
  %v2017 = vmul.f32 %v2015, %v2016
  %v2018 = vsub.f32 1.0, %v2017
  %v2019 = vmul.f32 %v2016, %v2018
  %v2020 = vadd.f32 %v2016, %v2019
  %vm2021 = vweird.f32 %v2015
  %vm2022 = vweird.f32 %v2016
  %vm2023 = vmor %vm2021, %vm2022
  %v2024 = vsel %vm2023, %v2016, %v2020
  %v2025 = vand.u32 2147483647, %v2015
  %vm2026 = vcmp.eq.f32.partialorder %v2025, 8.507059e+37
  %v2027 = vand.u32 %v2015, 2147483648
  %v2028 = vor.u32 1.1754944e-38, %v2027
  %v2029 = vsel %vm2026, %v2028, %v2024
  %v2030 = vmul.f32 1.0, %v2029
  %v2031 = vtanh.pop %v2011
  %v2032 = vmul.f32 %v2030, 0.0
  %2034 = vrot.lane.b32.xlu0 %v2031, 64
  %v2035 = vpop.permute.xlu0 %2034
  %v2037 = vmul.f32 %v2030, %v2035
  %2039 = vrot.lane.b32.xlu0 %v2037, 32
  %v2040 = vpop.permute.xlu0 %2039
  %v2042 = vadd.f32 %v2032, %v2040
  %v2043 = vtanh.pop %v2042
  %2045 = vrot.lane.b32.xlu0 %v2043, 64
  %v2046 = vpop.permute.xlu0 %2045
  %v2048 = vmul.f32 %v2030, %v2046
  %v2050 = vrot.slane %v2048, 4
  %2051 = vrot.lane.b32.xlu0 %v2050, 32
  %v2052 = vpop.permute.xlu0 %2051
  %v2053 = vsel %vm232, %v2052, 0
  %2055 = vmatpush.msra.mxu0 0.0
  %2056 = vmatpush.msra.mxu0 0.0
  %2057 = vmatpush.msra.mxu0 0.0
  %2058 = vmatpush.msra.mxu0 0.0
  %2059 = vmatpush.msra.mxu0 0.0
  %2060 = vmatpush.msra.mxu0 0.0
  %2061 = vmatpush.msra.mxu0 0.0
  %2062 = vmatpush.msra.mxu0 0.0
  %2063 = vmatpush.msra.mxu0 0.0
  %2064 = vmatpush.msra.mxu0 0.0
  %2065 = vmatpush.msra.mxu0 0.0
  %2066 = vmatpush.msra.mxu0 0.0
  %2067 = vmatpush.msra.mxu0 %v1452
  %2068 = vmatpush.msra.mxu0 %v1451
  %2069 = vmatpush.msra.mxu0 %v1450
  %2070 = vmatpush.msra.mxu0 %v1449
  %2071 = vmatmul.f32.gmra.mxu0 %v2053
  %v2072 = vpop.f32.mrf.mxu0
  %v2073 = vadd.f32 0.0, %v2072
  %2074 = vdwg.mxu0
  %v2075 = vadd.f32 %v1443, %v2073
  %v2076 = vxor.u32 %v2075, 2147483648
  %v2077 = vmul.f32 %v2076, 1.442695
  %v2078 = vpow.pop %v2077
  %v2079 = vadd.f32 %v2078, 1.0
  %v2080 = vrcp.pop %v2079
  %v2081 = vmul.f32 %v2079, %v2080
  %v2082 = vsub.f32 1.0, %v2081
  %v2083 = vmul.f32 %v2080, %v2082
  %v2084 = vadd.f32 %v2080, %v2083
  %vm2085 = vweird.f32 %v2079
  %vm2086 = vweird.f32 %v2080
  %vm2087 = vmor %vm2085, %vm2086
  %v2088 = vsel %vm2087, %v2080, %v2084
  %v2089 = vand.u32 2147483647, %v2079
  %vm2090 = vcmp.eq.f32.partialorder %v2089, 8.507059e+37
  %v2091 = vand.u32 %v2079, 2147483648
  %v2092 = vor.u32 1.1754944e-38, %v2091
  %v2093 = vsel %vm2090, %v2092, %v2088
  %v2094 = vmul.f32 1.0, %v2093
  %v2095 = vtanh.pop %v2075
  %v2097 = vrot.slane %v2042, 4
  %v2099 = vmul.f32 %v2094, %v2097
  %2101 = vrot.lane.b32.xlu0 %v2095, 64
  %v2102 = vpop.permute.xlu0 %2101
  %v2104 = vmul.f32 %v2094, %v2102
  %2106 = vrot.lane.b32.xlu0 %v2104, 32
  %v2107 = vpop.permute.xlu0 %2106
  %v2109 = vadd.f32 %v2099, %v2107
  %v2110 = vtanh.pop %v2109
  %2112 = vrot.lane.b32.xlu0 %v2110, 64
  %v2113 = vpop.permute.xlu0 %2112
  %v2115 = vmul.f32 %v2094, %v2113
  %2117 = vrot.lane.b32.xlu0 %v2115, 32
  %v2118 = vpop.permute.xlu0 %2117
  %v2119 = vsel %vm232, %v2118, 0
  %2121 = vmatpush.msra.mxu0 0.0
  %2122 = vmatpush.msra.mxu0 0.0
  %2123 = vmatpush.msra.mxu0 0.0
  %2124 = vmatpush.msra.mxu0 0.0
  %2125 = vmatpush.msra.mxu0 0.0
  %2126 = vmatpush.msra.mxu0 0.0
  %2127 = vmatpush.msra.mxu0 0.0
  %2128 = vmatpush.msra.mxu0 0.0
  %2129 = vmatpush.msra.mxu0 0.0
  %2130 = vmatpush.msra.mxu0 0.0
  %2131 = vmatpush.msra.mxu0 0.0
  %2132 = vmatpush.msra.mxu0 0.0
  %2133 = vmatpush.msra.mxu0 %v1452
  %2134 = vmatpush.msra.mxu0 %v1451
  %2135 = vmatpush.msra.mxu0 %v1450
  %2136 = vmatpush.msra.mxu0 %v1449
  %2137 = vmatmul.f32.gmra.mxu0 %v2119
  %v2138 = vpop.f32.mrf.mxu0
  %v2139 = vadd.f32 0.0, %v2138
  %2140 = vdwg.mxu0
  %v2142 = vrot.slane %v2139, 4
  %v2144 = vadd.f32 %v1440, %v2142
  %v2145 = vxor.u32 %v2144, 2147483648
  %v2146 = vmul.f32 %v2145, 1.442695
  %v2147 = vpow.pop %v2146
  %v2148 = vadd.f32 %v2147, 1.0
  %v2149 = vrcp.pop %v2148
  %v2150 = vmul.f32 %v2148, %v2149
  %v2151 = vsub.f32 1.0, %v2150
  %v2152 = vmul.f32 %v2149, %v2151
  %v2153 = vadd.f32 %v2149, %v2152
  %vm2154 = vweird.f32 %v2148
  %vm2155 = vweird.f32 %v2149
  %vm2156 = vmor %vm2154, %vm2155
  %v2157 = vsel %vm2156, %v2149, %v2153
  %v2158 = vand.u32 2147483647, %v2148
  %vm2159 = vcmp.eq.f32.partialorder %v2158, 8.507059e+37
  %v2160 = vand.u32 %v2148, 2147483648
  %v2161 = vor.u32 1.1754944e-38, %v2160
  %v2162 = vsel %vm2159, %v2161, %v2157
  %v2163 = vmul.f32 1.0, %v2162
  %v2164 = vtanh.pop %v2144
  %v2166 = vrot.slane %v2109, 4
  %v2168 = vmul.f32 %v2163, %v2166
  %2170 = vrot.lane.b32.xlu0 %v2164, 64
  %v2171 = vpop.permute.xlu0 %2170
  %v2173 = vmul.f32 %v2163, %v2171
  %2175 = vrot.lane.b32.xlu0 %v2173, 32
  %v2176 = vpop.permute.xlu0 %2175
  %v2178 = vadd.f32 %v2168, %v2176
  %v2179 = vtanh.pop %v2178
  %2181 = vrot.lane.b32.xlu0 %v2179, 64
  %v2182 = vpop.permute.xlu0 %2181
  %v2184 = vmul.f32 %v2163, %v2182
  %v2186 = vrot.slane %v2184, 4
  %2187 = vrot.lane.b32.xlu0 %v2186, 32
  %v2188 = vpop.permute.xlu0 %2187
  %v2189 = vsel %vm232, %v2188, 0
  %2191 = vmatpush.msra.mxu0 0.0
  %2192 = vmatpush.msra.mxu0 0.0
  %2193 = vmatpush.msra.mxu0 0.0
  %2194 = vmatpush.msra.mxu0 0.0
  %2195 = vmatpush.msra.mxu0 0.0
  %2196 = vmatpush.msra.mxu0 0.0
  %2197 = vmatpush.msra.mxu0 0.0
  %2198 = vmatpush.msra.mxu0 0.0
  %2199 = vmatpush.msra.mxu0 0.0
  %2200 = vmatpush.msra.mxu0 0.0
  %2201 = vmatpush.msra.mxu0 0.0
  %2202 = vmatpush.msra.mxu0 0.0
  %2203 = vmatpush.msra.mxu0 %v1452
  %2204 = vmatpush.msra.mxu0 %v1451
  %2205 = vmatpush.msra.mxu0 %v1450
  %2206 = vmatpush.msra.mxu0 %v1449
  %2207 = vmatmul.f32.gmra.mxu0 %v2189
  %v2208 = vpop.f32.mrf.mxu0
  %v2209 = vadd.f32 0.0, %v2208
  %2210 = vdwg.mxu0
  %v2211 = vadd.f32 %v1440, %v2209
  %v2212 = vxor.u32 %v2211, 2147483648
  %v2213 = vmul.f32 %v2212, 1.442695
  %v2214 = vpow.pop %v2213
  %v2215 = vadd.f32 %v2214, 1.0
  %v2216 = vrcp.pop %v2215
  %v2217 = vmul.f32 %v2215, %v2216
  %v2218 = vsub.f32 1.0, %v2217
  %v2219 = vmul.f32 %v2216, %v2218
  %v2220 = vadd.f32 %v2216, %v2219
  %vm2221 = vweird.f32 %v2215
  %vm2222 = vweird.f32 %v2216
  %vm2223 = vmor %vm2221, %vm2222
  %v2224 = vsel %vm2223, %v2216, %v2220
  %v2225 = vand.u32 2147483647, %v2215
  %vm2226 = vcmp.eq.f32.partialorder %v2225, 8.507059e+37
  %v2227 = vand.u32 %v2215, 2147483648
  %v2228 = vor.u32 1.1754944e-38, %v2227
  %v2229 = vsel %vm2226, %v2228, %v2224
  %v2230 = vmul.f32 1.0, %v2229
  %v2231 = vtanh.pop %v2211
  %v2233 = vrot.slane %v2178, 4
  %v2235 = vmul.f32 %v2230, %v2233
  %2237 = vrot.lane.b32.xlu0 %v2231, 64
  %v2238 = vpop.permute.xlu0 %2237
  %v2240 = vmul.f32 %v2230, %v2238
  %2242 = vrot.lane.b32.xlu0 %v2240, 32
  %v2243 = vpop.permute.xlu0 %2242
  %v2245 = vadd.f32 %v2235, %v2243
  %v2246 = vtanh.pop %v2245
  %2248 = vrot.lane.b32.xlu0 %v2246, 64
  %v2249 = vpop.permute.xlu0 %2248
  %v2251 = vmul.f32 %v2230, %v2249
  %2253 = vrot.lane.b32.xlu0 %v2251, 32
  %v2254 = vpop.permute.xlu0 %2253
  %v2255 = vsel %vm232, %v2254, 0
  %2257 = vmatpush.msra.mxu0 0.0
  %2258 = vmatpush.msra.mxu0 0.0
  %2259 = vmatpush.msra.mxu0 0.0
  %2260 = vmatpush.msra.mxu0 0.0
  %2261 = vmatpush.msra.mxu0 0.0
  %2262 = vmatpush.msra.mxu0 0.0
  %2263 = vmatpush.msra.mxu0 0.0
  %2264 = vmatpush.msra.mxu0 0.0
  %2265 = vmatpush.msra.mxu0 0.0
  %2266 = vmatpush.msra.mxu0 0.0
  %2267 = vmatpush.msra.mxu0 0.0
  %2268 = vmatpush.msra.mxu0 0.0
  %2269 = vmatpush.msra.mxu0 %v1452
  %2270 = vmatpush.msra.mxu0 %v1451
  %2271 = vmatpush.msra.mxu0 %v1450
  %2272 = vmatpush.msra.mxu0 %v1449
  %2273 = vmatmul.f32.gmra.mxu0 %v2255
  %v2274 = vpop.f32.mrf.mxu0
  %v2275 = vadd.f32 0.0, %v2274
  %2276 = vdwg.mxu0
  %v2278 = vrot.slane %v2275, 4
  %v2280 = vadd.f32 %v1437, %v2278
  %v2281 = vxor.u32 %v2280, 2147483648
  %v2282 = vmul.f32 %v2281, 1.442695
  %v2283 = vpow.pop %v2282
  %v2284 = vadd.f32 %v2283, 1.0
  %v2285 = vrcp.pop %v2284
  %v2286 = vmul.f32 %v2284, %v2285
  %v2287 = vsub.f32 1.0, %v2286
  %v2288 = vmul.f32 %v2285, %v2287
  %v2289 = vadd.f32 %v2285, %v2288
  %vm2290 = vweird.f32 %v2284
  %vm2291 = vweird.f32 %v2285
  %vm2292 = vmor %vm2290, %vm2291
  %v2293 = vsel %vm2292, %v2285, %v2289
  %v2294 = vand.u32 2147483647, %v2284
  %vm2295 = vcmp.eq.f32.partialorder %v2294, 8.507059e+37
  %v2296 = vand.u32 %v2284, 2147483648
  %v2297 = vor.u32 1.1754944e-38, %v2296
  %v2298 = vsel %vm2295, %v2297, %v2293
  %v2299 = vmul.f32 1.0, %v2298
  %v2300 = vtanh.pop %v2280
  %v2302 = vrot.slane %v2245, 4
  %v2304 = vmul.f32 %v2299, %v2302
  %2306 = vrot.lane.b32.xlu0 %v2300, 64
  %v2307 = vpop.permute.xlu0 %2306
  %v2309 = vmul.f32 %v2299, %v2307
  %2311 = vrot.lane.b32.xlu0 %v2309, 32
  %v2312 = vpop.permute.xlu0 %2311
  %v2314 = vadd.f32 %v2304, %v2312
  %v2315 = vtanh.pop %v2314
  %2317 = vrot.lane.b32.xlu0 %v2315, 64
  %v2318 = vpop.permute.xlu0 %2317
  %v2320 = vmul.f32 %v2299, %v2318
  %v2322 = vrot.slane %v2320, 4
  %2323 = vrot.lane.b32.xlu0 %v2322, 32
  %v2324 = vpop.permute.xlu0 %2323
  %v2325 = vsel %vm232, %v2324, 0
  %2327 = vmatpush.msra.mxu0 0.0
  %2328 = vmatpush.msra.mxu0 0.0
  %2329 = vmatpush.msra.mxu0 0.0
  %2330 = vmatpush.msra.mxu0 0.0
  %2331 = vmatpush.msra.mxu0 0.0
  %2332 = vmatpush.msra.mxu0 0.0
  %2333 = vmatpush.msra.mxu0 0.0
  %2334 = vmatpush.msra.mxu0 0.0
  %2335 = vmatpush.msra.mxu0 0.0
  %2336 = vmatpush.msra.mxu0 0.0
  %2337 = vmatpush.msra.mxu0 0.0
  %2338 = vmatpush.msra.mxu0 0.0
  %2339 = vmatpush.msra.mxu0 %v1452
  %2340 = vmatpush.msra.mxu0 %v1451
  %2341 = vmatpush.msra.mxu0 %v1450
  %2342 = vmatpush.msra.mxu0 %v1449
  %2343 = vmatmul.f32.gmra.mxu0 %v2325
  %v2344 = vpop.f32.mrf.mxu0
  %v2345 = vadd.f32 0.0, %v2344
  %2346 = vdwg.mxu0
  %v2347 = vadd.f32 %v1437, %v2345
  %v2348 = vxor.u32 %v2347, 2147483648
  %v2349 = vmul.f32 %v2348, 1.442695
  %v2350 = vpow.pop %v2349
  %v2351 = vadd.f32 %v2350, 1.0
  %v2352 = vrcp.pop %v2351
  %v2353 = vmul.f32 %v2351, %v2352
  %v2354 = vsub.f32 1.0, %v2353
  %v2355 = vmul.f32 %v2352, %v2354
  %v2356 = vadd.f32 %v2352, %v2355
  %vm2357 = vweird.f32 %v2351
  %vm2358 = vweird.f32 %v2352
  %vm2359 = vmor %vm2357, %vm2358
  %v2360 = vsel %vm2359, %v2352, %v2356
  %v2361 = vand.u32 2147483647, %v2351
  %vm2362 = vcmp.eq.f32.partialorder %v2361, 8.507059e+37
  %v2363 = vand.u32 %v2351, 2147483648
  %v2364 = vor.u32 1.1754944e-38, %v2363
  %v2365 = vsel %vm2362, %v2364, %v2360
  %v2366 = vmul.f32 1.0, %v2365
  %v2367 = vtanh.pop %v2347
  %v2369 = vrot.slane %v2314, 4
  %v2371 = vmul.f32 %v2366, %v2369
  %2373 = vrot.lane.b32.xlu0 %v2367, 64
  %v2374 = vpop.permute.xlu0 %2373
  %v2376 = vmul.f32 %v2366, %v2374
  %2378 = vrot.lane.b32.xlu0 %v2376, 32
  %v2379 = vpop.permute.xlu0 %2378
  %v2381 = vadd.f32 %v2371, %v2379
  %v2382 = vtanh.pop %v2381
  %2384 = vrot.lane.b32.xlu0 %v2382, 64
  %v2385 = vpop.permute.xlu0 %2384
  %v2387 = vmul.f32 %v2366, %v2385
  %2389 = vrot.lane.b32.xlu0 %v2387, 32
  %v2390 = vpop.permute.xlu0 %2389
  %v2391 = vsel %vm232, %v2390, 0
  %2393 = vmatpush.msra.mxu0 0.0
  %2394 = vmatpush.msra.mxu0 0.0
  %2395 = vmatpush.msra.mxu0 0.0
  %2396 = vmatpush.msra.mxu0 0.0
  %2397 = vmatpush.msra.mxu0 0.0
  %2398 = vmatpush.msra.mxu0 0.0
  %2399 = vmatpush.msra.mxu0 0.0
  %2400 = vmatpush.msra.mxu0 0.0
  %2401 = vmatpush.msra.mxu0 0.0
  %2402 = vmatpush.msra.mxu0 0.0
  %2403 = vmatpush.msra.mxu0 0.0
  %2404 = vmatpush.msra.mxu0 0.0
  %2405 = vmatpush.msra.mxu0 %v1452
  %2406 = vmatpush.msra.mxu0 %v1451
  %2407 = vmatpush.msra.mxu0 %v1450
  %2408 = vmatpush.msra.mxu0 %v1449
  %2409 = vmatmul.f32.gmra.mxu0 %v2391
  %v2410 = vpop.f32.mrf.mxu0
  %v2411 = vadd.f32 0.0, %v2410
  %2412 = vdwg.mxu0
  %v2414 = vrot.slane %v2411, 4
  %v2416 = vadd.f32 %v1434, %v2414
  %v2417 = vxor.u32 %v2416, 2147483648
  %v2418 = vmul.f32 %v2417, 1.442695
  %v2419 = vpow.pop %v2418
  %v2420 = vadd.f32 %v2419, 1.0
  %v2421 = vrcp.pop %v2420
  %v2422 = vmul.f32 %v2420, %v2421
  %v2423 = vsub.f32 1.0, %v2422
  %v2424 = vmul.f32 %v2421, %v2423
  %v2425 = vadd.f32 %v2421, %v2424
  %vm2426 = vweird.f32 %v2420
  %vm2427 = vweird.f32 %v2421
  %vm2428 = vmor %vm2426, %vm2427
  %v2429 = vsel %vm2428, %v2421, %v2425
  %v2430 = vand.u32 2147483647, %v2420
  %vm2431 = vcmp.eq.f32.partialorder %v2430, 8.507059e+37
  %v2432 = vand.u32 %v2420, 2147483648
  %v2433 = vor.u32 1.1754944e-38, %v2432
  %v2434 = vsel %vm2431, %v2433, %v2429
  %v2435 = vmul.f32 1.0, %v2434
  %v2436 = vtanh.pop %v2416
  %v2438 = vrot.slane %v2381, 4
  %v2440 = vmul.f32 %v2435, %v2438
  %2442 = vrot.lane.b32.xlu0 %v2436, 64
  %v2443 = vpop.permute.xlu0 %2442
  %v2445 = vmul.f32 %v2435, %v2443
  %2447 = vrot.lane.b32.xlu0 %v2445, 32
  %v2448 = vpop.permute.xlu0 %2447
  %v2450 = vadd.f32 %v2440, %v2448
  %v2451 = vtanh.pop %v2450
  %2453 = vrot.lane.b32.xlu0 %v2451, 64
  %v2454 = vpop.permute.xlu0 %2453
  %v2456 = vmul.f32 %v2435, %v2454
  %v2458 = vrot.slane %v2456, 4
  %2459 = vrot.lane.b32.xlu0 %v2458, 32
  %v2460 = vpop.permute.xlu0 %2459
  %v2461 = vsel %vm232, %v2460, 0
  %2463 = vmatpush.msra.mxu0 0.0
  %2464 = vmatpush.msra.mxu0 0.0
  %2465 = vmatpush.msra.mxu0 0.0
  %2466 = vmatpush.msra.mxu0 0.0
  %2467 = vmatpush.msra.mxu0 0.0
  %2468 = vmatpush.msra.mxu0 0.0
  %2469 = vmatpush.msra.mxu0 0.0
  %2470 = vmatpush.msra.mxu0 0.0
  %2471 = vmatpush.msra.mxu0 0.0
  %2472 = vmatpush.msra.mxu0 0.0
  %2473 = vmatpush.msra.mxu0 0.0
  %2474 = vmatpush.msra.mxu0 0.0
  %2475 = vmatpush.msra.mxu0 %v1452
  %2476 = vmatpush.msra.mxu0 %v1451
  %2477 = vmatpush.msra.mxu0 %v1450
  %2478 = vmatpush.msra.mxu0 %v1449
  %2479 = vmatmul.f32.gmra.mxu0 %v2461
  %v2480 = vpop.f32.mrf.mxu0
  %v2481 = vadd.f32 0.0, %v2480
  %2482 = vdwg.mxu0
  %v2483 = vadd.f32 %v1434, %v2481
  %v2484 = vxor.u32 %v2483, 2147483648
  %v2485 = vmul.f32 %v2484, 1.442695
  %v2486 = vpow.pop %v2485
  %v2487 = vadd.f32 %v2486, 1.0
  %v2488 = vrcp.pop %v2487
  %v2489 = vmul.f32 %v2487, %v2488
  %v2490 = vsub.f32 1.0, %v2489
  %v2491 = vmul.f32 %v2488, %v2490
  %v2492 = vadd.f32 %v2488, %v2491
  %vm2493 = vweird.f32 %v2487
  %vm2494 = vweird.f32 %v2488
  %vm2495 = vmor %vm2493, %vm2494
  %v2496 = vsel %vm2495, %v2488, %v2492
  %v2497 = vand.u32 2147483647, %v2487
  %vm2498 = vcmp.eq.f32.partialorder %v2497, 8.507059e+37
  %v2499 = vand.u32 %v2487, 2147483648
  %v2500 = vor.u32 1.1754944e-38, %v2499
  %v2501 = vsel %vm2498, %v2500, %v2496
  %v2502 = vmul.f32 1.0, %v2501
  %v2503 = vtanh.pop %v2483
  %v2505 = vrot.slane %v2450, 4
  %v2507 = vmul.f32 %v2502, %v2505
  %2509 = vrot.lane.b32.xlu0 %v2503, 64
  %v2510 = vpop.permute.xlu0 %2509
  %v2512 = vmul.f32 %v2502, %v2510
  %2514 = vrot.lane.b32.xlu0 %v2512, 32
  %v2515 = vpop.permute.xlu0 %2514
  %v2517 = vadd.f32 %v2507, %v2515
  %v2518 = vtanh.pop %v2517
  %2520 = vrot.lane.b32.xlu0 %v2518, 64
  %v2521 = vpop.permute.xlu0 %2520
  %v2523 = vmul.f32 %v2502, %v2521
  %v2524 = vsel %vm1307, %v1510, %v1579
  %v2525 = vsel %vm1307, %v1646, %v1715
  %v2526 = vsel %vm1307, %v1782, %v1851
  %v2527 = vsel %vm1307, %v1918, %v1987
  %v2528 = vsel %vm1307, %v2523, %v2456
  %v2529 = vsel %vm1307, %v2387, %v2320
  %v2530 = vsel %vm1307, %v2251, %v2184
  %v2531 = vsel %vm1307, %v2115, %v2048
  %2536 = vrot.lane.b32.xlu0 %v2524, 32
  %v2537 = vpop.permute.xlu0 %2536
  %2538 = vrot.lane.b32.xlu0 %v2525, 32
  %v2539 = vpop.permute.xlu0 %2538
  %2540 = vrot.lane.b32.xlu0 %v2526, 32
  %v2541 = vpop.permute.xlu0 %2540
  %2542 = vrot.lane.b32.xlu0 %v2527, 32
  %v2543 = vpop.permute.xlu0 %2542
  %2552 = vrot.lane.b32.xlu0 %v2528, 64
  %v2553 = vpop.permute.xlu0 %2552
  %2554 = vrot.lane.b32.xlu0 %v2529, 64
  %v2555 = vpop.permute.xlu0 %2554
  %2556 = vrot.lane.b32.xlu0 %v2530, 64
  %v2557 = vpop.permute.xlu0 %2556
  %2558 = vrot.lane.b32.xlu0 %v2531, 64
  %v2559 = vpop.permute.xlu0 %2558
  %v2564 = vsel %vm232, %v2537, %v2553
  %v2565 = vsel %vm232, %v2539, %v2555
  %v2566 = vsel %vm232, %v2541, %v2557
  %v2567 = vsel %vm232, %v2543, %v2559
  %v2568 = vld [vmem:[%s3] sm:$0xff]
  %v2569 = vld [vmem:[%s3 + $0x8] sm:$0xff]
  %v2570 = vld [vmem:[%s3 + $0x10] sm:$0xff]
  %v2571 = vld [vmem:[%s3 + $0x18] sm:$0xff]
  %v2572 = vld [vmem:[%s23] sm:$0xff]
  %v2573 = vld [vmem:[%s23 + $0x8] sm:$0xff]
  %v2574 = vld [vmem:[%s23 + $0x10] sm:$0xff]
  %v2575 = vld [vmem:[%s23 + $0x18] sm:$0xff]
  %v2576 = vld [vmem:[%s23 + $0x20] sm:$0xff]
  %v2577 = vld [vmem:[%s23 + $0x28] sm:$0xff]
  %v2578 = vld [vmem:[%s23 + $0x30] sm:$0xff]
  %v2579 = vld [vmem:[%s23 + $0x38] sm:$0xff]
  %v2580 = vld [vmem:[%s25] sm:$0x1]
  %v2582 = vperm.slane %v2580, 0
  %v2585 = vsel %vm1374, %v2564, 0
  %v2588 = vsel %vm1374, %v2565, 0
  %v2591 = vsel %vm1374, %v2566, 0
  %v2594 = vsel %vm1374, %v2567, 0
  %2596 = vmatpush.msra.mxu0 0.0
  %2597 = vmatpush.msra.mxu0 0.0
  %2598 = vmatpush.msra.mxu0 0.0
  %2599 = vmatpush.msra.mxu0 0.0
  %2600 = vmatpush.msra.mxu0 0.0
  %2601 = vmatpush.msra.mxu0 0.0
  %2602 = vmatpush.msra.mxu0 0.0
  %2603 = vmatpush.msra.mxu0 0.0
  %2604 = vmatpush.msra.mxu0 %v2579
  %2605 = vmatpush.msra.mxu0 %v2578
  %2606 = vmatpush.msra.mxu0 %v2577
  %2607 = vmatpush.msra.mxu0 %v2576
  %2608 = vmatpush.msra.mxu0 %v2575
  %2609 = vmatpush.msra.mxu0 %v2574
  %2610 = vmatpush.msra.mxu0 %v2573
  %2611 = vmatpush.msra.mxu0 %v2572
  %2612 = vmatmul.f32.gmra.mxu0 %v2585
  %v2613 = vpop.f32.mrf.mxu0
  %v2614 = vadd.f32 %v2582, %v2613
  %2615 = vmatmul.f32.gmra.mxu0 %v2588
  %v2616 = vpop.f32.mrf.mxu0
  %v2617 = vadd.f32 %v2582, %v2616
  %2618 = vmatmul.f32.gmra.mxu0 %v2591
  %v2619 = vpop.f32.mrf.mxu0
  %v2620 = vadd.f32 %v2582, %v2619
  %2621 = vmatmul.f32.gmra.mxu0 %v2594
  %v2622 = vpop.f32.mrf.mxu0
  %v2623 = vadd.f32 %v2582, %v2622
  %2624 = vdwg.mxu0
  %v2625 = vld [vmem:[%s27] sm:$0xff]
  %v2626 = vld [vmem:[%s27 + $0x8] sm:$0xff]
  %v2627 = vld [vmem:[%s27 + $0x10] sm:$0xff]
  %v2628 = vld [vmem:[%s27 + $0x18] sm:$0xff]
  %v2629 = vld [vmem:[%s27 + $0x20] sm:$0xff]
  %v2630 = vld [vmem:[%s27 + $0x28] sm:$0xff]
  %v2631 = vld [vmem:[%s27 + $0x30] sm:$0xff]
  %v2632 = vld [vmem:[%s27 + $0x38] sm:$0xff]
  %v2633 = vld [vmem:[%s29] sm:$0x1]
  %v2635 = vperm.slane %v2633, 0
  %2637 = vmatpush.msra.mxu0 0.0
  %2638 = vmatpush.msra.mxu0 0.0
  %2639 = vmatpush.msra.mxu0 0.0
  %2640 = vmatpush.msra.mxu0 0.0
  %2641 = vmatpush.msra.mxu0 0.0
  %2642 = vmatpush.msra.mxu0 0.0
  %2643 = vmatpush.msra.mxu0 0.0
  %2644 = vmatpush.msra.mxu0 0.0
  %2645 = vmatpush.msra.mxu0 %v2632
  %2646 = vmatpush.msra.mxu0 %v2631
  %2647 = vmatpush.msra.mxu0 %v2630
  %2648 = vmatpush.msra.mxu0 %v2629
  %2649 = vmatpush.msra.mxu0 %v2628
  %2650 = vmatpush.msra.mxu0 %v2627
  %2651 = vmatpush.msra.mxu0 %v2626
  %2652 = vmatpush.msra.mxu0 %v2625
  %2653 = vmatmul.f32.gmra.mxu0 %v2585
  %v2654 = vpop.f32.mrf.mxu0
  %v2655 = vadd.f32 %v2635, %v2654
  %2656 = vmatmul.f32.gmra.mxu0 %v2588
  %v2657 = vpop.f32.mrf.mxu0
  %v2658 = vadd.f32 %v2635, %v2657
  %2659 = vmatmul.f32.gmra.mxu0 %v2591
  %v2660 = vpop.f32.mrf.mxu0
  %v2661 = vadd.f32 %v2635, %v2660
  %2662 = vmatmul.f32.gmra.mxu0 %v2594
  %v2663 = vpop.f32.mrf.mxu0
  %v2664 = vadd.f32 %v2635, %v2663
  %2665 = vdwg.mxu0
  %v2666 = vld [vmem:[%s31] sm:$0xff]
  %v2667 = vld [vmem:[%s31 + $0x8] sm:$0xff]
  %v2668 = vld [vmem:[%s31 + $0x10] sm:$0xff]
  %v2669 = vld [vmem:[%s31 + $0x18] sm:$0xff]
  %v2670 = vld [vmem:[%s31 + $0x20] sm:$0xff]
  %v2671 = vld [vmem:[%s31 + $0x28] sm:$0xff]
  %v2672 = vld [vmem:[%s31 + $0x30] sm:$0xff]
  %v2673 = vld [vmem:[%s31 + $0x38] sm:$0xff]
  %v2674 = vld [vmem:[%s33] sm:$0x1]
  %v2676 = vperm.slane %v2674, 0
  %2678 = vmatpush.msra.mxu0 0.0
  %2679 = vmatpush.msra.mxu0 0.0
  %2680 = vmatpush.msra.mxu0 0.0
  %2681 = vmatpush.msra.mxu0 0.0
  %2682 = vmatpush.msra.mxu0 0.0
  %2683 = vmatpush.msra.mxu0 0.0
  %2684 = vmatpush.msra.mxu0 0.0
  %2685 = vmatpush.msra.mxu0 0.0
  %2686 = vmatpush.msra.mxu0 %v2673
  %2687 = vmatpush.msra.mxu0 %v2672
  %2688 = vmatpush.msra.mxu0 %v2671
  %2689 = vmatpush.msra.mxu0 %v2670
  %2690 = vmatpush.msra.mxu0 %v2669
  %2691 = vmatpush.msra.mxu0 %v2668
  %2692 = vmatpush.msra.mxu0 %v2667
  %2693 = vmatpush.msra.mxu0 %v2666
  %2694 = vmatmul.f32.gmra.mxu0 %v2585
  %v2695 = vpop.f32.mrf.mxu0
  %v2696 = vadd.f32 %v2676, %v2695
  %2697 = vmatmul.f32.gmra.mxu0 %v2588
  %v2698 = vpop.f32.mrf.mxu0
  %v2699 = vadd.f32 %v2676, %v2698
  %2700 = vmatmul.f32.gmra.mxu0 %v2591
  %v2701 = vpop.f32.mrf.mxu0
  %v2702 = vadd.f32 %v2676, %v2701
  %2703 = vmatmul.f32.gmra.mxu0 %v2594
  %v2704 = vpop.f32.mrf.mxu0
  %v2705 = vadd.f32 %v2676, %v2704
  %2706 = vdwg.mxu0
  %vm2707 = vcmask 130048
  %v2709 = vsel %vm2707, %v2614, 0
  %v2712 = vsel %vm2707, %v2617, 0
  %v2715 = vsel %vm2707, %v2620, 0
  %v2718 = vsel %vm2707, %v2623, 0
  %v2721 = vsel %vm2707, %v2655, 0
  %v2724 = vsel %vm2707, %v2658, 0
  %v2727 = vsel %vm2707, %v2661, 0
  %v2730 = vsel %vm2707, %v2664, 0
  %2732 = vmatpush.xpose.msra.mxu0 0.0
  %2733 = vmatpush.xpose.msra.mxu0 0.0
  %2734 = vmatpush.xpose.msra.mxu0 0.0
  %2735 = vmatpush.xpose.msra.mxu0 0.0
  %2736 = vmatpush.xpose.msra.mxu0 0.0
  %2737 = vmatpush.xpose.msra.mxu0 0.0
  %2738 = vmatpush.xpose.msra.mxu0 0.0
  %2739 = vmatpush.xpose.msra.mxu0 0.0
  %2740 = vmatpush.xpose.msra.mxu0 0.0
  %2741 = vmatpush.xpose.msra.mxu0 0.0
  %2742 = vmatpush.xpose.msra.mxu0 0.0
  %2743 = vmatpush.xpose.msra.mxu0 0.0
  %2744 = vmatpush.xpose.msra.mxu0 %v2730
  %2745 = vmatpush.xpose.msra.mxu0 %v2727
  %2746 = vmatpush.xpose.msra.mxu0 %v2724
  %2747 = vmatpush.xpose.msra.mxu0 %v2721
  %2748 = vmatmul.f32.gmra.mxu0 %v2709
  %v2749 = vpop.f32.mrf.mxu0
  %v2750 = vadd.f32 0.0, %v2749
  %2751 = vmatmul.f32.gmra.mxu0 %v2712
  %v2752 = vpop.f32.mrf.mxu0
  %v2753 = vadd.f32 0.0, %v2752
  %2754 = vmatmul.f32.gmra.mxu0 %v2715
  %v2755 = vpop.f32.mrf.mxu0
  %v2756 = vadd.f32 0.0, %v2755
  %2757 = vmatmul.f32.gmra.mxu0 %v2718
  %v2758 = vpop.f32.mrf.mxu0
  %v2759 = vadd.f32 0.0, %v2758
  %2760 = vdwg.mxu0
  %v2761 = vmul.f32 %v2750, 0.25
  %v2762 = vmul.f32 %v2753, 0.25
  %v2763 = vmul.f32 %v2756, 0.25
  %v2764 = vmul.f32 %v2759, 0.25
  %v2765 = vadd.f32 %v2761, %v2568
  %v2766 = vadd.f32 %v2762, %v2569
  %v2767 = vadd.f32 %v2763, %v2570
  %v2768 = vadd.f32 %v2764, %v2571
  %v2769 = vsel %vm232, %v2765, -inf
  %2770 = vmax.xlane.f32.xlu0 %v2769
  %v2771 = vpop.xlane.xlu0 %2770
  %v2772 = vsel %vm232, %v2766, -inf
  %2773 = vmax.xlane.f32.xlu0 %v2772
  %v2774 = vpop.xlane.xlu0 %2773
  %v2775 = vsel %vm232, %v2767, -inf
  %2776 = vmax.xlane.f32.xlu0 %v2775
  %v2777 = vpop.xlane.xlu0 %2776
  %v2778 = vsel %vm232, %v2768, -inf
  %2779 = vmax.xlane.f32.xlu0 %v2778
  %v2780 = vpop.xlane.xlu0 %2779
  %v2781 = vsub.f32 %v2765, %v2771
  %v2782 = vsub.f32 %v2766, %v2774
  %v2783 = vsub.f32 %v2767, %v2777
  %v2784 = vsub.f32 %v2768, %v2780
  %v2785 = vmul.f32 %v2781, 1.442695
  %v2786 = vpow.pop %v2785
  %v2787 = vmul.f32 %v2782, 1.442695
  %v2788 = vpow.pop %v2787
  %v2789 = vmul.f32 %v2783, 1.442695
  %v2790 = vpow.pop %v2789
  %v2791 = vmul.f32 %v2784, 1.442695
  %v2792 = vpow.pop %v2791
  %v2793 = vsel %vm232, %v2786, 0.0
  %2794 = vadd.xlane.f32.xlu0 %v2793
  %v2795 = vpop.xlane.xlu0 %2794
  %v2796 = vsel %vm232, %v2788, 0.0
  %2797 = vadd.xlane.f32.xlu0 %v2796
  %v2798 = vpop.xlane.xlu0 %2797
  %v2799 = vsel %vm232, %v2790, 0.0
  %2800 = vadd.xlane.f32.xlu0 %v2799
  %v2801 = vpop.xlane.xlu0 %2800
  %v2802 = vsel %vm232, %v2792, 0.0
  %2803 = vadd.xlane.f32.xlu0 %v2802
  %v2804 = vpop.xlane.xlu0 %2803
  %v2805 = vrcp.pop %v2795
  %v2806 = vmul.f32 %v2795, %v2805
  %v2807 = vsub.f32 1.0, %v2806
  %v2808 = vmul.f32 %v2805, %v2807
  %v2809 = vadd.f32 %v2805, %v2808
  %vm2810 = vweird.f32 %v2795
  %vm2811 = vweird.f32 %v2805
  %vm2812 = vmor %vm2810, %vm2811
  %v2813 = vsel %vm2812, %v2805, %v2809
  %v2814 = vand.u32 2147483647, %v2795
  %vm2815 = vcmp.eq.f32.partialorder %v2814, 8.507059e+37
  %v2816 = vand.u32 %v2795, 2147483648
  %v2817 = vor.u32 1.1754944e-38, %v2816
  %v2818 = vsel %vm2815, %v2817, %v2813
  %v2819 = vmul.f32 %v2786, %v2818
  %v2820 = vrcp.pop %v2798
  %v2821 = vmul.f32 %v2798, %v2820
  %v2822 = vsub.f32 1.0, %v2821
  %v2823 = vmul.f32 %v2820, %v2822
  %v2824 = vadd.f32 %v2820, %v2823
  %vm2825 = vweird.f32 %v2798
  %vm2826 = vweird.f32 %v2820
  %vm2827 = vmor %vm2825, %vm2826
  %v2828 = vsel %vm2827, %v2820, %v2824
  %v2829 = vand.u32 2147483647, %v2798
  %vm2830 = vcmp.eq.f32.partialorder %v2829, 8.507059e+37
  %v2831 = vand.u32 %v2798, 2147483648
  %v2832 = vor.u32 1.1754944e-38, %v2831
  %v2833 = vsel %vm2830, %v2832, %v2828
  %v2834 = vmul.f32 %v2788, %v2833
  %v2835 = vrcp.pop %v2801
  %v2836 = vmul.f32 %v2801, %v2835
  %v2837 = vsub.f32 1.0, %v2836
  %v2838 = vmul.f32 %v2835, %v2837
  %v2839 = vadd.f32 %v2835, %v2838
  %vm2840 = vweird.f32 %v2801
  %vm2841 = vweird.f32 %v2835
  %vm2842 = vmor %vm2840, %vm2841
  %v2843 = vsel %vm2842, %v2835, %v2839
  %v2844 = vand.u32 2147483647, %v2801
  %vm2845 = vcmp.eq.f32.partialorder %v2844, 8.507059e+37
  %v2846 = vand.u32 %v2801, 2147483648
  %v2847 = vor.u32 1.1754944e-38, %v2846
  %v2848 = vsel %vm2845, %v2847, %v2843
  %v2849 = vmul.f32 %v2790, %v2848
  %v2850 = vrcp.pop %v2804
  %v2851 = vmul.f32 %v2804, %v2850
  %v2852 = vsub.f32 1.0, %v2851
  %v2853 = vmul.f32 %v2850, %v2852
  %v2854 = vadd.f32 %v2850, %v2853
  %vm2855 = vweird.f32 %v2804
  %vm2856 = vweird.f32 %v2850
  %vm2857 = vmor %vm2855, %vm2856
  %v2858 = vsel %vm2857, %v2850, %v2854
  %v2859 = vand.u32 2147483647, %v2804
  %vm2860 = vcmp.eq.f32.partialorder %v2859, 8.507059e+37
  %v2861 = vand.u32 %v2804, 2147483648
  %v2862 = vor.u32 1.1754944e-38, %v2861
  %v2863 = vsel %vm2860, %v2862, %v2858
  %v2864 = vmul.f32 %v2792, %v2863
  %v2866 = vsel %vm232, %v2819, 0
  %v2869 = vsel %vm232, %v2834, 0
  %v2872 = vsel %vm232, %v2849, 0
  %v2875 = vsel %vm232, %v2864, 0
  %2877 = vmatpush.msra.mxu0 0.0
  %2878 = vmatpush.msra.mxu0 0.0
  %2879 = vmatpush.msra.mxu0 0.0
  %2880 = vmatpush.msra.mxu0 0.0
  %2881 = vmatpush.msra.mxu0 0.0
  %2882 = vmatpush.msra.mxu0 0.0
  %2883 = vmatpush.msra.mxu0 0.0
  %2884 = vmatpush.msra.mxu0 0.0
  %2885 = vmatpush.msra.mxu0 0.0
  %2886 = vmatpush.msra.mxu0 0.0
  %2887 = vmatpush.msra.mxu0 0.0
  %2888 = vmatpush.msra.mxu0 0.0
  %2889 = vmatpush.msra.mxu0 %v2705
  %2890 = vmatpush.msra.mxu0 %v2702
  %2891 = vmatpush.msra.mxu0 %v2699
  %2892 = vmatpush.msra.mxu0 %v2696
  %2893 = vmatmul.f32.gmra.mxu0 %v2866
  %v2894 = vpop.f32.mrf.mxu0
  %v2895 = vadd.f32 0.0, %v2894
  %2896 = vmatmul.f32.gmra.mxu0 %v2869
  %v2897 = vpop.f32.mrf.mxu0
  %v2898 = vadd.f32 0.0, %v2897
  %2899 = vmatmul.f32.gmra.mxu0 %v2872
  %v2900 = vpop.f32.mrf.mxu0
  %v2901 = vadd.f32 0.0, %v2900
  %2902 = vmatmul.f32.gmra.mxu0 %v2875
  %v2903 = vpop.f32.mrf.mxu0
  %v2904 = vadd.f32 0.0, %v2903
  %2905 = vdwg.mxu0
  %v2906 = vld [vmem:[%s35] sm:$0xff]
  %v2907 = vld [vmem:[%s35 + $0x8] sm:$0xff]
  %s2908 = scalar_lea.vmem %s23, 64
  %v2909 = vld [vmem:[%s2908] sm:$0xff]
  %v2910 = vld [vmem:[%s2908 + $0x8] sm:$0xff]
  %v2911 = vld [vmem:[%s2908 + $0x10] sm:$0xff]
  %v2912 = vld [vmem:[%s2908 + $0x18] sm:$0xff]
  %v2913 = vld [vmem:[%s2908 + $0x20] sm:$0xff]
  %v2914 = vld [vmem:[%s2908 + $0x28] sm:$0xff]
  %v2915 = vld [vmem:[%s2908 + $0x30] sm:$0xff]
  %v2916 = vld [vmem:[%s2908 + $0x38] sm:$0xff]
  %s2917 = scalar_lea.vmem %s25, 1
  %v2918 = vld [vmem:[%s2917] sm:$0x1]
  %v2920 = vperm.slane %v2918, 0
  %2922 = vmatpush.msra.mxu0 0.0
  %2923 = vmatpush.msra.mxu0 0.0
  %2924 = vmatpush.msra.mxu0 0.0
  %2925 = vmatpush.msra.mxu0 0.0
  %2926 = vmatpush.msra.mxu0 0.0
  %2927 = vmatpush.msra.mxu0 0.0
  %2928 = vmatpush.msra.mxu0 0.0
  %2929 = vmatpush.msra.mxu0 0.0
  %2930 = vmatpush.msra.mxu0 %v2916
  %2931 = vmatpush.msra.mxu0 %v2915
  %2932 = vmatpush.msra.mxu0 %v2914
  %2933 = vmatpush.msra.mxu0 %v2913
  %2934 = vmatpush.msra.mxu0 %v2912
  %2935 = vmatpush.msra.mxu0 %v2911
  %2936 = vmatpush.msra.mxu0 %v2910
  %2937 = vmatpush.msra.mxu0 %v2909
  %2938 = vmatmul.f32.gmra.mxu0 %v2585
  %v2939 = vpop.f32.mrf.mxu0
  %v2940 = vadd.f32 %v2920, %v2939
  %2941 = vmatmul.f32.gmra.mxu0 %v2588
  %v2942 = vpop.f32.mrf.mxu0
  %v2943 = vadd.f32 %v2920, %v2942
  %2944 = vmatmul.f32.gmra.mxu0 %v2591
  %v2945 = vpop.f32.mrf.mxu0
  %v2946 = vadd.f32 %v2920, %v2945
  %2947 = vmatmul.f32.gmra.mxu0 %v2594
  %v2948 = vpop.f32.mrf.mxu0
  %v2949 = vadd.f32 %v2920, %v2948
  %2950 = vdwg.mxu0
  %s2951 = scalar_lea.vmem %s27, 64
  %v2952 = vld [vmem:[%s2951] sm:$0xff]
  %v2953 = vld [vmem:[%s2951 + $0x8] sm:$0xff]
  %v2954 = vld [vmem:[%s2951 + $0x10] sm:$0xff]
  %v2955 = vld [vmem:[%s2951 + $0x18] sm:$0xff]
  %v2956 = vld [vmem:[%s2951 + $0x20] sm:$0xff]
  %v2957 = vld [vmem:[%s2951 + $0x28] sm:$0xff]
  %v2958 = vld [vmem:[%s2951 + $0x30] sm:$0xff]
  %v2959 = vld [vmem:[%s2951 + $0x38] sm:$0xff]
  %s2960 = scalar_lea.vmem %s29, 1
  %v2961 = vld [vmem:[%s2960] sm:$0x1]
  %v2963 = vperm.slane %v2961, 0
  %2965 = vmatpush.msra.mxu0 0.0
  %2966 = vmatpush.msra.mxu0 0.0
  %2967 = vmatpush.msra.mxu0 0.0
  %2968 = vmatpush.msra.mxu0 0.0
  %2969 = vmatpush.msra.mxu0 0.0
  %2970 = vmatpush.msra.mxu0 0.0
  %2971 = vmatpush.msra.mxu0 0.0
  %2972 = vmatpush.msra.mxu0 0.0
  %2973 = vmatpush.msra.mxu0 %v2959
  %2974 = vmatpush.msra.mxu0 %v2958
  %2975 = vmatpush.msra.mxu0 %v2957
  %2976 = vmatpush.msra.mxu0 %v2956
  %2977 = vmatpush.msra.mxu0 %v2955
  %2978 = vmatpush.msra.mxu0 %v2954
  %2979 = vmatpush.msra.mxu0 %v2953
  %2980 = vmatpush.msra.mxu0 %v2952
  %2981 = vmatmul.f32.gmra.mxu0 %v2585
  %v2982 = vpop.f32.mrf.mxu0
  %v2983 = vadd.f32 %v2963, %v2982
  %2984 = vmatmul.f32.gmra.mxu0 %v2588
  %v2985 = vpop.f32.mrf.mxu0
  %v2986 = vadd.f32 %v2963, %v2985
  %2987 = vmatmul.f32.gmra.mxu0 %v2591
  %v2988 = vpop.f32.mrf.mxu0
  %v2989 = vadd.f32 %v2963, %v2988
  %2990 = vmatmul.f32.gmra.mxu0 %v2594
  %v2991 = vpop.f32.mrf.mxu0
  %v2992 = vadd.f32 %v2963, %v2991
  %2993 = vdwg.mxu0
  %s2994 = scalar_lea.vmem %s31, 64
  %v2995 = vld [vmem:[%s2994] sm:$0xff]
  %v2996 = vld [vmem:[%s2994 + $0x8] sm:$0xff]
  %v2997 = vld [vmem:[%s2994 + $0x10] sm:$0xff]
  %v2998 = vld [vmem:[%s2994 + $0x18] sm:$0xff]
  %v2999 = vld [vmem:[%s2994 + $0x20] sm:$0xff]
  %v3000 = vld [vmem:[%s2994 + $0x28] sm:$0xff]
  %v3001 = vld [vmem:[%s2994 + $0x30] sm:$0xff]
  %v3002 = vld [vmem:[%s2994 + $0x38] sm:$0xff]
  %s3003 = scalar_lea.vmem %s33, 1
  %v3004 = vld [vmem:[%s3003] sm:$0x1]
  %v3006 = vperm.slane %v3004, 0
  %3008 = vmatpush.msra.mxu0 0.0
  %3009 = vmatpush.msra.mxu0 0.0
  %3010 = vmatpush.msra.mxu0 0.0
  %3011 = vmatpush.msra.mxu0 0.0
  %3012 = vmatpush.msra.mxu0 0.0
  %3013 = vmatpush.msra.mxu0 0.0
  %3014 = vmatpush.msra.mxu0 0.0
  %3015 = vmatpush.msra.mxu0 0.0
  %3016 = vmatpush.msra.mxu0 %v3002
  %3017 = vmatpush.msra.mxu0 %v3001
  %3018 = vmatpush.msra.mxu0 %v3000
  %3019 = vmatpush.msra.mxu0 %v2999
  %3020 = vmatpush.msra.mxu0 %v2998
  %3021 = vmatpush.msra.mxu0 %v2997
  %3022 = vmatpush.msra.mxu0 %v2996
  %3023 = vmatpush.msra.mxu0 %v2995
  %3024 = vmatmul.f32.gmra.mxu0 %v2585
  %v3025 = vpop.f32.mrf.mxu0
  %v3026 = vadd.f32 %v3006, %v3025
  %3027 = vmatmul.f32.gmra.mxu0 %v2588
  %v3028 = vpop.f32.mrf.mxu0
  %v3029 = vadd.f32 %v3006, %v3028
  %3030 = vmatmul.f32.gmra.mxu0 %v2591
  %v3031 = vpop.f32.mrf.mxu0
  %v3032 = vadd.f32 %v3006, %v3031
  %3033 = vmatmul.f32.gmra.mxu0 %v2594
  %v3034 = vpop.f32.mrf.mxu0
  %v3035 = vadd.f32 %v3006, %v3034
  %3036 = vdwg.mxu0
  %v3038 = vsel %vm2707, %v2940, 0
  %v3041 = vsel %vm2707, %v2943, 0
  %v3044 = vsel %vm2707, %v2946, 0
  %v3047 = vsel %vm2707, %v2949, 0
  %v3050 = vsel %vm2707, %v2983, 0
  %v3053 = vsel %vm2707, %v2986, 0
  %v3056 = vsel %vm2707, %v2989, 0
  %v3059 = vsel %vm2707, %v2992, 0
  %3061 = vmatpush.xpose.msra.mxu0 0.0
  %3062 = vmatpush.xpose.msra.mxu0 0.0
  %3063 = vmatpush.xpose.msra.mxu0 0.0
  %3064 = vmatpush.xpose.msra.mxu0 0.0
  %3065 = vmatpush.xpose.msra.mxu0 0.0
  %3066 = vmatpush.xpose.msra.mxu0 0.0
  %3067 = vmatpush.xpose.msra.mxu0 0.0
  %3068 = vmatpush.xpose.msra.mxu0 0.0
  %3069 = vmatpush.xpose.msra.mxu0 0.0
  %3070 = vmatpush.xpose.msra.mxu0 0.0
  %3071 = vmatpush.xpose.msra.mxu0 0.0
  %3072 = vmatpush.xpose.msra.mxu0 0.0
  %3073 = vmatpush.xpose.msra.mxu0 %v3059
  %3074 = vmatpush.xpose.msra.mxu0 %v3056
  %3075 = vmatpush.xpose.msra.mxu0 %v3053
  %3076 = vmatpush.xpose.msra.mxu0 %v3050
  %3077 = vmatmul.f32.gmra.mxu0 %v3038
  %v3078 = vpop.f32.mrf.mxu0
  %v3079 = vadd.f32 0.0, %v3078
  %3080 = vmatmul.f32.gmra.mxu0 %v3041
  %v3081 = vpop.f32.mrf.mxu0
  %v3082 = vadd.f32 0.0, %v3081
  %3083 = vmatmul.f32.gmra.mxu0 %v3044
  %v3084 = vpop.f32.mrf.mxu0
  %v3085 = vadd.f32 0.0, %v3084
  %3086 = vmatmul.f32.gmra.mxu0 %v3047
  %v3087 = vpop.f32.mrf.mxu0
  %v3088 = vadd.f32 0.0, %v3087
  %3089 = vdwg.mxu0
  %v3090 = vmul.f32 %v3079, 0.25
  %v3091 = vmul.f32 %v3082, 0.25
  %v3092 = vmul.f32 %v3085, 0.25
  %v3093 = vmul.f32 %v3088, 0.25
  %v3094 = vadd.f32 %v3090, %v2568
  %v3095 = vadd.f32 %v3091, %v2569
  %v3096 = vadd.f32 %v3092, %v2570
  %v3097 = vadd.f32 %v3093, %v2571
  %v3098 = vsel %vm232, %v3094, -inf
  %3099 = vmax.xlane.f32.xlu0 %v3098
  %v3100 = vpop.xlane.xlu0 %3099
  %v3101 = vsel %vm232, %v3095, -inf
  %3102 = vmax.xlane.f32.xlu0 %v3101
  %v3103 = vpop.xlane.xlu0 %3102
  %v3104 = vsel %vm232, %v3096, -inf
  %3105 = vmax.xlane.f32.xlu0 %v3104
  %v3106 = vpop.xlane.xlu0 %3105
  %v3107 = vsel %vm232, %v3097, -inf
  %3108 = vmax.xlane.f32.xlu0 %v3107
  %v3109 = vpop.xlane.xlu0 %3108
  %v3110 = vsub.f32 %v3094, %v3100
  %v3111 = vsub.f32 %v3095, %v3103
  %v3112 = vsub.f32 %v3096, %v3106
  %v3113 = vsub.f32 %v3097, %v3109
  %v3114 = vmul.f32 %v3110, 1.442695
  %v3115 = vpow.pop %v3114
  %v3116 = vmul.f32 %v3111, 1.442695
  %v3117 = vpow.pop %v3116
  %v3118 = vmul.f32 %v3112, 1.442695
  %v3119 = vpow.pop %v3118
  %v3120 = vmul.f32 %v3113, 1.442695
  %v3121 = vpow.pop %v3120
  %v3122 = vsel %vm232, %v3115, 0.0
  %3123 = vadd.xlane.f32.xlu0 %v3122
  %v3124 = vpop.xlane.xlu0 %3123
  %v3125 = vsel %vm232, %v3117, 0.0
  %3126 = vadd.xlane.f32.xlu0 %v3125
  %v3127 = vpop.xlane.xlu0 %3126
  %v3128 = vsel %vm232, %v3119, 0.0
  %3129 = vadd.xlane.f32.xlu0 %v3128
  %v3130 = vpop.xlane.xlu0 %3129
  %v3131 = vsel %vm232, %v3121, 0.0
  %3132 = vadd.xlane.f32.xlu0 %v3131
  %v3133 = vpop.xlane.xlu0 %3132
  %v3134 = vrcp.pop %v3124
  %v3135 = vmul.f32 %v3124, %v3134
  %v3136 = vsub.f32 1.0, %v3135
  %v3137 = vmul.f32 %v3134, %v3136
  %v3138 = vadd.f32 %v3134, %v3137
  %vm3139 = vweird.f32 %v3124
  %vm3140 = vweird.f32 %v3134
  %vm3141 = vmor %vm3139, %vm3140
  %v3142 = vsel %vm3141, %v3134, %v3138
  %v3143 = vand.u32 2147483647, %v3124
  %vm3144 = vcmp.eq.f32.partialorder %v3143, 8.507059e+37
  %v3145 = vand.u32 %v3124, 2147483648
  %v3146 = vor.u32 1.1754944e-38, %v3145
  %v3147 = vsel %vm3144, %v3146, %v3142
  %v3148 = vmul.f32 %v3115, %v3147
  %v3149 = vrcp.pop %v3127
  %v3150 = vmul.f32 %v3127, %v3149
  %v3151 = vsub.f32 1.0, %v3150
  %v3152 = vmul.f32 %v3149, %v3151
  %v3153 = vadd.f32 %v3149, %v3152
  %vm3154 = vweird.f32 %v3127
  %vm3155 = vweird.f32 %v3149
  %vm3156 = vmor %vm3154, %vm3155
  %v3157 = vsel %vm3156, %v3149, %v3153
  %v3158 = vand.u32 2147483647, %v3127
  %vm3159 = vcmp.eq.f32.partialorder %v3158, 8.507059e+37
  %v3160 = vand.u32 %v3127, 2147483648
  %v3161 = vor.u32 1.1754944e-38, %v3160
  %v3162 = vsel %vm3159, %v3161, %v3157
  %v3163 = vmul.f32 %v3117, %v3162
  %v3164 = vrcp.pop %v3130
  %v3165 = vmul.f32 %v3130, %v3164
  %v3166 = vsub.f32 1.0, %v3165
  %v3167 = vmul.f32 %v3164, %v3166
  %v3168 = vadd.f32 %v3164, %v3167
  %vm3169 = vweird.f32 %v3130
  %vm3170 = vweird.f32 %v3164
  %vm3171 = vmor %vm3169, %vm3170
  %v3172 = vsel %vm3171, %v3164, %v3168
  %v3173 = vand.u32 2147483647, %v3130
  %vm3174 = vcmp.eq.f32.partialorder %v3173, 8.507059e+37
  %v3175 = vand.u32 %v3130, 2147483648
  %v3176 = vor.u32 1.1754944e-38, %v3175
  %v3177 = vsel %vm3174, %v3176, %v3172
  %v3178 = vmul.f32 %v3119, %v3177
  %v3179 = vrcp.pop %v3133
  %v3180 = vmul.f32 %v3133, %v3179
  %v3181 = vsub.f32 1.0, %v3180
  %v3182 = vmul.f32 %v3179, %v3181
  %v3183 = vadd.f32 %v3179, %v3182
  %vm3184 = vweird.f32 %v3133
  %vm3185 = vweird.f32 %v3179
  %vm3186 = vmor %vm3184, %vm3185
  %v3187 = vsel %vm3186, %v3179, %v3183
  %v3188 = vand.u32 2147483647, %v3133
  %vm3189 = vcmp.eq.f32.partialorder %v3188, 8.507059e+37
  %v3190 = vand.u32 %v3133, 2147483648
  %v3191 = vor.u32 1.1754944e-38, %v3190
  %v3192 = vsel %vm3189, %v3191, %v3187
  %v3193 = vmul.f32 %v3121, %v3192
  %v3195 = vsel %vm232, %v3148, 0
  %v3198 = vsel %vm232, %v3163, 0
  %v3201 = vsel %vm232, %v3178, 0
  %v3204 = vsel %vm232, %v3193, 0
  %3206 = vmatpush.msra.mxu0 0.0
  %3207 = vmatpush.msra.mxu0 0.0
  %3208 = vmatpush.msra.mxu0 0.0
  %3209 = vmatpush.msra.mxu0 0.0
  %3210 = vmatpush.msra.mxu0 0.0
  %3211 = vmatpush.msra.mxu0 0.0
  %3212 = vmatpush.msra.mxu0 0.0
  %3213 = vmatpush.msra.mxu0 0.0
  %3214 = vmatpush.msra.mxu0 0.0
  %3215 = vmatpush.msra.mxu0 0.0
  %3216 = vmatpush.msra.mxu0 0.0
  %3217 = vmatpush.msra.mxu0 0.0
  %3218 = vmatpush.msra.mxu0 %v3035
  %3219 = vmatpush.msra.mxu0 %v3032
  %3220 = vmatpush.msra.mxu0 %v3029
  %3221 = vmatpush.msra.mxu0 %v3026
  %3222 = vmatmul.f32.gmra.mxu0 %v3195
  %v3223 = vpop.f32.mrf.mxu0
  %v3224 = vadd.f32 0.0, %v3223
  %3225 = vmatmul.f32.gmra.mxu0 %v3198
  %v3226 = vpop.f32.mrf.mxu0
  %v3227 = vadd.f32 0.0, %v3226
  %3228 = vmatmul.f32.gmra.mxu0 %v3201
  %v3229 = vpop.f32.mrf.mxu0
  %v3230 = vadd.f32 0.0, %v3229
  %3231 = vmatmul.f32.gmra.mxu0 %v3204
  %v3232 = vpop.f32.mrf.mxu0
  %v3233 = vadd.f32 0.0, %v3232
  %3234 = vdwg.mxu0
  %s3235 = scalar_lea.vmem %s35, 16
  %v3236 = vld [vmem:[%s3235] sm:$0xff]
  %v3237 = vld [vmem:[%s3235 + $0x8] sm:$0xff]
  %v3239 = vsel %vm2707, %v3224, 0
  %v3242 = vsel %vm2707, %v3227, 0
  %v3245 = vsel %vm2707, %v3230, 0
  %v3248 = vsel %vm2707, %v3233, 0
  %3250 = vmatpush.msra.mxu0 0.0
  %3251 = vmatpush.msra.mxu0 0.0
  %3252 = vmatpush.msra.mxu0 0.0
  %3253 = vmatpush.msra.mxu0 0.0
  %3254 = vmatpush.msra.mxu0 0.0
  %3255 = vmatpush.msra.mxu0 0.0
  %3256 = vmatpush.msra.mxu0 0.0
  %3257 = vmatpush.msra.mxu0 0.0
  %3258 = vmatpush.msra.mxu0 0.0
  %3259 = vmatpush.msra.mxu0 0.0
  %3260 = vmatpush.msra.mxu0 0.0
  %3261 = vmatpush.msra.mxu0 0.0
  %3262 = vmatpush.msra.mxu0 0.0
  %3263 = vmatpush.msra.mxu0 0.0
  %3264 = vmatpush.msra.mxu0 %v3237
  %3265 = vmatpush.msra.mxu0 %v3236
  %3266 = vmatmul.f32.gmra.mxu0 %v3239
  %v3267 = vpop.f32.mrf.mxu0
  %v3268 = vadd.f32 0.0, %v3267
  %3269 = vmatmul.f32.gmra.mxu0 %v3242
  %v3270 = vpop.f32.mrf.mxu0
  %v3271 = vadd.f32 0.0, %v3270
  %3272 = vmatmul.f32.gmra.mxu0 %v3245
  %v3273 = vpop.f32.mrf.mxu0
  %v3274 = vadd.f32 0.0, %v3273
  %3275 = vmatmul.f32.gmra.mxu0 %v3248
  %v3276 = vpop.f32.mrf.mxu0
  %v3277 = vadd.f32 0.0, %v3276
  %3278 = vdwg.mxu0
  %v3280 = vsel %vm2707, %v2895, 0
  %v3283 = vsel %vm2707, %v2898, 0
  %v3286 = vsel %vm2707, %v2901, 0
  %v3289 = vsel %vm2707, %v2904, 0
  %3291 = vmatpush.msra.mxu0 0.0
  %3292 = vmatpush.msra.mxu0 0.0
  %3293 = vmatpush.msra.mxu0 0.0
  %3294 = vmatpush.msra.mxu0 0.0
  %3295 = vmatpush.msra.mxu0 0.0
  %3296 = vmatpush.msra.mxu0 0.0
  %3297 = vmatpush.msra.mxu0 0.0
  %3298 = vmatpush.msra.mxu0 0.0
  %3299 = vmatpush.msra.mxu0 0.0
  %3300 = vmatpush.msra.mxu0 0.0
  %3301 = vmatpush.msra.mxu0 0.0
  %3302 = vmatpush.msra.mxu0 0.0
  %3303 = vmatpush.msra.mxu0 0.0
  %3304 = vmatpush.msra.mxu0 0.0
  %3305 = vmatpush.msra.mxu0 %v2907
  %3306 = vmatpush.msra.mxu0 %v2906
  %3307 = vmatmul.f32.gmra.mxu0 %v3280
  %v3308 = vpop.f32.mrf.mxu0
  %v3309 = vadd.f32 %v3268, %v3308
  %3310 = vmatmul.f32.gmra.mxu0 %v3283
  %v3311 = vpop.f32.mrf.mxu0
  %v3312 = vadd.f32 %v3271, %v3311
  %3313 = vmatmul.f32.gmra.mxu0 %v3286
  %v3314 = vpop.f32.mrf.mxu0
  %v3315 = vadd.f32 %v3274, %v3314
  %3316 = vmatmul.f32.gmra.mxu0 %v3289
  %v3317 = vpop.f32.mrf.mxu0
  %v3318 = vadd.f32 %v3277, %v3317
  %3319 = vdwg.mxu0
  %s3320 = scalar_lea.vmem %s23, 128
  %v3321 = vld [vmem:[%s3320] sm:$0xff]
  %v3322 = vld [vmem:[%s3320 + $0x8] sm:$0xff]
  %v3323 = vld [vmem:[%s3320 + $0x10] sm:$0xff]
  %v3324 = vld [vmem:[%s3320 + $0x18] sm:$0xff]
  %v3325 = vld [vmem:[%s3320 + $0x20] sm:$0xff]
  %v3326 = vld [vmem:[%s3320 + $0x28] sm:$0xff]
  %v3327 = vld [vmem:[%s3320 + $0x30] sm:$0xff]
  %v3328 = vld [vmem:[%s3320 + $0x38] sm:$0xff]
  %s3329 = scalar_lea.vmem %s25, 2
  %v3330 = vld [vmem:[%s3329] sm:$0x1]
  %v3332 = vperm.slane %v3330, 0
  %3334 = vmatpush.msra.mxu0 0.0
  %3335 = vmatpush.msra.mxu0 0.0
  %3336 = vmatpush.msra.mxu0 0.0
  %3337 = vmatpush.msra.mxu0 0.0
  %3338 = vmatpush.msra.mxu0 0.0
  %3339 = vmatpush.msra.mxu0 0.0
  %3340 = vmatpush.msra.mxu0 0.0
  %3341 = vmatpush.msra.mxu0 0.0
  %3342 = vmatpush.msra.mxu0 %v3328
  %3343 = vmatpush.msra.mxu0 %v3327
  %3344 = vmatpush.msra.mxu0 %v3326
  %3345 = vmatpush.msra.mxu0 %v3325
  %3346 = vmatpush.msra.mxu0 %v3324
  %3347 = vmatpush.msra.mxu0 %v3323
  %3348 = vmatpush.msra.mxu0 %v3322
  %3349 = vmatpush.msra.mxu0 %v3321
  %3350 = vmatmul.f32.gmra.mxu0 %v2585
  %v3351 = vpop.f32.mrf.mxu0
  %v3352 = vadd.f32 %v3332, %v3351
  %3353 = vmatmul.f32.gmra.mxu0 %v2588
  %v3354 = vpop.f32.mrf.mxu0
  %v3355 = vadd.f32 %v3332, %v3354
  %3356 = vmatmul.f32.gmra.mxu0 %v2591
  %v3357 = vpop.f32.mrf.mxu0
  %v3358 = vadd.f32 %v3332, %v3357
  %3359 = vmatmul.f32.gmra.mxu0 %v2594
  %v3360 = vpop.f32.mrf.mxu0
  %v3361 = vadd.f32 %v3332, %v3360
  %3362 = vdwg.mxu0
  %s3363 = scalar_lea.vmem %s27, 128
  %v3364 = vld [vmem:[%s3363] sm:$0xff]
  %v3365 = vld [vmem:[%s3363 + $0x8] sm:$0xff]
  %v3366 = vld [vmem:[%s3363 + $0x10] sm:$0xff]
  %v3367 = vld [vmem:[%s3363 + $0x18] sm:$0xff]
  %v3368 = vld [vmem:[%s3363 + $0x20] sm:$0xff]
  %v3369 = vld [vmem:[%s3363 + $0x28] sm:$0xff]
  %v3370 = vld [vmem:[%s3363 + $0x30] sm:$0xff]
  %v3371 = vld [vmem:[%s3363 + $0x38] sm:$0xff]
  %s3372 = scalar_lea.vmem %s29, 2
  %v3373 = vld [vmem:[%s3372] sm:$0x1]
  %v3375 = vperm.slane %v3373, 0
  %3377 = vmatpush.msra.mxu0 0.0
  %3378 = vmatpush.msra.mxu0 0.0
  %3379 = vmatpush.msra.mxu0 0.0
  %3380 = vmatpush.msra.mxu0 0.0
  %3381 = vmatpush.msra.mxu0 0.0
  %3382 = vmatpush.msra.mxu0 0.0
  %3383 = vmatpush.msra.mxu0 0.0
  %3384 = vmatpush.msra.mxu0 0.0
  %3385 = vmatpush.msra.mxu0 %v3371
  %3386 = vmatpush.msra.mxu0 %v3370
  %3387 = vmatpush.msra.mxu0 %v3369
  %3388 = vmatpush.msra.mxu0 %v3368
  %3389 = vmatpush.msra.mxu0 %v3367
  %3390 = vmatpush.msra.mxu0 %v3366
  %3391 = vmatpush.msra.mxu0 %v3365
  %3392 = vmatpush.msra.mxu0 %v3364
  %3393 = vmatmul.f32.gmra.mxu0 %v2585
  %v3394 = vpop.f32.mrf.mxu0
  %v3395 = vadd.f32 %v3375, %v3394
  %3396 = vmatmul.f32.gmra.mxu0 %v2588
  %v3397 = vpop.f32.mrf.mxu0
  %v3398 = vadd.f32 %v3375, %v3397
  %3399 = vmatmul.f32.gmra.mxu0 %v2591
  %v3400 = vpop.f32.mrf.mxu0
  %v3401 = vadd.f32 %v3375, %v3400
  %3402 = vmatmul.f32.gmra.mxu0 %v2594
  %v3403 = vpop.f32.mrf.mxu0
  %v3404 = vadd.f32 %v3375, %v3403
  %3405 = vdwg.mxu0
  %s3406 = scalar_lea.vmem %s31, 128
  %v3407 = vld [vmem:[%s3406] sm:$0xff]
  %v3408 = vld [vmem:[%s3406 + $0x8] sm:$0xff]
  %v3409 = vld [vmem:[%s3406 + $0x10] sm:$0xff]
  %v3410 = vld [vmem:[%s3406 + $0x18] sm:$0xff]
  %v3411 = vld [vmem:[%s3406 + $0x20] sm:$0xff]
  %v3412 = vld [vmem:[%s3406 + $0x28] sm:$0xff]
  %v3413 = vld [vmem:[%s3406 + $0x30] sm:$0xff]
  %v3414 = vld [vmem:[%s3406 + $0x38] sm:$0xff]
  %s3415 = scalar_lea.vmem %s33, 2
  %v3416 = vld [vmem:[%s3415] sm:$0x1]
  %v3418 = vperm.slane %v3416, 0
  %3420 = vmatpush.msra.mxu0 0.0
  %3421 = vmatpush.msra.mxu0 0.0
  %3422 = vmatpush.msra.mxu0 0.0
  %3423 = vmatpush.msra.mxu0 0.0
  %3424 = vmatpush.msra.mxu0 0.0
  %3425 = vmatpush.msra.mxu0 0.0
  %3426 = vmatpush.msra.mxu0 0.0
  %3427 = vmatpush.msra.mxu0 0.0
  %3428 = vmatpush.msra.mxu0 %v3414
  %3429 = vmatpush.msra.mxu0 %v3413
  %3430 = vmatpush.msra.mxu0 %v3412
  %3431 = vmatpush.msra.mxu0 %v3411
  %3432 = vmatpush.msra.mxu0 %v3410
  %3433 = vmatpush.msra.mxu0 %v3409
  %3434 = vmatpush.msra.mxu0 %v3408
  %3435 = vmatpush.msra.mxu0 %v3407
  %3436 = vmatmul.f32.gmra.mxu0 %v2585
  %v3437 = vpop.f32.mrf.mxu0
  %v3438 = vadd.f32 %v3418, %v3437
  %3439 = vmatmul.f32.gmra.mxu0 %v2588
  %v3440 = vpop.f32.mrf.mxu0
  %v3441 = vadd.f32 %v3418, %v3440
  %3442 = vmatmul.f32.gmra.mxu0 %v2591
  %v3443 = vpop.f32.mrf.mxu0
  %v3444 = vadd.f32 %v3418, %v3443
  %3445 = vmatmul.f32.gmra.mxu0 %v2594
  %v3446 = vpop.f32.mrf.mxu0
  %v3447 = vadd.f32 %v3418, %v3446
  %3448 = vdwg.mxu0
  %v3450 = vsel %vm2707, %v3352, 0
  %v3453 = vsel %vm2707, %v3355, 0
  %v3456 = vsel %vm2707, %v3358, 0
  %v3459 = vsel %vm2707, %v3361, 0
  %v3462 = vsel %vm2707, %v3395, 0
  %v3465 = vsel %vm2707, %v3398, 0
  %v3468 = vsel %vm2707, %v3401, 0
  %v3471 = vsel %vm2707, %v3404, 0
  %3473 = vmatpush.xpose.msra.mxu0 0.0
  %3474 = vmatpush.xpose.msra.mxu0 0.0
  %3475 = vmatpush.xpose.msra.mxu0 0.0
  %3476 = vmatpush.xpose.msra.mxu0 0.0
  %3477 = vmatpush.xpose.msra.mxu0 0.0
  %3478 = vmatpush.xpose.msra.mxu0 0.0
  %3479 = vmatpush.xpose.msra.mxu0 0.0
  %3480 = vmatpush.xpose.msra.mxu0 0.0
  %3481 = vmatpush.xpose.msra.mxu0 0.0
  %3482 = vmatpush.xpose.msra.mxu0 0.0
  %3483 = vmatpush.xpose.msra.mxu0 0.0
  %3484 = vmatpush.xpose.msra.mxu0 0.0
  %3485 = vmatpush.xpose.msra.mxu0 %v3471
  %3486 = vmatpush.xpose.msra.mxu0 %v3468
  %3487 = vmatpush.xpose.msra.mxu0 %v3465
  %3488 = vmatpush.xpose.msra.mxu0 %v3462
  %3489 = vmatmul.f32.gmra.mxu0 %v3450
  %v3490 = vpop.f32.mrf.mxu0
  %v3491 = vadd.f32 0.0, %v3490
  %3492 = vmatmul.f32.gmra.mxu0 %v3453
  %v3493 = vpop.f32.mrf.mxu0
  %v3494 = vadd.f32 0.0, %v3493
  %3495 = vmatmul.f32.gmra.mxu0 %v3456
  %v3496 = vpop.f32.mrf.mxu0
  %v3497 = vadd.f32 0.0, %v3496
  %3498 = vmatmul.f32.gmra.mxu0 %v3459
  %v3499 = vpop.f32.mrf.mxu0
  %v3500 = vadd.f32 0.0, %v3499
  %3501 = vdwg.mxu0
  %v3502 = vmul.f32 %v3491, 0.25
  %v3503 = vmul.f32 %v3494, 0.25
  %v3504 = vmul.f32 %v3497, 0.25
  %v3505 = vmul.f32 %v3500, 0.25
  %v3506 = vadd.f32 %v3502, %v2568
  %v3507 = vadd.f32 %v3503, %v2569
  %v3508 = vadd.f32 %v3504, %v2570
  %v3509 = vadd.f32 %v3505, %v2571
  %v3510 = vsel %vm232, %v3506, -inf
  %3511 = vmax.xlane.f32.xlu0 %v3510
  %v3512 = vpop.xlane.xlu0 %3511
  %v3513 = vsel %vm232, %v3507, -inf
  %3514 = vmax.xlane.f32.xlu0 %v3513
  %v3515 = vpop.xlane.xlu0 %3514
  %v3516 = vsel %vm232, %v3508, -inf
  %3517 = vmax.xlane.f32.xlu0 %v3516
  %v3518 = vpop.xlane.xlu0 %3517
  %v3519 = vsel %vm232, %v3509, -inf
  %3520 = vmax.xlane.f32.xlu0 %v3519
  %v3521 = vpop.xlane.xlu0 %3520
  %v3522 = vsub.f32 %v3506, %v3512
  %v3523 = vsub.f32 %v3507, %v3515
  %v3524 = vsub.f32 %v3508, %v3518
  %v3525 = vsub.f32 %v3509, %v3521
  %v3526 = vmul.f32 %v3522, 1.442695
  %v3527 = vpow.pop %v3526
  %v3528 = vmul.f32 %v3523, 1.442695
  %v3529 = vpow.pop %v3528
  %v3530 = vmul.f32 %v3524, 1.442695
  %v3531 = vpow.pop %v3530
  %v3532 = vmul.f32 %v3525, 1.442695
  %v3533 = vpow.pop %v3532
  %v3534 = vsel %vm232, %v3527, 0.0
  %3535 = vadd.xlane.f32.xlu0 %v3534
  %v3536 = vpop.xlane.xlu0 %3535
  %v3537 = vsel %vm232, %v3529, 0.0
  %3538 = vadd.xlane.f32.xlu0 %v3537
  %v3539 = vpop.xlane.xlu0 %3538
  %v3540 = vsel %vm232, %v3531, 0.0
  %3541 = vadd.xlane.f32.xlu0 %v3540
  %v3542 = vpop.xlane.xlu0 %3541
  %v3543 = vsel %vm232, %v3533, 0.0
  %3544 = vadd.xlane.f32.xlu0 %v3543
  %v3545 = vpop.xlane.xlu0 %3544
  %v3546 = vrcp.pop %v3536
  %v3547 = vmul.f32 %v3536, %v3546
  %v3548 = vsub.f32 1.0, %v3547
  %v3549 = vmul.f32 %v3546, %v3548
  %v3550 = vadd.f32 %v3546, %v3549
  %vm3551 = vweird.f32 %v3536
  %vm3552 = vweird.f32 %v3546
  %vm3553 = vmor %vm3551, %vm3552
  %v3554 = vsel %vm3553, %v3546, %v3550
  %v3555 = vand.u32 2147483647, %v3536
  %vm3556 = vcmp.eq.f32.partialorder %v3555, 8.507059e+37
  %v3557 = vand.u32 %v3536, 2147483648
  %v3558 = vor.u32 1.1754944e-38, %v3557
  %v3559 = vsel %vm3556, %v3558, %v3554
  %v3560 = vmul.f32 %v3527, %v3559
  %v3561 = vrcp.pop %v3539
  %v3562 = vmul.f32 %v3539, %v3561
  %v3563 = vsub.f32 1.0, %v3562
  %v3564 = vmul.f32 %v3561, %v3563
  %v3565 = vadd.f32 %v3561, %v3564
  %vm3566 = vweird.f32 %v3539
  %vm3567 = vweird.f32 %v3561
  %vm3568 = vmor %vm3566, %vm3567
  %v3569 = vsel %vm3568, %v3561, %v3565
  %v3570 = vand.u32 2147483647, %v3539
  %vm3571 = vcmp.eq.f32.partialorder %v3570, 8.507059e+37
  %v3572 = vand.u32 %v3539, 2147483648
  %v3573 = vor.u32 1.1754944e-38, %v3572
  %v3574 = vsel %vm3571, %v3573, %v3569
  %v3575 = vmul.f32 %v3529, %v3574
  %v3576 = vrcp.pop %v3542
  %v3577 = vmul.f32 %v3542, %v3576
  %v3578 = vsub.f32 1.0, %v3577
  %v3579 = vmul.f32 %v3576, %v3578
  %v3580 = vadd.f32 %v3576, %v3579
  %vm3581 = vweird.f32 %v3542
  %vm3582 = vweird.f32 %v3576
  %vm3583 = vmor %vm3581, %vm3582
  %v3584 = vsel %vm3583, %v3576, %v3580
  %v3585 = vand.u32 2147483647, %v3542
  %vm3586 = vcmp.eq.f32.partialorder %v3585, 8.507059e+37
  %v3587 = vand.u32 %v3542, 2147483648
  %v3588 = vor.u32 1.1754944e-38, %v3587
  %v3589 = vsel %vm3586, %v3588, %v3584
  %v3590 = vmul.f32 %v3531, %v3589
  %v3591 = vrcp.pop %v3545
  %v3592 = vmul.f32 %v3545, %v3591
  %v3593 = vsub.f32 1.0, %v3592
  %v3594 = vmul.f32 %v3591, %v3593
  %v3595 = vadd.f32 %v3591, %v3594
  %vm3596 = vweird.f32 %v3545
  %vm3597 = vweird.f32 %v3591
  %vm3598 = vmor %vm3596, %vm3597
  %v3599 = vsel %vm3598, %v3591, %v3595
  %v3600 = vand.u32 2147483647, %v3545
  %vm3601 = vcmp.eq.f32.partialorder %v3600, 8.507059e+37
  %v3602 = vand.u32 %v3545, 2147483648
  %v3603 = vor.u32 1.1754944e-38, %v3602
  %v3604 = vsel %vm3601, %v3603, %v3599
  %v3605 = vmul.f32 %v3533, %v3604
  %v3607 = vsel %vm232, %v3560, 0
  %v3610 = vsel %vm232, %v3575, 0
  %v3613 = vsel %vm232, %v3590, 0
  %v3616 = vsel %vm232, %v3605, 0
  %3618 = vmatpush.msra.mxu0 0.0
  %3619 = vmatpush.msra.mxu0 0.0
  %3620 = vmatpush.msra.mxu0 0.0
  %3621 = vmatpush.msra.mxu0 0.0
  %3622 = vmatpush.msra.mxu0 0.0
  %3623 = vmatpush.msra.mxu0 0.0
  %3624 = vmatpush.msra.mxu0 0.0
  %3625 = vmatpush.msra.mxu0 0.0
  %3626 = vmatpush.msra.mxu0 0.0
  %3627 = vmatpush.msra.mxu0 0.0
  %3628 = vmatpush.msra.mxu0 0.0
  %3629 = vmatpush.msra.mxu0 0.0
  %3630 = vmatpush.msra.mxu0 %v3447
  %3631 = vmatpush.msra.mxu0 %v3444
  %3632 = vmatpush.msra.mxu0 %v3441
  %3633 = vmatpush.msra.mxu0 %v3438
  %3634 = vmatmul.f32.gmra.mxu0 %v3607
  %v3635 = vpop.f32.mrf.mxu0
  %v3636 = vadd.f32 0.0, %v3635
  %3637 = vmatmul.f32.gmra.mxu0 %v3610
  %v3638 = vpop.f32.mrf.mxu0
  %v3639 = vadd.f32 0.0, %v3638
  %3640 = vmatmul.f32.gmra.mxu0 %v3613
  %v3641 = vpop.f32.mrf.mxu0
  %v3642 = vadd.f32 0.0, %v3641
  %3643 = vmatmul.f32.gmra.mxu0 %v3616
  %v3644 = vpop.f32.mrf.mxu0
  %v3645 = vadd.f32 0.0, %v3644
  %3646 = vdwg.mxu0
  %s3647 = scalar_lea.vmem %s35, 32
  %v3648 = vld [vmem:[%s3647] sm:$0xff]
  %v3649 = vld [vmem:[%s3647 + $0x8] sm:$0xff]
  %v3651 = vsel %vm2707, %v3636, 0
  %v3654 = vsel %vm2707, %v3639, 0
  %v3657 = vsel %vm2707, %v3642, 0
  %v3660 = vsel %vm2707, %v3645, 0
  %3662 = vmatpush.msra.mxu0 0.0
  %3663 = vmatpush.msra.mxu0 0.0
  %3664 = vmatpush.msra.mxu0 0.0
  %3665 = vmatpush.msra.mxu0 0.0
  %3666 = vmatpush.msra.mxu0 0.0
  %3667 = vmatpush.msra.mxu0 0.0
  %3668 = vmatpush.msra.mxu0 0.0
  %3669 = vmatpush.msra.mxu0 0.0
  %3670 = vmatpush.msra.mxu0 0.0
  %3671 = vmatpush.msra.mxu0 0.0
  %3672 = vmatpush.msra.mxu0 0.0
  %3673 = vmatpush.msra.mxu0 0.0
  %3674 = vmatpush.msra.mxu0 0.0
  %3675 = vmatpush.msra.mxu0 0.0
  %3676 = vmatpush.msra.mxu0 %v3649
  %3677 = vmatpush.msra.mxu0 %v3648
  %3678 = vmatmul.f32.gmra.mxu0 %v3651
  %v3679 = vpop.f32.mrf.mxu0
  %v3680 = vadd.f32 0.0, %v3679
  %3681 = vmatmul.f32.gmra.mxu0 %v3654
  %v3682 = vpop.f32.mrf.mxu0
  %v3683 = vadd.f32 0.0, %v3682
  %3684 = vmatmul.f32.gmra.mxu0 %v3657
  %v3685 = vpop.f32.mrf.mxu0
  %v3686 = vadd.f32 0.0, %v3685
  %3687 = vmatmul.f32.gmra.mxu0 %v3660
  %v3688 = vpop.f32.mrf.mxu0
  %v3689 = vadd.f32 0.0, %v3688
  %3690 = vdwg.mxu0
  %v3691 = vadd.f32 %v3309, %v3680
  %v3692 = vadd.f32 %v3312, %v3683
  %v3693 = vadd.f32 %v3315, %v3686
  %v3694 = vadd.f32 %v3318, %v3689
  %s3695 = scalar_lea.vmem %s23, 192
  %v3696 = vld [vmem:[%s3695] sm:$0xff]
  %v3697 = vld [vmem:[%s3695 + $0x8] sm:$0xff]
  %v3698 = vld [vmem:[%s3695 + $0x10] sm:$0xff]
  %v3699 = vld [vmem:[%s3695 + $0x18] sm:$0xff]
  %v3700 = vld [vmem:[%s3695 + $0x20] sm:$0xff]
  %v3701 = vld [vmem:[%s3695 + $0x28] sm:$0xff]
  %v3702 = vld [vmem:[%s3695 + $0x30] sm:$0xff]
  %v3703 = vld [vmem:[%s3695 + $0x38] sm:$0xff]
  %s3704 = scalar_lea.vmem %s25, 3
  %v3705 = vld [vmem:[%s3704] sm:$0x1]
  %v3707 = vperm.slane %v3705, 0
  %3709 = vmatpush.msra.mxu0 0.0
  %3710 = vmatpush.msra.mxu0 0.0
  %3711 = vmatpush.msra.mxu0 0.0
  %3712 = vmatpush.msra.mxu0 0.0
  %3713 = vmatpush.msra.mxu0 0.0
  %3714 = vmatpush.msra.mxu0 0.0
  %3715 = vmatpush.msra.mxu0 0.0
  %3716 = vmatpush.msra.mxu0 0.0
  %3717 = vmatpush.msra.mxu0 %v3703
  %3718 = vmatpush.msra.mxu0 %v3702
  %3719 = vmatpush.msra.mxu0 %v3701
  %3720 = vmatpush.msra.mxu0 %v3700
  %3721 = vmatpush.msra.mxu0 %v3699
  %3722 = vmatpush.msra.mxu0 %v3698
  %3723 = vmatpush.msra.mxu0 %v3697
  %3724 = vmatpush.msra.mxu0 %v3696
  %3725 = vmatmul.f32.gmra.mxu0 %v2585
  %v3726 = vpop.f32.mrf.mxu0
  %v3727 = vadd.f32 %v3707, %v3726
  %3728 = vmatmul.f32.gmra.mxu0 %v2588
  %v3729 = vpop.f32.mrf.mxu0
  %v3730 = vadd.f32 %v3707, %v3729
  %3731 = vmatmul.f32.gmra.mxu0 %v2591
  %v3732 = vpop.f32.mrf.mxu0
  %v3733 = vadd.f32 %v3707, %v3732
  %3734 = vmatmul.f32.gmra.mxu0 %v2594
  %v3735 = vpop.f32.mrf.mxu0
  %v3736 = vadd.f32 %v3707, %v3735
  %3737 = vdwg.mxu0
  %s3738 = scalar_lea.vmem %s27, 192
  %v3739 = vld [vmem:[%s3738] sm:$0xff]
  %v3740 = vld [vmem:[%s3738 + $0x8] sm:$0xff]
  %v3741 = vld [vmem:[%s3738 + $0x10] sm:$0xff]
  %v3742 = vld [vmem:[%s3738 + $0x18] sm:$0xff]
  %v3743 = vld [vmem:[%s3738 + $0x20] sm:$0xff]
  %v3744 = vld [vmem:[%s3738 + $0x28] sm:$0xff]
  %v3745 = vld [vmem:[%s3738 + $0x30] sm:$0xff]
  %v3746 = vld [vmem:[%s3738 + $0x38] sm:$0xff]
  %s3747 = scalar_lea.vmem %s29, 3
  %v3748 = vld [vmem:[%s3747] sm:$0x1]
  %v3750 = vperm.slane %v3748, 0
  %3752 = vmatpush.msra.mxu0 0.0
  %3753 = vmatpush.msra.mxu0 0.0
  %3754 = vmatpush.msra.mxu0 0.0
  %3755 = vmatpush.msra.mxu0 0.0
  %3756 = vmatpush.msra.mxu0 0.0
  %3757 = vmatpush.msra.mxu0 0.0
  %3758 = vmatpush.msra.mxu0 0.0
  %3759 = vmatpush.msra.mxu0 0.0
  %3760 = vmatpush.msra.mxu0 %v3746
  %3761 = vmatpush.msra.mxu0 %v3745
  %3762 = vmatpush.msra.mxu0 %v3744
  %3763 = vmatpush.msra.mxu0 %v3743
  %3764 = vmatpush.msra.mxu0 %v3742
  %3765 = vmatpush.msra.mxu0 %v3741
  %3766 = vmatpush.msra.mxu0 %v3740
  %3767 = vmatpush.msra.mxu0 %v3739
  %3768 = vmatmul.f32.gmra.mxu0 %v2585
  %v3769 = vpop.f32.mrf.mxu0
  %v3770 = vadd.f32 %v3750, %v3769
  %3771 = vmatmul.f32.gmra.mxu0 %v2588
  %v3772 = vpop.f32.mrf.mxu0
  %v3773 = vadd.f32 %v3750, %v3772
  %3774 = vmatmul.f32.gmra.mxu0 %v2591
  %v3775 = vpop.f32.mrf.mxu0
  %v3776 = vadd.f32 %v3750, %v3775
  %3777 = vmatmul.f32.gmra.mxu0 %v2594
  %v3778 = vpop.f32.mrf.mxu0
  %v3779 = vadd.f32 %v3750, %v3778
  %3780 = vdwg.mxu0
  %s3781 = scalar_lea.vmem %s31, 192
  %v3782 = vld [vmem:[%s3781] sm:$0xff]
  %v3783 = vld [vmem:[%s3781 + $0x8] sm:$0xff]
  %v3784 = vld [vmem:[%s3781 + $0x10] sm:$0xff]
  %v3785 = vld [vmem:[%s3781 + $0x18] sm:$0xff]
  %v3786 = vld [vmem:[%s3781 + $0x20] sm:$0xff]
  %v3787 = vld [vmem:[%s3781 + $0x28] sm:$0xff]
  %v3788 = vld [vmem:[%s3781 + $0x30] sm:$0xff]
  %v3789 = vld [vmem:[%s3781 + $0x38] sm:$0xff]
  %s3790 = scalar_lea.vmem %s33, 3
  %v3791 = vld [vmem:[%s3790] sm:$0x1]
  %v3793 = vperm.slane %v3791, 0
  %3795 = vmatpush.msra.mxu0 0.0
  %3796 = vmatpush.msra.mxu0 0.0
  %3797 = vmatpush.msra.mxu0 0.0
  %3798 = vmatpush.msra.mxu0 0.0
  %3799 = vmatpush.msra.mxu0 0.0
  %3800 = vmatpush.msra.mxu0 0.0
  %3801 = vmatpush.msra.mxu0 0.0
  %3802 = vmatpush.msra.mxu0 0.0
  %3803 = vmatpush.msra.mxu0 %v3789
  %3804 = vmatpush.msra.mxu0 %v3788
  %3805 = vmatpush.msra.mxu0 %v3787
  %3806 = vmatpush.msra.mxu0 %v3786
  %3807 = vmatpush.msra.mxu0 %v3785
  %3808 = vmatpush.msra.mxu0 %v3784
  %3809 = vmatpush.msra.mxu0 %v3783
  %3810 = vmatpush.msra.mxu0 %v3782
  %3811 = vmatmul.f32.gmra.mxu0 %v2585
  %v3812 = vpop.f32.mrf.mxu0
  %v3813 = vadd.f32 %v3793, %v3812
  %3814 = vmatmul.f32.gmra.mxu0 %v2588
  %v3815 = vpop.f32.mrf.mxu0
  %v3816 = vadd.f32 %v3793, %v3815
  %3817 = vmatmul.f32.gmra.mxu0 %v2591
  %v3818 = vpop.f32.mrf.mxu0
  %v3819 = vadd.f32 %v3793, %v3818
  %3820 = vmatmul.f32.gmra.mxu0 %v2594
  %v3821 = vpop.f32.mrf.mxu0
  %v3822 = vadd.f32 %v3793, %v3821
  %3823 = vdwg.mxu0
  %v3825 = vsel %vm2707, %v3727, 0
  %v3828 = vsel %vm2707, %v3730, 0
  %v3831 = vsel %vm2707, %v3733, 0
  %v3834 = vsel %vm2707, %v3736, 0
  %v3837 = vsel %vm2707, %v3770, 0
  %v3840 = vsel %vm2707, %v3773, 0
  %v3843 = vsel %vm2707, %v3776, 0
  %v3846 = vsel %vm2707, %v3779, 0
  %3848 = vmatpush.xpose.msra.mxu0 0.0
  %3849 = vmatpush.xpose.msra.mxu0 0.0
  %3850 = vmatpush.xpose.msra.mxu0 0.0
  %3851 = vmatpush.xpose.msra.mxu0 0.0
  %3852 = vmatpush.xpose.msra.mxu0 0.0
  %3853 = vmatpush.xpose.msra.mxu0 0.0
  %3854 = vmatpush.xpose.msra.mxu0 0.0
  %3855 = vmatpush.xpose.msra.mxu0 0.0
  %3856 = vmatpush.xpose.msra.mxu0 0.0
  %3857 = vmatpush.xpose.msra.mxu0 0.0
  %3858 = vmatpush.xpose.msra.mxu0 0.0
  %3859 = vmatpush.xpose.msra.mxu0 0.0
  %3860 = vmatpush.xpose.msra.mxu0 %v3846
  %3861 = vmatpush.xpose.msra.mxu0 %v3843
  %3862 = vmatpush.xpose.msra.mxu0 %v3840
  %3863 = vmatpush.xpose.msra.mxu0 %v3837
  %3864 = vmatmul.f32.gmra.mxu0 %v3825
  %v3865 = vpop.f32.mrf.mxu0
  %v3866 = vadd.f32 0.0, %v3865
  %3867 = vmatmul.f32.gmra.mxu0 %v3828
  %v3868 = vpop.f32.mrf.mxu0
  %v3869 = vadd.f32 0.0, %v3868
  %3870 = vmatmul.f32.gmra.mxu0 %v3831
  %v3871 = vpop.f32.mrf.mxu0
  %v3872 = vadd.f32 0.0, %v3871
  %3873 = vmatmul.f32.gmra.mxu0 %v3834
  %v3874 = vpop.f32.mrf.mxu0
  %v3875 = vadd.f32 0.0, %v3874
  %3876 = vdwg.mxu0
  %v3877 = vmul.f32 %v3866, 0.25
  %v3878 = vmul.f32 %v3869, 0.25
  %v3879 = vmul.f32 %v3872, 0.25
  %v3880 = vmul.f32 %v3875, 0.25
  %v3881 = vadd.f32 %v3877, %v2568
  %v3882 = vadd.f32 %v3878, %v2569
  %v3883 = vadd.f32 %v3879, %v2570
  %v3884 = vadd.f32 %v3880, %v2571
  %v3885 = vsel %vm232, %v3881, -inf
  %3886 = vmax.xlane.f32.xlu0 %v3885
  %v3887 = vpop.xlane.xlu0 %3886
  %v3888 = vsel %vm232, %v3882, -inf
  %3889 = vmax.xlane.f32.xlu0 %v3888
  %v3890 = vpop.xlane.xlu0 %3889
  %v3891 = vsel %vm232, %v3883, -inf
  %3892 = vmax.xlane.f32.xlu0 %v3891
  %v3893 = vpop.xlane.xlu0 %3892
  %v3894 = vsel %vm232, %v3884, -inf
  %3895 = vmax.xlane.f32.xlu0 %v3894
  %v3896 = vpop.xlane.xlu0 %3895
  %v3897 = vsub.f32 %v3881, %v3887
  %v3898 = vsub.f32 %v3882, %v3890
  %v3899 = vsub.f32 %v3883, %v3893
  %v3900 = vsub.f32 %v3884, %v3896
  %v3901 = vmul.f32 %v3897, 1.442695
  %v3902 = vpow.pop %v3901
  %v3903 = vmul.f32 %v3898, 1.442695
  %v3904 = vpow.pop %v3903
  %v3905 = vmul.f32 %v3899, 1.442695
  %v3906 = vpow.pop %v3905
  %v3907 = vmul.f32 %v3900, 1.442695
  %v3908 = vpow.pop %v3907
  %v3909 = vsel %vm232, %v3902, 0.0
  %3910 = vadd.xlane.f32.xlu0 %v3909
  %v3911 = vpop.xlane.xlu0 %3910
  %v3912 = vsel %vm232, %v3904, 0.0
  %3913 = vadd.xlane.f32.xlu0 %v3912
  %v3914 = vpop.xlane.xlu0 %3913
  %v3915 = vsel %vm232, %v3906, 0.0
  %3916 = vadd.xlane.f32.xlu0 %v3915
  %v3917 = vpop.xlane.xlu0 %3916
  %v3918 = vsel %vm232, %v3908, 0.0
  %3919 = vadd.xlane.f32.xlu0 %v3918
  %v3920 = vpop.xlane.xlu0 %3919
  %v3921 = vrcp.pop %v3911
  %v3922 = vmul.f32 %v3911, %v3921
  %v3923 = vsub.f32 1.0, %v3922
  %v3924 = vmul.f32 %v3921, %v3923
  %v3925 = vadd.f32 %v3921, %v3924
  %vm3926 = vweird.f32 %v3911
  %vm3927 = vweird.f32 %v3921
  %vm3928 = vmor %vm3926, %vm3927
  %v3929 = vsel %vm3928, %v3921, %v3925
  %v3930 = vand.u32 2147483647, %v3911
  %vm3931 = vcmp.eq.f32.partialorder %v3930, 8.507059e+37
  %v3932 = vand.u32 %v3911, 2147483648
  %v3933 = vor.u32 1.1754944e-38, %v3932
  %v3934 = vsel %vm3931, %v3933, %v3929
  %v3935 = vmul.f32 %v3902, %v3934
  %v3936 = vrcp.pop %v3914
  %v3937 = vmul.f32 %v3914, %v3936
  %v3938 = vsub.f32 1.0, %v3937
  %v3939 = vmul.f32 %v3936, %v3938
  %v3940 = vadd.f32 %v3936, %v3939
  %vm3941 = vweird.f32 %v3914
  %vm3942 = vweird.f32 %v3936
  %vm3943 = vmor %vm3941, %vm3942
  %v3944 = vsel %vm3943, %v3936, %v3940
  %v3945 = vand.u32 2147483647, %v3914
  %vm3946 = vcmp.eq.f32.partialorder %v3945, 8.507059e+37
  %v3947 = vand.u32 %v3914, 2147483648
  %v3948 = vor.u32 1.1754944e-38, %v3947
  %v3949 = vsel %vm3946, %v3948, %v3944
  %v3950 = vmul.f32 %v3904, %v3949
  %v3951 = vrcp.pop %v3917
  %v3952 = vmul.f32 %v3917, %v3951
  %v3953 = vsub.f32 1.0, %v3952
  %v3954 = vmul.f32 %v3951, %v3953
  %v3955 = vadd.f32 %v3951, %v3954
  %vm3956 = vweird.f32 %v3917
  %vm3957 = vweird.f32 %v3951
  %vm3958 = vmor %vm3956, %vm3957
  %v3959 = vsel %vm3958, %v3951, %v3955
  %v3960 = vand.u32 2147483647, %v3917
  %vm3961 = vcmp.eq.f32.partialorder %v3960, 8.507059e+37
  %v3962 = vand.u32 %v3917, 2147483648
  %v3963 = vor.u32 1.1754944e-38, %v3962
  %v3964 = vsel %vm3961, %v3963, %v3959
  %v3965 = vmul.f32 %v3906, %v3964
  %v3966 = vrcp.pop %v3920
  %v3967 = vmul.f32 %v3920, %v3966
  %v3968 = vsub.f32 1.0, %v3967
  %v3969 = vmul.f32 %v3966, %v3968
  %v3970 = vadd.f32 %v3966, %v3969
  %vm3971 = vweird.f32 %v3920
  %vm3972 = vweird.f32 %v3966
  %vm3973 = vmor %vm3971, %vm3972
  %v3974 = vsel %vm3973, %v3966, %v3970
  %v3975 = vand.u32 2147483647, %v3920
  %vm3976 = vcmp.eq.f32.partialorder %v3975, 8.507059e+37
  %v3977 = vand.u32 %v3920, 2147483648
  %v3978 = vor.u32 1.1754944e-38, %v3977
  %v3979 = vsel %vm3976, %v3978, %v3974
  %v3980 = vmul.f32 %v3908, %v3979
  %v3982 = vsel %vm232, %v3935, 0
  %v3985 = vsel %vm232, %v3950, 0
  %v3988 = vsel %vm232, %v3965, 0
  %v3991 = vsel %vm232, %v3980, 0
  %3993 = vmatpush.msra.mxu0 0.0
  %3994 = vmatpush.msra.mxu0 0.0
  %3995 = vmatpush.msra.mxu0 0.0
  %3996 = vmatpush.msra.mxu0 0.0
  %3997 = vmatpush.msra.mxu0 0.0
  %3998 = vmatpush.msra.mxu0 0.0
  %3999 = vmatpush.msra.mxu0 0.0
  %4000 = vmatpush.msra.mxu0 0.0
  %4001 = vmatpush.msra.mxu0 0.0
  %4002 = vmatpush.msra.mxu0 0.0
  %4003 = vmatpush.msra.mxu0 0.0
  %4004 = vmatpush.msra.mxu0 0.0
  %4005 = vmatpush.msra.mxu0 %v3822
  %4006 = vmatpush.msra.mxu0 %v3819
  %4007 = vmatpush.msra.mxu0 %v3816
  %4008 = vmatpush.msra.mxu0 %v3813
  %4009 = vmatmul.f32.gmra.mxu0 %v3982
  %v4010 = vpop.f32.mrf.mxu0
  %v4011 = vadd.f32 0.0, %v4010
  %4012 = vmatmul.f32.gmra.mxu0 %v3985
  %v4013 = vpop.f32.mrf.mxu0
  %v4014 = vadd.f32 0.0, %v4013
  %4015 = vmatmul.f32.gmra.mxu0 %v3988
  %v4016 = vpop.f32.mrf.mxu0
  %v4017 = vadd.f32 0.0, %v4016
  %4018 = vmatmul.f32.gmra.mxu0 %v3991
  %v4019 = vpop.f32.mrf.mxu0
  %v4020 = vadd.f32 0.0, %v4019
  %4021 = vdwg.mxu0
  %s4022 = scalar_lea.vmem %s35, 48
  %v4023 = vld [vmem:[%s4022] sm:$0xff]
  %v4024 = vld [vmem:[%s4022 + $0x8] sm:$0xff]
  %v4026 = vsel %vm2707, %v4011, 0
  %v4029 = vsel %vm2707, %v4014, 0
  %v4032 = vsel %vm2707, %v4017, 0
  %v4035 = vsel %vm2707, %v4020, 0
  %4037 = vmatpush.msra.mxu0 0.0
  %4038 = vmatpush.msra.mxu0 0.0
  %4039 = vmatpush.msra.mxu0 0.0
  %4040 = vmatpush.msra.mxu0 0.0
  %4041 = vmatpush.msra.mxu0 0.0
  %4042 = vmatpush.msra.mxu0 0.0
  %4043 = vmatpush.msra.mxu0 0.0
  %4044 = vmatpush.msra.mxu0 0.0
  %4045 = vmatpush.msra.mxu0 0.0
  %4046 = vmatpush.msra.mxu0 0.0
  %4047 = vmatpush.msra.mxu0 0.0
  %4048 = vmatpush.msra.mxu0 0.0
  %4049 = vmatpush.msra.mxu0 0.0
  %4050 = vmatpush.msra.mxu0 0.0
  %4051 = vmatpush.msra.mxu0 %v4024
  %4052 = vmatpush.msra.mxu0 %v4023
  %4053 = vmatmul.f32.gmra.mxu0 %v4026
  %v4054 = vpop.f32.mrf.mxu0
  %v4055 = vadd.f32 0.0, %v4054
  %4056 = vmatmul.f32.gmra.mxu0 %v4029
  %v4057 = vpop.f32.mrf.mxu0
  %v4058 = vadd.f32 0.0, %v4057
  %4059 = vmatmul.f32.gmra.mxu0 %v4032
  %v4060 = vpop.f32.mrf.mxu0
  %v4061 = vadd.f32 0.0, %v4060
  %4062 = vmatmul.f32.gmra.mxu0 %v4035
  %v4063 = vpop.f32.mrf.mxu0
  %v4064 = vadd.f32 0.0, %v4063
  %4065 = vdwg.mxu0
  %v4066 = vadd.f32 %v3691, %v4055
  %v4067 = vadd.f32 %v3692, %v4058
  %v4068 = vadd.f32 %v3693, %v4061
  %v4069 = vadd.f32 %v3694, %v4064
  %v4070 = vld [vmem:[%s37] sm:$0x1]
  %v4072 = vperm.slane %v4070, 0
  %v4074 = vadd.f32 %v4066, %v4072
  %v4075 = vadd.f32 %v4067, %v4072
  %v4076 = vadd.f32 %v4068, %v4072
  %v4077 = vadd.f32 %v4069, %v4072
  %v4078 = vld [vmem:[%s5] sm:$0xf]
  %v4080 = vsel %vm232, %v4078, 0
  %4082 = vmatpush.msra.mxu0 0.0
  %4083 = vmatpush.msra.mxu0 0.0
  %4084 = vmatpush.msra.mxu0 0.0
  %4085 = vmatpush.msra.mxu0 0.0
  %4086 = vmatpush.msra.mxu0 0.0
  %4087 = vmatpush.msra.mxu0 0.0
  %4088 = vmatpush.msra.mxu0 0.0
  %4089 = vmatpush.msra.mxu0 0.0
  %4090 = vmatpush.msra.mxu0 0.0
  %4091 = vmatpush.msra.mxu0 0.0
  %4092 = vmatpush.msra.mxu0 0.0
  %4093 = vmatpush.msra.mxu0 0.0
  %4094 = vmatpush.msra.mxu0 %v4077
  %4095 = vmatpush.msra.mxu0 %v4076
  %4096 = vmatpush.msra.mxu0 %v4075
  %4097 = vmatpush.msra.mxu0 %v4074
  %4098 = vmatmul.f32.gmra.mxu0 %v4080
  %v4099 = vpop.f32.mrf.mxu0
  %v4100 = vadd.f32 0.0, %v4099
  %4101 = vdwg.mxu0
  %v4102 = vpack.c.bf16 %v4100, %v4100
  %v4103 = vld [vmem:[%s39] sm:$0xff]
  %v4104 = vld [vmem:[%s39 + $0x8] sm:$0xff]
  %v4105 = vld [vmem:[%s39 + $0x10] sm:$0xff]
  %v4106 = vld [vmem:[%s39 + $0x18] sm:$0xff]
  %v4107 = vld [vmem:[%s39 + $0x20] sm:$0xff]
  %v4108 = vld [vmem:[%s39 + $0x28] sm:$0xff]
  %v4109 = vld [vmem:[%s39 + $0x30] sm:$0xff]
  %v4110 = vld [vmem:[%s39 + $0x38] sm:$0xff]
  %v4111 = vld [vmem:[%s41] sm:$0x3]
  %v4113 = vperm.slane %v4111, 0
  %v4114 = vperm.slane %v4111, 1
  %v4125 = vunpack.c.l.b16 %v4103
  %v4126 = vunpack.c.h.b16 %v4103
  %v4127 = vunpack.c.l.b16 %v4104
  %v4128 = vunpack.c.h.b16 %v4104
  %v4129 = vunpack.c.l.b16 %v4105
  %v4130 = vunpack.c.h.b16 %v4105
  %v4131 = vunpack.c.l.b16 %v4106
  %v4132 = vunpack.c.h.b16 %v4106
  %v4133 = vunpack.c.l.b16 %v4107
  %v4134 = vunpack.c.h.b16 %v4107
  %v4135 = vunpack.c.l.b16 %v4108
  %v4136 = vunpack.c.h.b16 %v4108
  %v4137 = vunpack.c.l.b16 %v4109
  %v4138 = vunpack.c.h.b16 %v4109
  %v4139 = vunpack.c.l.b16 %v4110
  %v4140 = vunpack.c.h.b16 %v4110
  %v4141 = vpack.c.b16 %v4127, %v4125
  %v4142 = vpack.c.b16 %v4128, %v4126
  %v4143 = vpack.c.b16 %v4131, %v4129
  %v4144 = vpack.c.b16 %v4132, %v4130
  %v4145 = vpack.c.b16 %v4135, %v4133
  %v4146 = vpack.c.b16 %v4136, %v4134
  %v4147 = vpack.c.b16 %v4139, %v4137
  %v4148 = vpack.c.b16 %v4140, %v4138
  %v4158 = vsel %vm1374, %v4102, 0
  %4160 = vmatpush.bf16.msra.mxu0 0
  %4161 = vmatpush.bf16.msra.mxu0 0
  %4162 = vmatpush.bf16.msra.mxu0 0
  %4163 = vmatpush.bf16.msra.mxu0 0
  %4164 = vmatpush.bf16.msra.mxu0 %v4147
  %4165 = vmatpush.bf16.msra.mxu0 %v4145
  %4166 = vmatpush.bf16.msra.mxu0 %v4143
  %4167 = vmatpush.bf16.msra.mxu0 %v4141
  %4168 = vmatmul.bf16.gmra.mxu0 %v4158
  %v4169 = vpop.f32.mrf.mxu0
  %v4170 = vadd.f32 %v4113, %v4169
  %v4171 = vpop.f32.mrf.mxu0
  %4172 = vdwg.mxu0
  %4173 = vmatpush.bf16.msra.mxu0 0
  %4174 = vmatpush.bf16.msra.mxu0 0
  %4175 = vmatpush.bf16.msra.mxu0 0
  %4176 = vmatpush.bf16.msra.mxu0 0
  %4177 = vmatpush.bf16.msra.mxu0 %v4148
  %4178 = vmatpush.bf16.msra.mxu0 %v4146
  %4179 = vmatpush.bf16.msra.mxu0 %v4144
  %4180 = vmatpush.bf16.msra.mxu0 %v4142
  %4181 = vmatmul.bf16.gmra.mxu0 %v4158
  %v4182 = vpop.f32.mrf.mxu0
  %v4183 = vadd.f32 %v4114, %v4182
  %v4184 = vpop.f32.mrf.mxu0
  %4185 = vdwg.mxu0
  %v4186 = vmax.f32 %v4170, 0.0
  %v4187 = vmax.f32 %v4183, 0.0
  %v4188 = vpack.c.bf16 %v4186, %v4186
  %v4189 = vpack.c.bf16 %v4187, %v4187
  %v4190 = vld [vmem:[%s43] sm:$0xf]
  %v4191 = vld [vmem:[%s43 + $0x4] sm:$0xf]
  %v4192 = vld [vmem:[%s43 + $0x8] sm:$0xf]
  %v4193 = vld [vmem:[%s43 + $0xc] sm:$0xf]
  %v4194 = vld [vmem:[%s43 + $0x10] sm:$0xf]
  %v4195 = vld [vmem:[%s43 + $0x14] sm:$0xf]
  %v4196 = vld [vmem:[%s43 + $0x18] sm:$0xf]
  %v4197 = vld [vmem:[%s43 + $0x1c] sm:$0xf]
  %v4198 = vld [vmem:[%s43 + $0x20] sm:$0xf]
  %v4199 = vld [vmem:[%s43 + $0x24] sm:$0xf]
  %v4200 = vld [vmem:[%s43 + $0x28] sm:$0xf]
  %v4201 = vld [vmem:[%s43 + $0x2c] sm:$0xf]
  %v4202 = vld [vmem:[%s43 + $0x30] sm:$0xf]
  %v4203 = vld [vmem:[%s43 + $0x34] sm:$0xf]
  %v4204 = vld [vmem:[%s43 + $0x38] sm:$0xf]
  %v4205 = vld [vmem:[%s43 + $0x3c] sm:$0xf]
  %v4206 = vld [vmem:[%s43 + $0x40] sm:$0xf]
  %v4207 = vld [vmem:[%s43 + $0x44] sm:$0xf]
  %v4208 = vld [vmem:[%s43 + $0x48] sm:$0xf]
  %v4209 = vld [vmem:[%s43 + $0x4c] sm:$0xf]
  %v4210 = vld [vmem:[%s43 + $0x50] sm:$0xf]
  %v4211 = vld [vmem:[%s43 + $0x54] sm:$0xf]
  %v4212 = vld [vmem:[%s43 + $0x58] sm:$0xf]
  %v4213 = vld [vmem:[%s43 + $0x5c] sm:$0xf]
  %v4214 = vld [vmem:[%s43 + $0x60] sm:$0xf]
  %v4215 = vld [vmem:[%s43 + $0x64] sm:$0xf]
  %v4216 = vld [vmem:[%s43 + $0x68] sm:$0xf]
  %v4217 = vld [vmem:[%s43 + $0x6c] sm:$0xf]
  %v4218 = vld [vmem:[%s43 + $0x70] sm:$0xf]
  %v4219 = vld [vmem:[%s43 + $0x74] sm:$0xf]
  %v4220 = vld [vmem:[%s43 + $0x78] sm:$0xf]
  %v4221 = vld [vmem:[%s43 + $0x7c] sm:$0xf]
  %v4222 = vld [vmem:[%s45] sm:$0x1]
  %v4224 = vperm.slane %v4222, 0
  %v4258 = vunpack.c.l.b16 %v4190
  %v4259 = vunpack.c.l.b16 %v4191
  %v4260 = vunpack.c.l.b16 %v4192
  %v4261 = vunpack.c.l.b16 %v4193
  %v4262 = vunpack.c.l.b16 %v4194
  %v4263 = vunpack.c.l.b16 %v4195
  %v4264 = vunpack.c.l.b16 %v4196
  %v4265 = vunpack.c.l.b16 %v4197
  %v4266 = vunpack.c.l.b16 %v4198
  %v4267 = vunpack.c.l.b16 %v4199
  %v4268 = vunpack.c.l.b16 %v4200
  %v4269 = vunpack.c.l.b16 %v4201
  %v4270 = vunpack.c.l.b16 %v4202
  %v4271 = vunpack.c.l.b16 %v4203
  %v4272 = vunpack.c.l.b16 %v4204
  %v4273 = vunpack.c.l.b16 %v4205
  %v4274 = vunpack.c.l.b16 %v4206
  %v4275 = vunpack.c.l.b16 %v4207
  %v4276 = vunpack.c.l.b16 %v4208
  %v4277 = vunpack.c.l.b16 %v4209
  %v4278 = vunpack.c.l.b16 %v4210
  %v4279 = vunpack.c.l.b16 %v4211
  %v4280 = vunpack.c.l.b16 %v4212
  %v4281 = vunpack.c.l.b16 %v4213
  %v4282 = vunpack.c.l.b16 %v4214
  %v4283 = vunpack.c.l.b16 %v4215
  %v4284 = vunpack.c.l.b16 %v4216
  %v4285 = vunpack.c.l.b16 %v4217
  %v4286 = vunpack.c.l.b16 %v4218
  %v4287 = vunpack.c.l.b16 %v4219
  %v4288 = vunpack.c.l.b16 %v4220
  %v4289 = vunpack.c.l.b16 %v4221
  %v4290 = vpack.c.b16 %v4259, %v4258
  %v4291 = vpack.c.b16 %v4261, %v4260
  %v4292 = vpack.c.b16 %v4263, %v4262
  %v4293 = vpack.c.b16 %v4265, %v4264
  %v4294 = vpack.c.b16 %v4267, %v4266
  %v4295 = vpack.c.b16 %v4269, %v4268
  %v4296 = vpack.c.b16 %v4271, %v4270
  %v4297 = vpack.c.b16 %v4273, %v4272
  %v4298 = vpack.c.b16 %v4275, %v4274
  %v4299 = vpack.c.b16 %v4277, %v4276
  %v4300 = vpack.c.b16 %v4279, %v4278
  %v4301 = vpack.c.b16 %v4281, %v4280
  %v4302 = vpack.c.b16 %v4283, %v4282
  %v4303 = vpack.c.b16 %v4285, %v4284
  %v4304 = vpack.c.b16 %v4287, %v4286
  %v4305 = vpack.c.b16 %v4289, %v4288
  %4322 = vmatpush.bf16.msra.mxu0 %v4297
  %4323 = vmatpush.bf16.msra.mxu0 %v4296
  %4324 = vmatpush.bf16.msra.mxu0 %v4295
  %4325 = vmatpush.bf16.msra.mxu0 %v4294
  %4326 = vmatpush.bf16.msra.mxu0 %v4293
  %4327 = vmatpush.bf16.msra.mxu0 %v4292
  %4328 = vmatpush.bf16.msra.mxu0 %v4291
  %4329 = vmatpush.bf16.msra.mxu0 %v4290
  %4330 = vmatmul.bf16.gmra.mxu0 %v4188
  %v4331 = vpop.f32.mrf.mxu0
  %v4332 = vadd.f32 %v4224, %v4331
  %v4333 = vpop.f32.mrf.mxu0
  %4334 = vdwg.mxu0
  %4335 = vmatpush.bf16.msra.mxu0 %v4305
  %4336 = vmatpush.bf16.msra.mxu0 %v4304
  %4337 = vmatpush.bf16.msra.mxu0 %v4303
  %4338 = vmatpush.bf16.msra.mxu0 %v4302
  %4339 = vmatpush.bf16.msra.mxu0 %v4301
  %4340 = vmatpush.bf16.msra.mxu0 %v4300
  %4341 = vmatpush.bf16.msra.mxu0 %v4299
  %4342 = vmatpush.bf16.msra.mxu0 %v4298
  %4343 = vmatmul.bf16.gmra.mxu0 %v4189
  %v4344 = vpop.f32.mrf.mxu0
  %v4345 = vadd.f32 %v4332, %v4344
  %v4346 = vpop.f32.mrf.mxu0
  %4347 = vdwg.mxu0
  %v4348 = vmax.f32 %v4345, 0.0
  %v4349 = vld [vmem:[%s47] sm:$0xff]
  %v4350 = vld [vmem:[%s47 + $0x8] sm:$0xff]
  %v4351 = vld [vmem:[%s47 + $0x10] sm:$0xff]
  %v4352 = vld [vmem:[%s47 + $0x18] sm:$0xff]
  %v4353 = vld [vmem:[%s47 + $0x20] sm:$0xff]
  %v4354 = vld [vmem:[%s47 + $0x28] sm:$0xff]
  %v4355 = vld [vmem:[%s47 + $0x30] sm:$0xff]
  %v4356 = vld [vmem:[%s47 + $0x38] sm:$0xff]
  %v4357 = vld [vmem:[%s47 + $0x40] sm:$0xff]
  %v4358 = vld [vmem:[%s47 + $0x48] sm:$0xff]
  %v4359 = vld [vmem:[%s47 + $0x50] sm:$0xff]
  %v4360 = vld [vmem:[%s47 + $0x58] sm:$0xff]
  %v4361 = vld [vmem:[%s47 + $0x60] sm:$0xff]
  %v4362 = vld [vmem:[%s47 + $0x68] sm:$0xff]
  %v4363 = vld [vmem:[%s47 + $0x70] sm:$0xff]
  %v4364 = vld [vmem:[%s47 + $0x78] sm:$0xff]
  %v4365 = vld [vmem:[%s49] sm:$0x1]
  %v4367 = vperm.slane %v4365, 0
  %4369 = vmatpush.msra.mxu0 %v4364
  %4370 = vmatpush.msra.mxu0 %v4363
  %4371 = vmatpush.msra.mxu0 %v4362
  %4372 = vmatpush.msra.mxu0 %v4361
  %4373 = vmatpush.msra.mxu0 %v4360
  %4374 = vmatpush.msra.mxu0 %v4359
  %4375 = vmatpush.msra.mxu0 %v4358
  %4376 = vmatpush.msra.mxu0 %v4357
  %4377 = vmatpush.msra.mxu0 %v4356
  %4378 = vmatpush.msra.mxu0 %v4355
  %4379 = vmatpush.msra.mxu0 %v4354
  %4380 = vmatpush.msra.mxu0 %v4353
  %4381 = vmatpush.msra.mxu0 %v4352
  %4382 = vmatpush.msra.mxu0 %v4351
  %4383 = vmatpush.msra.mxu0 %v4350
  %4384 = vmatpush.msra.mxu0 %v4349
  %4385 = vmatmul.f32.gmra.mxu0 %v4348
  %v4386 = vpop.f32.mrf.mxu0
  %v4387 = vadd.f32 %v4367, %v4386
  %4388 = vdwg.mxu0
  %v4390 = vrot.slane %v4387, 2
  %v4392 = vsub.f32 %v4387, %v4390
  %v4393 = vand.u32 2147483647, %v4392
  %v4394 = vmul.f32 %v4387, %v4390
  %4395 = vrot.lane.b32.xlu0 %v4390, 32
  %v4396 = vpop.permute.xlu0 %4395
  %4399 = vrot.lane.b32.xlu0 %v4393, 64
  %v4400 = vpop.permute.xlu0 %4399
  %4403 = vrot.lane.b32.xlu0 %v4394, 96
  %v4404 = vpop.permute.xlu0 %4403
  %v4406 = vsel %vm232, %v4387, %v4396
  %v4407 = vsel %vm1374, %v4406, %v4400
  %vm4408 = vcmask 785408
  %v4409 = vsel %vm4408, %v4407, %v4404
  %v4410 = vpack.c.bf16 %v4409, %v4409
  %v4411 = vld [vmem:[%s51] sm:$0xff]
  %v4412 = vld [vmem:[%s51 + $0x8] sm:$0xff]
  %v4413 = vld [vmem:[%s51 + $0x10] sm:$0xff]
  %v4414 = vld [vmem:[%s51 + $0x18] sm:$0xff]
  %v4415 = vld [vmem:[%s51 + $0x20] sm:$0xff]
  %v4416 = vld [vmem:[%s51 + $0x28] sm:$0xff]
  %v4417 = vld [vmem:[%s51 + $0x30] sm:$0xff]
  %v4418 = vld [vmem:[%s51 + $0x38] sm:$0xff]
  %v4419 = vld [vmem:[%s51 + $0x40] sm:$0xff]
  %v4420 = vld [vmem:[%s51 + $0x48] sm:$0xff]
  %v4421 = vld [vmem:[%s51 + $0x50] sm:$0xff]
  %v4422 = vld [vmem:[%s51 + $0x58] sm:$0xff]
  %v4423 = vld [vmem:[%s51 + $0x60] sm:$0xff]
  %v4424 = vld [vmem:[%s51 + $0x68] sm:$0xff]
  %v4425 = vld [vmem:[%s51 + $0x70] sm:$0xff]
  %v4426 = vld [vmem:[%s51 + $0x78] sm:$0xff]
  %v4427 = vld [vmem:[%s53] sm:$0x3]
  %v4429 = vperm.slane %v4427, 0
  %v4430 = vperm.slane %v4427, 1
  %v4449 = vunpack.c.l.b16 %v4411
  %v4450 = vunpack.c.h.b16 %v4411
  %v4451 = vunpack.c.l.b16 %v4412
  %v4452 = vunpack.c.h.b16 %v4412
  %v4453 = vunpack.c.l.b16 %v4413
  %v4454 = vunpack.c.h.b16 %v4413
  %v4455 = vunpack.c.l.b16 %v4414
  %v4456 = vunpack.c.h.b16 %v4414
  %v4457 = vunpack.c.l.b16 %v4415
  %v4458 = vunpack.c.h.b16 %v4415
  %v4459 = vunpack.c.l.b16 %v4416
  %v4460 = vunpack.c.h.b16 %v4416
  %v4461 = vunpack.c.l.b16 %v4417
  %v4462 = vunpack.c.h.b16 %v4417
  %v4463 = vunpack.c.l.b16 %v4418
  %v4464 = vunpack.c.h.b16 %v4418
  %v4465 = vunpack.c.l.b16 %v4419
  %v4466 = vunpack.c.h.b16 %v4419
  %v4467 = vunpack.c.l.b16 %v4420
  %v4468 = vunpack.c.h.b16 %v4420
  %v4469 = vunpack.c.l.b16 %v4421
  %v4470 = vunpack.c.h.b16 %v4421
  %v4471 = vunpack.c.l.b16 %v4422
  %v4472 = vunpack.c.h.b16 %v4422
  %v4473 = vunpack.c.l.b16 %v4423
  %v4474 = vunpack.c.h.b16 %v4423
  %v4475 = vunpack.c.l.b16 %v4424
  %v4476 = vunpack.c.h.b16 %v4424
  %v4477 = vunpack.c.l.b16 %v4425
  %v4478 = vunpack.c.h.b16 %v4425
  %v4479 = vunpack.c.l.b16 %v4426
  %v4480 = vunpack.c.h.b16 %v4426
  %v4481 = vpack.c.b16 %v4451, %v4449
  %v4482 = vpack.c.b16 %v4452, %v4450
  %v4483 = vpack.c.b16 %v4455, %v4453
  %v4484 = vpack.c.b16 %v4456, %v4454
  %v4485 = vpack.c.b16 %v4459, %v4457
  %v4486 = vpack.c.b16 %v4460, %v4458
  %v4487 = vpack.c.b16 %v4463, %v4461
  %v4488 = vpack.c.b16 %v4464, %v4462
  %v4489 = vpack.c.b16 %v4467, %v4465
  %v4490 = vpack.c.b16 %v4468, %v4466
  %v4491 = vpack.c.b16 %v4471, %v4469
  %v4492 = vpack.c.b16 %v4472, %v4470
  %v4493 = vpack.c.b16 %v4475, %v4473
  %v4494 = vpack.c.b16 %v4476, %v4474
  %v4495 = vpack.c.b16 %v4479, %v4477
  %v4496 = vpack.c.b16 %v4480, %v4478
  %4513 = vmatpush.bf16.msra.mxu0 %v4495
  %4514 = vmatpush.bf16.msra.mxu0 %v4493
  %4515 = vmatpush.bf16.msra.mxu0 %v4491
  %4516 = vmatpush.bf16.msra.mxu0 %v4489
  %4517 = vmatpush.bf16.msra.mxu0 %v4487
  %4518 = vmatpush.bf16.msra.mxu0 %v4485
  %4519 = vmatpush.bf16.msra.mxu0 %v4483
  %4520 = vmatpush.bf16.msra.mxu0 %v4481
  %4521 = vmatmul.bf16.gmra.mxu0 %v4410
  %v4522 = vpop.f32.mrf.mxu0
  %v4523 = vadd.f32 %v4429, %v4522
  %v4524 = vpop.f32.mrf.mxu0
  %4525 = vdwg.mxu0
  %4526 = vmatpush.bf16.msra.mxu0 %v4496
  %4527 = vmatpush.bf16.msra.mxu0 %v4494
  %4528 = vmatpush.bf16.msra.mxu0 %v4492
  %4529 = vmatpush.bf16.msra.mxu0 %v4490
  %4530 = vmatpush.bf16.msra.mxu0 %v4488
  %4531 = vmatpush.bf16.msra.mxu0 %v4486
  %4532 = vmatpush.bf16.msra.mxu0 %v4484
  %4533 = vmatpush.bf16.msra.mxu0 %v4482
  %4534 = vmatmul.bf16.gmra.mxu0 %v4410
  %v4535 = vpop.f32.mrf.mxu0
  %v4536 = vadd.f32 %v4430, %v4535
  %v4537 = vpop.f32.mrf.mxu0
  %4538 = vdwg.mxu0
  %v4539 = vmax.f32 %v4523, 0.0
  %v4540 = vmax.f32 %v4536, 0.0
  %v4541 = vpack.c.bf16 %v4539, %v4539
  %v4542 = vpack.c.bf16 %v4540, %v4540
  %v4543 = vld [vmem:[%s55] sm:$0xf]
  %v4544 = vld [vmem:[%s55 + $0x4] sm:$0xf]
  %v4545 = vld [vmem:[%s55 + $0x8] sm:$0xf]
  %v4546 = vld [vmem:[%s55 + $0xc] sm:$0xf]
  %v4547 = vld [vmem:[%s55 + $0x10] sm:$0xf]
  %v4548 = vld [vmem:[%s55 + $0x14] sm:$0xf]
  %v4549 = vld [vmem:[%s55 + $0x18] sm:$0xf]
  %v4550 = vld [vmem:[%s55 + $0x1c] sm:$0xf]
  %v4551 = vld [vmem:[%s55 + $0x20] sm:$0xf]
  %v4552 = vld [vmem:[%s55 + $0x24] sm:$0xf]
  %v4553 = vld [vmem:[%s55 + $0x28] sm:$0xf]
  %v4554 = vld [vmem:[%s55 + $0x2c] sm:$0xf]
  %v4555 = vld [vmem:[%s55 + $0x30] sm:$0xf]
  %v4556 = vld [vmem:[%s55 + $0x34] sm:$0xf]
  %v4557 = vld [vmem:[%s55 + $0x38] sm:$0xf]
  %v4558 = vld [vmem:[%s55 + $0x3c] sm:$0xf]
  %v4559 = vld [vmem:[%s55 + $0x40] sm:$0xf]
  %v4560 = vld [vmem:[%s55 + $0x44] sm:$0xf]
  %v4561 = vld [vmem:[%s55 + $0x48] sm:$0xf]
  %v4562 = vld [vmem:[%s55 + $0x4c] sm:$0xf]
  %v4563 = vld [vmem:[%s55 + $0x50] sm:$0xf]
  %v4564 = vld [vmem:[%s55 + $0x54] sm:$0xf]
  %v4565 = vld [vmem:[%s55 + $0x58] sm:$0xf]
  %v4566 = vld [vmem:[%s55 + $0x5c] sm:$0xf]
  %v4567 = vld [vmem:[%s55 + $0x60] sm:$0xf]
  %v4568 = vld [vmem:[%s55 + $0x64] sm:$0xf]
  %v4569 = vld [vmem:[%s55 + $0x68] sm:$0xf]
  %v4570 = vld [vmem:[%s55 + $0x6c] sm:$0xf]
  %v4571 = vld [vmem:[%s55 + $0x70] sm:$0xf]
  %v4572 = vld [vmem:[%s55 + $0x74] sm:$0xf]
  %v4573 = vld [vmem:[%s55 + $0x78] sm:$0xf]
  %v4574 = vld [vmem:[%s55 + $0x7c] sm:$0xf]
  %v4575 = vld [vmem:[%s57] sm:$0x1]
  %v4577 = vperm.slane %v4575, 0
  %v4611 = vunpack.c.l.b16 %v4543
  %v4612 = vunpack.c.l.b16 %v4544
  %v4613 = vunpack.c.l.b16 %v4545
  %v4614 = vunpack.c.l.b16 %v4546
  %v4615 = vunpack.c.l.b16 %v4547
  %v4616 = vunpack.c.l.b16 %v4548
  %v4617 = vunpack.c.l.b16 %v4549
  %v4618 = vunpack.c.l.b16 %v4550
  %v4619 = vunpack.c.l.b16 %v4551
  %v4620 = vunpack.c.l.b16 %v4552
  %v4621 = vunpack.c.l.b16 %v4553
  %v4622 = vunpack.c.l.b16 %v4554
  %v4623 = vunpack.c.l.b16 %v4555
  %v4624 = vunpack.c.l.b16 %v4556
  %v4625 = vunpack.c.l.b16 %v4557
  %v4626 = vunpack.c.l.b16 %v4558
  %v4627 = vunpack.c.l.b16 %v4559
  %v4628 = vunpack.c.l.b16 %v4560
  %v4629 = vunpack.c.l.b16 %v4561
  %v4630 = vunpack.c.l.b16 %v4562
  %v4631 = vunpack.c.l.b16 %v4563
  %v4632 = vunpack.c.l.b16 %v4564
  %v4633 = vunpack.c.l.b16 %v4565
  %v4634 = vunpack.c.l.b16 %v4566
  %v4635 = vunpack.c.l.b16 %v4567
  %v4636 = vunpack.c.l.b16 %v4568
  %v4637 = vunpack.c.l.b16 %v4569
  %v4638 = vunpack.c.l.b16 %v4570
  %v4639 = vunpack.c.l.b16 %v4571
  %v4640 = vunpack.c.l.b16 %v4572
  %v4641 = vunpack.c.l.b16 %v4573
  %v4642 = vunpack.c.l.b16 %v4574
  %v4643 = vpack.c.b16 %v4612, %v4611
  %v4644 = vpack.c.b16 %v4614, %v4613
  %v4645 = vpack.c.b16 %v4616, %v4615
  %v4646 = vpack.c.b16 %v4618, %v4617
  %v4647 = vpack.c.b16 %v4620, %v4619
  %v4648 = vpack.c.b16 %v4622, %v4621
  %v4649 = vpack.c.b16 %v4624, %v4623
  %v4650 = vpack.c.b16 %v4626, %v4625
  %v4651 = vpack.c.b16 %v4628, %v4627
  %v4652 = vpack.c.b16 %v4630, %v4629
  %v4653 = vpack.c.b16 %v4632, %v4631
  %v4654 = vpack.c.b16 %v4634, %v4633
  %v4655 = vpack.c.b16 %v4636, %v4635
  %v4656 = vpack.c.b16 %v4638, %v4637
  %v4657 = vpack.c.b16 %v4640, %v4639
  %v4658 = vpack.c.b16 %v4642, %v4641
  %4675 = vmatpush.bf16.msra.mxu0 %v4650
  %4676 = vmatpush.bf16.msra.mxu0 %v4649
  %4677 = vmatpush.bf16.msra.mxu0 %v4648
  %4678 = vmatpush.bf16.msra.mxu0 %v4647
  %4679 = vmatpush.bf16.msra.mxu0 %v4646
  %4680 = vmatpush.bf16.msra.mxu0 %v4645
  %4681 = vmatpush.bf16.msra.mxu0 %v4644
  %4682 = vmatpush.bf16.msra.mxu0 %v4643
  %4683 = vmatmul.bf16.gmra.mxu0 %v4541
  %v4684 = vpop.f32.mrf.mxu0
  %v4685 = vadd.f32 %v4577, %v4684
  %v4686 = vpop.f32.mrf.mxu0
  %4687 = vdwg.mxu0
  %4688 = vmatpush.bf16.msra.mxu0 %v4658
  %4689 = vmatpush.bf16.msra.mxu0 %v4657
  %4690 = vmatpush.bf16.msra.mxu0 %v4656
  %4691 = vmatpush.bf16.msra.mxu0 %v4655
  %4692 = vmatpush.bf16.msra.mxu0 %v4654
  %4693 = vmatpush.bf16.msra.mxu0 %v4653
  %4694 = vmatpush.bf16.msra.mxu0 %v4652
  %4695 = vmatpush.bf16.msra.mxu0 %v4651
  %4696 = vmatmul.bf16.gmra.mxu0 %v4542
  %v4697 = vpop.f32.mrf.mxu0
  %v4698 = vadd.f32 %v4685, %v4697
  %v4699 = vpop.f32.mrf.mxu0
  %4700 = vdwg.mxu0
  %v4701 = vmax.f32 %v4698, 0.0
  %v4702 = vld [vmem:[%s59] sm:$0xff]
  %v4703 = vld [vmem:[%s59 + $0x8] sm:$0xff]
  %v4704 = vld [vmem:[%s59 + $0x10] sm:$0xff]
  %v4705 = vld [vmem:[%s59 + $0x18] sm:$0xff]
  %v4706 = vld [vmem:[%s59 + $0x20] sm:$0xff]
  %v4707 = vld [vmem:[%s59 + $0x28] sm:$0xff]
  %v4708 = vld [vmem:[%s59 + $0x30] sm:$0xff]
  %v4709 = vld [vmem:[%s59 + $0x38] sm:$0xff]
  %v4710 = vld [vmem:[%s59 + $0x40] sm:$0xff]
  %v4711 = vld [vmem:[%s59 + $0x48] sm:$0xff]
  %v4712 = vld [vmem:[%s59 + $0x50] sm:$0xff]
  %v4713 = vld [vmem:[%s59 + $0x58] sm:$0xff]
  %v4714 = vld [vmem:[%s59 + $0x60] sm:$0xff]
  %v4715 = vld [vmem:[%s59 + $0x68] sm:$0xff]
  %v4716 = vld [vmem:[%s59 + $0x70] sm:$0xff]
  %v4717 = vld [vmem:[%s59 + $0x78] sm:$0xff]
  %v4718 = vld [vmem:[%s61] sm:$0x1]
  %v4720 = vperm.slane %v4718, 0
  %4722 = vmatpush.msra.mxu0 %v4717
  %4723 = vmatpush.msra.mxu0 %v4716
  %4724 = vmatpush.msra.mxu0 %v4715
  %4725 = vmatpush.msra.mxu0 %v4714
  %4726 = vmatpush.msra.mxu0 %v4713
  %4727 = vmatpush.msra.mxu0 %v4712
  %4728 = vmatpush.msra.mxu0 %v4711
  %4729 = vmatpush.msra.mxu0 %v4710
  %4730 = vmatpush.msra.mxu0 %v4709
  %4731 = vmatpush.msra.mxu0 %v4708
  %4732 = vmatpush.msra.mxu0 %v4707
  %4733 = vmatpush.msra.mxu0 %v4706
  %4734 = vmatpush.msra.mxu0 %v4705
  %4735 = vmatpush.msra.mxu0 %v4704
  %4736 = vmatpush.msra.mxu0 %v4703
  %4737 = vmatpush.msra.mxu0 %v4702
  %4738 = vmatmul.f32.gmra.mxu0 %v4701
  %v4739 = vpop.f32.mrf.mxu0
  %v4740 = vadd.f32 %v4720, %v4739
  %4741 = vdwg.mxu0
  %v4742 = vmax.f32 %v4740, 0.0
  %v4743 = vld [vmem:[%s63] sm:$0xff]
  %v4744 = vld [vmem:[%s63 + $0x8] sm:$0xff]
  %v4745 = vld [vmem:[%s63 + $0x10] sm:$0xff]
  %v4746 = vld [vmem:[%s63 + $0x18] sm:$0xff]
  %v4747 = vld [vmem:[%s63 + $0x20] sm:$0xff]
  %v4748 = vld [vmem:[%s63 + $0x28] sm:$0xff]
  %v4749 = vld [vmem:[%s63 + $0x30] sm:$0xff]
  %v4750 = vld [vmem:[%s63 + $0x38] sm:$0xff]
  %v4751 = vld [vmem:[#allocation2] sm:$0x1]
  %v4753 = vperm.slane %v4751, 0
  %v4756 = vsel %vm1374, %v4742, 0
  %4758 = vmatpush.msra.mxu0 0.0
  %4759 = vmatpush.msra.mxu0 0.0
  %4760 = vmatpush.msra.mxu0 0.0
  %4761 = vmatpush.msra.mxu0 0.0
  %4762 = vmatpush.msra.mxu0 0.0
  %4763 = vmatpush.msra.mxu0 0.0
  %4764 = vmatpush.msra.mxu0 0.0
  %4765 = vmatpush.msra.mxu0 0.0
  %4766 = vmatpush.msra.mxu0 %v4750
  %4767 = vmatpush.msra.mxu0 %v4749
  %4768 = vmatpush.msra.mxu0 %v4748
  %4769 = vmatpush.msra.mxu0 %v4747
  %4770 = vmatpush.msra.mxu0 %v4746
  %4771 = vmatpush.msra.mxu0 %v4745
  %4772 = vmatpush.msra.mxu0 %v4744
  %4773 = vmatpush.msra.mxu0 %v4743
  %4774 = vmatmul.f32.gmra.mxu0 %v4756
  %v4775 = vpop.f32.mrf.mxu0
  %v4776 = vadd.f32 %v4753, %v4775
  %4777 = vdwg.mxu0
  %v4778 = vxor.u32 %v4776, 2147483648
  %v4779 = vmul.f32 %v4778, 1.442695
  %v4780 = vpow.pop %v4779
  %v4781 = vadd.f32 %v4780, 1.0
  %v4782 = vrcp.pop %v4781
  %v4783 = vmul.f32 %v4781, %v4782
  %v4784 = vsub.f32 1.0, %v4783
  %v4785 = vmul.f32 %v4782, %v4784
  %v4786 = vadd.f32 %v4782, %v4785
  %vm4787 = vweird.f32 %v4781
  %vm4788 = vweird.f32 %v4782
  %vm4789 = vmor %vm4787, %vm4788
  %v4790 = vsel %vm4789, %v4782, %v4786
  %v4791 = vand.u32 2147483647, %v4781
  %vm4792 = vcmp.eq.f32.partialorder %v4791, 8.507059e+37
  %v4793 = vand.u32 %v4781, 2147483648
  %v4794 = vor.u32 1.1754944e-38, %v4793
  %v4795 = vsel %vm4792, %v4794, %v4790
  %v4796 = vmul.f32 1.0, %v4795
  %vm4797 = vcmask 1024
  %4798 = vst.msk [vmem:[%s67] sm:$0x3] %vm4797, %v4796
  // Predicated region
  $region134: #{siamese_forward.1} parent=0 // pred_check
    _
  $region135: #{siamese_forward.1} parent=0 // pred_check_branch
    %4800 = sbr.rel (0) target = $region137
  $region136: #{siamese_forward.1} parent=0 // pred_region
    _
  $region137: #{siamese_forward.1} parent=0 // pred_fallthru
    _
  // Predicated region
  $region138: #{siamese_forward.1} parent=0 // pred_check
    _
  $region139: #{siamese_forward.1} parent=0 // pred_check_branch
    %4802 = sbr.rel (0) target = $region141
  $region140: #{siamese_forward.1} parent=0 // pred_region
    _
  $region141: #{siamese_forward.1} parent=0 // pred_fallthru
    _

</llo_original>
